<compile_context>
chip_gen: v5e
topology: v5e:2x2
jax: 0.10.0
libtpu: 0.0.40
codegen_flags: <defaults>
</compile_context>

<pallas_src>
import math
import jax
import jax.numpy as jnp
from jax import lax
from jax.experimental import pallas as pl
from jax.experimental.pallas import tpu as pltpu


# ----------------------------------------------------------------------------
# Pallas kernel: fused  W @ X + bias [+ residual] -> activation (-> optional split)
#   W:(N,K) bf16   X:(K,tm) bf16   bias:(N,1) f32   residual:(N,tm) bf16
#   outputs bf16; M (=B*Ho*Wo) on the lane axis -> lane-dense stores.
# ----------------------------------------------------------------------------
def _make_kernel(act, has_res, split):
    def _epilogue(vals_f32, dtype, apply_elu):
        t = vals_f32.astype(dtype)                 # bf16 epilogue (EUP bf16 on v6e/v7x)
        if apply_elu:
            # clamp dead branch so exp never sees large positives
            return jnp.where(t > 0, t, jnp.exp(jnp.minimum(t, 0.0)) - 1.0)
        return t

    def kernel(*refs):
        if has_res:
            w_ref, b_ref, x_ref, r_ref = refs[:4]
            outs = refs[4:]
        else:
            w_ref, b_ref, x_ref = refs[:3]
            outs = refs[3:]
        acc = jnp.dot(w_ref[...], x_ref[...], preferred_element_type=jnp.float32)
        acc = acc + b_ref[...]
        if has_res:
            acc = acc + r_ref[...].astype(jnp.float32)
        if split is None:
            (o_ref,) = outs
            o_ref[...] = _epilogue(acc, o_ref.dtype, act == "elu")
        else:
            # rows [0, split) = conv1 path (ELU); rows [split, N) = downsample path
            h_ref, d_ref = outs
            h_ref[...] = _epilogue(acc[:split, :], h_ref.dtype, True)
            d_ref[...] = acc[split:, :].astype(d_ref.dtype)

    return kernel


# ----------------------------------------------------------------------------
# XLA fallback for tiny problems (M < 256): launch + DMA overhead dominates there.
# ----------------------------------------------------------------------------
def _elu_f32(x):
    return jnp.where(x > 0, x, jnp.expm1(jnp.minimum(x, 0.0)))


def _fused_xla(w, b, x_t, residual, act, split):
    acc = jnp.dot(w.astype(jnp.float32), x_t.astype(jnp.float32),
                  precision=lax.Precision.HIGHEST) + b[:, None]
    if residual is not None:
        acc = acc + residual.astype(jnp.float32)
    if split is None:
        return _elu_f32(acc) if act == "elu" else acc
    return _elu_f32(acc[:split]), acc[split:]


def fused_matmul(w, b, x_t, residual=None, act="none", split=None,
                 tm_max=16384, min_pallas_m=256):
    """out[N,M] = act(w @ x_t + b [+ residual]).  w:(N,K) f32, x_t:(K,M).
    split=c -> returns (elu(out[:c]), out[c:]) as two bf16 outputs."""
    N, K = w.shape
    K2, M = x_t.shape
    assert K == K2, (w.shape, x_t.shape)

    if M < min_pallas_m:                      # conv4 / final Linear: keep in XLA
        return _fused_xla(w, b, x_t, residual, act, split)

    wb = w.astype(jnp.bfloat16)               # MXU operands bf16, f32 accumulation
    xb = x_t.astype(jnp.bfloat16)
    b2 = b.reshape(N, 1).astype(jnp.float32)

    tm = M if M <= tm_max else tm_max         # collapse to one grid step when possible
    steps = pl.cdiv(M, tm)

    args = [wb, b2, xb]
    in_specs = [
        pl.BlockSpec((N, K), lambda i: (0, 0)),
        pl.BlockSpec((N, 1), lambda i: (0, 0)),
        pl.BlockSpec((K, tm), lambda i: (0, i)),
    ]
    bytes_accessed = wb.size * 2 + b2.size * 4 + xb.size * 2
    if residual is not None:
        rb = residual.astype(jnp.bfloat16)    # residual stream read once -> bf16
        args.append(rb)
        in_specs.append(pl.BlockSpec((N, tm), lambda i: (0, i)))
        bytes_accessed += rb.size * 2

    out_dt = jnp.bfloat16                     # bf16 inter-layer maps: halve writeback
    if split is None:
        out_shape = jax.ShapeDtypeStruct((N, M), out_dt)
        out_specs = pl.BlockSpec((N, tm), lambda i: (0, i))
        trans = N * M if act == "elu" else 0
    else:
        out_shape = (jax.ShapeDtypeStruct((split, M), out_dt),
                     jax.ShapeDtypeStruct((N - split, M), out_dt))
        out_specs = (pl.BlockSpec((split, tm), lambda i: (0, i)),
                     pl.BlockSpec((N - split, tm), lambda i: (0, i)))
        trans = split * M
    bytes_accessed += N * M * 2

    return pl.pallas_call(
        _make_kernel(act, residual is not None, split),
        out_shape=out_shape,
        grid=(steps,),
        in_specs=in_specs,
        out_specs=out_specs,
        compiler_params=pltpu.CompilerParams(
            dimension_semantics=("parallel",),
            vmem_limit_bytes=32 * 1024 * 1024),
        cost_estimate=pl.CostEstimate(
            flops=2 * N * K * M,
            transcendentals=trans,
            bytes_accessed=int(bytes_accessed)),
    )(*args)


# ----------------------------------------------------------------------------
# Glue: transposed im2col (channels-major), BN folding, maxpool, STFT
# ----------------------------------------------------------------------------
def _im2col_t(x, stride):
    """x: (C, B, H, W) canonical layout, 3x3 kernel, pad=1.
    Returns col^T of shape (C*9, B*Ho*Wo) in bf16, plus Ho, Wo."""
    C, B, H, W = x.shape
    x = x.astype(jnp.bfloat16)
    xp = jnp.pad(x, ((0, 0), (0, 0), (1, 1), (1, 1)))
    Ho = (H - 1) // stride + 1
    Wo = (W - 1) // stride + 1
    slabs = []
    for kh in range(3):
        for kw in range(3):
            slabs.append(
                xp[:, :,
                   kh: kh + (Ho - 1) * stride + 1: stride,
                   kw: kw + (Wo - 1) * stride + 1: stride])
    col = jnp.stack(slabs, axis=1)                 # (C, 9, B, Ho, Wo)
    return col.reshape(C * 9, B * Ho * Wo), Ho, Wo


def _fold_bn(conv_p, bn_p, eps=1e-5):
    """Fold inference BatchNorm into the conv weight/bias."""
    s = bn_p["gamma"] / jnp.sqrt(bn_p["var"] + eps)
    w = conv_p["w"].reshape(conv_p["w"].shape[0], -1) * s[:, None]   # (Cout, Cin*9)
    b = (conv_p["b"] - bn_p["mean"]) * s + bn_p["beta"]
    return w, b


def conv_bn(x, conv_p, bn_p, stride, act="none"):
    """Conv2d(3x3, pad=1) + BN (inference) as one lane-dense matmul."""
    B = x.shape[1]
    cout = conv_p["w"].shape[0]
    col, Ho, Wo = _im2col_t(x, stride)
    w, b = _fold_bn(conv_p, bn_p)
    out = fused_matmul(w, b, col, act=act)                 # (Cout, B*Ho*Wo)
    return out.reshape(cout, B, Ho, Wo)


def maxpool2(x):
    C, B, H, W = x.shape
    Hf, Wf = H // 2, W // 2
    x = x[:, :, : Hf * 2, : Wf * 2].reshape(C, B, Hf, 2, Wf, 2)
    return x.max(axis=(3, 5))


def res_block(x, p, stride, pooling):
    """conv1 and downsample share one im2col -> ONE fused matmul with two kernel
    outputs (ELU'd h in bf16, residual in bf16); residual add fused into conv2."""
    B = x.shape[1]
    cout = p["conv1"]["w"].shape[0]

    col, Ho, Wo = _im2col_t(x, stride)
    w1, b1 = _fold_bn(p["conv1"], p["bn1"])
    wd, bd = _fold_bn(p["down_conv"], p["down_bn"])
    w_cat = jnp.concatenate([w1, wd], axis=0)              # (2*Cout, K)
    b_cat = jnp.concatenate([b1, bd], axis=0)
    h_flat, res = fused_matmul(w_cat, b_cat, col, act="elu", split=cout)

    h = h_flat.reshape(cout, B, Ho, Wo)                    # ELU(bn1(conv1(x)))
    col2, _, _ = _im2col_t(h, 1)
    w2, b2 = _fold_bn(p["conv2"], p["bn2"])
    out = fused_matmul(w2, b2, col2, residual=res, act="none")       # (Cout, M)
    out = out.reshape(cout, B, Ho, Wo)
    if pooling:
        out = maxpool2(out)
    # Dropout(0.5): inference mode -> identity
    return out


def stft_features(x):
    """torch_stft equivalent: (B,1,L) -> canonical (2, B, 129, T);
    channels = [log(|re|+eps), log(|im|+eps)], n_fft=256, hop=64,
    center=False, rectangular window, onesided.
    Kept in f32 XLA (tiny; bf16 DFT before log would lose precision)."""
    sig = x[:, 0, :].astype(jnp.float32)
    L = sig.shape[1]
    n_fft, hop = 256, 64
    nfreq = n_fft // 2 + 1
    T = (L - n_fft) // hop + 1

    idx = jnp.arange(T)[:, None] * hop + jnp.arange(n_fft)[None, :]  # (T, 256)
    frames = sig[:, idx]                                             # (B, T, 256)

    n = jnp.arange(n_fft, dtype=jnp.float32)[None, :]
    f = jnp.arange(nfreq, dtype=jnp.float32)[:, None]
    ang = 2.0 * jnp.pi * f * n / n_fft
    re = jnp.einsum("fn,btn->fbt", jnp.cos(ang), frames,
                    precision=lax.Precision.HIGHEST)                 # (129, B, T)
    im = jnp.einsum("fn,btn->fbt", -jnp.sin(ang), frames,
                    precision=lax.Precision.HIGHEST)
    feat = jnp.log(jnp.abs(jnp.stack([re, im], axis=0)) + 1e-8)      # (2, 129, B, T)
    return feat.transpose(0, 2, 1, 3)                                # (2, B, 129, T)


# ----------------------------------------------------------------------------
# Deterministic parameter init (matches PyTorch module shapes)
# ----------------------------------------------------------------------------
def _conv_init(key, cout, cin):
    k1, k2 = jax.random.split(key)
    fan = cin * 9
    w = jax.random.normal(k1, (cout, cin, 3, 3), jnp.float32) / math.sqrt(fan)
    b = jax.random.normal(k2, (cout,), jnp.float32) * 0.01
    return {"w": w, "b": b}


def _bn_init(c):
    return {"gamma": jnp.ones((c,), jnp.float32),
            "beta": jnp.zeros((c,), jnp.float32),
            "mean": jnp.zeros((c,), jnp.float32),
            "var": jnp.ones((c,), jnp.float32)}


def _resblock_init(key, cin, cout):
    k1, k2, k3 = jax.random.split(key, 3)
    return {"conv1": _conv_init(k1, cout, cin), "bn1": _bn_init(cout),
            "conv2": _conv_init(k2, cout, cout), "bn2": _bn_init(cout),
            "down_conv": _conv_init(k3, cout, cin), "down_bn": _bn_init(cout)}


def init_params(key):
    ks = jax.random.split(key, 6)
    return {
        "conv1": {"conv": _conv_init(ks[0], 6, 2), "bn": _bn_init(6)},
        "conv2": _resblock_init(ks[1], 6, 8),
        "conv3": _resblock_init(ks[2], 8, 16),
        "conv4": _resblock_init(ks[3], 16, 32),
        "lin": {"w": jax.random.normal(ks[4], (5, 256), jnp.float32) / math.sqrt(256.0),
                "b": jax.random.normal(ks[5], (5,), jnp.float32) * 0.01},
    }


# ----------------------------------------------------------------------------
# Full forward (ft_loss: frozen encoder -> Linear(256, 5))
# ----------------------------------------------------------------------------
def ft_loss_forward(params, time_dat):
    x = stft_features(time_dat)                                      # (2, B, 129, T)
    x = conv_bn(x, params["conv1"]["conv"], params["conv1"]["bn"], 1, act="elu")
    x = res_block(x, params["conv2"], stride=2, pooling=False)
    x = res_block(x, params["conv3"], stride=2, pooling=True)
    x = res_block(x, params["conv4"], stride=2, pooling=True)        # (32, B, 4, 2)
    B = x.shape[1]
    feats = x.transpose(1, 0, 2, 3).reshape(B, -1).astype(jnp.float32)  # (B, 256)
    out_t = fused_matmul(params["lin"]["w"], params["lin"]["b"],
                         feats.T, act="none")                         # (5, B), XLA path
    return out_t.T                                                    # (B, 5)


if __name__ == "__main__":
    key = jax.random.PRNGKey(0)
    kp, kx = jax.random.split(key)
    params = init_params(kp)
    # B=2, 1 EEG channel, 3750 samples (30 s @ 125 Hz) -> STFT frames T=55,
    # which makes the flattened encoder feature exactly 256 as required by lin.
    time_dat = jax.random.normal(kx, (2, 1, 3750), jnp.float32)

    fwd = jax.jit(ft_loss_forward)
    out = fwd(params, time_dat)
    out = jax.block_until_ready(out)

    assert out.shape == (2, 5), out.shape
    assert bool(jnp.all(jnp.isfinite(out)))
    print("KERNEL_OK")
</pallas_src>

<mosaic_0001>
module attributes {stable_mosaic.version = 11 : i64} {
  func.func @kernel(%arg0: i32, %arg1: memref<6x18xbf16, #tpu.memory_space<vmem>>, %arg2: memref<6x1xf32, #tpu.memory_space<vmem>>, %arg3: memref<18x14190xbf16, #tpu.memory_space<vmem>>, %arg4: memref<6x14190xbf16, #tpu.memory_space<vmem>>) attributes {dimension_semantics = [#tpu.dimension_semantics<parallel>], iteration_bounds = array<i64: 1>, scalar_prefetch = 0 : i64, scratch_operands = 0 : i64, tpu.core_type = #tpu.core_type<tc>, window_params = [{pipeline_mode = #tpu.pipeline_mode<synchronous>, transform_indices = @transform_0, window_bounds = array<i64: 6, 18>}, {pipeline_mode = #tpu.pipeline_mode<synchronous>, transform_indices = @transform_1, window_bounds = array<i64: 6, 1>}, {transform_indices = @transform_2, window_bounds = array<i64: 18, 14190>}, {transform_indices = @transform_3, window_bounds = array<i64: 6, 14190>}]} {
    %c0 = arith.constant 0 : index
    %c0_0 = arith.constant 0 : index
    %0 = vector.load %arg1[%c0, %c0_0] : memref<6x18xbf16, #tpu.memory_space<vmem>>, vector<6x18xbf16>
    %c0_1 = arith.constant 0 : index
    %c0_2 = arith.constant 0 : index
    %1 = vector.load %arg3[%c0_1, %c0_2] : memref<18x14190xbf16, #tpu.memory_space<vmem>>, vector<18x14190xbf16>
    %cst = arith.constant dense<0.000000e+00> : vector<6x14190xf32>
    %2 = tpu.matmul %0, %1, %cst {dimension_numbers = #tpu.dot_dimension_numbers<[1], [0], [0], [1], [0, 0, 1, 1], [], []>} : vector<6x18xbf16>, vector<18x14190xbf16>, vector<6x14190xf32> -> vector<6x14190xf32>
    %c0_3 = arith.constant 0 : index
    %c0_4 = arith.constant 0 : index
    %3 = vector.load %arg2[%c0_3, %c0_4] : memref<6x1xf32, #tpu.memory_space<vmem>>, vector<6x1xf32>
    %4 = vector.broadcast %3 : vector<6x1xf32> to vector<6x14190xf32>
    %5 = arith.addf %2, %4 : vector<6x14190xf32>
    %6 = arith.truncf %5 : vector<6x14190xf32> to vector<6x14190xbf16>
    %cst_5 = arith.constant 0.000000e+00 : bf16
    %7 = vector.broadcast %cst_5 : bf16 to vector<6x14190xbf16>
    %8 = arith.cmpf ogt, %6, %7 : vector<6x14190xbf16>
    %cst_6 = arith.constant 0.000000e+00 : bf16
    %9 = vector.broadcast %cst_6 : bf16 to vector<6x14190xbf16>
    %10 = arith.minimumf %6, %9 : vector<6x14190xbf16>
    %11 = math.exp %10 : vector<6x14190xbf16>
    %cst_7 = arith.constant 1.000000e+00 : bf16
    %12 = vector.broadcast %cst_7 : bf16 to vector<6x14190xbf16>
    %13 = arith.subf %11, %12 : vector<6x14190xbf16>
    %14 = arith.select %8, %6, %13 : vector<6x14190xi1>, vector<6x14190xbf16>
    %c0_8 = arith.constant 0 : index
    %c0_9 = arith.constant 0 : index
    %15 = vector.load %arg4[%c0_8, %c0_9] : memref<6x14190xbf16, #tpu.memory_space<vmem>>, vector<6x14190xbf16>
    tpu.vector_store %arg4[%c0_8, %c0_9], %14 {strides = array<i32>} : memref<6x14190xbf16, #tpu.memory_space<vmem>>, vector<6x14190xbf16>,
    return
  }
  func.func @transform_0(%arg0: i32) -> (i32, i32) {
    %c0_i32 = arith.constant 0 : i32
    %c0_i32_0 = arith.constant 0 : i32
    %c0_i32_1 = arith.constant 0 : i32
    return %c0_i32, %c0_i32_0 : i32, i32
  }
  func.func @transform_1(%arg0: i32) -> (i32, i32) {
    %c0_i32 = arith.constant 0 : i32
    %c0_i32_0 = arith.constant 0 : i32
    %c0_i32_1 = arith.constant 0 : i32
    return %c0_i32, %c0_i32_0 : i32, i32
  }
  func.func @transform_2(%arg0: i32) -> (i32, i32) {
    %c0_i32 = arith.constant 0 : i32
    %c0_i32_0 = arith.constant 0 : i32
    return %c0_i32, %arg0 : i32, i32
  }
  func.func @transform_3(%arg0: i32) -> (i32, i32) {
    %c0_i32 = arith.constant 0 : i32
    %c0_i32_0 = arith.constant 0 : i32
    return %c0_i32, %arg0 : i32, i32
  }
}

module attributes {stable_mosaic.version = 11 : i64} {
  func.func @kernel(%arg0: i32, %arg1: memref<16x54xbf16, #tpu.memory_space<vmem>>, %arg2: memref<16x1xf32, #tpu.memory_space<vmem>>, %arg3: memref<54x3640xbf16, #tpu.memory_space<vmem>>, %arg4: memref<8x3640xbf16, #tpu.memory_space<vmem>>, %arg5: memref<8x3640xbf16, #tpu.memory_space<vmem>>) attributes {dimension_semantics = [#tpu.dimension_semantics<parallel>], iteration_bounds = array<i64: 1>, scalar_prefetch = 0 : i64, scratch_operands = 0 : i64, tpu.core_type = #tpu.core_type<tc>, window_params = [{pipeline_mode = #tpu.pipeline_mode<synchronous>, transform_indices = @transform_0, window_bounds = array<i64: 16, 54>}, {pipeline_mode = #tpu.pipeline_mode<synchronous>, transform_indices = @transform_1, window_bounds = array<i64: 16, 1>}, {transform_indices = @transform_2, window_bounds = array<i64: 54, 3640>}, {transform_indices = @transform_3, window_bounds = array<i64: 8, 3640>}, {transform_indices = @transform_4, window_bounds = array<i64: 8, 3640>}]} {
    %c0 = arith.constant 0 : index
    %c0_0 = arith.constant 0 : index
    %0 = vector.load %arg1[%c0, %c0_0] : memref<16x54xbf16, #tpu.memory_space<vmem>>, vector<16x54xbf16>
    %c0_1 = arith.constant 0 : index
    %c0_2 = arith.constant 0 : index
    %1 = vector.load %arg3[%c0_1, %c0_2] : memref<54x3640xbf16, #tpu.memory_space<vmem>>, vector<54x3640xbf16>
    %cst = arith.constant dense<0.000000e+00> : vector<16x3640xf32>
    %2 = tpu.matmul %0, %1, %cst {dimension_numbers = #tpu.dot_dimension_numbers<[1], [0], [0], [1], [0, 0, 1, 1], [], []>} : vector<16x54xbf16>, vector<54x3640xbf16>, vector<16x3640xf32> -> vector<16x3640xf32>
    %c0_3 = arith.constant 0 : index
    %c0_4 = arith.constant 0 : index
    %3 = vector.load %arg2[%c0_3, %c0_4] : memref<16x1xf32, #tpu.memory_space<vmem>>, vector<16x1xf32>
    %4 = vector.broadcast %3 : vector<16x1xf32> to vector<16x3640xf32>
    %5 = arith.addf %2, %4 : vector<16x3640xf32>
    %6 = vector.extract_strided_slice %5 {offsets = [0, 0], sizes = [8, 3640], strides = [1, 1]} : vector<16x3640xf32> to vector<8x3640xf32>
    %7 = arith.truncf %6 : vector<8x3640xf32> to vector<8x3640xbf16>
    %cst_5 = arith.constant 0.000000e+00 : bf16
    %8 = vector.broadcast %cst_5 : bf16 to vector<8x3640xbf16>
    %9 = arith.cmpf ogt, %7, %8 : vector<8x3640xbf16>
    %cst_6 = arith.constant 0.000000e+00 : bf16
    %10 = vector.broadcast %cst_6 : bf16 to vector<8x3640xbf16>
    %11 = arith.minimumf %7, %10 : vector<8x3640xbf16>
    %12 = math.exp %11 : vector<8x3640xbf16>
    %cst_7 = arith.constant 1.000000e+00 : bf16
    %13 = vector.broadcast %cst_7 : bf16 to vector<8x3640xbf16>
    %14 = arith.subf %12, %13 : vector<8x3640xbf16>
    %15 = arith.select %9, %7, %14 : vector<8x3640xi1>, vector<8x3640xbf16>
    %c0_8 = arith.constant 0 : index
    %c0_9 = arith.constant 0 : index
    %16 = vector.load %arg4[%c0_8, %c0_9] : memref<8x3640xbf16, #tpu.memory_space<vmem>>, vector<8x3640xbf16>
    tpu.vector_store %arg4[%c0_8, %c0_9], %15 {strides = array<i32>} : memref<8x3640xbf16, #tpu.memory_space<vmem>>, vector<8x3640xbf16>,
    %17 = vector.extract_strided_slice %5 {offsets = [8, 0], sizes = [8, 3640], strides = [1, 1]} : vector<16x3640xf32> to vector<8x3640xf32>
    %18 = arith.truncf %17 : vector<8x3640xf32> to vector<8x3640xbf16>
    %c0_10 = arith.constant 0 : index
    %c0_11 = arith.constant 0 : index
    %19 = vector.load %arg5[%c0_10, %c0_11] : memref<8x3640xbf16, #tpu.memory_space<vmem>>, vector<8x3640xbf16>
    tpu.vector_store %arg5[%c0_10, %c0_11], %18 {strides = array<i32>} : memref<8x3640xbf16, #tpu.memory_space<vmem>>, vector<8x3640xbf16>,
    return
  }
  func.func @transform_0(%arg0: i32) -> (i32, i32) {
    %c0_i32 = arith.constant 0 : i32
    %c0_i32_0 = arith.constant 0 : i32
    %c0_i32_1 = arith.constant 0 : i32
    return %c0_i32, %c0_i32_0 : i32, i32
  }
  func.func @transform_1(%arg0: i32) -> (i32, i32) {
    %c0_i32 = arith.constant 0 : i32
    %c0_i32_0 = arith.constant 0 : i32
    %c0_i32_1 = arith.constant 0 : i32
    return %c0_i32, %c0_i32_0 : i32, i32
  }
  func.func @transform_2(%arg0: i32) -> (i32, i32) {
    %c0_i32 = arith.constant 0 : i32
    %c0_i32_0 = arith.constant 0 : i32
    return %c0_i32, %arg0 : i32, i32
  }
  func.func @transform_3(%arg0: i32) -> (i32, i32) {
    %c0_i32 = arith.constant 0 : i32
    %c0_i32_0 = arith.constant 0 : i32
    return %c0_i32, %arg0 : i32, i32
  }
  func.func @transform_4(%arg0: i32) -> (i32, i32) {
    %c0_i32 = arith.constant 0 : i32
    %c0_i32_0 = arith.constant 0 : i32
    return %c0_i32, %arg0 : i32, i32
  }
}

module attributes {stable_mosaic.version = 11 : i64} {
  func.func @kernel(%arg0: i32, %arg1: memref<8x72xbf16, #tpu.memory_space<vmem>>, %arg2: memref<8x1xf32, #tpu.memory_space<vmem>>, %arg3: memref<72x3640xbf16, #tpu.memory_space<vmem>>, %arg4: memref<8x3640xbf16, #tpu.memory_space<vmem>>, %arg5: memref<8x3640xbf16, #tpu.memory_space<vmem>>) attributes {dimension_semantics = [#tpu.dimension_semantics<parallel>], iteration_bounds = array<i64: 1>, scalar_prefetch = 0 : i64, scratch_operands = 0 : i64, tpu.core_type = #tpu.core_type<tc>, window_params = [{pipeline_mode = #tpu.pipeline_mode<synchronous>, transform_indices = @transform_0, window_bounds = array<i64: 8, 72>}, {pipeline_mode = #tpu.pipeline_mode<synchronous>, transform_indices = @transform_1, window_bounds = array<i64: 8, 1>}, {transform_indices = @transform_2, window_bounds = array<i64: 72, 3640>}, {transform_indices = @transform_3, window_bounds = array<i64: 8, 3640>}, {transform_indices = @transform_4, window_bounds = array<i64: 8, 3640>}]} {
    %c0 = arith.constant 0 : index
    %c0_0 = arith.constant 0 : index
    %0 = vector.load %arg1[%c0, %c0_0] : memref<8x72xbf16, #tpu.memory_space<vmem>>, vector<8x72xbf16>
    %c0_1 = arith.constant 0 : index
    %c0_2 = arith.constant 0 : index
    %1 = vector.load %arg3[%c0_1, %c0_2] : memref<72x3640xbf16, #tpu.memory_space<vmem>>, vector<72x3640xbf16>
    %cst = arith.constant dense<0.000000e+00> : vector<8x3640xf32>
    %2 = tpu.matmul %0, %1, %cst {dimension_numbers = #tpu.dot_dimension_numbers<[1], [0], [0], [1], [0, 0, 1, 1], [], []>} : vector<8x72xbf16>, vector<72x3640xbf16>, vector<8x3640xf32> -> vector<8x3640xf32>
    %c0_3 = arith.constant 0 : index
    %c0_4 = arith.constant 0 : index
    %3 = vector.load %arg2[%c0_3, %c0_4] : memref<8x1xf32, #tpu.memory_space<vmem>>, vector<8x1xf32>
    %4 = vector.broadcast %3 : vector<8x1xf32> to vector<8x3640xf32>
    %5 = arith.addf %2, %4 : vector<8x3640xf32>
    %c0_5 = arith.constant 0 : index
    %c0_6 = arith.constant 0 : index
    %6 = vector.load %arg4[%c0_5, %c0_6] : memref<8x3640xbf16, #tpu.memory_space<vmem>>, vector<8x3640xbf16>
    %7 = arith.extf %6 : vector<8x3640xbf16> to vector<8x3640xf32>
    %8 = arith.addf %5, %7 : vector<8x3640xf32>
    %9 = arith.truncf %8 : vector<8x3640xf32> to vector<8x3640xbf16>
    %c0_7 = arith.constant 0 : index
    %c0_8 = arith.constant 0 : index
    %10 = vector.load %arg5[%c0_7, %c0_8] : memref<8x3640xbf16, #tpu.memory_space<vmem>>, vector<8x3640xbf16>
    tpu.vector_store %arg5[%c0_7, %c0_8], %9 {strides = array<i32>} : memref<8x3640xbf16, #tpu.memory_space<vmem>>, vector<8x3640xbf16>,
    return
  }
  func.func @transform_0(%arg0: i32) -> (i32, i32) {
    %c0_i32 = arith.constant 0 : i32
    %c0_i32_0 = arith.constant 0 : i32
    %c0_i32_1 = arith.constant 0 : i32
    return %c0_i32, %c0_i32_0 : i32, i32
  }
  func.func @transform_1(%arg0: i32) -> (i32, i32) {
    %c0_i32 = arith.constant 0 : i32
    %c0_i32_0 = arith.constant 0 : i32
    %c0_i32_1 = arith.constant 0 : i32
    return %c0_i32, %c0_i32_0 : i32, i32
  }
  func.func @transform_2(%arg0: i32) -> (i32, i32) {
    %c0_i32 = arith.constant 0 : i32
    %c0_i32_0 = arith.constant 0 : i32
    return %c0_i32, %arg0 : i32, i32
  }
  func.func @transform_3(%arg0: i32) -> (i32, i32) {
    %c0_i32 = arith.constant 0 : i32
    %c0_i32_0 = arith.constant 0 : i32
    return %c0_i32, %arg0 : i32, i32
  }
  func.func @transform_4(%arg0: i32) -> (i32, i32) {
    %c0_i32 = arith.constant 0 : i32
    %c0_i32_0 = arith.constant 0 : i32
    return %c0_i32, %arg0 : i32, i32
  }
}

module attributes {stable_mosaic.version = 11 : i64} {
  func.func @kernel(%arg0: i32, %arg1: memref<32x72xbf16, #tpu.memory_space<vmem>>, %arg2: memref<32x1xf32, #tpu.memory_space<vmem>>, %arg3: memref<72x924xbf16, #tpu.memory_space<vmem>>, %arg4: memref<16x924xbf16, #tpu.memory_space<vmem>>, %arg5: memref<16x924xbf16, #tpu.memory_space<vmem>>) attributes {dimension_semantics = [#tpu.dimension_semantics<parallel>], iteration_bounds = array<i64: 1>, scalar_prefetch = 0 : i64, scratch_operands = 0 : i64, tpu.core_type = #tpu.core_type<tc>, window_params = [{pipeline_mode = #tpu.pipeline_mode<synchronous>, transform_indices = @transform_0, window_bounds = array<i64: 32, 72>}, {pipeline_mode = #tpu.pipeline_mode<synchronous>, transform_indices = @transform_1, window_bounds = array<i64: 32, 1>}, {transform_indices = @transform_2, window_bounds = array<i64: 72, 924>}, {transform_indices = @transform_3, window_bounds = array<i64: 16, 924>}, {transform_indices = @transform_4, window_bounds = array<i64: 16, 924>}]} {
    %c0 = arith.constant 0 : index
    %c0_0 = arith.constant 0 : index
    %0 = vector.load %arg1[%c0, %c0_0] : memref<32x72xbf16, #tpu.memory_space<vmem>>, vector<32x72xbf16>
    %c0_1 = arith.constant 0 : index
    %c0_2 = arith.constant 0 : index
    %1 = vector.load %arg3[%c0_1, %c0_2] : memref<72x924xbf16, #tpu.memory_space<vmem>>, vector<72x924xbf16>
    %cst = arith.constant dense<0.000000e+00> : vector<32x924xf32>
    %2 = tpu.matmul %0, %1, %cst {dimension_numbers = #tpu.dot_dimension_numbers<[1], [0], [0], [1], [0, 0, 1, 1], [], []>} : vector<32x72xbf16>, vector<72x924xbf16>, vector<32x924xf32> -> vector<32x924xf32>
    %c0_3 = arith.constant 0 : index
    %c0_4 = arith.constant 0 : index
    %3 = vector.load %arg2[%c0_3, %c0_4] : memref<32x1xf32, #tpu.memory_space<vmem>>, vector<32x1xf32>
    %4 = vector.broadcast %3 : vector<32x1xf32> to vector<32x924xf32>
    %5 = arith.addf %2, %4 : vector<32x924xf32>
    %6 = vector.extract_strided_slice %5 {offsets = [0, 0], sizes = [16, 924], strides = [1, 1]} : vector<32x924xf32> to vector<16x924xf32>
    %7 = arith.truncf %6 : vector<16x924xf32> to vector<16x924xbf16>
    %cst_5 = arith.constant 0.000000e+00 : bf16
    %8 = vector.broadcast %cst_5 : bf16 to vector<16x924xbf16>
    %9 = arith.cmpf ogt, %7, %8 : vector<16x924xbf16>
    %cst_6 = arith.constant 0.000000e+00 : bf16
    %10 = vector.broadcast %cst_6 : bf16 to vector<16x924xbf16>
    %11 = arith.minimumf %7, %10 : vector<16x924xbf16>
    %12 = math.exp %11 : vector<16x924xbf16>
    %cst_7 = arith.constant 1.000000e+00 : bf16
    %13 = vector.broadcast %cst_7 : bf16 to vector<16x924xbf16>
    %14 = arith.subf %12, %13 : vector<16x924xbf16>
    %15 = arith.select %9, %7, %14 : vector<16x924xi1>, vector<16x924xbf16>
    %c0_8 = arith.constant 0 : index
    %c0_9 = arith.constant 0 : index
    %16 = vector.load %arg4[%c0_8, %c0_9] : memref<16x924xbf16, #tpu.memory_space<vmem>>, vector<16x924xbf16>
    tpu.vector_store %arg4[%c0_8, %c0_9], %15 {strides = array<i32>} : memref<16x924xbf16, #tpu.memory_space<vmem>>, vector<16x924xbf16>,
    %17 = vector.extract_strided_slice %5 {offsets = [16, 0], sizes = [16, 924], strides = [1, 1]} : vector<32x924xf32> to vector<16x924xf32>
    %18 = arith.truncf %17 : vector<16x924xf32> to vector<16x924xbf16>
    %c0_10 = arith.constant 0 : index
    %c0_11 = arith.constant 0 : index
    %19 = vector.load %arg5[%c0_10, %c0_11] : memref<16x924xbf16, #tpu.memory_space<vmem>>, vector<16x924xbf16>
    tpu.vector_store %arg5[%c0_10, %c0_11], %18 {strides = array<i32>} : memref<16x924xbf16, #tpu.memory_space<vmem>>, vector<16x924xbf16>,
    return
  }
  func.func @transform_0(%arg0: i32) -> (i32, i32) {
    %c0_i32 = arith.constant 0 : i32
    %c0_i32_0 = arith.constant 0 : i32
    %c0_i32_1 = arith.constant 0 : i32
    return %c0_i32, %c0_i32_0 : i32, i32
  }
  func.func @transform_1(%arg0: i32) -> (i32, i32) {
    %c0_i32 = arith.constant 0 : i32
    %c0_i32_0 = arith.constant 0 : i32
    %c0_i32_1 = arith.constant 0 : i32
    return %c0_i32, %c0_i32_0 : i32, i32
  }
  func.func @transform_2(%arg0: i32) -> (i32, i32) {
    %c0_i32 = arith.constant 0 : i32
    %c0_i32_0 = arith.constant 0 : i32
    return %c0_i32, %arg0 : i32, i32
  }
  func.func @transform_3(%arg0: i32) -> (i32, i32) {
    %c0_i32 = arith.constant 0 : i32
    %c0_i32_0 = arith.constant 0 : i32
    return %c0_i32, %arg0 : i32, i32
  }
  func.func @transform_4(%arg0: i32) -> (i32, i32) {
    %c0_i32 = arith.constant 0 : i32
    %c0_i32_0 = arith.constant 0 : i32
    return %c0_i32, %arg0 : i32, i32
  }
}

module attributes {stable_mosaic.version = 11 : i64} {
  func.func @kernel(%arg0: i32, %arg1: memref<16x144xbf16, #tpu.memory_space<vmem>>, %arg2: memref<16x1xf32, #tpu.memory_space<vmem>>, %arg3: memref<144x924xbf16, #tpu.memory_space<vmem>>, %arg4: memref<16x924xbf16, #tpu.memory_space<vmem>>, %arg5: memref<16x924xbf16, #tpu.memory_space<vmem>>) attributes {dimension_semantics = [#tpu.dimension_semantics<parallel>], iteration_bounds = array<i64: 1>, scalar_prefetch = 0 : i64, scratch_operands = 0 : i64, tpu.core_type = #tpu.core_type<tc>, window_params = [{pipeline_mode = #tpu.pipeline_mode<synchronous>, transform_indices = @transform_0, window_bounds = array<i64: 16, 144>}, {pipeline_mode = #tpu.pipeline_mode<synchronous>, transform_indices = @transform_1, window_bounds = array<i64: 16, 1>}, {transform_indices = @transform_2, window_bounds = array<i64: 144, 924>}, {transform_indices = @transform_3, window_bounds = array<i64: 16, 924>}, {transform_indices = @transform_4, window_bounds = array<i64: 16, 924>}]} {
    %c0 = arith.constant 0 : index
    %c0_0 = arith.constant 0 : index
    %0 = vector.load %arg1[%c0, %c0_0] : memref<16x144xbf16, #tpu.memory_space<vmem>>, vector<16x144xbf16>
    %c0_1 = arith.constant 0 : index
    %c0_2 = arith.constant 0 : index
    %1 = vector.load %arg3[%c0_1, %c0_2] : memref<144x924xbf16, #tpu.memory_space<vmem>>, vector<144x924xbf16>
    %cst = arith.constant dense<0.000000e+00> : vector<16x924xf32>
    %2 = tpu.matmul %0, %1, %cst {dimension_numbers = #tpu.dot_dimension_numbers<[1], [0], [0], [1], [0, 0, 1, 1], [], []>} : vector<16x144xbf16>, vector<144x924xbf16>, vector<16x924xf32> -> vector<16x924xf32>
    %c0_3 = arith.constant 0 : index
    %c0_4 = arith.constant 0 : index
    %3 = vector.load %arg2[%c0_3, %c0_4] : memref<16x1xf32, #tpu.memory_space<vmem>>, vector<16x1xf32>
    %4 = vector.broadcast %3 : vector<16x1xf32> to vector<16x924xf32>
    %5 = arith.addf %2, %4 : vector<16x924xf32>
    %c0_5 = arith.constant 0 : index
    %c0_6 = arith.constant 0 : index
    %6 = vector.load %arg4[%c0_5, %c0_6] : memref<16x924xbf16, #tpu.memory_space<vmem>>, vector<16x924xbf16>
    %7 = arith.extf %6 : vector<16x924xbf16> to vector<16x924xf32>
    %8 = arith.addf %5, %7 : vector<16x924xf32>
    %9 = arith.truncf %8 : vector<16x924xf32> to vector<16x924xbf16>
    %c0_7 = arith.constant 0 : index
    %c0_8 = arith.constant 0 : index
    %10 = vector.load %arg5[%c0_7, %c0_8] : memref<16x924xbf16, #tpu.memory_space<vmem>>, vector<16x924xbf16>
    tpu.vector_store %arg5[%c0_7, %c0_8], %9 {strides = array<i32>} : memref<16x924xbf16, #tpu.memory_space<vmem>>, vector<16x924xbf16>,
    return
  }
  func.func @transform_0(%arg0: i32) -> (i32, i32) {
    %c0_i32 = arith.constant 0 : i32
    %c0_i32_0 = arith.constant 0 : i32
    %c0_i32_1 = arith.constant 0 : i32
    return %c0_i32, %c0_i32_0 : i32, i32
  }
  func.func @transform_1(%arg0: i32) -> (i32, i32) {
    %c0_i32 = arith.constant 0 : i32
    %c0_i32_0 = arith.constant 0 : i32
    %c0_i32_1 = arith.constant 0 : i32
    return %c0_i32, %c0_i32_0 : i32, i32
  }
  func.func @transform_2(%arg0: i32) -> (i32, i32) {
    %c0_i32 = arith.constant 0 : i32
    %c0_i32_0 = arith.constant 0 : i32
    return %c0_i32, %arg0 : i32, i32
  }
  func.func @transform_3(%arg0: i32) -> (i32, i32) {
    %c0_i32 = arith.constant 0 : i32
    %c0_i32_0 = arith.constant 0 : i32
    return %c0_i32, %arg0 : i32, i32
  }
  func.func @transform_4(%arg0: i32) -> (i32, i32) {
    %c0_i32 = arith.constant 0 : i32
    %c0_i32_0 = arith.constant 0 : i32
    return %c0_i32, %arg0 : i32, i32
  }
}

</mosaic_0001>

<llo_original>
// kernel: ft_loss_forward.5
$region0: #{ft_loss_forward.5}
  #allocation0 [shape = 'u32[]', space=smem, size = 0x4, offset = 0x4, fixed_abs, tag = 'smem constant byte address 0x4 - core index']
  #allocation1 [shape = 'u32[72,128]{1,0:T(1,128)}', space=vmem, size = 0x9000, scoped, tag = 'internal scratch']
  %s0 = inlined_call_operand.vmem [shape: bf16[6,18], index: 0, kind: input, shape index: {}]
  %s1 = inlined_call_operand.vmem [shape: f32[6,1], index: 1, kind: input, shape index: {}]
  %s2 = inlined_call_operand.vmem [shape: bf16[18,14190], index: 2, kind: input, shape index: {}]
  %s3 = inlined_call_operand.vmem [shape: bf16[6,14190], index: 3, kind: output, shape index: {}]
  %s4 = sld [smem:[#allocation0]]
  $region22: #{ft_loss_forward.5} parent=0
    _
  %s6 = ssub.s32 1, %s4
  %s7 = scalar_select 0, %s6, %s4
  // Predicated region
  $region2: #{ft_loss_forward.5} parent=0 // pred_check
    _
  $region3: #{ft_loss_forward.5} parent=0 // pred_check_branch
    %9 = sbr.rel (0) target = $region5
  $region4: #{ft_loss_forward.5} parent=0 // pred_region
    _
  $region5: #{ft_loss_forward.5} parent=0 // pred_fallthru
    _
  // Predicated region
  $region6: #{ft_loss_forward.5} parent=0 // pred_check
    _
  $region7: #{ft_loss_forward.5} parent=0 // pred_check_branch
    %11 = sbr.rel (0) target = $region9
  $region8: #{ft_loss_forward.5} parent=0 // pred_region
    _
  $region9: #{ft_loss_forward.5} parent=0 // pred_fallthru
    _
  // Predicated region
  $region10: #{ft_loss_forward.5} parent=0 // pred_check
    _
  $region11: #{ft_loss_forward.5} parent=0 // pred_check_branch
    %13 = sbr.rel (0) target = $region13
  $region12: #{ft_loss_forward.5} parent=0 // pred_region
    _
  $region13: #{ft_loss_forward.5} parent=0 // pred_fallthru
    _
  %v15 = vld [vmem:[%s0] sm:$0x7]
  %v16 = vld [vmem:[%s2] sm:$0xff]
  %v17 = vld [vmem:[%s2 + $0x8] sm:$0xff]
  %v18 = vld [vmem:[%s2 + $0x10] sm:$0xff]
  %v19 = vld [vmem:[%s2 + $0x18] sm:$0xff]
  %v20 = vld [vmem:[%s2 + $0x20] sm:$0xff]
  %v21 = vld [vmem:[%s2 + $0x28] sm:$0xff]
  %v22 = vld [vmem:[%s2 + $0x30] sm:$0xff]
  %v23 = vld [vmem:[%s2 + $0x38] sm:$0xff]
  %v24 = vld [vmem:[%s2 + $0x40] sm:$0xff]
  %v25 = vld [vmem:[%s2 + $0x48] sm:$0xff]
  %v26 = vld [vmem:[%s2 + $0x50] sm:$0xff]
  %v27 = vld [vmem:[%s2 + $0x58] sm:$0xff]
  %v28 = vld [vmem:[%s2 + $0x60] sm:$0xff]
  %v29 = vld [vmem:[%s2 + $0x68] sm:$0xff]
  %v30 = vld [vmem:[%s2 + $0x70] sm:$0xff]
  %v31 = vld [vmem:[%s2 + $0x78] sm:$0xff]
  %v32 = vld [vmem:[%s2 + $0x80] sm:$0xff]
  %v33 = vld [vmem:[%s2 + $0x88] sm:$0xff]
  %v34 = vld [vmem:[%s2 + $0x90] sm:$0xff]
  %v35 = vld [vmem:[%s2 + $0x98] sm:$0xff]
  %v36 = vld [vmem:[%s2 + $0xa0] sm:$0xff]
  %v37 = vld [vmem:[%s2 + $0xa8] sm:$0xff]
  %v38 = vld [vmem:[%s2 + $0xb0] sm:$0xff]
  %v39 = vld [vmem:[%s2 + $0xb8] sm:$0xff]
  %v40 = vld [vmem:[%s2 + $0xc0] sm:$0xff]
  %v41 = vld [vmem:[%s2 + $0xc8] sm:$0xff]
  %v42 = vld [vmem:[%s2 + $0xd0] sm:$0xff]
  %v43 = vld [vmem:[%s2 + $0xd8] sm:$0xff]
  %v44 = vld [vmem:[%s2 + $0xe0] sm:$0xff]
  %v45 = vld [vmem:[%s2 + $0xe8] sm:$0xff]
  %v46 = vld [vmem:[%s2 + $0xf0] sm:$0xff]
  %v47 = vld [vmem:[%s2 + $0xf8] sm:$0xff]
  %v48 = vld [vmem:[%s2 + $0x100] sm:$0xff]
  %v49 = vld [vmem:[%s2 + $0x108] sm:$0xff]
  %v50 = vld [vmem:[%s2 + $0x110] sm:$0xff]
  %v51 = vld [vmem:[%s2 + $0x118] sm:$0xff]
  %v52 = vld [vmem:[%s2 + $0x120] sm:$0xff]
  %v53 = vld [vmem:[%s2 + $0x128] sm:$0xff]
  %v54 = vld [vmem:[%s2 + $0x130] sm:$0xff]
  %v55 = vld [vmem:[%s2 + $0x138] sm:$0xff]
  %v56 = vld [vmem:[%s2 + $0x140] sm:$0xff]
  %v57 = vld [vmem:[%s2 + $0x148] sm:$0xff]
  %v58 = vld [vmem:[%s2 + $0x150] sm:$0xff]
  %v59 = vld [vmem:[%s2 + $0x158] sm:$0xff]
  %v60 = vld [vmem:[%s2 + $0x160] sm:$0xff]
  %v61 = vld [vmem:[%s2 + $0x168] sm:$0xff]
  %v62 = vld [vmem:[%s2 + $0x170] sm:$0xff]
  %v63 = vld [vmem:[%s2 + $0x178] sm:$0xff]
  %v64 = vld [vmem:[%s2 + $0x180] sm:$0xff]
  %v65 = vld [vmem:[%s2 + $0x188] sm:$0xff]
  %v66 = vld [vmem:[%s2 + $0x190] sm:$0xff]
  %v67 = vld [vmem:[%s2 + $0x198] sm:$0xff]
  %v68 = vld [vmem:[%s2 + $0x1a0] sm:$0xff]
  %v69 = vld [vmem:[%s2 + $0x1a8] sm:$0xff]
  %v70 = vld [vmem:[%s2 + $0x1b0] sm:$0xff]
  %v71 = vld [vmem:[%s2 + $0x1b8] sm:$0xf]
  %v72 = vld [vmem:[%s2 + $0x1bc] sm:$0xff]
  %v73 = vld [vmem:[%s2 + $0x1c4] sm:$0xff]
  %v74 = vld [vmem:[%s2 + $0x1cc] sm:$0xff]
  %v75 = vld [vmem:[%s2 + $0x1d4] sm:$0xff]
  %v76 = vld [vmem:[%s2 + $0x1dc] sm:$0xff]
  %v77 = vld [vmem:[%s2 + $0x1e4] sm:$0xff]
  %v78 = vld [vmem:[%s2 + $0x1ec] sm:$0xff]
  %v79 = vld [vmem:[%s2 + $0x1f4] sm:$0xff]
  %v80 = vld [vmem:[%s2 + $0x1fc] sm:$0xff]
  %v81 = vld [vmem:[%s2 + $0x204] sm:$0xff]
  %v82 = vld [vmem:[%s2 + $0x20c] sm:$0xff]
  %v83 = vld [vmem:[%s2 + $0x214] sm:$0xff]
  %v84 = vld [vmem:[%s2 + $0x21c] sm:$0xff]
  %v85 = vld [vmem:[%s2 + $0x224] sm:$0xff]
  %v86 = vld [vmem:[%s2 + $0x22c] sm:$0xff]
  %v87 = vld [vmem:[%s2 + $0x234] sm:$0xff]
  %v88 = vld [vmem:[%s2 + $0x23c] sm:$0xff]
  %v89 = vld [vmem:[%s2 + $0x244] sm:$0xff]
  %v90 = vld [vmem:[%s2 + $0x24c] sm:$0xff]
  %v91 = vld [vmem:[%s2 + $0x254] sm:$0xff]
  %v92 = vld [vmem:[%s2 + $0x25c] sm:$0xff]
  %v93 = vld [vmem:[%s2 + $0x264] sm:$0xff]
  %v94 = vld [vmem:[%s2 + $0x26c] sm:$0xff]
  %v95 = vld [vmem:[%s2 + $0x274] sm:$0xff]
  %v96 = vld [vmem:[%s2 + $0x27c] sm:$0xff]
  %v97 = vld [vmem:[%s2 + $0x284] sm:$0xff]
  %v98 = vld [vmem:[%s2 + $0x28c] sm:$0xff]
  %v99 = vld [vmem:[%s2 + $0x294] sm:$0xff]
  %v100 = vld [vmem:[%s2 + $0x29c] sm:$0xff]
  %v101 = vld [vmem:[%s2 + $0x2a4] sm:$0xff]
  %v102 = vld [vmem:[%s2 + $0x2ac] sm:$0xff]
  %v103 = vld [vmem:[%s2 + $0x2b4] sm:$0xff]
  %v104 = vld [vmem:[%s2 + $0x2bc] sm:$0xff]
  %v105 = vld [vmem:[%s2 + $0x2c4] sm:$0xff]
  %v106 = vld [vmem:[%s2 + $0x2cc] sm:$0xff]
  %v107 = vld [vmem:[%s2 + $0x2d4] sm:$0xff]
  %v108 = vld [vmem:[%s2 + $0x2dc] sm:$0xff]
  %v109 = vld [vmem:[%s2 + $0x2e4] sm:$0xff]
  %v110 = vld [vmem:[%s2 + $0x2ec] sm:$0xff]
  %v111 = vld [vmem:[%s2 + $0x2f4] sm:$0xff]
  %v112 = vld [vmem:[%s2 + $0x2fc] sm:$0xff]
  %v113 = vld [vmem:[%s2 + $0x304] sm:$0xff]
  %v114 = vld [vmem:[%s2 + $0x30c] sm:$0xff]
  %v115 = vld [vmem:[%s2 + $0x314] sm:$0xff]
  %v116 = vld [vmem:[%s2 + $0x31c] sm:$0xff]
  %v117 = vld [vmem:[%s2 + $0x324] sm:$0xff]
  %v118 = vld [vmem:[%s2 + $0x32c] sm:$0xff]
  %v119 = vld [vmem:[%s2 + $0x334] sm:$0xff]
  %v120 = vld [vmem:[%s2 + $0x33c] sm:$0xff]
  %v121 = vld [vmem:[%s2 + $0x344] sm:$0xff]
  %v122 = vld [vmem:[%s2 + $0x34c] sm:$0xff]
  %v123 = vld [vmem:[%s2 + $0x354] sm:$0xff]
  %v124 = vld [vmem:[%s2 + $0x35c] sm:$0xff]
  %v125 = vld [vmem:[%s2 + $0x364] sm:$0xff]
  %v126 = vld [vmem:[%s2 + $0x36c] sm:$0xff]
  %v127 = vld [vmem:[%s2 + $0x374] sm:$0xf]
  %v128 = vld [vmem:[%s2 + $0x378] sm:$0x11]
  %v129 = vld [vmem:[%s2 + $0x380] sm:$0x11]
  %v130 = vld [vmem:[%s2 + $0x388] sm:$0x11]
  %v131 = vld [vmem:[%s2 + $0x390] sm:$0x11]
  %v132 = vld [vmem:[%s2 + $0x398] sm:$0x11]
  %v133 = vld [vmem:[%s2 + $0x3a0] sm:$0x11]
  %v134 = vld [vmem:[%s2 + $0x3a8] sm:$0x11]
  %v135 = vld [vmem:[%s2 + $0x3b0] sm:$0x11]
  %v136 = vld [vmem:[%s2 + $0x3b8] sm:$0x11]
  %v137 = vld [vmem:[%s2 + $0x3c0] sm:$0x11]
  %v138 = vld [vmem:[%s2 + $0x3c8] sm:$0x11]
  %v139 = vld [vmem:[%s2 + $0x3d0] sm:$0x11]
  %v140 = vld [vmem:[%s2 + $0x3d8] sm:$0x11]
  %v141 = vld [vmem:[%s2 + $0x3e0] sm:$0x11]
  %v142 = vld [vmem:[%s2 + $0x3e8] sm:$0x11]
  %v143 = vld [vmem:[%s2 + $0x3f0] sm:$0x11]
  %v144 = vld [vmem:[%s2 + $0x3f8] sm:$0x11]
  %v145 = vld [vmem:[%s2 + $0x400] sm:$0x11]
  %v146 = vld [vmem:[%s2 + $0x408] sm:$0x11]
  %v147 = vld [vmem:[%s2 + $0x410] sm:$0x11]
  %v148 = vld [vmem:[%s2 + $0x418] sm:$0x11]
  %v149 = vld [vmem:[%s2 + $0x420] sm:$0x11]
  %v150 = vld [vmem:[%s2 + $0x428] sm:$0x11]
  %v151 = vld [vmem:[%s2 + $0x430] sm:$0x11]
  %v152 = vld [vmem:[%s2 + $0x438] sm:$0x11]
  %v153 = vld [vmem:[%s2 + $0x440] sm:$0x11]
  %v154 = vld [vmem:[%s2 + $0x448] sm:$0x11]
  %v155 = vld [vmem:[%s2 + $0x450] sm:$0x11]
  %v156 = vld [vmem:[%s2 + $0x458] sm:$0x11]
  %v157 = vld [vmem:[%s2 + $0x460] sm:$0x11]
  %v158 = vld [vmem:[%s2 + $0x468] sm:$0x11]
  %v159 = vld [vmem:[%s2 + $0x470] sm:$0x11]
  %v160 = vld [vmem:[%s2 + $0x478] sm:$0x11]
  %v161 = vld [vmem:[%s2 + $0x480] sm:$0x11]
  %v162 = vld [vmem:[%s2 + $0x488] sm:$0x11]
  %v163 = vld [vmem:[%s2 + $0x490] sm:$0x11]
  %v164 = vld [vmem:[%s2 + $0x498] sm:$0x11]
  %v165 = vld [vmem:[%s2 + $0x4a0] sm:$0x11]
  %v166 = vld [vmem:[%s2 + $0x4a8] sm:$0x11]
  %v167 = vld [vmem:[%s2 + $0x4b0] sm:$0x11]
  %v168 = vld [vmem:[%s2 + $0x4b8] sm:$0x11]
  %v169 = vld [vmem:[%s2 + $0x4c0] sm:$0x11]
  %v170 = vld [vmem:[%s2 + $0x4c8] sm:$0x11]
  %v171 = vld [vmem:[%s2 + $0x4d0] sm:$0x11]
  %v172 = vld [vmem:[%s2 + $0x4d8] sm:$0x11]
  %v173 = vld [vmem:[%s2 + $0x4e0] sm:$0x11]
  %v174 = vld [vmem:[%s2 + $0x4e8] sm:$0x11]
  %v175 = vld [vmem:[%s2 + $0x4f0] sm:$0x11]
  %v176 = vld [vmem:[%s2 + $0x4f8] sm:$0x11]
  %v177 = vld [vmem:[%s2 + $0x500] sm:$0x11]
  %v178 = vld [vmem:[%s2 + $0x508] sm:$0x11]
  %v179 = vld [vmem:[%s2 + $0x510] sm:$0x11]
  %v180 = vld [vmem:[%s2 + $0x518] sm:$0x11]
  %v181 = vld [vmem:[%s2 + $0x520] sm:$0x11]
  %v182 = vld [vmem:[%s2 + $0x528] sm:$0x11]
  %v183 = vld [vmem:[%s2 + $0x530] sm:$0x1]
  %v184 = vld [vmem:[%s1] sm:$0x3f]
  %186 = vset.pattern.permute.xlu0 0
  %187 = vperm.xlu0 %186, %v184
  %v188 = vpop.permute.xlu0 %187
  %v358 = vunpack.c.l.b16 %v16
  %v359 = vunpack.c.h.b16 %v16
  %v360 = vunpack.c.l.b16 %v17
  %v361 = vunpack.c.h.b16 %v17
  %v362 = vunpack.c.l.b16 %v18
  %v363 = vunpack.c.h.b16 %v18
  %v364 = vunpack.c.l.b16 %v19
  %v365 = vunpack.c.h.b16 %v19
  %v366 = vunpack.c.l.b16 %v20
  %v367 = vunpack.c.h.b16 %v20
  %v368 = vunpack.c.l.b16 %v21
  %v369 = vunpack.c.h.b16 %v21
  %v370 = vunpack.c.l.b16 %v22
  %v371 = vunpack.c.h.b16 %v22
  %v372 = vunpack.c.l.b16 %v23
  %v373 = vunpack.c.h.b16 %v23
  %v374 = vunpack.c.l.b16 %v24
  %v375 = vunpack.c.h.b16 %v24
  %v376 = vunpack.c.l.b16 %v25
  %v377 = vunpack.c.h.b16 %v25
  %v378 = vunpack.c.l.b16 %v26
  %v379 = vunpack.c.h.b16 %v26
  %v380 = vunpack.c.l.b16 %v27
  %v381 = vunpack.c.h.b16 %v27
  %v382 = vunpack.c.l.b16 %v28
  %v383 = vunpack.c.h.b16 %v28
  %v384 = vunpack.c.l.b16 %v29
  %v385 = vunpack.c.h.b16 %v29
  %v386 = vunpack.c.l.b16 %v30
  %v387 = vunpack.c.h.b16 %v30
  %v388 = vunpack.c.l.b16 %v31
  %v389 = vunpack.c.h.b16 %v31
  %v390 = vunpack.c.l.b16 %v32
  %v391 = vunpack.c.h.b16 %v32
  %v392 = vunpack.c.l.b16 %v33
  %v393 = vunpack.c.h.b16 %v33
  %v394 = vunpack.c.l.b16 %v34
  %v395 = vunpack.c.h.b16 %v34
  %v396 = vunpack.c.l.b16 %v35
  %v397 = vunpack.c.h.b16 %v35
  %v398 = vunpack.c.l.b16 %v36
  %v399 = vunpack.c.h.b16 %v36
  %v400 = vunpack.c.l.b16 %v37
  %v401 = vunpack.c.h.b16 %v37
  %v402 = vunpack.c.l.b16 %v38
  %v403 = vunpack.c.h.b16 %v38
  %v404 = vunpack.c.l.b16 %v39
  %v405 = vunpack.c.h.b16 %v39
  %v406 = vunpack.c.l.b16 %v40
  %v407 = vunpack.c.h.b16 %v40
  %v408 = vunpack.c.l.b16 %v41
  %v409 = vunpack.c.h.b16 %v41
  %v410 = vunpack.c.l.b16 %v42
  %v411 = vunpack.c.h.b16 %v42
  %v412 = vunpack.c.l.b16 %v43
  %v413 = vunpack.c.h.b16 %v43
  %v414 = vunpack.c.l.b16 %v44
  %v415 = vunpack.c.h.b16 %v44
  %v416 = vunpack.c.l.b16 %v45
  %v417 = vunpack.c.h.b16 %v45
  %v418 = vunpack.c.l.b16 %v46
  %v419 = vunpack.c.h.b16 %v46
  %v420 = vunpack.c.l.b16 %v47
  %v421 = vunpack.c.h.b16 %v47
  %v422 = vunpack.c.l.b16 %v48
  %v423 = vunpack.c.h.b16 %v48
  %v424 = vunpack.c.l.b16 %v49
  %v425 = vunpack.c.h.b16 %v49
  %v426 = vunpack.c.l.b16 %v50
  %v427 = vunpack.c.h.b16 %v50
  %v428 = vunpack.c.l.b16 %v51
  %v429 = vunpack.c.h.b16 %v51
  %v430 = vunpack.c.l.b16 %v52
  %v431 = vunpack.c.h.b16 %v52
  %v432 = vunpack.c.l.b16 %v53
  %v433 = vunpack.c.h.b16 %v53
  %v434 = vunpack.c.l.b16 %v54
  %v435 = vunpack.c.h.b16 %v54
  %v436 = vunpack.c.l.b16 %v55
  %v437 = vunpack.c.h.b16 %v55
  %v438 = vunpack.c.l.b16 %v56
  %v439 = vunpack.c.h.b16 %v56
  %v440 = vunpack.c.l.b16 %v57
  %v441 = vunpack.c.h.b16 %v57
  %v442 = vunpack.c.l.b16 %v58
  %v443 = vunpack.c.h.b16 %v58
  %v444 = vunpack.c.l.b16 %v59
  %v445 = vunpack.c.h.b16 %v59
  %v446 = vunpack.c.l.b16 %v60
  %v447 = vunpack.c.h.b16 %v60
  %v448 = vunpack.c.l.b16 %v61
  %v449 = vunpack.c.h.b16 %v61
  %v450 = vunpack.c.l.b16 %v62
  %v451 = vunpack.c.h.b16 %v62
  %v452 = vunpack.c.l.b16 %v63
  %v453 = vunpack.c.h.b16 %v63
  %v454 = vunpack.c.l.b16 %v64
  %v455 = vunpack.c.h.b16 %v64
  %v456 = vunpack.c.l.b16 %v65
  %v457 = vunpack.c.h.b16 %v65
  %v458 = vunpack.c.l.b16 %v66
  %v459 = vunpack.c.h.b16 %v66
  %v460 = vunpack.c.l.b16 %v67
  %v461 = vunpack.c.h.b16 %v67
  %v462 = vunpack.c.l.b16 %v68
  %v463 = vunpack.c.h.b16 %v68
  %v464 = vunpack.c.l.b16 %v69
  %v465 = vunpack.c.h.b16 %v69
  %v466 = vunpack.c.l.b16 %v70
  %v467 = vunpack.c.h.b16 %v70
  %v468 = vunpack.c.l.b16 %v71
  %v469 = vunpack.c.l.b16 %v72
  %v470 = vunpack.c.h.b16 %v72
  %v471 = vunpack.c.l.b16 %v73
  %v472 = vunpack.c.h.b16 %v73
  %v473 = vunpack.c.l.b16 %v74
  %v474 = vunpack.c.h.b16 %v74
  %v475 = vunpack.c.l.b16 %v75
  %v476 = vunpack.c.h.b16 %v75
  %v477 = vunpack.c.l.b16 %v76
  %v478 = vunpack.c.h.b16 %v76
  %v479 = vunpack.c.l.b16 %v77
  %v480 = vunpack.c.h.b16 %v77
  %v481 = vunpack.c.l.b16 %v78
  %v482 = vunpack.c.h.b16 %v78
  %v483 = vunpack.c.l.b16 %v79
  %v484 = vunpack.c.h.b16 %v79
  %v485 = vunpack.c.l.b16 %v80
  %v486 = vunpack.c.h.b16 %v80
  %v487 = vunpack.c.l.b16 %v81
  %v488 = vunpack.c.h.b16 %v81
  %v489 = vunpack.c.l.b16 %v82
  %v490 = vunpack.c.h.b16 %v82
  %v491 = vunpack.c.l.b16 %v83
  %v492 = vunpack.c.h.b16 %v83
  %v493 = vunpack.c.l.b16 %v84
  %v494 = vunpack.c.h.b16 %v84
  %v495 = vunpack.c.l.b16 %v85
  %v496 = vunpack.c.h.b16 %v85
  %v497 = vunpack.c.l.b16 %v86
  %v498 = vunpack.c.h.b16 %v86
  %v499 = vunpack.c.l.b16 %v87
  %v500 = vunpack.c.h.b16 %v87
  %v501 = vunpack.c.l.b16 %v88
  %v502 = vunpack.c.h.b16 %v88
  %v503 = vunpack.c.l.b16 %v89
  %v504 = vunpack.c.h.b16 %v89
  %v505 = vunpack.c.l.b16 %v90
  %v506 = vunpack.c.h.b16 %v90
  %v507 = vunpack.c.l.b16 %v91
  %v508 = vunpack.c.h.b16 %v91
  %v509 = vunpack.c.l.b16 %v92
  %v510 = vunpack.c.h.b16 %v92
  %v511 = vunpack.c.l.b16 %v93
  %v512 = vunpack.c.h.b16 %v93
  %v513 = vunpack.c.l.b16 %v94
  %v514 = vunpack.c.h.b16 %v94
  %v515 = vunpack.c.l.b16 %v95
  %v516 = vunpack.c.h.b16 %v95
  %v517 = vunpack.c.l.b16 %v96
  %v518 = vunpack.c.h.b16 %v96
  %v519 = vunpack.c.l.b16 %v97
  %v520 = vunpack.c.h.b16 %v97
  %v521 = vunpack.c.l.b16 %v98
  %v522 = vunpack.c.h.b16 %v98
  %v523 = vunpack.c.l.b16 %v99
  %v524 = vunpack.c.h.b16 %v99
  %v525 = vunpack.c.l.b16 %v100
  %v526 = vunpack.c.h.b16 %v100
  %v527 = vunpack.c.l.b16 %v101
  %v528 = vunpack.c.h.b16 %v101
  %v529 = vunpack.c.l.b16 %v102
  %v530 = vunpack.c.h.b16 %v102
  %v531 = vunpack.c.l.b16 %v103
  %v532 = vunpack.c.h.b16 %v103
  %v533 = vunpack.c.l.b16 %v104
  %v534 = vunpack.c.h.b16 %v104
  %v535 = vunpack.c.l.b16 %v105
  %v536 = vunpack.c.h.b16 %v105
  %v537 = vunpack.c.l.b16 %v106
  %v538 = vunpack.c.h.b16 %v106
  %v539 = vunpack.c.l.b16 %v107
  %v540 = vunpack.c.h.b16 %v107
  %v541 = vunpack.c.l.b16 %v108
  %v542 = vunpack.c.h.b16 %v108
  %v543 = vunpack.c.l.b16 %v109
  %v544 = vunpack.c.h.b16 %v109
  %v545 = vunpack.c.l.b16 %v110
  %v546 = vunpack.c.h.b16 %v110
  %v547 = vunpack.c.l.b16 %v111
  %v548 = vunpack.c.h.b16 %v111
  %v549 = vunpack.c.l.b16 %v112
  %v550 = vunpack.c.h.b16 %v112
  %v551 = vunpack.c.l.b16 %v113
  %v552 = vunpack.c.h.b16 %v113
  %v553 = vunpack.c.l.b16 %v114
  %v554 = vunpack.c.h.b16 %v114
  %v555 = vunpack.c.l.b16 %v115
  %v556 = vunpack.c.h.b16 %v115
  %v557 = vunpack.c.l.b16 %v116
  %v558 = vunpack.c.h.b16 %v116
  %v559 = vunpack.c.l.b16 %v117
  %v560 = vunpack.c.h.b16 %v117
  %v561 = vunpack.c.l.b16 %v118
  %v562 = vunpack.c.h.b16 %v118
  %v563 = vunpack.c.l.b16 %v119
  %v564 = vunpack.c.h.b16 %v119
  %v565 = vunpack.c.l.b16 %v120
  %v566 = vunpack.c.h.b16 %v120
  %v567 = vunpack.c.l.b16 %v121
  %v568 = vunpack.c.h.b16 %v121
  %v569 = vunpack.c.l.b16 %v122
  %v570 = vunpack.c.h.b16 %v122
  %v571 = vunpack.c.l.b16 %v123
  %v572 = vunpack.c.h.b16 %v123
  %v573 = vunpack.c.l.b16 %v124
  %v574 = vunpack.c.h.b16 %v124
  %v575 = vunpack.c.l.b16 %v125
  %v576 = vunpack.c.h.b16 %v125
  %v577 = vunpack.c.l.b16 %v126
  %v578 = vunpack.c.h.b16 %v126
  %v579 = vunpack.c.l.b16 %v127
  %v580 = vunpack.c.l.b16 %v128
  %v581 = vunpack.c.h.b16 %v128
  %v582 = vunpack.c.l.b16 %v129
  %v583 = vunpack.c.h.b16 %v129
  %v584 = vunpack.c.l.b16 %v130
  %v585 = vunpack.c.h.b16 %v130
  %v586 = vunpack.c.l.b16 %v131
  %v587 = vunpack.c.h.b16 %v131
  %v588 = vunpack.c.l.b16 %v132
  %v589 = vunpack.c.h.b16 %v132
  %v590 = vunpack.c.l.b16 %v133
  %v591 = vunpack.c.h.b16 %v133
  %v592 = vunpack.c.l.b16 %v134
  %v593 = vunpack.c.h.b16 %v134
  %v594 = vunpack.c.l.b16 %v135
  %v595 = vunpack.c.h.b16 %v135
  %v596 = vunpack.c.l.b16 %v136
  %v597 = vunpack.c.h.b16 %v136
  %v598 = vunpack.c.l.b16 %v137
  %v599 = vunpack.c.h.b16 %v137
  %v600 = vunpack.c.l.b16 %v138
  %v601 = vunpack.c.h.b16 %v138
  %v602 = vunpack.c.l.b16 %v139
  %v603 = vunpack.c.h.b16 %v139
  %v604 = vunpack.c.l.b16 %v140
  %v605 = vunpack.c.h.b16 %v140
  %v606 = vunpack.c.l.b16 %v141
  %v607 = vunpack.c.h.b16 %v141
  %v608 = vunpack.c.l.b16 %v142
  %v609 = vunpack.c.h.b16 %v142
  %v610 = vunpack.c.l.b16 %v143
  %v611 = vunpack.c.h.b16 %v143
  %v612 = vunpack.c.l.b16 %v144
  %v613 = vunpack.c.h.b16 %v144
  %v614 = vunpack.c.l.b16 %v145
  %v615 = vunpack.c.h.b16 %v145
  %v616 = vunpack.c.l.b16 %v146
  %v617 = vunpack.c.h.b16 %v146
  %v618 = vunpack.c.l.b16 %v147
  %v619 = vunpack.c.h.b16 %v147
  %v620 = vunpack.c.l.b16 %v148
  %v621 = vunpack.c.h.b16 %v148
  %v622 = vunpack.c.l.b16 %v149
  %v623 = vunpack.c.h.b16 %v149
  %v624 = vunpack.c.l.b16 %v150
  %v625 = vunpack.c.h.b16 %v150
  %v626 = vunpack.c.l.b16 %v151
  %v627 = vunpack.c.h.b16 %v151
  %v628 = vunpack.c.l.b16 %v152
  %v629 = vunpack.c.h.b16 %v152
  %v630 = vunpack.c.l.b16 %v153
  %v631 = vunpack.c.h.b16 %v153
  %v632 = vunpack.c.l.b16 %v154
  %v633 = vunpack.c.h.b16 %v154
  %v634 = vunpack.c.l.b16 %v155
  %v635 = vunpack.c.h.b16 %v155
  %v636 = vunpack.c.l.b16 %v156
  %v637 = vunpack.c.h.b16 %v156
  %v638 = vunpack.c.l.b16 %v157
  %v639 = vunpack.c.h.b16 %v157
  %v640 = vunpack.c.l.b16 %v158
  %v641 = vunpack.c.h.b16 %v158
  %v642 = vunpack.c.l.b16 %v159
  %v643 = vunpack.c.h.b16 %v159
  %v644 = vunpack.c.l.b16 %v160
  %v645 = vunpack.c.h.b16 %v160
  %v646 = vunpack.c.l.b16 %v161
  %v647 = vunpack.c.h.b16 %v161
  %v648 = vunpack.c.l.b16 %v162
  %v649 = vunpack.c.h.b16 %v162
  %v650 = vunpack.c.l.b16 %v163
  %v651 = vunpack.c.h.b16 %v163
  %v652 = vunpack.c.l.b16 %v164
  %v653 = vunpack.c.h.b16 %v164
  %v654 = vunpack.c.l.b16 %v165
  %v655 = vunpack.c.h.b16 %v165
  %v656 = vunpack.c.l.b16 %v166
  %v657 = vunpack.c.h.b16 %v166
  %v658 = vunpack.c.l.b16 %v167
  %v659 = vunpack.c.h.b16 %v167
  %v660 = vunpack.c.l.b16 %v168
  %v661 = vunpack.c.h.b16 %v168
  %v662 = vunpack.c.l.b16 %v169
  %v663 = vunpack.c.h.b16 %v169
  %v664 = vunpack.c.l.b16 %v170
  %v665 = vunpack.c.h.b16 %v170
  %v666 = vunpack.c.l.b16 %v171
  %v667 = vunpack.c.h.b16 %v171
  %v668 = vunpack.c.l.b16 %v172
  %v669 = vunpack.c.h.b16 %v172
  %v670 = vunpack.c.l.b16 %v173
  %v671 = vunpack.c.h.b16 %v173
  %v672 = vunpack.c.l.b16 %v174
  %v673 = vunpack.c.h.b16 %v174
  %v674 = vunpack.c.l.b16 %v175
  %v675 = vunpack.c.h.b16 %v175
  %v676 = vunpack.c.l.b16 %v176
  %v677 = vunpack.c.h.b16 %v176
  %v678 = vunpack.c.l.b16 %v177
  %v679 = vunpack.c.h.b16 %v177
  %v680 = vunpack.c.l.b16 %v178
  %v681 = vunpack.c.h.b16 %v178
  %v682 = vunpack.c.l.b16 %v179
  %v683 = vunpack.c.h.b16 %v179
  %v684 = vunpack.c.l.b16 %v180
  %v685 = vunpack.c.h.b16 %v180
  %v686 = vunpack.c.l.b16 %v181
  %v687 = vunpack.c.h.b16 %v181
  %v688 = vunpack.c.l.b16 %v182
  %v689 = vunpack.c.h.b16 %v182
  %v690 = vunpack.c.l.b16 %v183
  %v691 = vpack.c.b16 %v469, %v358
  %v692 = vpack.c.b16 %v470, %v359
  %v693 = vpack.c.b16 %v471, %v360
  %v694 = vpack.c.b16 %v472, %v361
  %v695 = vpack.c.b16 %v473, %v362
  %v696 = vpack.c.b16 %v474, %v363
  %v697 = vpack.c.b16 %v475, %v364
  %v698 = vpack.c.b16 %v476, %v365
  %v699 = vpack.c.b16 %v477, %v366
  %v700 = vpack.c.b16 %v478, %v367
  %v701 = vpack.c.b16 %v479, %v368
  %v702 = vpack.c.b16 %v480, %v369
  %v703 = vpack.c.b16 %v481, %v370
  %v704 = vpack.c.b16 %v482, %v371
  %v705 = vpack.c.b16 %v483, %v372
  %v706 = vpack.c.b16 %v484, %v373
  %v707 = vpack.c.b16 %v485, %v374
  %v708 = vpack.c.b16 %v486, %v375
  %v709 = vpack.c.b16 %v487, %v376
  %v710 = vpack.c.b16 %v488, %v377
  %v711 = vpack.c.b16 %v489, %v378
  %v712 = vpack.c.b16 %v490, %v379
  %v713 = vpack.c.b16 %v491, %v380
  %v714 = vpack.c.b16 %v492, %v381
  %v715 = vpack.c.b16 %v493, %v382
  %v716 = vpack.c.b16 %v494, %v383
  %v717 = vpack.c.b16 %v495, %v384
  %v718 = vpack.c.b16 %v496, %v385
  %v719 = vpack.c.b16 %v497, %v386
  %v720 = vpack.c.b16 %v498, %v387
  %v721 = vpack.c.b16 %v499, %v388
  %v722 = vpack.c.b16 %v500, %v389
  %v723 = vpack.c.b16 %v501, %v390
  %v724 = vpack.c.b16 %v502, %v391
  %v725 = vpack.c.b16 %v503, %v392
  %v726 = vpack.c.b16 %v504, %v393
  %v727 = vpack.c.b16 %v505, %v394
  %v728 = vpack.c.b16 %v506, %v395
  %v729 = vpack.c.b16 %v507, %v396
  %v730 = vpack.c.b16 %v508, %v397
  %v731 = vpack.c.b16 %v509, %v398
  %v732 = vpack.c.b16 %v510, %v399
  %v733 = vpack.c.b16 %v511, %v400
  %v734 = vpack.c.b16 %v512, %v401
  %v735 = vpack.c.b16 %v513, %v402
  %v736 = vpack.c.b16 %v514, %v403
  %v737 = vpack.c.b16 %v515, %v404
  %v738 = vpack.c.b16 %v516, %v405
  %v739 = vpack.c.b16 %v517, %v406
  %v740 = vpack.c.b16 %v518, %v407
  %v741 = vpack.c.b16 %v519, %v408
  %v742 = vpack.c.b16 %v520, %v409
  %v743 = vpack.c.b16 %v521, %v410
  %v744 = vpack.c.b16 %v522, %v411
  %v745 = vpack.c.b16 %v523, %v412
  %v746 = vpack.c.b16 %v524, %v413
  %v747 = vpack.c.b16 %v525, %v414
  %v748 = vpack.c.b16 %v526, %v415
  %v749 = vpack.c.b16 %v527, %v416
  %v750 = vpack.c.b16 %v528, %v417
  %v751 = vpack.c.b16 %v529, %v418
  %v752 = vpack.c.b16 %v530, %v419
  %v753 = vpack.c.b16 %v531, %v420
  %v754 = vpack.c.b16 %v532, %v421
  %v755 = vpack.c.b16 %v533, %v422
  %v756 = vpack.c.b16 %v534, %v423
  %v757 = vpack.c.b16 %v535, %v424
  %v758 = vpack.c.b16 %v536, %v425
  %v759 = vpack.c.b16 %v537, %v426
  %v760 = vpack.c.b16 %v538, %v427
  %v761 = vpack.c.b16 %v539, %v428
  %v762 = vpack.c.b16 %v540, %v429
  %v763 = vpack.c.b16 %v541, %v430
  %v764 = vpack.c.b16 %v542, %v431
  %v765 = vpack.c.b16 %v543, %v432
  %v766 = vpack.c.b16 %v544, %v433
  %v767 = vpack.c.b16 %v545, %v434
  %v768 = vpack.c.b16 %v546, %v435
  %v769 = vpack.c.b16 %v547, %v436
  %v770 = vpack.c.b16 %v548, %v437
  %v771 = vpack.c.b16 %v549, %v438
  %v772 = vpack.c.b16 %v550, %v439
  %v773 = vpack.c.b16 %v551, %v440
  %v774 = vpack.c.b16 %v552, %v441
  %v775 = vpack.c.b16 %v553, %v442
  %v776 = vpack.c.b16 %v554, %v443
  %v777 = vpack.c.b16 %v555, %v444
  %v778 = vpack.c.b16 %v556, %v445
  %v779 = vpack.c.b16 %v557, %v446
  %v780 = vpack.c.b16 %v558, %v447
  %v781 = vpack.c.b16 %v559, %v448
  %v782 = vpack.c.b16 %v560, %v449
  %v783 = vpack.c.b16 %v561, %v450
  %v784 = vpack.c.b16 %v562, %v451
  %v785 = vpack.c.b16 %v563, %v452
  %v786 = vpack.c.b16 %v564, %v453
  %v787 = vpack.c.b16 %v565, %v454
  %v788 = vpack.c.b16 %v566, %v455
  %v789 = vpack.c.b16 %v567, %v456
  %v790 = vpack.c.b16 %v568, %v457
  %v791 = vpack.c.b16 %v569, %v458
  %v792 = vpack.c.b16 %v570, %v459
  %v793 = vpack.c.b16 %v571, %v460
  %v794 = vpack.c.b16 %v572, %v461
  %v795 = vpack.c.b16 %v573, %v462
  %v796 = vpack.c.b16 %v574, %v463
  %v797 = vpack.c.b16 %v575, %v464
  %v798 = vpack.c.b16 %v576, %v465
  %v799 = vpack.c.b16 %v577, %v466
  %v800 = vpack.c.b16 %v578, %v467
  %v801 = vpack.c.b16 %v579, %v468
  %v802 = vpack.c.b16 %v580, %v580
  %v803 = vpack.c.b16 %v581, %v581
  %v804 = vpack.c.b16 %v582, %v582
  %v805 = vpack.c.b16 %v583, %v583
  %v806 = vpack.c.b16 %v584, %v584
  %v807 = vpack.c.b16 %v585, %v585
  %v808 = vpack.c.b16 %v586, %v586
  %v809 = vpack.c.b16 %v587, %v587
  %v810 = vpack.c.b16 %v588, %v588
  %v811 = vpack.c.b16 %v589, %v589
  %v812 = vpack.c.b16 %v590, %v590
  %v813 = vpack.c.b16 %v591, %v591
  %v814 = vpack.c.b16 %v592, %v592
  %v815 = vpack.c.b16 %v593, %v593
  %v816 = vpack.c.b16 %v594, %v594
  %v817 = vpack.c.b16 %v595, %v595
  %v818 = vpack.c.b16 %v596, %v596
  %v819 = vpack.c.b16 %v597, %v597
  %v820 = vpack.c.b16 %v598, %v598
  %v821 = vpack.c.b16 %v599, %v599
  %v822 = vpack.c.b16 %v600, %v600
  %v823 = vpack.c.b16 %v601, %v601
  %v824 = vpack.c.b16 %v602, %v602
  %v825 = vpack.c.b16 %v603, %v603
  %v826 = vpack.c.b16 %v604, %v604
  %v827 = vpack.c.b16 %v605, %v605
  %v828 = vpack.c.b16 %v606, %v606
  %v829 = vpack.c.b16 %v607, %v607
  %v830 = vpack.c.b16 %v608, %v608
  %v831 = vpack.c.b16 %v609, %v609
  %v832 = vpack.c.b16 %v610, %v610
  %v833 = vpack.c.b16 %v611, %v611
  %v834 = vpack.c.b16 %v612, %v612
  %v835 = vpack.c.b16 %v613, %v613
  %v836 = vpack.c.b16 %v614, %v614
  %v837 = vpack.c.b16 %v615, %v615
  %v838 = vpack.c.b16 %v616, %v616
  %v839 = vpack.c.b16 %v617, %v617
  %v840 = vpack.c.b16 %v618, %v618
  %v841 = vpack.c.b16 %v619, %v619
  %v842 = vpack.c.b16 %v620, %v620
  %v843 = vpack.c.b16 %v621, %v621
  %v844 = vpack.c.b16 %v622, %v622
  %v845 = vpack.c.b16 %v623, %v623
  %v846 = vpack.c.b16 %v624, %v624
  %v847 = vpack.c.b16 %v625, %v625
  %v848 = vpack.c.b16 %v626, %v626
  %v849 = vpack.c.b16 %v627, %v627
  %v850 = vpack.c.b16 %v628, %v628
  %v851 = vpack.c.b16 %v629, %v629
  %v852 = vpack.c.b16 %v630, %v630
  %v853 = vpack.c.b16 %v631, %v631
  %v854 = vpack.c.b16 %v632, %v632
  %v855 = vpack.c.b16 %v633, %v633
  %v856 = vpack.c.b16 %v634, %v634
  %v857 = vpack.c.b16 %v635, %v635
  %v858 = vpack.c.b16 %v636, %v636
  %v859 = vpack.c.b16 %v637, %v637
  %v860 = vpack.c.b16 %v638, %v638
  %v861 = vpack.c.b16 %v639, %v639
  %v862 = vpack.c.b16 %v640, %v640
  %v863 = vpack.c.b16 %v641, %v641
  %v864 = vpack.c.b16 %v642, %v642
  %v865 = vpack.c.b16 %v643, %v643
  %v866 = vpack.c.b16 %v644, %v644
  %v867 = vpack.c.b16 %v645, %v645
  %v868 = vpack.c.b16 %v646, %v646
  %v869 = vpack.c.b16 %v647, %v647
  %v870 = vpack.c.b16 %v648, %v648
  %v871 = vpack.c.b16 %v649, %v649
  %v872 = vpack.c.b16 %v650, %v650
  %v873 = vpack.c.b16 %v651, %v651
  %v874 = vpack.c.b16 %v652, %v652
  %v875 = vpack.c.b16 %v653, %v653
  %v876 = vpack.c.b16 %v654, %v654
  %v877 = vpack.c.b16 %v655, %v655
  %v878 = vpack.c.b16 %v656, %v656
  %v879 = vpack.c.b16 %v657, %v657
  %v880 = vpack.c.b16 %v658, %v658
  %v881 = vpack.c.b16 %v659, %v659
  %v882 = vpack.c.b16 %v660, %v660
  %v883 = vpack.c.b16 %v661, %v661
  %v884 = vpack.c.b16 %v662, %v662
  %v885 = vpack.c.b16 %v663, %v663
  %v886 = vpack.c.b16 %v664, %v664
  %v887 = vpack.c.b16 %v665, %v665
  %v888 = vpack.c.b16 %v666, %v666
  %v889 = vpack.c.b16 %v667, %v667
  %v890 = vpack.c.b16 %v668, %v668
  %v891 = vpack.c.b16 %v669, %v669
  %v892 = vpack.c.b16 %v670, %v670
  %v893 = vpack.c.b16 %v671, %v671
  %v894 = vpack.c.b16 %v672, %v672
  %v895 = vpack.c.b16 %v673, %v673
  %v896 = vpack.c.b16 %v674, %v674
  %v897 = vpack.c.b16 %v675, %v675
  %v898 = vpack.c.b16 %v676, %v676
  %v899 = vpack.c.b16 %v677, %v677
  %v900 = vpack.c.b16 %v678, %v678
  %v901 = vpack.c.b16 %v679, %v679
  %v902 = vpack.c.b16 %v680, %v680
  %v903 = vpack.c.b16 %v681, %v681
  %v904 = vpack.c.b16 %v682, %v682
  %v905 = vpack.c.b16 %v683, %v683
  %v906 = vpack.c.b16 %v684, %v684
  %v907 = vpack.c.b16 %v685, %v685
  %v908 = vpack.c.b16 %v686, %v686
  %v909 = vpack.c.b16 %v687, %v687
  %v910 = vpack.c.b16 %v688, %v688
  %v911 = vpack.c.b16 %v689, %v689
  %v912 = vpack.c.b16 %v690, %v690
  %vm1024 = vcmask 146432
  %v1026 = vsel %vm1024, %v15, 0
  %vm1028 = vcmask 1040384
  %v1030 = vsel %vm1028, %v802, 0
  %v1033 = vsel %vm1028, %v803, 0
  %v1036 = vsel %vm1028, %v804, 0
  %v1039 = vsel %vm1028, %v805, 0
  %v1042 = vsel %vm1028, %v806, 0
  %v1045 = vsel %vm1028, %v807, 0
  %v1048 = vsel %vm1028, %v808, 0
  %v1051 = vsel %vm1028, %v809, 0
  %v1054 = vsel %vm1028, %v810, 0
  %v1057 = vsel %vm1028, %v811, 0
  %v1060 = vsel %vm1028, %v812, 0
  %v1063 = vsel %vm1028, %v813, 0
  %v1066 = vsel %vm1028, %v814, 0
  %v1069 = vsel %vm1028, %v815, 0
  %v1072 = vsel %vm1028, %v816, 0
  %v1075 = vsel %vm1028, %v817, 0
  %v1078 = vsel %vm1028, %v818, 0
  %v1081 = vsel %vm1028, %v819, 0
  %v1084 = vsel %vm1028, %v820, 0
  %v1087 = vsel %vm1028, %v821, 0
  %v1090 = vsel %vm1028, %v822, 0
  %v1093 = vsel %vm1028, %v823, 0
  %v1096 = vsel %vm1028, %v824, 0
  %v1099 = vsel %vm1028, %v825, 0
  %v1102 = vsel %vm1028, %v826, 0
  %v1105 = vsel %vm1028, %v827, 0
  %v1108 = vsel %vm1028, %v828, 0
  %v1111 = vsel %vm1028, %v829, 0
  %v1114 = vsel %vm1028, %v830, 0
  %v1117 = vsel %vm1028, %v831, 0
  %v1120 = vsel %vm1028, %v832, 0
  %v1123 = vsel %vm1028, %v833, 0
  %v1126 = vsel %vm1028, %v834, 0
  %v1129 = vsel %vm1028, %v835, 0
  %v1132 = vsel %vm1028, %v836, 0
  %v1135 = vsel %vm1028, %v837, 0
  %v1138 = vsel %vm1028, %v838, 0
  %v1141 = vsel %vm1028, %v839, 0
  %v1144 = vsel %vm1028, %v840, 0
  %v1147 = vsel %vm1028, %v841, 0
  %v1150 = vsel %vm1028, %v842, 0
  %v1153 = vsel %vm1028, %v843, 0
  %v1156 = vsel %vm1028, %v844, 0
  %v1159 = vsel %vm1028, %v845, 0
  %v1162 = vsel %vm1028, %v846, 0
  %v1165 = vsel %vm1028, %v847, 0
  %v1168 = vsel %vm1028, %v848, 0
  %v1171 = vsel %vm1028, %v849, 0
  %v1174 = vsel %vm1028, %v850, 0
  %v1177 = vsel %vm1028, %v851, 0
  %v1180 = vsel %vm1028, %v852, 0
  %v1183 = vsel %vm1028, %v853, 0
  %v1186 = vsel %vm1028, %v854, 0
  %v1189 = vsel %vm1028, %v855, 0
  %v1192 = vsel %vm1028, %v856, 0
  %v1195 = vsel %vm1028, %v857, 0
  %v1198 = vsel %vm1028, %v858, 0
  %v1201 = vsel %vm1028, %v859, 0
  %v1204 = vsel %vm1028, %v860, 0
  %v1207 = vsel %vm1028, %v861, 0
  %v1210 = vsel %vm1028, %v862, 0
  %v1213 = vsel %vm1028, %v863, 0
  %v1216 = vsel %vm1028, %v864, 0
  %v1219 = vsel %vm1028, %v865, 0
  %v1222 = vsel %vm1028, %v866, 0
  %v1225 = vsel %vm1028, %v867, 0
  %v1228 = vsel %vm1028, %v868, 0
  %v1231 = vsel %vm1028, %v869, 0
  %v1234 = vsel %vm1028, %v870, 0
  %v1237 = vsel %vm1028, %v871, 0
  %v1240 = vsel %vm1028, %v872, 0
  %v1243 = vsel %vm1028, %v873, 0
  %v1246 = vsel %vm1028, %v874, 0
  %v1249 = vsel %vm1028, %v875, 0
  %v1252 = vsel %vm1028, %v876, 0
  %v1255 = vsel %vm1028, %v877, 0
  %v1258 = vsel %vm1028, %v878, 0
  %v1261 = vsel %vm1028, %v879, 0
  %v1264 = vsel %vm1028, %v880, 0
  %v1267 = vsel %vm1028, %v881, 0
  %v1270 = vsel %vm1028, %v882, 0
  %v1273 = vsel %vm1028, %v883, 0
  %v1276 = vsel %vm1028, %v884, 0
  %v1279 = vsel %vm1028, %v885, 0
  %v1282 = vsel %vm1028, %v886, 0
  %v1285 = vsel %vm1028, %v887, 0
  %v1288 = vsel %vm1028, %v888, 0
  %v1291 = vsel %vm1028, %v889, 0
  %v1294 = vsel %vm1028, %v890, 0
  %v1297 = vsel %vm1028, %v891, 0
  %v1300 = vsel %vm1028, %v892, 0
  %v1303 = vsel %vm1028, %v893, 0
  %v1306 = vsel %vm1028, %v894, 0
  %v1309 = vsel %vm1028, %v895, 0
  %v1312 = vsel %vm1028, %v896, 0
  %v1315 = vsel %vm1028, %v897, 0
  %v1318 = vsel %vm1028, %v898, 0
  %v1321 = vsel %vm1028, %v899, 0
  %v1324 = vsel %vm1028, %v900, 0
  %v1327 = vsel %vm1028, %v901, 0
  %v1330 = vsel %vm1028, %v902, 0
  %v1333 = vsel %vm1028, %v903, 0
  %v1336 = vsel %vm1028, %v904, 0
  %v1339 = vsel %vm1028, %v905, 0
  %v1342 = vsel %vm1028, %v906, 0
  %v1345 = vsel %vm1028, %v907, 0
  %v1348 = vsel %vm1028, %v908, 0
  %v1351 = vsel %vm1028, %v909, 0
  %v1354 = vsel %vm1028, %v910, 0
  %v1357 = vsel %vm1028, %v911, 0
  %v1360 = vsel %vm1028, %v912, 0
  %1362 = vmatpush.bf16.msra.mxu0 0
  %1363 = vmatpush.bf16.msra.mxu0 0
  %1364 = vmatpush.bf16.msra.mxu0 0
  %1365 = vmatpush.bf16.msra.mxu0 0
  %1366 = vmatpush.bf16.msra.mxu0 0
  %1367 = vmatpush.bf16.msra.mxu0 0
  %1368 = vmatpush.bf16.msra.mxu0 %v1030
  %1369 = vmatpush.bf16.msra.mxu0 %v691
  %1370 = vmatmul.bf16.gmra.mxu0 %v1026
  %v1371 = vpop.f32.mrf.mxu0
  %v1372 = vadd.f32 %v188, %v1371
  %v1373 = vpop.f32.mrf.mxu0
  %1374 = vdwg.mxu0
  %1375 = vmatpush.bf16.msra.mxu0 0
  %1376 = vmatpush.bf16.msra.mxu0 0
  %1377 = vmatpush.bf16.msra.mxu0 0
  %1378 = vmatpush.bf16.msra.mxu0 0
  %1379 = vmatpush.bf16.msra.mxu0 0
  %1380 = vmatpush.bf16.msra.mxu0 0
  %1381 = vmatpush.bf16.msra.mxu0 %v1033
  %1382 = vmatpush.bf16.msra.mxu0 %v692
  %1383 = vmatmul.bf16.gmra.mxu0 %v1026
  %v1384 = vpop.f32.mrf.mxu0
  %v1385 = vadd.f32 %v188, %v1384
  %v1386 = vpop.f32.mrf.mxu0
  %1387 = vdwg.mxu0
  %1388 = vmatpush.bf16.msra.mxu0 0
  %1389 = vmatpush.bf16.msra.mxu0 0
  %1390 = vmatpush.bf16.msra.mxu0 0
  %1391 = vmatpush.bf16.msra.mxu0 0
  %1392 = vmatpush.bf16.msra.mxu0 0
  %1393 = vmatpush.bf16.msra.mxu0 0
  %1394 = vmatpush.bf16.msra.mxu0 %v1036
  %1395 = vmatpush.bf16.msra.mxu0 %v693
  %1396 = vmatmul.bf16.gmra.mxu0 %v1026
  %v1397 = vpop.f32.mrf.mxu0
  %v1398 = vadd.f32 %v188, %v1397
  %v1399 = vpop.f32.mrf.mxu0
  %1400 = vdwg.mxu0
  %1401 = vmatpush.bf16.msra.mxu0 0
  %1402 = vmatpush.bf16.msra.mxu0 0
  %1403 = vmatpush.bf16.msra.mxu0 0
  %1404 = vmatpush.bf16.msra.mxu0 0
  %1405 = vmatpush.bf16.msra.mxu0 0
  %1406 = vmatpush.bf16.msra.mxu0 0
  %1407 = vmatpush.bf16.msra.mxu0 %v1039
  %1408 = vmatpush.bf16.msra.mxu0 %v694
  %1409 = vmatmul.bf16.gmra.mxu0 %v1026
  %v1410 = vpop.f32.mrf.mxu0
  %v1411 = vadd.f32 %v188, %v1410
  %v1412 = vpop.f32.mrf.mxu0
  %1413 = vdwg.mxu0
  %1414 = vmatpush.bf16.msra.mxu0 0
  %1415 = vmatpush.bf16.msra.mxu0 0
  %1416 = vmatpush.bf16.msra.mxu0 0
  %1417 = vmatpush.bf16.msra.mxu0 0
  %1418 = vmatpush.bf16.msra.mxu0 0
  %1419 = vmatpush.bf16.msra.mxu0 0
  %1420 = vmatpush.bf16.msra.mxu0 %v1042
  %1421 = vmatpush.bf16.msra.mxu0 %v695
  %1422 = vmatmul.bf16.gmra.mxu0 %v1026
  %v1423 = vpop.f32.mrf.mxu0
  %v1424 = vadd.f32 %v188, %v1423
  %v1425 = vpop.f32.mrf.mxu0
  %1426 = vdwg.mxu0
  %1427 = vmatpush.bf16.msra.mxu0 0
  %1428 = vmatpush.bf16.msra.mxu0 0
  %1429 = vmatpush.bf16.msra.mxu0 0
  %1430 = vmatpush.bf16.msra.mxu0 0
  %1431 = vmatpush.bf16.msra.mxu0 0
  %1432 = vmatpush.bf16.msra.mxu0 0
  %1433 = vmatpush.bf16.msra.mxu0 %v1045
  %1434 = vmatpush.bf16.msra.mxu0 %v696
  %1435 = vmatmul.bf16.gmra.mxu0 %v1026
  %v1436 = vpop.f32.mrf.mxu0
  %v1437 = vadd.f32 %v188, %v1436
  %v1438 = vpop.f32.mrf.mxu0
  %1439 = vdwg.mxu0
  %1440 = vmatpush.bf16.msra.mxu0 0
  %1441 = vmatpush.bf16.msra.mxu0 0
  %1442 = vmatpush.bf16.msra.mxu0 0
  %1443 = vmatpush.bf16.msra.mxu0 0
  %1444 = vmatpush.bf16.msra.mxu0 0
  %1445 = vmatpush.bf16.msra.mxu0 0
  %1446 = vmatpush.bf16.msra.mxu0 %v1048
  %1447 = vmatpush.bf16.msra.mxu0 %v697
  %1448 = vmatmul.bf16.gmra.mxu0 %v1026
  %v1449 = vpop.f32.mrf.mxu0
  %v1450 = vadd.f32 %v188, %v1449
  %v1451 = vpop.f32.mrf.mxu0
  %1452 = vdwg.mxu0
  %1453 = vmatpush.bf16.msra.mxu0 0
  %1454 = vmatpush.bf16.msra.mxu0 0
  %1455 = vmatpush.bf16.msra.mxu0 0
  %1456 = vmatpush.bf16.msra.mxu0 0
  %1457 = vmatpush.bf16.msra.mxu0 0
  %1458 = vmatpush.bf16.msra.mxu0 0
  %1459 = vmatpush.bf16.msra.mxu0 %v1051
  %1460 = vmatpush.bf16.msra.mxu0 %v698
  %1461 = vmatmul.bf16.gmra.mxu0 %v1026
  %v1462 = vpop.f32.mrf.mxu0
  %v1463 = vadd.f32 %v188, %v1462
  %v1464 = vpop.f32.mrf.mxu0
  %1465 = vdwg.mxu0
  %1466 = vmatpush.bf16.msra.mxu0 0
  %1467 = vmatpush.bf16.msra.mxu0 0
  %1468 = vmatpush.bf16.msra.mxu0 0
  %1469 = vmatpush.bf16.msra.mxu0 0
  %1470 = vmatpush.bf16.msra.mxu0 0
  %1471 = vmatpush.bf16.msra.mxu0 0
  %1472 = vmatpush.bf16.msra.mxu0 %v1054
  %1473 = vmatpush.bf16.msra.mxu0 %v699
  %1474 = vmatmul.bf16.gmra.mxu0 %v1026
  %v1475 = vpop.f32.mrf.mxu0
  %v1476 = vadd.f32 %v188, %v1475
  %v1477 = vpop.f32.mrf.mxu0
  %1478 = vdwg.mxu0
  %1479 = vmatpush.bf16.msra.mxu0 0
  %1480 = vmatpush.bf16.msra.mxu0 0
  %1481 = vmatpush.bf16.msra.mxu0 0
  %1482 = vmatpush.bf16.msra.mxu0 0
  %1483 = vmatpush.bf16.msra.mxu0 0
  %1484 = vmatpush.bf16.msra.mxu0 0
  %1485 = vmatpush.bf16.msra.mxu0 %v1057
  %1486 = vmatpush.bf16.msra.mxu0 %v700
  %1487 = vmatmul.bf16.gmra.mxu0 %v1026
  %v1488 = vpop.f32.mrf.mxu0
  %v1489 = vadd.f32 %v188, %v1488
  %v1490 = vpop.f32.mrf.mxu0
  %1491 = vdwg.mxu0
  %1492 = vmatpush.bf16.msra.mxu0 0
  %1493 = vmatpush.bf16.msra.mxu0 0
  %1494 = vmatpush.bf16.msra.mxu0 0
  %1495 = vmatpush.bf16.msra.mxu0 0
  %1496 = vmatpush.bf16.msra.mxu0 0
  %1497 = vmatpush.bf16.msra.mxu0 0
  %1498 = vmatpush.bf16.msra.mxu0 %v1060
  %1499 = vmatpush.bf16.msra.mxu0 %v701
  %1500 = vmatmul.bf16.gmra.mxu0 %v1026
  %v1501 = vpop.f32.mrf.mxu0
  %v1502 = vadd.f32 %v188, %v1501
  %v1503 = vpop.f32.mrf.mxu0
  %1504 = vdwg.mxu0
  %1505 = vmatpush.bf16.msra.mxu0 0
  %1506 = vmatpush.bf16.msra.mxu0 0
  %1507 = vmatpush.bf16.msra.mxu0 0
  %1508 = vmatpush.bf16.msra.mxu0 0
  %1509 = vmatpush.bf16.msra.mxu0 0
  %1510 = vmatpush.bf16.msra.mxu0 0
  %1511 = vmatpush.bf16.msra.mxu0 %v1063
  %1512 = vmatpush.bf16.msra.mxu0 %v702
  %1513 = vmatmul.bf16.gmra.mxu0 %v1026
  %v1514 = vpop.f32.mrf.mxu0
  %v1515 = vadd.f32 %v188, %v1514
  %v1516 = vpop.f32.mrf.mxu0
  %1517 = vdwg.mxu0
  %1518 = vmatpush.bf16.msra.mxu0 0
  %1519 = vmatpush.bf16.msra.mxu0 0
  %1520 = vmatpush.bf16.msra.mxu0 0
  %1521 = vmatpush.bf16.msra.mxu0 0
  %1522 = vmatpush.bf16.msra.mxu0 0
  %1523 = vmatpush.bf16.msra.mxu0 0
  %1524 = vmatpush.bf16.msra.mxu0 %v1066
  %1525 = vmatpush.bf16.msra.mxu0 %v703
  %1526 = vmatmul.bf16.gmra.mxu0 %v1026
  %v1527 = vpop.f32.mrf.mxu0
  %v1528 = vadd.f32 %v188, %v1527
  %v1529 = vpop.f32.mrf.mxu0
  %1530 = vdwg.mxu0
  %1531 = vmatpush.bf16.msra.mxu0 0
  %1532 = vmatpush.bf16.msra.mxu0 0
  %1533 = vmatpush.bf16.msra.mxu0 0
  %1534 = vmatpush.bf16.msra.mxu0 0
  %1535 = vmatpush.bf16.msra.mxu0 0
  %1536 = vmatpush.bf16.msra.mxu0 0
  %1537 = vmatpush.bf16.msra.mxu0 %v1069
  %1538 = vmatpush.bf16.msra.mxu0 %v704
  %1539 = vmatmul.bf16.gmra.mxu0 %v1026
  %v1540 = vpop.f32.mrf.mxu0
  %v1541 = vadd.f32 %v188, %v1540
  %v1542 = vpop.f32.mrf.mxu0
  %1543 = vdwg.mxu0
  %1544 = vmatpush.bf16.msra.mxu0 0
  %1545 = vmatpush.bf16.msra.mxu0 0
  %1546 = vmatpush.bf16.msra.mxu0 0
  %1547 = vmatpush.bf16.msra.mxu0 0
  %1548 = vmatpush.bf16.msra.mxu0 0
  %1549 = vmatpush.bf16.msra.mxu0 0
  %1550 = vmatpush.bf16.msra.mxu0 %v1072
  %1551 = vmatpush.bf16.msra.mxu0 %v705
  %1552 = vmatmul.bf16.gmra.mxu0 %v1026
  %v1553 = vpop.f32.mrf.mxu0
  %v1554 = vadd.f32 %v188, %v1553
  %v1555 = vpop.f32.mrf.mxu0
  %1556 = vdwg.mxu0
  %1557 = vmatpush.bf16.msra.mxu0 0
  %1558 = vmatpush.bf16.msra.mxu0 0
  %1559 = vmatpush.bf16.msra.mxu0 0
  %1560 = vmatpush.bf16.msra.mxu0 0
  %1561 = vmatpush.bf16.msra.mxu0 0
  %1562 = vmatpush.bf16.msra.mxu0 0
  %1563 = vmatpush.bf16.msra.mxu0 %v1075
  %1564 = vmatpush.bf16.msra.mxu0 %v706
  %1565 = vmatmul.bf16.gmra.mxu0 %v1026
  %v1566 = vpop.f32.mrf.mxu0
  %v1567 = vadd.f32 %v188, %v1566
  %v1568 = vpop.f32.mrf.mxu0
  %1569 = vdwg.mxu0
  %1570 = vmatpush.bf16.msra.mxu0 0
  %1571 = vmatpush.bf16.msra.mxu0 0
  %1572 = vmatpush.bf16.msra.mxu0 0
  %1573 = vmatpush.bf16.msra.mxu0 0
  %1574 = vmatpush.bf16.msra.mxu0 0
  %1575 = vmatpush.bf16.msra.mxu0 0
  %1576 = vmatpush.bf16.msra.mxu0 %v1078
  %1577 = vmatpush.bf16.msra.mxu0 %v707
  %1578 = vmatmul.bf16.gmra.mxu0 %v1026
  %v1579 = vpop.f32.mrf.mxu0
  %v1580 = vadd.f32 %v188, %v1579
  %v1581 = vpop.f32.mrf.mxu0
  %1582 = vdwg.mxu0
  %1583 = vmatpush.bf16.msra.mxu0 0
  %1584 = vmatpush.bf16.msra.mxu0 0
  %1585 = vmatpush.bf16.msra.mxu0 0
  %1586 = vmatpush.bf16.msra.mxu0 0
  %1587 = vmatpush.bf16.msra.mxu0 0
  %1588 = vmatpush.bf16.msra.mxu0 0
  %1589 = vmatpush.bf16.msra.mxu0 %v1081
  %1590 = vmatpush.bf16.msra.mxu0 %v708
  %1591 = vmatmul.bf16.gmra.mxu0 %v1026
  %v1592 = vpop.f32.mrf.mxu0
  %v1593 = vadd.f32 %v188, %v1592
  %v1594 = vpop.f32.mrf.mxu0
  %1595 = vdwg.mxu0
  %1596 = vmatpush.bf16.msra.mxu0 0
  %1597 = vmatpush.bf16.msra.mxu0 0
  %1598 = vmatpush.bf16.msra.mxu0 0
  %1599 = vmatpush.bf16.msra.mxu0 0
  %1600 = vmatpush.bf16.msra.mxu0 0
  %1601 = vmatpush.bf16.msra.mxu0 0
  %1602 = vmatpush.bf16.msra.mxu0 %v1084
  %1603 = vmatpush.bf16.msra.mxu0 %v709
  %1604 = vmatmul.bf16.gmra.mxu0 %v1026
  %v1605 = vpop.f32.mrf.mxu0
  %v1606 = vadd.f32 %v188, %v1605
  %v1607 = vpop.f32.mrf.mxu0
  %1608 = vdwg.mxu0
  %1609 = vmatpush.bf16.msra.mxu0 0
  %1610 = vmatpush.bf16.msra.mxu0 0
  %1611 = vmatpush.bf16.msra.mxu0 0
  %1612 = vmatpush.bf16.msra.mxu0 0
  %1613 = vmatpush.bf16.msra.mxu0 0
  %1614 = vmatpush.bf16.msra.mxu0 0
  %1615 = vmatpush.bf16.msra.mxu0 %v1087
  %1616 = vmatpush.bf16.msra.mxu0 %v710
  %1617 = vmatmul.bf16.gmra.mxu0 %v1026
  %v1618 = vpop.f32.mrf.mxu0
  %v1619 = vadd.f32 %v188, %v1618
  %v1620 = vpop.f32.mrf.mxu0
  %1621 = vdwg.mxu0
  %1622 = vmatpush.bf16.msra.mxu0 0
  %1623 = vmatpush.bf16.msra.mxu0 0
  %1624 = vmatpush.bf16.msra.mxu0 0
  %1625 = vmatpush.bf16.msra.mxu0 0
  %1626 = vmatpush.bf16.msra.mxu0 0
  %1627 = vmatpush.bf16.msra.mxu0 0
  %1628 = vmatpush.bf16.msra.mxu0 %v1090
  %1629 = vmatpush.bf16.msra.mxu0 %v711
  %1630 = vmatmul.bf16.gmra.mxu0 %v1026
  %v1631 = vpop.f32.mrf.mxu0
  %v1632 = vadd.f32 %v188, %v1631
  %v1633 = vpop.f32.mrf.mxu0
  %1634 = vdwg.mxu0
  %1635 = vmatpush.bf16.msra.mxu0 0
  %1636 = vmatpush.bf16.msra.mxu0 0
  %1637 = vmatpush.bf16.msra.mxu0 0
  %1638 = vmatpush.bf16.msra.mxu0 0
  %1639 = vmatpush.bf16.msra.mxu0 0
  %1640 = vmatpush.bf16.msra.mxu0 0
  %1641 = vmatpush.bf16.msra.mxu0 %v1093
  %1642 = vmatpush.bf16.msra.mxu0 %v712
  %1643 = vmatmul.bf16.gmra.mxu0 %v1026
  %v1644 = vpop.f32.mrf.mxu0
  %v1645 = vadd.f32 %v188, %v1644
  %v1646 = vpop.f32.mrf.mxu0
  %1647 = vdwg.mxu0
  %1648 = vmatpush.bf16.msra.mxu0 0
  %1649 = vmatpush.bf16.msra.mxu0 0
  %1650 = vmatpush.bf16.msra.mxu0 0
  %1651 = vmatpush.bf16.msra.mxu0 0
  %1652 = vmatpush.bf16.msra.mxu0 0
  %1653 = vmatpush.bf16.msra.mxu0 0
  %1654 = vmatpush.bf16.msra.mxu0 %v1096
  %1655 = vmatpush.bf16.msra.mxu0 %v713
  %1656 = vmatmul.bf16.gmra.mxu0 %v1026
  %v1657 = vpop.f32.mrf.mxu0
  %v1658 = vadd.f32 %v188, %v1657
  %v1659 = vpop.f32.mrf.mxu0
  %1660 = vdwg.mxu0
  %1661 = vmatpush.bf16.msra.mxu0 0
  %1662 = vmatpush.bf16.msra.mxu0 0
  %1663 = vmatpush.bf16.msra.mxu0 0
  %1664 = vmatpush.bf16.msra.mxu0 0
  %1665 = vmatpush.bf16.msra.mxu0 0
  %1666 = vmatpush.bf16.msra.mxu0 0
  %1667 = vmatpush.bf16.msra.mxu0 %v1099
  %1668 = vmatpush.bf16.msra.mxu0 %v714
  %1669 = vmatmul.bf16.gmra.mxu0 %v1026
  %v1670 = vpop.f32.mrf.mxu0
  %v1671 = vadd.f32 %v188, %v1670
  %v1672 = vpop.f32.mrf.mxu0
  %1673 = vdwg.mxu0
  %1674 = vmatpush.bf16.msra.mxu0 0
  %1675 = vmatpush.bf16.msra.mxu0 0
  %1676 = vmatpush.bf16.msra.mxu0 0
  %1677 = vmatpush.bf16.msra.mxu0 0
  %1678 = vmatpush.bf16.msra.mxu0 0
  %1679 = vmatpush.bf16.msra.mxu0 0
  %1680 = vmatpush.bf16.msra.mxu0 %v1102
  %1681 = vmatpush.bf16.msra.mxu0 %v715
  %1682 = vmatmul.bf16.gmra.mxu0 %v1026
  %v1683 = vpop.f32.mrf.mxu0
  %v1684 = vadd.f32 %v188, %v1683
  %v1685 = vpop.f32.mrf.mxu0
  %1686 = vdwg.mxu0
  %1687 = vmatpush.bf16.msra.mxu0 0
  %1688 = vmatpush.bf16.msra.mxu0 0
  %1689 = vmatpush.bf16.msra.mxu0 0
  %1690 = vmatpush.bf16.msra.mxu0 0
  %1691 = vmatpush.bf16.msra.mxu0 0
  %1692 = vmatpush.bf16.msra.mxu0 0
  %1693 = vmatpush.bf16.msra.mxu0 %v1105
  %1694 = vmatpush.bf16.msra.mxu0 %v716
  %1695 = vmatmul.bf16.gmra.mxu0 %v1026
  %v1696 = vpop.f32.mrf.mxu0
  %v1697 = vadd.f32 %v188, %v1696
  %v1698 = vpop.f32.mrf.mxu0
  %1699 = vdwg.mxu0
  %1700 = vmatpush.bf16.msra.mxu0 0
  %1701 = vmatpush.bf16.msra.mxu0 0
  %1702 = vmatpush.bf16.msra.mxu0 0
  %1703 = vmatpush.bf16.msra.mxu0 0
  %1704 = vmatpush.bf16.msra.mxu0 0
  %1705 = vmatpush.bf16.msra.mxu0 0
  %1706 = vmatpush.bf16.msra.mxu0 %v1108
  %1707 = vmatpush.bf16.msra.mxu0 %v717
  %1708 = vmatmul.bf16.gmra.mxu0 %v1026
  %v1709 = vpop.f32.mrf.mxu0
  %v1710 = vadd.f32 %v188, %v1709
  %v1711 = vpop.f32.mrf.mxu0
  %1712 = vdwg.mxu0
  %1713 = vmatpush.bf16.msra.mxu0 0
  %1714 = vmatpush.bf16.msra.mxu0 0
  %1715 = vmatpush.bf16.msra.mxu0 0
  %1716 = vmatpush.bf16.msra.mxu0 0
  %1717 = vmatpush.bf16.msra.mxu0 0
  %1718 = vmatpush.bf16.msra.mxu0 0
  %1719 = vmatpush.bf16.msra.mxu0 %v1111
  %1720 = vmatpush.bf16.msra.mxu0 %v718
  %1721 = vmatmul.bf16.gmra.mxu0 %v1026
  %v1722 = vpop.f32.mrf.mxu0
  %v1723 = vadd.f32 %v188, %v1722
  %v1724 = vpop.f32.mrf.mxu0
  %1725 = vdwg.mxu0
  %1726 = vmatpush.bf16.msra.mxu0 0
  %1727 = vmatpush.bf16.msra.mxu0 0
  %1728 = vmatpush.bf16.msra.mxu0 0
  %1729 = vmatpush.bf16.msra.mxu0 0
  %1730 = vmatpush.bf16.msra.mxu0 0
  %1731 = vmatpush.bf16.msra.mxu0 0
  %1732 = vmatpush.bf16.msra.mxu0 %v1114
  %1733 = vmatpush.bf16.msra.mxu0 %v719
  %1734 = vmatmul.bf16.gmra.mxu0 %v1026
  %v1735 = vpop.f32.mrf.mxu0
  %v1736 = vadd.f32 %v188, %v1735
  %v1737 = vpop.f32.mrf.mxu0
  %1738 = vdwg.mxu0
  %1739 = vmatpush.bf16.msra.mxu0 0
  %1740 = vmatpush.bf16.msra.mxu0 0
  %1741 = vmatpush.bf16.msra.mxu0 0
  %1742 = vmatpush.bf16.msra.mxu0 0
  %1743 = vmatpush.bf16.msra.mxu0 0
  %1744 = vmatpush.bf16.msra.mxu0 0
  %1745 = vmatpush.bf16.msra.mxu0 %v1117
  %1746 = vmatpush.bf16.msra.mxu0 %v720
  %1747 = vmatmul.bf16.gmra.mxu0 %v1026
  %v1748 = vpop.f32.mrf.mxu0
  %v1749 = vadd.f32 %v188, %v1748
  %v1750 = vpop.f32.mrf.mxu0
  %1751 = vdwg.mxu0
  %1752 = vmatpush.bf16.msra.mxu0 0
  %1753 = vmatpush.bf16.msra.mxu0 0
  %1754 = vmatpush.bf16.msra.mxu0 0
  %1755 = vmatpush.bf16.msra.mxu0 0
  %1756 = vmatpush.bf16.msra.mxu0 0
  %1757 = vmatpush.bf16.msra.mxu0 0
  %1758 = vmatpush.bf16.msra.mxu0 %v1120
  %1759 = vmatpush.bf16.msra.mxu0 %v721
  %1760 = vmatmul.bf16.gmra.mxu0 %v1026
  %v1761 = vpop.f32.mrf.mxu0
  %v1762 = vadd.f32 %v188, %v1761
  %v1763 = vpop.f32.mrf.mxu0
  %1764 = vdwg.mxu0
  %1765 = vmatpush.bf16.msra.mxu0 0
  %1766 = vmatpush.bf16.msra.mxu0 0
  %1767 = vmatpush.bf16.msra.mxu0 0
  %1768 = vmatpush.bf16.msra.mxu0 0
  %1769 = vmatpush.bf16.msra.mxu0 0
  %1770 = vmatpush.bf16.msra.mxu0 0
  %1771 = vmatpush.bf16.msra.mxu0 %v1123
  %1772 = vmatpush.bf16.msra.mxu0 %v722
  %1773 = vmatmul.bf16.gmra.mxu0 %v1026
  %v1774 = vpop.f32.mrf.mxu0
  %v1775 = vadd.f32 %v188, %v1774
  %v1776 = vpop.f32.mrf.mxu0
  %1777 = vdwg.mxu0
  %1778 = vmatpush.bf16.msra.mxu0 0
  %1779 = vmatpush.bf16.msra.mxu0 0
  %1780 = vmatpush.bf16.msra.mxu0 0
  %1781 = vmatpush.bf16.msra.mxu0 0
  %1782 = vmatpush.bf16.msra.mxu0 0
  %1783 = vmatpush.bf16.msra.mxu0 0
  %1784 = vmatpush.bf16.msra.mxu0 %v1126
  %1785 = vmatpush.bf16.msra.mxu0 %v723
  %1786 = vmatmul.bf16.gmra.mxu0 %v1026
  %v1787 = vpop.f32.mrf.mxu0
  %v1788 = vadd.f32 %v188, %v1787
  %v1789 = vpop.f32.mrf.mxu0
  %1790 = vdwg.mxu0
  %1791 = vmatpush.bf16.msra.mxu0 0
  %1792 = vmatpush.bf16.msra.mxu0 0
  %1793 = vmatpush.bf16.msra.mxu0 0
  %1794 = vmatpush.bf16.msra.mxu0 0
  %1795 = vmatpush.bf16.msra.mxu0 0
  %1796 = vmatpush.bf16.msra.mxu0 0
  %1797 = vmatpush.bf16.msra.mxu0 %v1129
  %1798 = vmatpush.bf16.msra.mxu0 %v724
  %1799 = vmatmul.bf16.gmra.mxu0 %v1026
  %v1800 = vpop.f32.mrf.mxu0
  %v1801 = vadd.f32 %v188, %v1800
  %v1802 = vpop.f32.mrf.mxu0
  %1803 = vdwg.mxu0
  %1804 = vmatpush.bf16.msra.mxu0 0
  %1805 = vmatpush.bf16.msra.mxu0 0
  %1806 = vmatpush.bf16.msra.mxu0 0
  %1807 = vmatpush.bf16.msra.mxu0 0
  %1808 = vmatpush.bf16.msra.mxu0 0
  %1809 = vmatpush.bf16.msra.mxu0 0
  %1810 = vmatpush.bf16.msra.mxu0 %v1132
  %1811 = vmatpush.bf16.msra.mxu0 %v725
  %1812 = vmatmul.bf16.gmra.mxu0 %v1026
  %v1813 = vpop.f32.mrf.mxu0
  %v1814 = vadd.f32 %v188, %v1813
  %v1815 = vpop.f32.mrf.mxu0
  %1816 = vdwg.mxu0
  %1817 = vmatpush.bf16.msra.mxu0 0
  %1818 = vmatpush.bf16.msra.mxu0 0
  %1819 = vmatpush.bf16.msra.mxu0 0
  %1820 = vmatpush.bf16.msra.mxu0 0
  %1821 = vmatpush.bf16.msra.mxu0 0
  %1822 = vmatpush.bf16.msra.mxu0 0
  %1823 = vmatpush.bf16.msra.mxu0 %v1135
  %1824 = vmatpush.bf16.msra.mxu0 %v726
  %1825 = vmatmul.bf16.gmra.mxu0 %v1026
  %v1826 = vpop.f32.mrf.mxu0
  %v1827 = vadd.f32 %v188, %v1826
  %v1828 = vpop.f32.mrf.mxu0
  %1829 = vdwg.mxu0
  %1830 = vmatpush.bf16.msra.mxu0 0
  %1831 = vmatpush.bf16.msra.mxu0 0
  %1832 = vmatpush.bf16.msra.mxu0 0
  %1833 = vmatpush.bf16.msra.mxu0 0
  %1834 = vmatpush.bf16.msra.mxu0 0
  %1835 = vmatpush.bf16.msra.mxu0 0
  %1836 = vmatpush.bf16.msra.mxu0 %v1138
  %1837 = vmatpush.bf16.msra.mxu0 %v727
  %1838 = vmatmul.bf16.gmra.mxu0 %v1026
  %v1839 = vpop.f32.mrf.mxu0
  %v1840 = vadd.f32 %v188, %v1839
  %v1841 = vpop.f32.mrf.mxu0
  %1842 = vdwg.mxu0
  %1843 = vmatpush.bf16.msra.mxu0 0
  %1844 = vmatpush.bf16.msra.mxu0 0
  %1845 = vmatpush.bf16.msra.mxu0 0
  %1846 = vmatpush.bf16.msra.mxu0 0
  %1847 = vmatpush.bf16.msra.mxu0 0
  %1848 = vmatpush.bf16.msra.mxu0 0
  %1849 = vmatpush.bf16.msra.mxu0 %v1141
  %1850 = vmatpush.bf16.msra.mxu0 %v728
  %1851 = vmatmul.bf16.gmra.mxu0 %v1026
  %v1852 = vpop.f32.mrf.mxu0
  %v1853 = vadd.f32 %v188, %v1852
  %v1854 = vpop.f32.mrf.mxu0
  %1855 = vdwg.mxu0
  %1856 = vmatpush.bf16.msra.mxu0 0
  %1857 = vmatpush.bf16.msra.mxu0 0
  %1858 = vmatpush.bf16.msra.mxu0 0
  %1859 = vmatpush.bf16.msra.mxu0 0
  %1860 = vmatpush.bf16.msra.mxu0 0
  %1861 = vmatpush.bf16.msra.mxu0 0
  %1862 = vmatpush.bf16.msra.mxu0 %v1144
  %1863 = vmatpush.bf16.msra.mxu0 %v729
  %1864 = vmatmul.bf16.gmra.mxu0 %v1026
  %v1865 = vpop.f32.mrf.mxu0
  %v1866 = vadd.f32 %v188, %v1865
  %v1867 = vpop.f32.mrf.mxu0
  %1868 = vdwg.mxu0
  %1869 = vmatpush.bf16.msra.mxu0 0
  %1870 = vmatpush.bf16.msra.mxu0 0
  %1871 = vmatpush.bf16.msra.mxu0 0
  %1872 = vmatpush.bf16.msra.mxu0 0
  %1873 = vmatpush.bf16.msra.mxu0 0
  %1874 = vmatpush.bf16.msra.mxu0 0
  %1875 = vmatpush.bf16.msra.mxu0 %v1147
  %1876 = vmatpush.bf16.msra.mxu0 %v730
  %1877 = vmatmul.bf16.gmra.mxu0 %v1026
  %v1878 = vpop.f32.mrf.mxu0
  %v1879 = vadd.f32 %v188, %v1878
  %v1880 = vpop.f32.mrf.mxu0
  %1881 = vdwg.mxu0
  %1882 = vmatpush.bf16.msra.mxu0 0
  %1883 = vmatpush.bf16.msra.mxu0 0
  %1884 = vmatpush.bf16.msra.mxu0 0
  %1885 = vmatpush.bf16.msra.mxu0 0
  %1886 = vmatpush.bf16.msra.mxu0 0
  %1887 = vmatpush.bf16.msra.mxu0 0
  %1888 = vmatpush.bf16.msra.mxu0 %v1150
  %1889 = vmatpush.bf16.msra.mxu0 %v731
  %1890 = vmatmul.bf16.gmra.mxu0 %v1026
  %v1891 = vpop.f32.mrf.mxu0
  %v1892 = vadd.f32 %v188, %v1891
  %v1893 = vpop.f32.mrf.mxu0
  %1894 = vdwg.mxu0
  %1895 = vmatpush.bf16.msra.mxu0 0
  %1896 = vmatpush.bf16.msra.mxu0 0
  %1897 = vmatpush.bf16.msra.mxu0 0
  %1898 = vmatpush.bf16.msra.mxu0 0
  %1899 = vmatpush.bf16.msra.mxu0 0
  %1900 = vmatpush.bf16.msra.mxu0 0
  %1901 = vmatpush.bf16.msra.mxu0 %v1153
  %1902 = vmatpush.bf16.msra.mxu0 %v732
  %1903 = vmatmul.bf16.gmra.mxu0 %v1026
  %v1904 = vpop.f32.mrf.mxu0
  %v1905 = vadd.f32 %v188, %v1904
  %v1906 = vpop.f32.mrf.mxu0
  %1907 = vdwg.mxu0
  %1908 = vmatpush.bf16.msra.mxu0 0
  %1909 = vmatpush.bf16.msra.mxu0 0
  %1910 = vmatpush.bf16.msra.mxu0 0
  %1911 = vmatpush.bf16.msra.mxu0 0
  %1912 = vmatpush.bf16.msra.mxu0 0
  %1913 = vmatpush.bf16.msra.mxu0 0
  %1914 = vmatpush.bf16.msra.mxu0 %v1156
  %1915 = vmatpush.bf16.msra.mxu0 %v733
  %1916 = vmatmul.bf16.gmra.mxu0 %v1026
  %v1917 = vpop.f32.mrf.mxu0
  %v1918 = vadd.f32 %v188, %v1917
  %v1919 = vpop.f32.mrf.mxu0
  %1920 = vdwg.mxu0
  %1921 = vmatpush.bf16.msra.mxu0 0
  %1922 = vmatpush.bf16.msra.mxu0 0
  %1923 = vmatpush.bf16.msra.mxu0 0
  %1924 = vmatpush.bf16.msra.mxu0 0
  %1925 = vmatpush.bf16.msra.mxu0 0
  %1926 = vmatpush.bf16.msra.mxu0 0
  %1927 = vmatpush.bf16.msra.mxu0 %v1159
  %1928 = vmatpush.bf16.msra.mxu0 %v734
  %1929 = vmatmul.bf16.gmra.mxu0 %v1026
  %v1930 = vpop.f32.mrf.mxu0
  %v1931 = vadd.f32 %v188, %v1930
  %v1932 = vpop.f32.mrf.mxu0
  %1933 = vdwg.mxu0
  %1934 = vmatpush.bf16.msra.mxu0 0
  %1935 = vmatpush.bf16.msra.mxu0 0
  %1936 = vmatpush.bf16.msra.mxu0 0
  %1937 = vmatpush.bf16.msra.mxu0 0
  %1938 = vmatpush.bf16.msra.mxu0 0
  %1939 = vmatpush.bf16.msra.mxu0 0
  %1940 = vmatpush.bf16.msra.mxu0 %v1162
  %1941 = vmatpush.bf16.msra.mxu0 %v735
  %1942 = vmatmul.bf16.gmra.mxu0 %v1026
  %v1943 = vpop.f32.mrf.mxu0
  %v1944 = vadd.f32 %v188, %v1943
  %v1945 = vpop.f32.mrf.mxu0
  %1946 = vdwg.mxu0
  %1947 = vmatpush.bf16.msra.mxu0 0
  %1948 = vmatpush.bf16.msra.mxu0 0
  %1949 = vmatpush.bf16.msra.mxu0 0
  %1950 = vmatpush.bf16.msra.mxu0 0
  %1951 = vmatpush.bf16.msra.mxu0 0
  %1952 = vmatpush.bf16.msra.mxu0 0
  %1953 = vmatpush.bf16.msra.mxu0 %v1165
  %1954 = vmatpush.bf16.msra.mxu0 %v736
  %1955 = vmatmul.bf16.gmra.mxu0 %v1026
  %v1956 = vpop.f32.mrf.mxu0
  %v1957 = vadd.f32 %v188, %v1956
  %v1958 = vpop.f32.mrf.mxu0
  %1959 = vdwg.mxu0
  %1960 = vmatpush.bf16.msra.mxu0 0
  %1961 = vmatpush.bf16.msra.mxu0 0
  %1962 = vmatpush.bf16.msra.mxu0 0
  %1963 = vmatpush.bf16.msra.mxu0 0
  %1964 = vmatpush.bf16.msra.mxu0 0
  %1965 = vmatpush.bf16.msra.mxu0 0
  %1966 = vmatpush.bf16.msra.mxu0 %v1168
  %1967 = vmatpush.bf16.msra.mxu0 %v737
  %1968 = vmatmul.bf16.gmra.mxu0 %v1026
  %v1969 = vpop.f32.mrf.mxu0
  %v1970 = vadd.f32 %v188, %v1969
  %v1971 = vpop.f32.mrf.mxu0
  %1972 = vdwg.mxu0
  %1973 = vmatpush.bf16.msra.mxu0 0
  %1974 = vmatpush.bf16.msra.mxu0 0
  %1975 = vmatpush.bf16.msra.mxu0 0
  %1976 = vmatpush.bf16.msra.mxu0 0
  %1977 = vmatpush.bf16.msra.mxu0 0
  %1978 = vmatpush.bf16.msra.mxu0 0
  %1979 = vmatpush.bf16.msra.mxu0 %v1171
  %1980 = vmatpush.bf16.msra.mxu0 %v738
  %1981 = vmatmul.bf16.gmra.mxu0 %v1026
  %v1982 = vpop.f32.mrf.mxu0
  %v1983 = vadd.f32 %v188, %v1982
  %v1984 = vpop.f32.mrf.mxu0
  %1985 = vdwg.mxu0
  %1986 = vmatpush.bf16.msra.mxu0 0
  %1987 = vmatpush.bf16.msra.mxu0 0
  %1988 = vmatpush.bf16.msra.mxu0 0
  %1989 = vmatpush.bf16.msra.mxu0 0
  %1990 = vmatpush.bf16.msra.mxu0 0
  %1991 = vmatpush.bf16.msra.mxu0 0
  %1992 = vmatpush.bf16.msra.mxu0 %v1174
  %1993 = vmatpush.bf16.msra.mxu0 %v739
  %1994 = vmatmul.bf16.gmra.mxu0 %v1026
  %v1995 = vpop.f32.mrf.mxu0
  %v1996 = vadd.f32 %v188, %v1995
  %v1997 = vpop.f32.mrf.mxu0
  %1998 = vdwg.mxu0
  %1999 = vmatpush.bf16.msra.mxu0 0
  %2000 = vmatpush.bf16.msra.mxu0 0
  %2001 = vmatpush.bf16.msra.mxu0 0
  %2002 = vmatpush.bf16.msra.mxu0 0
  %2003 = vmatpush.bf16.msra.mxu0 0
  %2004 = vmatpush.bf16.msra.mxu0 0
  %2005 = vmatpush.bf16.msra.mxu0 %v1177
  %2006 = vmatpush.bf16.msra.mxu0 %v740
  %2007 = vmatmul.bf16.gmra.mxu0 %v1026
  %v2008 = vpop.f32.mrf.mxu0
  %v2009 = vadd.f32 %v188, %v2008
  %v2010 = vpop.f32.mrf.mxu0
  %2011 = vdwg.mxu0
  %2012 = vmatpush.bf16.msra.mxu0 0
  %2013 = vmatpush.bf16.msra.mxu0 0
  %2014 = vmatpush.bf16.msra.mxu0 0
  %2015 = vmatpush.bf16.msra.mxu0 0
  %2016 = vmatpush.bf16.msra.mxu0 0
  %2017 = vmatpush.bf16.msra.mxu0 0
  %2018 = vmatpush.bf16.msra.mxu0 %v1180
  %2019 = vmatpush.bf16.msra.mxu0 %v741
  %2020 = vmatmul.bf16.gmra.mxu0 %v1026
  %v2021 = vpop.f32.mrf.mxu0
  %v2022 = vadd.f32 %v188, %v2021
  %v2023 = vpop.f32.mrf.mxu0
  %2024 = vdwg.mxu0
  %2025 = vmatpush.bf16.msra.mxu0 0
  %2026 = vmatpush.bf16.msra.mxu0 0
  %2027 = vmatpush.bf16.msra.mxu0 0
  %2028 = vmatpush.bf16.msra.mxu0 0
  %2029 = vmatpush.bf16.msra.mxu0 0
  %2030 = vmatpush.bf16.msra.mxu0 0
  %2031 = vmatpush.bf16.msra.mxu0 %v1183
  %2032 = vmatpush.bf16.msra.mxu0 %v742
  %2033 = vmatmul.bf16.gmra.mxu0 %v1026
  %v2034 = vpop.f32.mrf.mxu0
  %v2035 = vadd.f32 %v188, %v2034
  %v2036 = vpop.f32.mrf.mxu0
  %2037 = vdwg.mxu0
  %2038 = vmatpush.bf16.msra.mxu0 0
  %2039 = vmatpush.bf16.msra.mxu0 0
  %2040 = vmatpush.bf16.msra.mxu0 0
  %2041 = vmatpush.bf16.msra.mxu0 0
  %2042 = vmatpush.bf16.msra.mxu0 0
  %2043 = vmatpush.bf16.msra.mxu0 0
  %2044 = vmatpush.bf16.msra.mxu0 %v1186
  %2045 = vmatpush.bf16.msra.mxu0 %v743
  %2046 = vmatmul.bf16.gmra.mxu0 %v1026
  %v2047 = vpop.f32.mrf.mxu0
  %v2048 = vadd.f32 %v188, %v2047
  %v2049 = vpop.f32.mrf.mxu0
  %2050 = vdwg.mxu0
  %2051 = vmatpush.bf16.msra.mxu0 0
  %2052 = vmatpush.bf16.msra.mxu0 0
  %2053 = vmatpush.bf16.msra.mxu0 0
  %2054 = vmatpush.bf16.msra.mxu0 0
  %2055 = vmatpush.bf16.msra.mxu0 0
  %2056 = vmatpush.bf16.msra.mxu0 0
  %2057 = vmatpush.bf16.msra.mxu0 %v1189
  %2058 = vmatpush.bf16.msra.mxu0 %v744
  %2059 = vmatmul.bf16.gmra.mxu0 %v1026
  %v2060 = vpop.f32.mrf.mxu0
  %v2061 = vadd.f32 %v188, %v2060
  %v2062 = vpop.f32.mrf.mxu0
  %2063 = vdwg.mxu0
  %2064 = vmatpush.bf16.msra.mxu0 0
  %2065 = vmatpush.bf16.msra.mxu0 0
  %2066 = vmatpush.bf16.msra.mxu0 0
  %2067 = vmatpush.bf16.msra.mxu0 0
  %2068 = vmatpush.bf16.msra.mxu0 0
  %2069 = vmatpush.bf16.msra.mxu0 0
  %2070 = vmatpush.bf16.msra.mxu0 %v1192
  %2071 = vmatpush.bf16.msra.mxu0 %v745
  %2072 = vmatmul.bf16.gmra.mxu0 %v1026
  %v2073 = vpop.f32.mrf.mxu0
  %v2074 = vadd.f32 %v188, %v2073
  %v2075 = vpop.f32.mrf.mxu0
  %2076 = vdwg.mxu0
  %2077 = vmatpush.bf16.msra.mxu0 0
  %2078 = vmatpush.bf16.msra.mxu0 0
  %2079 = vmatpush.bf16.msra.mxu0 0
  %2080 = vmatpush.bf16.msra.mxu0 0
  %2081 = vmatpush.bf16.msra.mxu0 0
  %2082 = vmatpush.bf16.msra.mxu0 0
  %2083 = vmatpush.bf16.msra.mxu0 %v1195
  %2084 = vmatpush.bf16.msra.mxu0 %v746
  %2085 = vmatmul.bf16.gmra.mxu0 %v1026
  %v2086 = vpop.f32.mrf.mxu0
  %v2087 = vadd.f32 %v188, %v2086
  %v2088 = vpop.f32.mrf.mxu0
  %2089 = vdwg.mxu0
  %2090 = vmatpush.bf16.msra.mxu0 0
  %2091 = vmatpush.bf16.msra.mxu0 0
  %2092 = vmatpush.bf16.msra.mxu0 0
  %2093 = vmatpush.bf16.msra.mxu0 0
  %2094 = vmatpush.bf16.msra.mxu0 0
  %2095 = vmatpush.bf16.msra.mxu0 0
  %2096 = vmatpush.bf16.msra.mxu0 %v1198
  %2097 = vmatpush.bf16.msra.mxu0 %v747
  %2098 = vmatmul.bf16.gmra.mxu0 %v1026
  %v2099 = vpop.f32.mrf.mxu0
  %v2100 = vadd.f32 %v188, %v2099
  %v2101 = vpop.f32.mrf.mxu0
  %2102 = vdwg.mxu0
  %2103 = vmatpush.bf16.msra.mxu0 0
  %2104 = vmatpush.bf16.msra.mxu0 0
  %2105 = vmatpush.bf16.msra.mxu0 0
  %2106 = vmatpush.bf16.msra.mxu0 0
  %2107 = vmatpush.bf16.msra.mxu0 0
  %2108 = vmatpush.bf16.msra.mxu0 0
  %2109 = vmatpush.bf16.msra.mxu0 %v1201
  %2110 = vmatpush.bf16.msra.mxu0 %v748
  %2111 = vmatmul.bf16.gmra.mxu0 %v1026
  %v2112 = vpop.f32.mrf.mxu0
  %v2113 = vadd.f32 %v188, %v2112
  %v2114 = vpop.f32.mrf.mxu0
  %2115 = vdwg.mxu0
  %2116 = vmatpush.bf16.msra.mxu0 0
  %2117 = vmatpush.bf16.msra.mxu0 0
  %2118 = vmatpush.bf16.msra.mxu0 0
  %2119 = vmatpush.bf16.msra.mxu0 0
  %2120 = vmatpush.bf16.msra.mxu0 0
  %2121 = vmatpush.bf16.msra.mxu0 0
  %2122 = vmatpush.bf16.msra.mxu0 %v1204
  %2123 = vmatpush.bf16.msra.mxu0 %v749
  %2124 = vmatmul.bf16.gmra.mxu0 %v1026
  %v2125 = vpop.f32.mrf.mxu0
  %v2126 = vadd.f32 %v188, %v2125
  %v2127 = vpop.f32.mrf.mxu0
  %2128 = vdwg.mxu0
  %2129 = vmatpush.bf16.msra.mxu0 0
  %2130 = vmatpush.bf16.msra.mxu0 0
  %2131 = vmatpush.bf16.msra.mxu0 0
  %2132 = vmatpush.bf16.msra.mxu0 0
  %2133 = vmatpush.bf16.msra.mxu0 0
  %2134 = vmatpush.bf16.msra.mxu0 0
  %2135 = vmatpush.bf16.msra.mxu0 %v1207
  %2136 = vmatpush.bf16.msra.mxu0 %v750
  %2137 = vmatmul.bf16.gmra.mxu0 %v1026
  %v2138 = vpop.f32.mrf.mxu0
  %v2139 = vadd.f32 %v188, %v2138
  %v2140 = vpop.f32.mrf.mxu0
  %2141 = vdwg.mxu0
  %2142 = vmatpush.bf16.msra.mxu0 0
  %2143 = vmatpush.bf16.msra.mxu0 0
  %2144 = vmatpush.bf16.msra.mxu0 0
  %2145 = vmatpush.bf16.msra.mxu0 0
  %2146 = vmatpush.bf16.msra.mxu0 0
  %2147 = vmatpush.bf16.msra.mxu0 0
  %2148 = vmatpush.bf16.msra.mxu0 %v1210
  %2149 = vmatpush.bf16.msra.mxu0 %v751
  %2150 = vmatmul.bf16.gmra.mxu0 %v1026
  %v2151 = vpop.f32.mrf.mxu0
  %v2152 = vadd.f32 %v188, %v2151
  %v2153 = vpop.f32.mrf.mxu0
  %2154 = vdwg.mxu0
  %2155 = vmatpush.bf16.msra.mxu0 0
  %2156 = vmatpush.bf16.msra.mxu0 0
  %2157 = vmatpush.bf16.msra.mxu0 0
  %2158 = vmatpush.bf16.msra.mxu0 0
  %2159 = vmatpush.bf16.msra.mxu0 0
  %2160 = vmatpush.bf16.msra.mxu0 0
  %2161 = vmatpush.bf16.msra.mxu0 %v1213
  %2162 = vmatpush.bf16.msra.mxu0 %v752
  %2163 = vmatmul.bf16.gmra.mxu0 %v1026
  %v2164 = vpop.f32.mrf.mxu0
  %v2165 = vadd.f32 %v188, %v2164
  %v2166 = vpop.f32.mrf.mxu0
  %2167 = vdwg.mxu0
  %2168 = vmatpush.bf16.msra.mxu0 0
  %2169 = vmatpush.bf16.msra.mxu0 0
  %2170 = vmatpush.bf16.msra.mxu0 0
  %2171 = vmatpush.bf16.msra.mxu0 0
  %2172 = vmatpush.bf16.msra.mxu0 0
  %2173 = vmatpush.bf16.msra.mxu0 0
  %2174 = vmatpush.bf16.msra.mxu0 %v1216
  %2175 = vmatpush.bf16.msra.mxu0 %v753
  %2176 = vmatmul.bf16.gmra.mxu0 %v1026
  %v2177 = vpop.f32.mrf.mxu0
  %v2178 = vadd.f32 %v188, %v2177
  %v2179 = vpop.f32.mrf.mxu0
  %2180 = vdwg.mxu0
  %2181 = vmatpush.bf16.msra.mxu0 0
  %2182 = vmatpush.bf16.msra.mxu0 0
  %2183 = vmatpush.bf16.msra.mxu0 0
  %2184 = vmatpush.bf16.msra.mxu0 0
  %2185 = vmatpush.bf16.msra.mxu0 0
  %2186 = vmatpush.bf16.msra.mxu0 0
  %2187 = vmatpush.bf16.msra.mxu0 %v1219
  %2188 = vmatpush.bf16.msra.mxu0 %v754
  %2189 = vmatmul.bf16.gmra.mxu0 %v1026
  %v2190 = vpop.f32.mrf.mxu0
  %v2191 = vadd.f32 %v188, %v2190
  %v2192 = vpop.f32.mrf.mxu0
  %2193 = vdwg.mxu0
  %2194 = vmatpush.bf16.msra.mxu0 0
  %2195 = vmatpush.bf16.msra.mxu0 0
  %2196 = vmatpush.bf16.msra.mxu0 0
  %2197 = vmatpush.bf16.msra.mxu0 0
  %2198 = vmatpush.bf16.msra.mxu0 0
  %2199 = vmatpush.bf16.msra.mxu0 0
  %2200 = vmatpush.bf16.msra.mxu0 %v1222
  %2201 = vmatpush.bf16.msra.mxu0 %v755
  %2202 = vmatmul.bf16.gmra.mxu0 %v1026
  %v2203 = vpop.f32.mrf.mxu0
  %v2204 = vadd.f32 %v188, %v2203
  %v2205 = vpop.f32.mrf.mxu0
  %2206 = vdwg.mxu0
  %2207 = vmatpush.bf16.msra.mxu0 0
  %2208 = vmatpush.bf16.msra.mxu0 0
  %2209 = vmatpush.bf16.msra.mxu0 0
  %2210 = vmatpush.bf16.msra.mxu0 0
  %2211 = vmatpush.bf16.msra.mxu0 0
  %2212 = vmatpush.bf16.msra.mxu0 0
  %2213 = vmatpush.bf16.msra.mxu0 %v1225
  %2214 = vmatpush.bf16.msra.mxu0 %v756
  %2215 = vmatmul.bf16.gmra.mxu0 %v1026
  %v2216 = vpop.f32.mrf.mxu0
  %v2217 = vadd.f32 %v188, %v2216
  %v2218 = vpop.f32.mrf.mxu0
  %2219 = vdwg.mxu0
  %2220 = vmatpush.bf16.msra.mxu0 0
  %2221 = vmatpush.bf16.msra.mxu0 0
  %2222 = vmatpush.bf16.msra.mxu0 0
  %2223 = vmatpush.bf16.msra.mxu0 0
  %2224 = vmatpush.bf16.msra.mxu0 0
  %2225 = vmatpush.bf16.msra.mxu0 0
  %2226 = vmatpush.bf16.msra.mxu0 %v1228
  %2227 = vmatpush.bf16.msra.mxu0 %v757
  %2228 = vmatmul.bf16.gmra.mxu0 %v1026
  %v2229 = vpop.f32.mrf.mxu0
  %v2230 = vadd.f32 %v188, %v2229
  %v2231 = vpop.f32.mrf.mxu0
  %2232 = vdwg.mxu0
  %2233 = vmatpush.bf16.msra.mxu0 0
  %2234 = vmatpush.bf16.msra.mxu0 0
  %2235 = vmatpush.bf16.msra.mxu0 0
  %2236 = vmatpush.bf16.msra.mxu0 0
  %2237 = vmatpush.bf16.msra.mxu0 0
  %2238 = vmatpush.bf16.msra.mxu0 0
  %2239 = vmatpush.bf16.msra.mxu0 %v1231
  %2240 = vmatpush.bf16.msra.mxu0 %v758
  %2241 = vmatmul.bf16.gmra.mxu0 %v1026
  %v2242 = vpop.f32.mrf.mxu0
  %v2243 = vadd.f32 %v188, %v2242
  %v2244 = vpop.f32.mrf.mxu0
  %2245 = vdwg.mxu0
  %2246 = vmatpush.bf16.msra.mxu0 0
  %2247 = vmatpush.bf16.msra.mxu0 0
  %2248 = vmatpush.bf16.msra.mxu0 0
  %2249 = vmatpush.bf16.msra.mxu0 0
  %2250 = vmatpush.bf16.msra.mxu0 0
  %2251 = vmatpush.bf16.msra.mxu0 0
  %2252 = vmatpush.bf16.msra.mxu0 %v1234
  %2253 = vmatpush.bf16.msra.mxu0 %v759
  %2254 = vmatmul.bf16.gmra.mxu0 %v1026
  %v2255 = vpop.f32.mrf.mxu0
  %v2256 = vadd.f32 %v188, %v2255
  %v2257 = vpop.f32.mrf.mxu0
  %2258 = vdwg.mxu0
  %2259 = vmatpush.bf16.msra.mxu0 0
  %2260 = vmatpush.bf16.msra.mxu0 0
  %2261 = vmatpush.bf16.msra.mxu0 0
  %2262 = vmatpush.bf16.msra.mxu0 0
  %2263 = vmatpush.bf16.msra.mxu0 0
  %2264 = vmatpush.bf16.msra.mxu0 0
  %2265 = vmatpush.bf16.msra.mxu0 %v1237
  %2266 = vmatpush.bf16.msra.mxu0 %v760
  %2267 = vmatmul.bf16.gmra.mxu0 %v1026
  %v2268 = vpop.f32.mrf.mxu0
  %v2269 = vadd.f32 %v188, %v2268
  %v2270 = vpop.f32.mrf.mxu0
  %2271 = vdwg.mxu0
  %2272 = vmatpush.bf16.msra.mxu0 0
  %2273 = vmatpush.bf16.msra.mxu0 0
  %2274 = vmatpush.bf16.msra.mxu0 0
  %2275 = vmatpush.bf16.msra.mxu0 0
  %2276 = vmatpush.bf16.msra.mxu0 0
  %2277 = vmatpush.bf16.msra.mxu0 0
  %2278 = vmatpush.bf16.msra.mxu0 %v1240
  %2279 = vmatpush.bf16.msra.mxu0 %v761
  %2280 = vmatmul.bf16.gmra.mxu0 %v1026
  %v2281 = vpop.f32.mrf.mxu0
  %v2282 = vadd.f32 %v188, %v2281
  %v2283 = vpop.f32.mrf.mxu0
  %2284 = vdwg.mxu0
  %2285 = vmatpush.bf16.msra.mxu0 0
  %2286 = vmatpush.bf16.msra.mxu0 0
  %2287 = vmatpush.bf16.msra.mxu0 0
  %2288 = vmatpush.bf16.msra.mxu0 0
  %2289 = vmatpush.bf16.msra.mxu0 0
  %2290 = vmatpush.bf16.msra.mxu0 0
  %2291 = vmatpush.bf16.msra.mxu0 %v1243
  %2292 = vmatpush.bf16.msra.mxu0 %v762
  %2293 = vmatmul.bf16.gmra.mxu0 %v1026
  %v2294 = vpop.f32.mrf.mxu0
  %v2295 = vadd.f32 %v188, %v2294
  %v2296 = vpop.f32.mrf.mxu0
  %2297 = vdwg.mxu0
  %2298 = vmatpush.bf16.msra.mxu0 0
  %2299 = vmatpush.bf16.msra.mxu0 0
  %2300 = vmatpush.bf16.msra.mxu0 0
  %2301 = vmatpush.bf16.msra.mxu0 0
  %2302 = vmatpush.bf16.msra.mxu0 0
  %2303 = vmatpush.bf16.msra.mxu0 0
  %2304 = vmatpush.bf16.msra.mxu0 %v1246
  %2305 = vmatpush.bf16.msra.mxu0 %v763
  %2306 = vmatmul.bf16.gmra.mxu0 %v1026
  %v2307 = vpop.f32.mrf.mxu0
  %v2308 = vadd.f32 %v188, %v2307
  %v2309 = vpop.f32.mrf.mxu0
  %2310 = vdwg.mxu0
  %2311 = vmatpush.bf16.msra.mxu0 0
  %2312 = vmatpush.bf16.msra.mxu0 0
  %2313 = vmatpush.bf16.msra.mxu0 0
  %2314 = vmatpush.bf16.msra.mxu0 0
  %2315 = vmatpush.bf16.msra.mxu0 0
  %2316 = vmatpush.bf16.msra.mxu0 0
  %2317 = vmatpush.bf16.msra.mxu0 %v1249
  %2318 = vmatpush.bf16.msra.mxu0 %v764
  %2319 = vmatmul.bf16.gmra.mxu0 %v1026
  %v2320 = vpop.f32.mrf.mxu0
  %v2321 = vadd.f32 %v188, %v2320
  %v2322 = vpop.f32.mrf.mxu0
  %2323 = vdwg.mxu0
  %2324 = vmatpush.bf16.msra.mxu0 0
  %2325 = vmatpush.bf16.msra.mxu0 0
  %2326 = vmatpush.bf16.msra.mxu0 0
  %2327 = vmatpush.bf16.msra.mxu0 0
  %2328 = vmatpush.bf16.msra.mxu0 0
  %2329 = vmatpush.bf16.msra.mxu0 0
  %2330 = vmatpush.bf16.msra.mxu0 %v1252
  %2331 = vmatpush.bf16.msra.mxu0 %v765
  %2332 = vmatmul.bf16.gmra.mxu0 %v1026
  %v2333 = vpop.f32.mrf.mxu0
  %v2334 = vadd.f32 %v188, %v2333
  %v2335 = vpop.f32.mrf.mxu0
  %2336 = vdwg.mxu0
  %2337 = vmatpush.bf16.msra.mxu0 0
  %2338 = vmatpush.bf16.msra.mxu0 0
  %2339 = vmatpush.bf16.msra.mxu0 0
  %2340 = vmatpush.bf16.msra.mxu0 0
  %2341 = vmatpush.bf16.msra.mxu0 0
  %2342 = vmatpush.bf16.msra.mxu0 0
  %2343 = vmatpush.bf16.msra.mxu0 %v1255
  %2344 = vmatpush.bf16.msra.mxu0 %v766
  %2345 = vmatmul.bf16.gmra.mxu0 %v1026
  %v2346 = vpop.f32.mrf.mxu0
  %v2347 = vadd.f32 %v188, %v2346
  %v2348 = vpop.f32.mrf.mxu0
  %2349 = vdwg.mxu0
  %2350 = vmatpush.bf16.msra.mxu0 0
  %2351 = vmatpush.bf16.msra.mxu0 0
  %2352 = vmatpush.bf16.msra.mxu0 0
  %2353 = vmatpush.bf16.msra.mxu0 0
  %2354 = vmatpush.bf16.msra.mxu0 0
  %2355 = vmatpush.bf16.msra.mxu0 0
  %2356 = vmatpush.bf16.msra.mxu0 %v1258
  %2357 = vmatpush.bf16.msra.mxu0 %v767
  %2358 = vmatmul.bf16.gmra.mxu0 %v1026
  %v2359 = vpop.f32.mrf.mxu0
  %v2360 = vadd.f32 %v188, %v2359
  %v2361 = vpop.f32.mrf.mxu0
  %2362 = vdwg.mxu0
  %2363 = vmatpush.bf16.msra.mxu0 0
  %2364 = vmatpush.bf16.msra.mxu0 0
  %2365 = vmatpush.bf16.msra.mxu0 0
  %2366 = vmatpush.bf16.msra.mxu0 0
  %2367 = vmatpush.bf16.msra.mxu0 0
  %2368 = vmatpush.bf16.msra.mxu0 0
  %2369 = vmatpush.bf16.msra.mxu0 %v1261
  %2370 = vmatpush.bf16.msra.mxu0 %v768
  %2371 = vmatmul.bf16.gmra.mxu0 %v1026
  %v2372 = vpop.f32.mrf.mxu0
  %v2373 = vadd.f32 %v188, %v2372
  %v2374 = vpop.f32.mrf.mxu0
  %2375 = vdwg.mxu0
  %2376 = vmatpush.bf16.msra.mxu0 0
  %2377 = vmatpush.bf16.msra.mxu0 0
  %2378 = vmatpush.bf16.msra.mxu0 0
  %2379 = vmatpush.bf16.msra.mxu0 0
  %2380 = vmatpush.bf16.msra.mxu0 0
  %2381 = vmatpush.bf16.msra.mxu0 0
  %2382 = vmatpush.bf16.msra.mxu0 %v1264
  %2383 = vmatpush.bf16.msra.mxu0 %v769
  %2384 = vmatmul.bf16.gmra.mxu0 %v1026
  %v2385 = vpop.f32.mrf.mxu0
  %v2386 = vadd.f32 %v188, %v2385
  %v2387 = vpop.f32.mrf.mxu0
  %2388 = vdwg.mxu0
  %2389 = vmatpush.bf16.msra.mxu0 0
  %2390 = vmatpush.bf16.msra.mxu0 0
  %2391 = vmatpush.bf16.msra.mxu0 0
  %2392 = vmatpush.bf16.msra.mxu0 0
  %2393 = vmatpush.bf16.msra.mxu0 0
  %2394 = vmatpush.bf16.msra.mxu0 0
  %2395 = vmatpush.bf16.msra.mxu0 %v1267
  %2396 = vmatpush.bf16.msra.mxu0 %v770
  %2397 = vmatmul.bf16.gmra.mxu0 %v1026
  %v2398 = vpop.f32.mrf.mxu0
  %v2399 = vadd.f32 %v188, %v2398
  %v2400 = vpop.f32.mrf.mxu0
  %2401 = vdwg.mxu0
  %2402 = vmatpush.bf16.msra.mxu0 0
  %2403 = vmatpush.bf16.msra.mxu0 0
  %2404 = vmatpush.bf16.msra.mxu0 0
  %2405 = vmatpush.bf16.msra.mxu0 0
  %2406 = vmatpush.bf16.msra.mxu0 0
  %2407 = vmatpush.bf16.msra.mxu0 0
  %2408 = vmatpush.bf16.msra.mxu0 %v1270
  %2409 = vmatpush.bf16.msra.mxu0 %v771
  %2410 = vmatmul.bf16.gmra.mxu0 %v1026
  %v2411 = vpop.f32.mrf.mxu0
  %v2412 = vadd.f32 %v188, %v2411
  %v2413 = vpop.f32.mrf.mxu0
  %2414 = vdwg.mxu0
  %2415 = vmatpush.bf16.msra.mxu0 0
  %2416 = vmatpush.bf16.msra.mxu0 0
  %2417 = vmatpush.bf16.msra.mxu0 0
  %2418 = vmatpush.bf16.msra.mxu0 0
  %2419 = vmatpush.bf16.msra.mxu0 0
  %2420 = vmatpush.bf16.msra.mxu0 0
  %2421 = vmatpush.bf16.msra.mxu0 %v1273
  %2422 = vmatpush.bf16.msra.mxu0 %v772
  %2423 = vmatmul.bf16.gmra.mxu0 %v1026
  %v2424 = vpop.f32.mrf.mxu0
  %v2425 = vadd.f32 %v188, %v2424
  %v2426 = vpop.f32.mrf.mxu0
  %2427 = vdwg.mxu0
  %2428 = vmatpush.bf16.msra.mxu0 0
  %2429 = vmatpush.bf16.msra.mxu0 0
  %2430 = vmatpush.bf16.msra.mxu0 0
  %2431 = vmatpush.bf16.msra.mxu0 0
  %2432 = vmatpush.bf16.msra.mxu0 0
  %2433 = vmatpush.bf16.msra.mxu0 0
  %2434 = vmatpush.bf16.msra.mxu0 %v1276
  %2435 = vmatpush.bf16.msra.mxu0 %v773
  %2436 = vmatmul.bf16.gmra.mxu0 %v1026
  %v2437 = vpop.f32.mrf.mxu0
  %v2438 = vadd.f32 %v188, %v2437
  %v2439 = vpop.f32.mrf.mxu0
  %2440 = vdwg.mxu0
  %2441 = vmatpush.bf16.msra.mxu0 0
  %2442 = vmatpush.bf16.msra.mxu0 0
  %2443 = vmatpush.bf16.msra.mxu0 0
  %2444 = vmatpush.bf16.msra.mxu0 0
  %2445 = vmatpush.bf16.msra.mxu0 0
  %2446 = vmatpush.bf16.msra.mxu0 0
  %2447 = vmatpush.bf16.msra.mxu0 %v1279
  %2448 = vmatpush.bf16.msra.mxu0 %v774
  %2449 = vmatmul.bf16.gmra.mxu0 %v1026
  %v2450 = vpop.f32.mrf.mxu0
  %v2451 = vadd.f32 %v188, %v2450
  %v2452 = vpop.f32.mrf.mxu0
  %2453 = vdwg.mxu0
  %2454 = vmatpush.bf16.msra.mxu0 0
  %2455 = vmatpush.bf16.msra.mxu0 0
  %2456 = vmatpush.bf16.msra.mxu0 0
  %2457 = vmatpush.bf16.msra.mxu0 0
  %2458 = vmatpush.bf16.msra.mxu0 0
  %2459 = vmatpush.bf16.msra.mxu0 0
  %2460 = vmatpush.bf16.msra.mxu0 %v1282
  %2461 = vmatpush.bf16.msra.mxu0 %v775
  %2462 = vmatmul.bf16.gmra.mxu0 %v1026
  %v2463 = vpop.f32.mrf.mxu0
  %v2464 = vadd.f32 %v188, %v2463
  %v2465 = vpop.f32.mrf.mxu0
  %2466 = vdwg.mxu0
  %2467 = vmatpush.bf16.msra.mxu0 0
  %2468 = vmatpush.bf16.msra.mxu0 0
  %2469 = vmatpush.bf16.msra.mxu0 0
  %2470 = vmatpush.bf16.msra.mxu0 0
  %2471 = vmatpush.bf16.msra.mxu0 0
  %2472 = vmatpush.bf16.msra.mxu0 0
  %2473 = vmatpush.bf16.msra.mxu0 %v1285
  %2474 = vmatpush.bf16.msra.mxu0 %v776
  %2475 = vmatmul.bf16.gmra.mxu0 %v1026
  %v2476 = vpop.f32.mrf.mxu0
  %v2477 = vadd.f32 %v188, %v2476
  %v2478 = vpop.f32.mrf.mxu0
  %2479 = vdwg.mxu0
  %2480 = vmatpush.bf16.msra.mxu0 0
  %2481 = vmatpush.bf16.msra.mxu0 0
  %2482 = vmatpush.bf16.msra.mxu0 0
  %2483 = vmatpush.bf16.msra.mxu0 0
  %2484 = vmatpush.bf16.msra.mxu0 0
  %2485 = vmatpush.bf16.msra.mxu0 0
  %2486 = vmatpush.bf16.msra.mxu0 %v1288
  %2487 = vmatpush.bf16.msra.mxu0 %v777
  %2488 = vmatmul.bf16.gmra.mxu0 %v1026
  %v2489 = vpop.f32.mrf.mxu0
  %v2490 = vadd.f32 %v188, %v2489
  %v2491 = vpop.f32.mrf.mxu0
  %2492 = vdwg.mxu0
  %2493 = vmatpush.bf16.msra.mxu0 0
  %2494 = vmatpush.bf16.msra.mxu0 0
  %2495 = vmatpush.bf16.msra.mxu0 0
  %2496 = vmatpush.bf16.msra.mxu0 0
  %2497 = vmatpush.bf16.msra.mxu0 0
  %2498 = vmatpush.bf16.msra.mxu0 0
  %2499 = vmatpush.bf16.msra.mxu0 %v1291
  %2500 = vmatpush.bf16.msra.mxu0 %v778
  %2501 = vmatmul.bf16.gmra.mxu0 %v1026
  %v2502 = vpop.f32.mrf.mxu0
  %v2503 = vadd.f32 %v188, %v2502
  %v2504 = vpop.f32.mrf.mxu0
  %2505 = vdwg.mxu0
  %2506 = vmatpush.bf16.msra.mxu0 0
  %2507 = vmatpush.bf16.msra.mxu0 0
  %2508 = vmatpush.bf16.msra.mxu0 0
  %2509 = vmatpush.bf16.msra.mxu0 0
  %2510 = vmatpush.bf16.msra.mxu0 0
  %2511 = vmatpush.bf16.msra.mxu0 0
  %2512 = vmatpush.bf16.msra.mxu0 %v1294
  %2513 = vmatpush.bf16.msra.mxu0 %v779
  %2514 = vmatmul.bf16.gmra.mxu0 %v1026
  %v2515 = vpop.f32.mrf.mxu0
  %v2516 = vadd.f32 %v188, %v2515
  %v2517 = vpop.f32.mrf.mxu0
  %2518 = vdwg.mxu0
  %2519 = vmatpush.bf16.msra.mxu0 0
  %2520 = vmatpush.bf16.msra.mxu0 0
  %2521 = vmatpush.bf16.msra.mxu0 0
  %2522 = vmatpush.bf16.msra.mxu0 0
  %2523 = vmatpush.bf16.msra.mxu0 0
  %2524 = vmatpush.bf16.msra.mxu0 0
  %2525 = vmatpush.bf16.msra.mxu0 %v1297
  %2526 = vmatpush.bf16.msra.mxu0 %v780
  %2527 = vmatmul.bf16.gmra.mxu0 %v1026
  %v2528 = vpop.f32.mrf.mxu0
  %v2529 = vadd.f32 %v188, %v2528
  %v2530 = vpop.f32.mrf.mxu0
  %2531 = vdwg.mxu0
  %2532 = vmatpush.bf16.msra.mxu0 0
  %2533 = vmatpush.bf16.msra.mxu0 0
  %2534 = vmatpush.bf16.msra.mxu0 0
  %2535 = vmatpush.bf16.msra.mxu0 0
  %2536 = vmatpush.bf16.msra.mxu0 0
  %2537 = vmatpush.bf16.msra.mxu0 0
  %2538 = vmatpush.bf16.msra.mxu0 %v1300
  %2539 = vmatpush.bf16.msra.mxu0 %v781
  %2540 = vmatmul.bf16.gmra.mxu0 %v1026
  %v2541 = vpop.f32.mrf.mxu0
  %v2542 = vadd.f32 %v188, %v2541
  %v2543 = vpop.f32.mrf.mxu0
  %2544 = vdwg.mxu0
  %2545 = vmatpush.bf16.msra.mxu0 0
  %2546 = vmatpush.bf16.msra.mxu0 0
  %2547 = vmatpush.bf16.msra.mxu0 0
  %2548 = vmatpush.bf16.msra.mxu0 0
  %2549 = vmatpush.bf16.msra.mxu0 0
  %2550 = vmatpush.bf16.msra.mxu0 0
  %2551 = vmatpush.bf16.msra.mxu0 %v1303
  %2552 = vmatpush.bf16.msra.mxu0 %v782
  %2553 = vmatmul.bf16.gmra.mxu0 %v1026
  %v2554 = vpop.f32.mrf.mxu0
  %v2555 = vadd.f32 %v188, %v2554
  %v2556 = vpop.f32.mrf.mxu0
  %2557 = vdwg.mxu0
  %2558 = vmatpush.bf16.msra.mxu0 0
  %2559 = vmatpush.bf16.msra.mxu0 0
  %2560 = vmatpush.bf16.msra.mxu0 0
  %2561 = vmatpush.bf16.msra.mxu0 0
  %2562 = vmatpush.bf16.msra.mxu0 0
  %2563 = vmatpush.bf16.msra.mxu0 0
  %2564 = vmatpush.bf16.msra.mxu0 %v1306
  %2565 = vmatpush.bf16.msra.mxu0 %v783
  %2566 = vmatmul.bf16.gmra.mxu0 %v1026
  %v2567 = vpop.f32.mrf.mxu0
  %v2568 = vadd.f32 %v188, %v2567
  %v2569 = vpop.f32.mrf.mxu0
  %2570 = vdwg.mxu0
  %2571 = vmatpush.bf16.msra.mxu0 0
  %2572 = vmatpush.bf16.msra.mxu0 0
  %2573 = vmatpush.bf16.msra.mxu0 0
  %2574 = vmatpush.bf16.msra.mxu0 0
  %2575 = vmatpush.bf16.msra.mxu0 0
  %2576 = vmatpush.bf16.msra.mxu0 0
  %2577 = vmatpush.bf16.msra.mxu0 %v1309
  %2578 = vmatpush.bf16.msra.mxu0 %v784
  %2579 = vmatmul.bf16.gmra.mxu0 %v1026
  %v2580 = vpop.f32.mrf.mxu0
  %v2581 = vadd.f32 %v188, %v2580
  %v2582 = vpop.f32.mrf.mxu0
  %2583 = vdwg.mxu0
  %2584 = vmatpush.bf16.msra.mxu0 0
  %2585 = vmatpush.bf16.msra.mxu0 0
  %2586 = vmatpush.bf16.msra.mxu0 0
  %2587 = vmatpush.bf16.msra.mxu0 0
  %2588 = vmatpush.bf16.msra.mxu0 0
  %2589 = vmatpush.bf16.msra.mxu0 0
  %2590 = vmatpush.bf16.msra.mxu0 %v1312
  %2591 = vmatpush.bf16.msra.mxu0 %v785
  %2592 = vmatmul.bf16.gmra.mxu0 %v1026
  %v2593 = vpop.f32.mrf.mxu0
  %v2594 = vadd.f32 %v188, %v2593
  %v2595 = vpop.f32.mrf.mxu0
  %2596 = vdwg.mxu0
  %2597 = vmatpush.bf16.msra.mxu0 0
  %2598 = vmatpush.bf16.msra.mxu0 0
  %2599 = vmatpush.bf16.msra.mxu0 0
  %2600 = vmatpush.bf16.msra.mxu0 0
  %2601 = vmatpush.bf16.msra.mxu0 0
  %2602 = vmatpush.bf16.msra.mxu0 0
  %2603 = vmatpush.bf16.msra.mxu0 %v1315
  %2604 = vmatpush.bf16.msra.mxu0 %v786
  %2605 = vmatmul.bf16.gmra.mxu0 %v1026
  %v2606 = vpop.f32.mrf.mxu0
  %v2607 = vadd.f32 %v188, %v2606
  %v2608 = vpop.f32.mrf.mxu0
  %2609 = vdwg.mxu0
  %2610 = vmatpush.bf16.msra.mxu0 0
  %2611 = vmatpush.bf16.msra.mxu0 0
  %2612 = vmatpush.bf16.msra.mxu0 0
  %2613 = vmatpush.bf16.msra.mxu0 0
  %2614 = vmatpush.bf16.msra.mxu0 0
  %2615 = vmatpush.bf16.msra.mxu0 0
  %2616 = vmatpush.bf16.msra.mxu0 %v1318
  %2617 = vmatpush.bf16.msra.mxu0 %v787
  %2618 = vmatmul.bf16.gmra.mxu0 %v1026
  %v2619 = vpop.f32.mrf.mxu0
  %v2620 = vadd.f32 %v188, %v2619
  %v2621 = vpop.f32.mrf.mxu0
  %2622 = vdwg.mxu0
  %2623 = vmatpush.bf16.msra.mxu0 0
  %2624 = vmatpush.bf16.msra.mxu0 0
  %2625 = vmatpush.bf16.msra.mxu0 0
  %2626 = vmatpush.bf16.msra.mxu0 0
  %2627 = vmatpush.bf16.msra.mxu0 0
  %2628 = vmatpush.bf16.msra.mxu0 0
  %2629 = vmatpush.bf16.msra.mxu0 %v1321
  %2630 = vmatpush.bf16.msra.mxu0 %v788
  %2631 = vmatmul.bf16.gmra.mxu0 %v1026
  %v2632 = vpop.f32.mrf.mxu0
  %v2633 = vadd.f32 %v188, %v2632
  %v2634 = vpop.f32.mrf.mxu0
  %2635 = vdwg.mxu0
  %2636 = vmatpush.bf16.msra.mxu0 0
  %2637 = vmatpush.bf16.msra.mxu0 0
  %2638 = vmatpush.bf16.msra.mxu0 0
  %2639 = vmatpush.bf16.msra.mxu0 0
  %2640 = vmatpush.bf16.msra.mxu0 0
  %2641 = vmatpush.bf16.msra.mxu0 0
  %2642 = vmatpush.bf16.msra.mxu0 %v1324
  %2643 = vmatpush.bf16.msra.mxu0 %v789
  %2644 = vmatmul.bf16.gmra.mxu0 %v1026
  %v2645 = vpop.f32.mrf.mxu0
  %v2646 = vadd.f32 %v188, %v2645
  %v2647 = vpop.f32.mrf.mxu0
  %2648 = vdwg.mxu0
  %2649 = vmatpush.bf16.msra.mxu0 0
  %2650 = vmatpush.bf16.msra.mxu0 0
  %2651 = vmatpush.bf16.msra.mxu0 0
  %2652 = vmatpush.bf16.msra.mxu0 0
  %2653 = vmatpush.bf16.msra.mxu0 0
  %2654 = vmatpush.bf16.msra.mxu0 0
  %2655 = vmatpush.bf16.msra.mxu0 %v1327
  %2656 = vmatpush.bf16.msra.mxu0 %v790
  %2657 = vmatmul.bf16.gmra.mxu0 %v1026
  %v2658 = vpop.f32.mrf.mxu0
  %v2659 = vadd.f32 %v188, %v2658
  %v2660 = vpop.f32.mrf.mxu0
  %2661 = vdwg.mxu0
  %2662 = vmatpush.bf16.msra.mxu0 0
  %2663 = vmatpush.bf16.msra.mxu0 0
  %2664 = vmatpush.bf16.msra.mxu0 0
  %2665 = vmatpush.bf16.msra.mxu0 0
  %2666 = vmatpush.bf16.msra.mxu0 0
  %2667 = vmatpush.bf16.msra.mxu0 0
  %2668 = vmatpush.bf16.msra.mxu0 %v1330
  %2669 = vmatpush.bf16.msra.mxu0 %v791
  %2670 = vmatmul.bf16.gmra.mxu0 %v1026
  %v2671 = vpop.f32.mrf.mxu0
  %v2672 = vadd.f32 %v188, %v2671
  %v2673 = vpop.f32.mrf.mxu0
  %2674 = vdwg.mxu0
  %2675 = vmatpush.bf16.msra.mxu0 0
  %2676 = vmatpush.bf16.msra.mxu0 0
  %2677 = vmatpush.bf16.msra.mxu0 0
  %2678 = vmatpush.bf16.msra.mxu0 0
  %2679 = vmatpush.bf16.msra.mxu0 0
  %2680 = vmatpush.bf16.msra.mxu0 0
  %2681 = vmatpush.bf16.msra.mxu0 %v1333
  %2682 = vmatpush.bf16.msra.mxu0 %v792
  %2683 = vmatmul.bf16.gmra.mxu0 %v1026
  %v2684 = vpop.f32.mrf.mxu0
  %v2685 = vadd.f32 %v188, %v2684
  %v2686 = vpop.f32.mrf.mxu0
  %2687 = vdwg.mxu0
  %2688 = vmatpush.bf16.msra.mxu0 0
  %2689 = vmatpush.bf16.msra.mxu0 0
  %2690 = vmatpush.bf16.msra.mxu0 0
  %2691 = vmatpush.bf16.msra.mxu0 0
  %2692 = vmatpush.bf16.msra.mxu0 0
  %2693 = vmatpush.bf16.msra.mxu0 0
  %2694 = vmatpush.bf16.msra.mxu0 %v1336
  %2695 = vmatpush.bf16.msra.mxu0 %v793
  %2696 = vmatmul.bf16.gmra.mxu0 %v1026
  %v2697 = vpop.f32.mrf.mxu0
  %v2698 = vadd.f32 %v188, %v2697
  %v2699 = vpop.f32.mrf.mxu0
  %2700 = vdwg.mxu0
  %2701 = vmatpush.bf16.msra.mxu0 0
  %2702 = vmatpush.bf16.msra.mxu0 0
  %2703 = vmatpush.bf16.msra.mxu0 0
  %2704 = vmatpush.bf16.msra.mxu0 0
  %2705 = vmatpush.bf16.msra.mxu0 0
  %2706 = vmatpush.bf16.msra.mxu0 0
  %2707 = vmatpush.bf16.msra.mxu0 %v1339
  %2708 = vmatpush.bf16.msra.mxu0 %v794
  %2709 = vmatmul.bf16.gmra.mxu0 %v1026
  %v2710 = vpop.f32.mrf.mxu0
  %v2711 = vadd.f32 %v188, %v2710
  %v2712 = vpop.f32.mrf.mxu0
  %2713 = vdwg.mxu0
  %2714 = vmatpush.bf16.msra.mxu0 0
  %2715 = vmatpush.bf16.msra.mxu0 0
  %2716 = vmatpush.bf16.msra.mxu0 0
  %2717 = vmatpush.bf16.msra.mxu0 0
  %2718 = vmatpush.bf16.msra.mxu0 0
  %2719 = vmatpush.bf16.msra.mxu0 0
  %2720 = vmatpush.bf16.msra.mxu0 %v1342
  %2721 = vmatpush.bf16.msra.mxu0 %v795
  %2722 = vmatmul.bf16.gmra.mxu0 %v1026
  %v2723 = vpop.f32.mrf.mxu0
  %v2724 = vadd.f32 %v188, %v2723
  %v2725 = vpop.f32.mrf.mxu0
  %2726 = vdwg.mxu0
  %2727 = vmatpush.bf16.msra.mxu0 0
  %2728 = vmatpush.bf16.msra.mxu0 0
  %2729 = vmatpush.bf16.msra.mxu0 0
  %2730 = vmatpush.bf16.msra.mxu0 0
  %2731 = vmatpush.bf16.msra.mxu0 0
  %2732 = vmatpush.bf16.msra.mxu0 0
  %2733 = vmatpush.bf16.msra.mxu0 %v1345
  %2734 = vmatpush.bf16.msra.mxu0 %v796
  %2735 = vmatmul.bf16.gmra.mxu0 %v1026
  %v2736 = vpop.f32.mrf.mxu0
  %v2737 = vadd.f32 %v188, %v2736
  %v2738 = vpop.f32.mrf.mxu0
  %2739 = vdwg.mxu0
  %2740 = vmatpush.bf16.msra.mxu0 0
  %2741 = vmatpush.bf16.msra.mxu0 0
  %2742 = vmatpush.bf16.msra.mxu0 0
  %2743 = vmatpush.bf16.msra.mxu0 0
  %2744 = vmatpush.bf16.msra.mxu0 0
  %2745 = vmatpush.bf16.msra.mxu0 0
  %2746 = vmatpush.bf16.msra.mxu0 %v1348
  %2747 = vmatpush.bf16.msra.mxu0 %v797
  %2748 = vmatmul.bf16.gmra.mxu0 %v1026
  %v2749 = vpop.f32.mrf.mxu0
  %v2750 = vadd.f32 %v188, %v2749
  %v2751 = vpop.f32.mrf.mxu0
  %2752 = vdwg.mxu0
  %2753 = vmatpush.bf16.msra.mxu0 0
  %2754 = vmatpush.bf16.msra.mxu0 0
  %2755 = vmatpush.bf16.msra.mxu0 0
  %2756 = vmatpush.bf16.msra.mxu0 0
  %2757 = vmatpush.bf16.msra.mxu0 0
  %2758 = vmatpush.bf16.msra.mxu0 0
  %2759 = vmatpush.bf16.msra.mxu0 %v1351
  %2760 = vmatpush.bf16.msra.mxu0 %v798
  %2761 = vmatmul.bf16.gmra.mxu0 %v1026
  %v2762 = vpop.f32.mrf.mxu0
  %v2763 = vadd.f32 %v188, %v2762
  %v2764 = vpop.f32.mrf.mxu0
  %2765 = vdwg.mxu0
  %2766 = vmatpush.bf16.msra.mxu0 0
  %2767 = vmatpush.bf16.msra.mxu0 0
  %2768 = vmatpush.bf16.msra.mxu0 0
  %2769 = vmatpush.bf16.msra.mxu0 0
  %2770 = vmatpush.bf16.msra.mxu0 0
  %2771 = vmatpush.bf16.msra.mxu0 0
  %2772 = vmatpush.bf16.msra.mxu0 %v1354
  %2773 = vmatpush.bf16.msra.mxu0 %v799
  %2774 = vmatmul.bf16.gmra.mxu0 %v1026
  %v2775 = vpop.f32.mrf.mxu0
  %v2776 = vadd.f32 %v188, %v2775
  %v2777 = vpop.f32.mrf.mxu0
  %2778 = vdwg.mxu0
  %2779 = vmatpush.bf16.msra.mxu0 0
  %2780 = vmatpush.bf16.msra.mxu0 0
  %2781 = vmatpush.bf16.msra.mxu0 0
  %2782 = vmatpush.bf16.msra.mxu0 0
  %2783 = vmatpush.bf16.msra.mxu0 0
  %2784 = vmatpush.bf16.msra.mxu0 0
  %2785 = vmatpush.bf16.msra.mxu0 %v1357
  %2786 = vmatpush.bf16.msra.mxu0 %v800
  %2787 = vmatmul.bf16.gmra.mxu0 %v1026
  %v2788 = vpop.f32.mrf.mxu0
  %v2789 = vadd.f32 %v188, %v2788
  %v2790 = vpop.f32.mrf.mxu0
  %2791 = vdwg.mxu0
  %2792 = vmatpush.bf16.msra.mxu0 0
  %2793 = vmatpush.bf16.msra.mxu0 0
  %2794 = vmatpush.bf16.msra.mxu0 0
  %2795 = vmatpush.bf16.msra.mxu0 0
  %2796 = vmatpush.bf16.msra.mxu0 0
  %2797 = vmatpush.bf16.msra.mxu0 0
  %2798 = vmatpush.bf16.msra.mxu0 %v1360
  %2799 = vmatpush.bf16.msra.mxu0 %v801
  %2800 = vmatmul.bf16.gmra.mxu0 %v1026
  %v2801 = vpop.f32.mrf.mxu0
  %v2802 = vadd.f32 %v188, %v2801
  %v2803 = vpop.f32.mrf.mxu0
  %2804 = vdwg.mxu0
  %v2805 = vpack.c.bf16 %v1385, %v1372
  %v2806 = vpack.c.bf16 %v1411, %v1398
  %v2807 = vpack.c.bf16 %v1437, %v1424
  %v2808 = vpack.c.bf16 %v1463, %v1450
  %v2809 = vpack.c.bf16 %v1489, %v1476
  %v2810 = vpack.c.bf16 %v1515, %v1502
  %v2811 = vpack.c.bf16 %v1541, %v1528
  %v2812 = vpack.c.bf16 %v1567, %v1554
  %v2813 = vpack.c.bf16 %v1593, %v1580
  %v2814 = vpack.c.bf16 %v1619, %v1606
  %v2815 = vpack.c.bf16 %v1645, %v1632
  %v2816 = vpack.c.bf16 %v1671, %v1658
  %v2817 = vpack.c.bf16 %v1697, %v1684
  %v2818 = vpack.c.bf16 %v1723, %v1710
  %v2819 = vpack.c.bf16 %v1749, %v1736
  %v2820 = vpack.c.bf16 %v1775, %v1762
  %v2821 = vpack.c.bf16 %v1801, %v1788
  %v2822 = vpack.c.bf16 %v1827, %v1814
  %v2823 = vpack.c.bf16 %v1853, %v1840
  %v2824 = vpack.c.bf16 %v1879, %v1866
  %v2825 = vpack.c.bf16 %v1905, %v1892
  %v2826 = vpack.c.bf16 %v1931, %v1918
  %v2827 = vpack.c.bf16 %v1957, %v1944
  %v2828 = vpack.c.bf16 %v1983, %v1970
  %v2829 = vpack.c.bf16 %v2009, %v1996
  %v2830 = vpack.c.bf16 %v2035, %v2022
  %v2831 = vpack.c.bf16 %v2061, %v2048
  %v2832 = vpack.c.bf16 %v2087, %v2074
  %v2833 = vpack.c.bf16 %v2113, %v2100
  %v2834 = vpack.c.bf16 %v2139, %v2126
  %v2835 = vpack.c.bf16 %v2165, %v2152
  %v2836 = vpack.c.bf16 %v2191, %v2178
  %v2837 = vpack.c.bf16 %v2217, %v2204
  %v2838 = vpack.c.bf16 %v2243, %v2230
  %v2839 = vpack.c.bf16 %v2269, %v2256
  %v2840 = vpack.c.bf16 %v2295, %v2282
  %v2841 = vpack.c.bf16 %v2321, %v2308
  %v2842 = vpack.c.bf16 %v2347, %v2334
  %v2843 = vpack.c.bf16 %v2373, %v2360
  %v2844 = vpack.c.bf16 %v2399, %v2386
  %v2845 = vpack.c.bf16 %v2425, %v2412
  %v2846 = vpack.c.bf16 %v2451, %v2438
  %v2847 = vpack.c.bf16 %v2477, %v2464
  %v2848 = vpack.c.bf16 %v2503, %v2490
  %v2849 = vpack.c.bf16 %v2529, %v2516
  %v2850 = vpack.c.bf16 %v2555, %v2542
  %v2851 = vpack.c.bf16 %v2581, %v2568
  %v2852 = vpack.c.bf16 %v2607, %v2594
  %v2853 = vpack.c.bf16 %v2633, %v2620
  %v2854 = vpack.c.bf16 %v2659, %v2646
  %v2855 = vpack.c.bf16 %v2685, %v2672
  %v2856 = vpack.c.bf16 %v2711, %v2698
  %v2857 = vpack.c.bf16 %v2737, %v2724
  %v2858 = vpack.c.bf16 %v2763, %v2750
  %v2859 = vpack.c.bf16 %v2789, %v2776
  %v2860 = vpack.c.bf16 %v2802, %v2802
  %v2861 = vunpack.c.l.bf16 %v2805
  %v2862 = vunpack.c.h.bf16 %v2805
  %v2863 = vunpack.c.l.bf16 %v2806
  %v2864 = vunpack.c.h.bf16 %v2806
  %v2865 = vunpack.c.l.bf16 %v2807
  %v2866 = vunpack.c.h.bf16 %v2807
  %v2867 = vunpack.c.l.bf16 %v2808
  %v2868 = vunpack.c.h.bf16 %v2808
  %v2869 = vunpack.c.l.bf16 %v2809
  %v2870 = vunpack.c.h.bf16 %v2809
  %v2871 = vunpack.c.l.bf16 %v2810
  %v2872 = vunpack.c.h.bf16 %v2810
  %v2873 = vunpack.c.l.bf16 %v2811
  %v2874 = vunpack.c.h.bf16 %v2811
  %v2875 = vunpack.c.l.bf16 %v2812
  %v2876 = vunpack.c.h.bf16 %v2812
  %v2877 = vunpack.c.l.bf16 %v2813
  %v2878 = vunpack.c.h.bf16 %v2813
  %v2879 = vunpack.c.l.bf16 %v2814
  %v2880 = vunpack.c.h.bf16 %v2814
  %v2881 = vunpack.c.l.bf16 %v2815
  %v2882 = vunpack.c.h.bf16 %v2815
  %v2883 = vunpack.c.l.bf16 %v2816
  %v2884 = vunpack.c.h.bf16 %v2816
  %v2885 = vunpack.c.l.bf16 %v2817
  %v2886 = vunpack.c.h.bf16 %v2817
  %v2887 = vunpack.c.l.bf16 %v2818
  %v2888 = vunpack.c.h.bf16 %v2818
  %v2889 = vunpack.c.l.bf16 %v2819
  %v2890 = vunpack.c.h.bf16 %v2819
  %v2891 = vunpack.c.l.bf16 %v2820
  %v2892 = vunpack.c.h.bf16 %v2820
  %v2893 = vunpack.c.l.bf16 %v2821
  %v2894 = vunpack.c.h.bf16 %v2821
  %v2895 = vunpack.c.l.bf16 %v2822
  %v2896 = vunpack.c.h.bf16 %v2822
  %v2897 = vunpack.c.l.bf16 %v2823
  %v2898 = vunpack.c.h.bf16 %v2823
  %v2899 = vunpack.c.l.bf16 %v2824
  %v2900 = vunpack.c.h.bf16 %v2824
  %v2901 = vunpack.c.l.bf16 %v2825
  %v2902 = vunpack.c.h.bf16 %v2825
  %v2903 = vunpack.c.l.bf16 %v2826
  %v2904 = vunpack.c.h.bf16 %v2826
  %v2905 = vunpack.c.l.bf16 %v2827
  %v2906 = vunpack.c.h.bf16 %v2827
  %v2907 = vunpack.c.l.bf16 %v2828
  %v2908 = vunpack.c.h.bf16 %v2828
  %v2909 = vunpack.c.l.bf16 %v2829
  %v2910 = vunpack.c.h.bf16 %v2829
  %v2911 = vunpack.c.l.bf16 %v2830
  %v2912 = vunpack.c.h.bf16 %v2830
  %v2913 = vunpack.c.l.bf16 %v2831
  %v2914 = vunpack.c.h.bf16 %v2831
  %v2915 = vunpack.c.l.bf16 %v2832
  %v2916 = vunpack.c.h.bf16 %v2832
  %v2917 = vunpack.c.l.bf16 %v2833
  %v2918 = vunpack.c.h.bf16 %v2833
  %v2919 = vunpack.c.l.bf16 %v2834
  %v2920 = vunpack.c.h.bf16 %v2834
  %v2921 = vunpack.c.l.bf16 %v2835
  %v2922 = vunpack.c.h.bf16 %v2835
  %v2923 = vunpack.c.l.bf16 %v2836
  %v2924 = vunpack.c.h.bf16 %v2836
  %v2925 = vunpack.c.l.bf16 %v2837
  %v2926 = vunpack.c.h.bf16 %v2837
  %v2927 = vunpack.c.l.bf16 %v2838
  %v2928 = vunpack.c.h.bf16 %v2838
  %v2929 = vunpack.c.l.bf16 %v2839
  %v2930 = vunpack.c.h.bf16 %v2839
  %v2931 = vunpack.c.l.bf16 %v2840
  %v2932 = vunpack.c.h.bf16 %v2840
  %v2933 = vunpack.c.l.bf16 %v2841
  %v2934 = vunpack.c.h.bf16 %v2841
  %v2935 = vunpack.c.l.bf16 %v2842
  %v2936 = vunpack.c.h.bf16 %v2842
  %v2937 = vunpack.c.l.bf16 %v2843
  %v2938 = vunpack.c.h.bf16 %v2843
  %v2939 = vunpack.c.l.bf16 %v2844
  %v2940 = vunpack.c.h.bf16 %v2844
  %v2941 = vunpack.c.l.bf16 %v2845
  %v2942 = vunpack.c.h.bf16 %v2845
  %v2943 = vunpack.c.l.bf16 %v2846
  %v2944 = vunpack.c.h.bf16 %v2846
  %v2945 = vunpack.c.l.bf16 %v2847
  %v2946 = vunpack.c.h.bf16 %v2847
  %v2947 = vunpack.c.l.bf16 %v2848
  %v2948 = vunpack.c.h.bf16 %v2848
  %v2949 = vunpack.c.l.bf16 %v2849
  %v2950 = vunpack.c.h.bf16 %v2849
  %v2951 = vunpack.c.l.bf16 %v2850
  %v2952 = vunpack.c.h.bf16 %v2850
  %v2953 = vunpack.c.l.bf16 %v2851
  %v2954 = vunpack.c.h.bf16 %v2851
  %v2955 = vunpack.c.l.bf16 %v2852
  %v2956 = vunpack.c.h.bf16 %v2852
  %v2957 = vunpack.c.l.bf16 %v2853
  %v2958 = vunpack.c.h.bf16 %v2853
  %v2959 = vunpack.c.l.bf16 %v2854
  %v2960 = vunpack.c.h.bf16 %v2854
  %v2961 = vunpack.c.l.bf16 %v2855
  %v2962 = vunpack.c.h.bf16 %v2855
  %v2963 = vunpack.c.l.bf16 %v2856
  %v2964 = vunpack.c.h.bf16 %v2856
  %v2965 = vunpack.c.l.bf16 %v2857
  %v2966 = vunpack.c.h.bf16 %v2857
  %v2967 = vunpack.c.l.bf16 %v2858
  %v2968 = vunpack.c.h.bf16 %v2858
  %v2969 = vunpack.c.l.bf16 %v2859
  %v2970 = vunpack.c.h.bf16 %v2859
  %v2971 = vunpack.c.l.bf16 %v2860
  %vm2972 = vcmp.gt.f32.partialorder %v2861, 0.0
  %vm2973 = vcmp.gt.f32.partialorder %v2862, 0.0
  %vm2974 = vcmp.gt.f32.partialorder %v2863, 0.0
  %vm2975 = vcmp.gt.f32.partialorder %v2864, 0.0
  %vm2976 = vcmp.gt.f32.partialorder %v2865, 0.0
  %vm2977 = vcmp.gt.f32.partialorder %v2866, 0.0
  %vm2978 = vcmp.gt.f32.partialorder %v2867, 0.0
  %vm2979 = vcmp.gt.f32.partialorder %v2868, 0.0
  %vm2980 = vcmp.gt.f32.partialorder %v2869, 0.0
  %vm2981 = vcmp.gt.f32.partialorder %v2870, 0.0
  %vm2982 = vcmp.gt.f32.partialorder %v2871, 0.0
  %vm2983 = vcmp.gt.f32.partialorder %v2872, 0.0
  %vm2984 = vcmp.gt.f32.partialorder %v2873, 0.0
  %vm2985 = vcmp.gt.f32.partialorder %v2874, 0.0
  %vm2986 = vcmp.gt.f32.partialorder %v2875, 0.0
  %vm2987 = vcmp.gt.f32.partialorder %v2876, 0.0
  %vm2988 = vcmp.gt.f32.partialorder %v2877, 0.0
  %vm2989 = vcmp.gt.f32.partialorder %v2878, 0.0
  %vm2990 = vcmp.gt.f32.partialorder %v2879, 0.0
  %vm2991 = vcmp.gt.f32.partialorder %v2880, 0.0
  %vm2992 = vcmp.gt.f32.partialorder %v2881, 0.0
  %vm2993 = vcmp.gt.f32.partialorder %v2882, 0.0
  %vm2994 = vcmp.gt.f32.partialorder %v2883, 0.0
  %vm2995 = vcmp.gt.f32.partialorder %v2884, 0.0
  %vm2996 = vcmp.gt.f32.partialorder %v2885, 0.0
  %vm2997 = vcmp.gt.f32.partialorder %v2886, 0.0
  %vm2998 = vcmp.gt.f32.partialorder %v2887, 0.0
  %vm2999 = vcmp.gt.f32.partialorder %v2888, 0.0
  %vm3000 = vcmp.gt.f32.partialorder %v2889, 0.0
  %vm3001 = vcmp.gt.f32.partialorder %v2890, 0.0
  %vm3002 = vcmp.gt.f32.partialorder %v2891, 0.0
  %vm3003 = vcmp.gt.f32.partialorder %v2892, 0.0
  %vm3004 = vcmp.gt.f32.partialorder %v2893, 0.0
  %vm3005 = vcmp.gt.f32.partialorder %v2894, 0.0
  %vm3006 = vcmp.gt.f32.partialorder %v2895, 0.0
  %vm3007 = vcmp.gt.f32.partialorder %v2896, 0.0
  %vm3008 = vcmp.gt.f32.partialorder %v2897, 0.0
  %vm3009 = vcmp.gt.f32.partialorder %v2898, 0.0
  %vm3010 = vcmp.gt.f32.partialorder %v2899, 0.0
  %vm3011 = vcmp.gt.f32.partialorder %v2900, 0.0
  %vm3012 = vcmp.gt.f32.partialorder %v2901, 0.0
  %vm3013 = vcmp.gt.f32.partialorder %v2902, 0.0
  %vm3014 = vcmp.gt.f32.partialorder %v2903, 0.0
  %vm3015 = vcmp.gt.f32.partialorder %v2904, 0.0
  %vm3016 = vcmp.gt.f32.partialorder %v2905, 0.0
  %vm3017 = vcmp.gt.f32.partialorder %v2906, 0.0
  %vm3018 = vcmp.gt.f32.partialorder %v2907, 0.0
  %vm3019 = vcmp.gt.f32.partialorder %v2908, 0.0
  %vm3020 = vcmp.gt.f32.partialorder %v2909, 0.0
  %vm3021 = vcmp.gt.f32.partialorder %v2910, 0.0
  %vm3022 = vcmp.gt.f32.partialorder %v2911, 0.0
  %vm3023 = vcmp.gt.f32.partialorder %v2912, 0.0
  %vm3024 = vcmp.gt.f32.partialorder %v2913, 0.0
  %vm3025 = vcmp.gt.f32.partialorder %v2914, 0.0
  %vm3026 = vcmp.gt.f32.partialorder %v2915, 0.0
  %vm3027 = vcmp.gt.f32.partialorder %v2916, 0.0
  %vm3028 = vcmp.gt.f32.partialorder %v2917, 0.0
  %vm3029 = vcmp.gt.f32.partialorder %v2918, 0.0
  %vm3030 = vcmp.gt.f32.partialorder %v2919, 0.0
  %vm3031 = vcmp.gt.f32.partialorder %v2920, 0.0
  %vm3032 = vcmp.gt.f32.partialorder %v2921, 0.0
  %vm3033 = vcmp.gt.f32.partialorder %v2922, 0.0
  %vm3034 = vcmp.gt.f32.partialorder %v2923, 0.0
  %vm3035 = vcmp.gt.f32.partialorder %v2924, 0.0
  %vm3036 = vcmp.gt.f32.partialorder %v2925, 0.0
  %vm3037 = vcmp.gt.f32.partialorder %v2926, 0.0
  %vm3038 = vcmp.gt.f32.partialorder %v2927, 0.0
  %vm3039 = vcmp.gt.f32.partialorder %v2928, 0.0
  %vm3040 = vcmp.gt.f32.partialorder %v2929, 0.0
  %vm3041 = vcmp.gt.f32.partialorder %v2930, 0.0
  %vm3042 = vcmp.gt.f32.partialorder %v2931, 0.0
  %vm3043 = vcmp.gt.f32.partialorder %v2932, 0.0
  %vm3044 = vcmp.gt.f32.partialorder %v2933, 0.0
  %vm3045 = vcmp.gt.f32.partialorder %v2934, 0.0
  %vm3046 = vcmp.gt.f32.partialorder %v2935, 0.0
  %vm3047 = vcmp.gt.f32.partialorder %v2936, 0.0
  %vm3048 = vcmp.gt.f32.partialorder %v2937, 0.0
  %vm3049 = vcmp.gt.f32.partialorder %v2938, 0.0
  %vm3050 = vcmp.gt.f32.partialorder %v2939, 0.0
  %vm3051 = vcmp.gt.f32.partialorder %v2940, 0.0
  %vm3052 = vcmp.gt.f32.partialorder %v2941, 0.0
  %vm3053 = vcmp.gt.f32.partialorder %v2942, 0.0
  %vm3054 = vcmp.gt.f32.partialorder %v2943, 0.0
  %vm3055 = vcmp.gt.f32.partialorder %v2944, 0.0
  %vm3056 = vcmp.gt.f32.partialorder %v2945, 0.0
  %vm3057 = vcmp.gt.f32.partialorder %v2946, 0.0
  %vm3058 = vcmp.gt.f32.partialorder %v2947, 0.0
  %vm3059 = vcmp.gt.f32.partialorder %v2948, 0.0
  %vm3060 = vcmp.gt.f32.partialorder %v2949, 0.0
  %vm3061 = vcmp.gt.f32.partialorder %v2950, 0.0
  %vm3062 = vcmp.gt.f32.partialorder %v2951, 0.0
  %vm3063 = vcmp.gt.f32.partialorder %v2952, 0.0
  %vm3064 = vcmp.gt.f32.partialorder %v2953, 0.0
  %vm3065 = vcmp.gt.f32.partialorder %v2954, 0.0
  %vm3066 = vcmp.gt.f32.partialorder %v2955, 0.0
  %vm3067 = vcmp.gt.f32.partialorder %v2956, 0.0
  %vm3068 = vcmp.gt.f32.partialorder %v2957, 0.0
  %vm3069 = vcmp.gt.f32.partialorder %v2958, 0.0
  %vm3070 = vcmp.gt.f32.partialorder %v2959, 0.0
  %vm3071 = vcmp.gt.f32.partialorder %v2960, 0.0
  %vm3072 = vcmp.gt.f32.partialorder %v2961, 0.0
  %vm3073 = vcmp.gt.f32.partialorder %v2962, 0.0
  %vm3074 = vcmp.gt.f32.partialorder %v2963, 0.0
  %vm3075 = vcmp.gt.f32.partialorder %v2964, 0.0
  %vm3076 = vcmp.gt.f32.partialorder %v2965, 0.0
  %vm3077 = vcmp.gt.f32.partialorder %v2966, 0.0
  %vm3078 = vcmp.gt.f32.partialorder %v2967, 0.0
  %vm3079 = vcmp.gt.f32.partialorder %v2968, 0.0
  %vm3080 = vcmp.gt.f32.partialorder %v2969, 0.0
  %vm3081 = vcmp.gt.f32.partialorder %v2970, 0.0
  %vm3082 = vcmp.gt.f32.partialorder %v2971, 0.0
  %v3083 = vmin.f32 %v2861, 0.0
  %v3084 = vmin.f32 %v2862, 0.0
  %v3085 = vmin.f32 %v2863, 0.0
  %v3086 = vmin.f32 %v2864, 0.0
  %v3087 = vmin.f32 %v2865, 0.0
  %v3088 = vmin.f32 %v2866, 0.0
  %v3089 = vmin.f32 %v2867, 0.0
  %v3090 = vmin.f32 %v2868, 0.0
  %v3091 = vmin.f32 %v2869, 0.0
  %v3092 = vmin.f32 %v2870, 0.0
  %v3093 = vmin.f32 %v2871, 0.0
  %v3094 = vmin.f32 %v2872, 0.0
  %v3095 = vmin.f32 %v2873, 0.0
  %v3096 = vmin.f32 %v2874, 0.0
  %v3097 = vmin.f32 %v2875, 0.0
  %v3098 = vmin.f32 %v2876, 0.0
  %v3099 = vmin.f32 %v2877, 0.0
  %v3100 = vmin.f32 %v2878, 0.0
  %v3101 = vmin.f32 %v2879, 0.0
  %v3102 = vmin.f32 %v2880, 0.0
  %v3103 = vmin.f32 %v2881, 0.0
  %v3104 = vmin.f32 %v2882, 0.0
  %v3105 = vmin.f32 %v2883, 0.0
  %v3106 = vmin.f32 %v2884, 0.0
  %v3107 = vmin.f32 %v2885, 0.0
  %v3108 = vmin.f32 %v2886, 0.0
  %v3109 = vmin.f32 %v2887, 0.0
  %v3110 = vmin.f32 %v2888, 0.0
  %v3111 = vmin.f32 %v2889, 0.0
  %v3112 = vmin.f32 %v2890, 0.0
  %v3113 = vmin.f32 %v2891, 0.0
  %v3114 = vmin.f32 %v2892, 0.0
  %v3115 = vmin.f32 %v2893, 0.0
  %v3116 = vmin.f32 %v2894, 0.0
  %v3117 = vmin.f32 %v2895, 0.0
  %v3118 = vmin.f32 %v2896, 0.0
  %v3119 = vmin.f32 %v2897, 0.0
  %v3120 = vmin.f32 %v2898, 0.0
  %v3121 = vmin.f32 %v2899, 0.0
  %v3122 = vmin.f32 %v2900, 0.0
  %v3123 = vmin.f32 %v2901, 0.0
  %v3124 = vmin.f32 %v2902, 0.0
  %v3125 = vmin.f32 %v2903, 0.0
  %v3126 = vmin.f32 %v2904, 0.0
  %v3127 = vmin.f32 %v2905, 0.0
  %v3128 = vmin.f32 %v2906, 0.0
  %v3129 = vmin.f32 %v2907, 0.0
  %v3130 = vmin.f32 %v2908, 0.0
  %v3131 = vmin.f32 %v2909, 0.0
  %v3132 = vmin.f32 %v2910, 0.0
  %v3133 = vmin.f32 %v2911, 0.0
  %v3134 = vmin.f32 %v2912, 0.0
  %v3135 = vmin.f32 %v2913, 0.0
  %v3136 = vmin.f32 %v2914, 0.0
  %v3137 = vmin.f32 %v2915, 0.0
  %v3138 = vmin.f32 %v2916, 0.0
  %v3139 = vmin.f32 %v2917, 0.0
  %v3140 = vmin.f32 %v2918, 0.0
  %v3141 = vmin.f32 %v2919, 0.0
  %v3142 = vmin.f32 %v2920, 0.0
  %v3143 = vmin.f32 %v2921, 0.0
  %v3144 = vmin.f32 %v2922, 0.0
  %v3145 = vmin.f32 %v2923, 0.0
  %v3146 = vmin.f32 %v2924, 0.0
  %v3147 = vmin.f32 %v2925, 0.0
  %v3148 = vmin.f32 %v2926, 0.0
  %v3149 = vmin.f32 %v2927, 0.0
  %v3150 = vmin.f32 %v2928, 0.0
  %v3151 = vmin.f32 %v2929, 0.0
  %v3152 = vmin.f32 %v2930, 0.0
  %v3153 = vmin.f32 %v2931, 0.0
  %v3154 = vmin.f32 %v2932, 0.0
  %v3155 = vmin.f32 %v2933, 0.0
  %v3156 = vmin.f32 %v2934, 0.0
  %v3157 = vmin.f32 %v2935, 0.0
  %v3158 = vmin.f32 %v2936, 0.0
  %v3159 = vmin.f32 %v2937, 0.0
  %v3160 = vmin.f32 %v2938, 0.0
  %v3161 = vmin.f32 %v2939, 0.0
  %v3162 = vmin.f32 %v2940, 0.0
  %v3163 = vmin.f32 %v2941, 0.0
  %v3164 = vmin.f32 %v2942, 0.0
  %v3165 = vmin.f32 %v2943, 0.0
  %v3166 = vmin.f32 %v2944, 0.0
  %v3167 = vmin.f32 %v2945, 0.0
  %v3168 = vmin.f32 %v2946, 0.0
  %v3169 = vmin.f32 %v2947, 0.0
  %v3170 = vmin.f32 %v2948, 0.0
  %v3171 = vmin.f32 %v2949, 0.0
  %v3172 = vmin.f32 %v2950, 0.0
  %v3173 = vmin.f32 %v2951, 0.0
  %v3174 = vmin.f32 %v2952, 0.0
  %v3175 = vmin.f32 %v2953, 0.0
  %v3176 = vmin.f32 %v2954, 0.0
  %v3177 = vmin.f32 %v2955, 0.0
  %v3178 = vmin.f32 %v2956, 0.0
  %v3179 = vmin.f32 %v2957, 0.0
  %v3180 = vmin.f32 %v2958, 0.0
  %v3181 = vmin.f32 %v2959, 0.0
  %v3182 = vmin.f32 %v2960, 0.0
  %v3183 = vmin.f32 %v2961, 0.0
  %v3184 = vmin.f32 %v2962, 0.0
  %v3185 = vmin.f32 %v2963, 0.0
  %v3186 = vmin.f32 %v2964, 0.0
  %v3187 = vmin.f32 %v2965, 0.0
  %v3188 = vmin.f32 %v2966, 0.0
  %v3189 = vmin.f32 %v2967, 0.0
  %v3190 = vmin.f32 %v2968, 0.0
  %v3191 = vmin.f32 %v2969, 0.0
  %v3192 = vmin.f32 %v2970, 0.0
  %v3193 = vmin.f32 %v2971, 0.0
  %v3194 = vpack.c.bf16 %v3084, %v3083
  %v3195 = vpack.c.bf16 %v3086, %v3085
  %v3196 = vpack.c.bf16 %v3088, %v3087
  %v3197 = vpack.c.bf16 %v3090, %v3089
  %v3198 = vpack.c.bf16 %v3092, %v3091
  %v3199 = vpack.c.bf16 %v3094, %v3093
  %v3200 = vpack.c.bf16 %v3096, %v3095
  %v3201 = vpack.c.bf16 %v3098, %v3097
  %v3202 = vpack.c.bf16 %v3100, %v3099
  %v3203 = vpack.c.bf16 %v3102, %v3101
  %v3204 = vpack.c.bf16 %v3104, %v3103
  %v3205 = vpack.c.bf16 %v3106, %v3105
  %v3206 = vpack.c.bf16 %v3108, %v3107
  %v3207 = vpack.c.bf16 %v3110, %v3109
  %v3208 = vpack.c.bf16 %v3112, %v3111
  %v3209 = vpack.c.bf16 %v3114, %v3113
  %v3210 = vpack.c.bf16 %v3116, %v3115
  %v3211 = vpack.c.bf16 %v3118, %v3117
  %v3212 = vpack.c.bf16 %v3120, %v3119
  %v3213 = vpack.c.bf16 %v3122, %v3121
  %v3214 = vpack.c.bf16 %v3124, %v3123
  %v3215 = vpack.c.bf16 %v3126, %v3125
  %v3216 = vpack.c.bf16 %v3128, %v3127
  %v3217 = vpack.c.bf16 %v3130, %v3129
  %v3218 = vpack.c.bf16 %v3132, %v3131
  %v3219 = vpack.c.bf16 %v3134, %v3133
  %v3220 = vpack.c.bf16 %v3136, %v3135
  %v3221 = vpack.c.bf16 %v3138, %v3137
  %v3222 = vpack.c.bf16 %v3140, %v3139
  %v3223 = vpack.c.bf16 %v3142, %v3141
  %v3224 = vpack.c.bf16 %v3144, %v3143
  %v3225 = vpack.c.bf16 %v3146, %v3145
  %v3226 = vpack.c.bf16 %v3148, %v3147
  %v3227 = vpack.c.bf16 %v3150, %v3149
  %v3228 = vpack.c.bf16 %v3152, %v3151
  %v3229 = vpack.c.bf16 %v3154, %v3153
  %v3230 = vpack.c.bf16 %v3156, %v3155
  %v3231 = vpack.c.bf16 %v3158, %v3157
  %v3232 = vpack.c.bf16 %v3160, %v3159
  %v3233 = vpack.c.bf16 %v3162, %v3161
  %v3234 = vpack.c.bf16 %v3164, %v3163
  %v3235 = vpack.c.bf16 %v3166, %v3165
  %v3236 = vpack.c.bf16 %v3168, %v3167
  %v3237 = vpack.c.bf16 %v3170, %v3169
  %v3238 = vpack.c.bf16 %v3172, %v3171
  %v3239 = vpack.c.bf16 %v3174, %v3173
  %v3240 = vpack.c.bf16 %v3176, %v3175
  %v3241 = vpack.c.bf16 %v3178, %v3177
  %v3242 = vpack.c.bf16 %v3180, %v3179
  %v3243 = vpack.c.bf16 %v3182, %v3181
  %v3244 = vpack.c.bf16 %v3184, %v3183
  %v3245 = vpack.c.bf16 %v3186, %v3185
  %v3246 = vpack.c.bf16 %v3188, %v3187
  %v3247 = vpack.c.bf16 %v3190, %v3189
  %v3248 = vpack.c.bf16 %v3192, %v3191
  %v3249 = vpack.c.bf16 %v3193, %v3193
  %v3250 = vunpack.c.l.bf16 %v3194
  %v3251 = vunpack.c.h.bf16 %v3194
  %v3252 = vunpack.c.l.bf16 %v3195
  %v3253 = vunpack.c.h.bf16 %v3195
  %v3254 = vunpack.c.l.bf16 %v3196
  %v3255 = vunpack.c.h.bf16 %v3196
  %v3256 = vunpack.c.l.bf16 %v3197
  %v3257 = vunpack.c.h.bf16 %v3197
  %v3258 = vunpack.c.l.bf16 %v3198
  %v3259 = vunpack.c.h.bf16 %v3198
  %v3260 = vunpack.c.l.bf16 %v3199
  %v3261 = vunpack.c.h.bf16 %v3199
  %v3262 = vunpack.c.l.bf16 %v3200
  %v3263 = vunpack.c.h.bf16 %v3200
  %v3264 = vunpack.c.l.bf16 %v3201
  %v3265 = vunpack.c.h.bf16 %v3201
  %v3266 = vunpack.c.l.bf16 %v3202
  %v3267 = vunpack.c.h.bf16 %v3202
  %v3268 = vunpack.c.l.bf16 %v3203
  %v3269 = vunpack.c.h.bf16 %v3203
  %v3270 = vunpack.c.l.bf16 %v3204
  %v3271 = vunpack.c.h.bf16 %v3204
  %v3272 = vunpack.c.l.bf16 %v3205
  %v3273 = vunpack.c.h.bf16 %v3205
  %v3274 = vunpack.c.l.bf16 %v3206
  %v3275 = vunpack.c.h.bf16 %v3206
  %v3276 = vunpack.c.l.bf16 %v3207
  %v3277 = vunpack.c.h.bf16 %v3207
  %v3278 = vunpack.c.l.bf16 %v3208
  %v3279 = vunpack.c.h.bf16 %v3208
  %v3280 = vunpack.c.l.bf16 %v3209
  %v3281 = vunpack.c.h.bf16 %v3209
  %v3282 = vunpack.c.l.bf16 %v3210
  %v3283 = vunpack.c.h.bf16 %v3210
  %v3284 = vunpack.c.l.bf16 %v3211
  %v3285 = vunpack.c.h.bf16 %v3211
  %v3286 = vunpack.c.l.bf16 %v3212
  %v3287 = vunpack.c.h.bf16 %v3212
  %v3288 = vunpack.c.l.bf16 %v3213
  %v3289 = vunpack.c.h.bf16 %v3213
  %v3290 = vunpack.c.l.bf16 %v3214
  %v3291 = vunpack.c.h.bf16 %v3214
  %v3292 = vunpack.c.l.bf16 %v3215
  %v3293 = vunpack.c.h.bf16 %v3215
  %v3294 = vunpack.c.l.bf16 %v3216
  %v3295 = vunpack.c.h.bf16 %v3216
  %v3296 = vunpack.c.l.bf16 %v3217
  %v3297 = vunpack.c.h.bf16 %v3217
  %v3298 = vunpack.c.l.bf16 %v3218
  %v3299 = vunpack.c.h.bf16 %v3218
  %v3300 = vunpack.c.l.bf16 %v3219
  %v3301 = vunpack.c.h.bf16 %v3219
  %v3302 = vunpack.c.l.bf16 %v3220
  %v3303 = vunpack.c.h.bf16 %v3220
  %v3304 = vunpack.c.l.bf16 %v3221
  %v3305 = vunpack.c.h.bf16 %v3221
  %v3306 = vunpack.c.l.bf16 %v3222
  %v3307 = vunpack.c.h.bf16 %v3222
  %v3308 = vunpack.c.l.bf16 %v3223
  %v3309 = vunpack.c.h.bf16 %v3223
  %v3310 = vunpack.c.l.bf16 %v3224
  %v3311 = vunpack.c.h.bf16 %v3224
  %v3312 = vunpack.c.l.bf16 %v3225
  %v3313 = vunpack.c.h.bf16 %v3225
  %v3314 = vunpack.c.l.bf16 %v3226
  %v3315 = vunpack.c.h.bf16 %v3226
  %v3316 = vunpack.c.l.bf16 %v3227
  %v3317 = vunpack.c.h.bf16 %v3227
  %v3318 = vunpack.c.l.bf16 %v3228
  %v3319 = vunpack.c.h.bf16 %v3228
  %v3320 = vunpack.c.l.bf16 %v3229
  %v3321 = vunpack.c.h.bf16 %v3229
  %v3322 = vunpack.c.l.bf16 %v3230
  %v3323 = vunpack.c.h.bf16 %v3230
  %v3324 = vunpack.c.l.bf16 %v3231
  %v3325 = vunpack.c.h.bf16 %v3231
  %v3326 = vunpack.c.l.bf16 %v3232
  %v3327 = vunpack.c.h.bf16 %v3232
  %v3328 = vunpack.c.l.bf16 %v3233
  %v3329 = vunpack.c.h.bf16 %v3233
  %v3330 = vunpack.c.l.bf16 %v3234
  %v3331 = vunpack.c.h.bf16 %v3234
  %v3332 = vunpack.c.l.bf16 %v3235
  %v3333 = vunpack.c.h.bf16 %v3235
  %v3334 = vunpack.c.l.bf16 %v3236
  %v3335 = vunpack.c.h.bf16 %v3236
  %v3336 = vunpack.c.l.bf16 %v3237
  %v3337 = vunpack.c.h.bf16 %v3237
  %v3338 = vunpack.c.l.bf16 %v3238
  %v3339 = vunpack.c.h.bf16 %v3238
  %v3340 = vunpack.c.l.bf16 %v3239
  %v3341 = vunpack.c.h.bf16 %v3239
  %v3342 = vunpack.c.l.bf16 %v3240
  %v3343 = vunpack.c.h.bf16 %v3240
  %v3344 = vunpack.c.l.bf16 %v3241
  %v3345 = vunpack.c.h.bf16 %v3241
  %v3346 = vunpack.c.l.bf16 %v3242
  %v3347 = vunpack.c.h.bf16 %v3242
  %v3348 = vunpack.c.l.bf16 %v3243
  %v3349 = vunpack.c.h.bf16 %v3243
  %v3350 = vunpack.c.l.bf16 %v3244
  %v3351 = vunpack.c.h.bf16 %v3244
  %v3352 = vunpack.c.l.bf16 %v3245
  %v3353 = vunpack.c.h.bf16 %v3245
  %v3354 = vunpack.c.l.bf16 %v3246
  %v3355 = vunpack.c.h.bf16 %v3246
  %v3356 = vunpack.c.l.bf16 %v3247
  %v3357 = vunpack.c.h.bf16 %v3247
  %v3358 = vunpack.c.l.bf16 %v3248
  %v3359 = vunpack.c.h.bf16 %v3248
  %v3360 = vunpack.c.l.bf16 %v3249
  %v3361 = vmul.f32 %v3250, 1.442695
  %v3362 = vpow.pop %v3361
  %v3363 = vmul.f32 %v3251, 1.442695
  %v3364 = vpow.pop %v3363
  %v3365 = vmul.f32 %v3252, 1.442695
  %v3366 = vpow.pop %v3365
  %v3367 = vmul.f32 %v3253, 1.442695
  %v3368 = vpow.pop %v3367
  %v3369 = vmul.f32 %v3254, 1.442695
  %v3370 = vpow.pop %v3369
  %v3371 = vmul.f32 %v3255, 1.442695
  %v3372 = vpow.pop %v3371
  %v3373 = vmul.f32 %v3256, 1.442695
  %v3374 = vpow.pop %v3373
  %v3375 = vmul.f32 %v3257, 1.442695
  %v3376 = vpow.pop %v3375
  %v3377 = vmul.f32 %v3258, 1.442695
  %v3378 = vpow.pop %v3377
  %v3379 = vmul.f32 %v3259, 1.442695
  %v3380 = vpow.pop %v3379
  %v3381 = vmul.f32 %v3260, 1.442695
  %v3382 = vpow.pop %v3381
  %v3383 = vmul.f32 %v3261, 1.442695
  %v3384 = vpow.pop %v3383
  %v3385 = vmul.f32 %v3262, 1.442695
  %v3386 = vpow.pop %v3385
  %v3387 = vmul.f32 %v3263, 1.442695
  %v3388 = vpow.pop %v3387
  %v3389 = vmul.f32 %v3264, 1.442695
  %v3390 = vpow.pop %v3389
  %v3391 = vmul.f32 %v3265, 1.442695
  %v3392 = vpow.pop %v3391
  %v3393 = vmul.f32 %v3266, 1.442695
  %v3394 = vpow.pop %v3393
  %v3395 = vmul.f32 %v3267, 1.442695
  %v3396 = vpow.pop %v3395
  %v3397 = vmul.f32 %v3268, 1.442695
  %v3398 = vpow.pop %v3397
  %v3399 = vmul.f32 %v3269, 1.442695
  %v3400 = vpow.pop %v3399
  %v3401 = vmul.f32 %v3270, 1.442695
  %v3402 = vpow.pop %v3401
  %v3403 = vmul.f32 %v3271, 1.442695
  %v3404 = vpow.pop %v3403
  %v3405 = vmul.f32 %v3272, 1.442695
  %v3406 = vpow.pop %v3405
  %v3407 = vmul.f32 %v3273, 1.442695
  %v3408 = vpow.pop %v3407
  %v3409 = vmul.f32 %v3274, 1.442695
  %v3410 = vpow.pop %v3409
  %v3411 = vmul.f32 %v3275, 1.442695
  %v3412 = vpow.pop %v3411
  %v3413 = vmul.f32 %v3276, 1.442695
  %v3414 = vpow.pop %v3413
  %v3415 = vmul.f32 %v3277, 1.442695
  %v3416 = vpow.pop %v3415
  %v3417 = vmul.f32 %v3278, 1.442695
  %v3418 = vpow.pop %v3417
  %v3419 = vmul.f32 %v3279, 1.442695
  %v3420 = vpow.pop %v3419
  %v3421 = vmul.f32 %v3280, 1.442695
  %v3422 = vpow.pop %v3421
  %v3423 = vmul.f32 %v3281, 1.442695
  %v3424 = vpow.pop %v3423
  %v3425 = vmul.f32 %v3282, 1.442695
  %v3426 = vpow.pop %v3425
  %v3427 = vmul.f32 %v3283, 1.442695
  %v3428 = vpow.pop %v3427
  %v3429 = vmul.f32 %v3284, 1.442695
  %v3430 = vpow.pop %v3429
  %v3431 = vmul.f32 %v3285, 1.442695
  %v3432 = vpow.pop %v3431
  %v3433 = vmul.f32 %v3286, 1.442695
  %v3434 = vpow.pop %v3433
  %v3435 = vmul.f32 %v3287, 1.442695
  %v3436 = vpow.pop %v3435
  %v3437 = vmul.f32 %v3288, 1.442695
  %v3438 = vpow.pop %v3437
  %v3439 = vmul.f32 %v3289, 1.442695
  %v3440 = vpow.pop %v3439
  %v3441 = vmul.f32 %v3290, 1.442695
  %v3442 = vpow.pop %v3441
  %v3443 = vmul.f32 %v3291, 1.442695
  %v3444 = vpow.pop %v3443
  %v3445 = vmul.f32 %v3292, 1.442695
  %v3446 = vpow.pop %v3445
  %v3447 = vmul.f32 %v3293, 1.442695
  %v3448 = vpow.pop %v3447
  %v3449 = vmul.f32 %v3294, 1.442695
  %v3450 = vpow.pop %v3449
  %v3451 = vmul.f32 %v3295, 1.442695
  %v3452 = vpow.pop %v3451
  %v3453 = vmul.f32 %v3296, 1.442695
  %v3454 = vpow.pop %v3453
  %v3455 = vmul.f32 %v3297, 1.442695
  %v3456 = vpow.pop %v3455
  %v3457 = vmul.f32 %v3298, 1.442695
  %v3458 = vpow.pop %v3457
  %v3459 = vmul.f32 %v3299, 1.442695
  %v3460 = vpow.pop %v3459
  %v3461 = vmul.f32 %v3300, 1.442695
  %v3462 = vpow.pop %v3461
  %v3463 = vmul.f32 %v3301, 1.442695
  %v3464 = vpow.pop %v3463
  %v3465 = vmul.f32 %v3302, 1.442695
  %v3466 = vpow.pop %v3465
  %v3467 = vmul.f32 %v3303, 1.442695
  %v3468 = vpow.pop %v3467
  %v3469 = vmul.f32 %v3304, 1.442695
  %v3470 = vpow.pop %v3469
  %v3471 = vmul.f32 %v3305, 1.442695
  %v3472 = vpow.pop %v3471
  %v3473 = vmul.f32 %v3306, 1.442695
  %v3474 = vpow.pop %v3473
  %v3475 = vmul.f32 %v3307, 1.442695
  %v3476 = vpow.pop %v3475
  %v3477 = vmul.f32 %v3308, 1.442695
  %v3478 = vpow.pop %v3477
  %v3479 = vmul.f32 %v3309, 1.442695
  %v3480 = vpow.pop %v3479
  %v3481 = vmul.f32 %v3310, 1.442695
  %v3482 = vpow.pop %v3481
  %v3483 = vmul.f32 %v3311, 1.442695
  %v3484 = vpow.pop %v3483
  %v3485 = vmul.f32 %v3312, 1.442695
  %v3486 = vpow.pop %v3485
  %v3487 = vmul.f32 %v3313, 1.442695
  %v3488 = vpow.pop %v3487
  %v3489 = vmul.f32 %v3314, 1.442695
  %v3490 = vpow.pop %v3489
  %v3491 = vmul.f32 %v3315, 1.442695
  %v3492 = vpow.pop %v3491
  %v3493 = vmul.f32 %v3316, 1.442695
  %v3494 = vpow.pop %v3493
  %v3495 = vmul.f32 %v3317, 1.442695
  %v3496 = vpow.pop %v3495
  %v3497 = vmul.f32 %v3318, 1.442695
  %v3498 = vpow.pop %v3497
  %v3499 = vmul.f32 %v3319, 1.442695
  %v3500 = vpow.pop %v3499
  %v3501 = vmul.f32 %v3320, 1.442695
  %v3502 = vpow.pop %v3501
  %v3503 = vmul.f32 %v3321, 1.442695
  %v3504 = vpow.pop %v3503
  %v3505 = vmul.f32 %v3322, 1.442695
  %v3506 = vpow.pop %v3505
  %v3507 = vmul.f32 %v3323, 1.442695
  %v3508 = vpow.pop %v3507
  %v3509 = vmul.f32 %v3324, 1.442695
  %v3510 = vpow.pop %v3509
  %v3511 = vmul.f32 %v3325, 1.442695
  %v3512 = vpow.pop %v3511
  %v3513 = vmul.f32 %v3326, 1.442695
  %v3514 = vpow.pop %v3513
  %v3515 = vmul.f32 %v3327, 1.442695
  %v3516 = vpow.pop %v3515
  %v3517 = vmul.f32 %v3328, 1.442695
  %v3518 = vpow.pop %v3517
  %v3519 = vmul.f32 %v3329, 1.442695
  %v3520 = vpow.pop %v3519
  %v3521 = vmul.f32 %v3330, 1.442695
  %v3522 = vpow.pop %v3521
  %v3523 = vmul.f32 %v3331, 1.442695
  %v3524 = vpow.pop %v3523
  %v3525 = vmul.f32 %v3332, 1.442695
  %v3526 = vpow.pop %v3525
  %v3527 = vmul.f32 %v3333, 1.442695
  %v3528 = vpow.pop %v3527
  %v3529 = vmul.f32 %v3334, 1.442695
  %v3530 = vpow.pop %v3529
  %v3531 = vmul.f32 %v3335, 1.442695
  %v3532 = vpow.pop %v3531
  %v3533 = vmul.f32 %v3336, 1.442695
  %v3534 = vpow.pop %v3533
  %v3535 = vmul.f32 %v3337, 1.442695
  %v3536 = vpow.pop %v3535
  %v3537 = vmul.f32 %v3338, 1.442695
  %v3538 = vpow.pop %v3537
  %v3539 = vmul.f32 %v3339, 1.442695
  %v3540 = vpow.pop %v3539
  %v3541 = vmul.f32 %v3340, 1.442695
  %v3542 = vpow.pop %v3541
  %v3543 = vmul.f32 %v3341, 1.442695
  %v3544 = vpow.pop %v3543
  %v3545 = vmul.f32 %v3342, 1.442695
  %v3546 = vpow.pop %v3545
  %v3547 = vmul.f32 %v3343, 1.442695
  %v3548 = vpow.pop %v3547
  %v3549 = vmul.f32 %v3344, 1.442695
  %v3550 = vpow.pop %v3549
  %v3551 = vmul.f32 %v3345, 1.442695
  %v3552 = vpow.pop %v3551
  %v3553 = vmul.f32 %v3346, 1.442695
  %v3554 = vpow.pop %v3553
  %v3555 = vmul.f32 %v3347, 1.442695
  %v3556 = vpow.pop %v3555
  %v3557 = vmul.f32 %v3348, 1.442695
  %v3558 = vpow.pop %v3557
  %v3559 = vmul.f32 %v3349, 1.442695
  %v3560 = vpow.pop %v3559
  %v3561 = vmul.f32 %v3350, 1.442695
  %v3562 = vpow.pop %v3561
  %v3563 = vmul.f32 %v3351, 1.442695
  %v3564 = vpow.pop %v3563
  %v3565 = vmul.f32 %v3352, 1.442695
  %v3566 = vpow.pop %v3565
  %v3567 = vmul.f32 %v3353, 1.442695
  %v3568 = vpow.pop %v3567
  %v3569 = vmul.f32 %v3354, 1.442695
  %v3570 = vpow.pop %v3569
  %v3571 = vmul.f32 %v3355, 1.442695
  %v3572 = vpow.pop %v3571
  %v3573 = vmul.f32 %v3356, 1.442695
  %v3574 = vpow.pop %v3573
  %v3575 = vmul.f32 %v3357, 1.442695
  %v3576 = vpow.pop %v3575
  %v3577 = vmul.f32 %v3358, 1.442695
  %v3578 = vpow.pop %v3577
  %v3579 = vmul.f32 %v3359, 1.442695
  %v3580 = vpow.pop %v3579
  %v3581 = vmul.f32 %v3360, 1.442695
  %v3582 = vpow.pop %v3581
  %v3583 = vpack.c.bf16 %v3364, %v3362
  %v3584 = vpack.c.bf16 %v3368, %v3366
  %v3585 = vpack.c.bf16 %v3372, %v3370
  %v3586 = vpack.c.bf16 %v3376, %v3374
  %v3587 = vpack.c.bf16 %v3380, %v3378
  %v3588 = vpack.c.bf16 %v3384, %v3382
  %v3589 = vpack.c.bf16 %v3388, %v3386
  %v3590 = vpack.c.bf16 %v3392, %v3390
  %v3591 = vpack.c.bf16 %v3396, %v3394
  %v3592 = vpack.c.bf16 %v3400, %v3398
  %v3593 = vpack.c.bf16 %v3404, %v3402
  %v3594 = vpack.c.bf16 %v3408, %v3406
  %v3595 = vpack.c.bf16 %v3412, %v3410
  %v3596 = vpack.c.bf16 %v3416, %v3414
  %v3597 = vpack.c.bf16 %v3420, %v3418
  %v3598 = vpack.c.bf16 %v3424, %v3422
  %v3599 = vpack.c.bf16 %v3428, %v3426
  %v3600 = vpack.c.bf16 %v3432, %v3430
  %v3601 = vpack.c.bf16 %v3436, %v3434
  %v3602 = vpack.c.bf16 %v3440, %v3438
  %v3603 = vpack.c.bf16 %v3444, %v3442
  %v3604 = vpack.c.bf16 %v3448, %v3446
  %v3605 = vpack.c.bf16 %v3452, %v3450
  %v3606 = vpack.c.bf16 %v3456, %v3454
  %v3607 = vpack.c.bf16 %v3460, %v3458
  %v3608 = vpack.c.bf16 %v3464, %v3462
  %v3609 = vpack.c.bf16 %v3468, %v3466
  %v3610 = vpack.c.bf16 %v3472, %v3470
  %v3611 = vpack.c.bf16 %v3476, %v3474
  %v3612 = vpack.c.bf16 %v3480, %v3478
  %v3613 = vpack.c.bf16 %v3484, %v3482
  %v3614 = vpack.c.bf16 %v3488, %v3486
  %v3615 = vpack.c.bf16 %v3492, %v3490
  %v3616 = vpack.c.bf16 %v3496, %v3494
  %v3617 = vpack.c.bf16 %v3500, %v3498
  %v3618 = vpack.c.bf16 %v3504, %v3502
  %v3619 = vpack.c.bf16 %v3508, %v3506
  %v3620 = vpack.c.bf16 %v3512, %v3510
  %v3621 = vpack.c.bf16 %v3516, %v3514
  %v3622 = vpack.c.bf16 %v3520, %v3518
  %v3623 = vpack.c.bf16 %v3524, %v3522
  %v3624 = vpack.c.bf16 %v3528, %v3526
  %v3625 = vpack.c.bf16 %v3532, %v3530
  %v3626 = vpack.c.bf16 %v3536, %v3534
  %v3627 = vpack.c.bf16 %v3540, %v3538
  %v3628 = vpack.c.bf16 %v3544, %v3542
  %v3629 = vpack.c.bf16 %v3548, %v3546
  %v3630 = vpack.c.bf16 %v3552, %v3550
  %v3631 = vpack.c.bf16 %v3556, %v3554
  %v3632 = vpack.c.bf16 %v3560, %v3558
  %v3633 = vpack.c.bf16 %v3564, %v3562
  %v3634 = vpack.c.bf16 %v3568, %v3566
  %v3635 = vpack.c.bf16 %v3572, %v3570
  %v3636 = vpack.c.bf16 %v3576, %v3574
  %v3637 = vpack.c.bf16 %v3580, %v3578
  %v3638 = vpack.c.bf16 %v3582, %v3582
  %v3639 = vunpack.c.l.bf16 %v3583
  %v3640 = vunpack.c.h.bf16 %v3583
  %v3641 = vunpack.c.l.bf16 %v3584
  %v3642 = vunpack.c.h.bf16 %v3584
  %v3643 = vunpack.c.l.bf16 %v3585
  %v3644 = vunpack.c.h.bf16 %v3585
  %v3645 = vunpack.c.l.bf16 %v3586
  %v3646 = vunpack.c.h.bf16 %v3586
  %v3647 = vunpack.c.l.bf16 %v3587
  %v3648 = vunpack.c.h.bf16 %v3587
  %v3649 = vunpack.c.l.bf16 %v3588
  %v3650 = vunpack.c.h.bf16 %v3588
  %v3651 = vunpack.c.l.bf16 %v3589
  %v3652 = vunpack.c.h.bf16 %v3589
  %v3653 = vunpack.c.l.bf16 %v3590
  %v3654 = vunpack.c.h.bf16 %v3590
  %v3655 = vunpack.c.l.bf16 %v3591
  %v3656 = vunpack.c.h.bf16 %v3591
  %v3657 = vunpack.c.l.bf16 %v3592
  %v3658 = vunpack.c.h.bf16 %v3592
  %v3659 = vunpack.c.l.bf16 %v3593
  %v3660 = vunpack.c.h.bf16 %v3593
  %v3661 = vunpack.c.l.bf16 %v3594
  %v3662 = vunpack.c.h.bf16 %v3594
  %v3663 = vunpack.c.l.bf16 %v3595
  %v3664 = vunpack.c.h.bf16 %v3595
  %v3665 = vunpack.c.l.bf16 %v3596
  %v3666 = vunpack.c.h.bf16 %v3596
  %v3667 = vunpack.c.l.bf16 %v3597
  %v3668 = vunpack.c.h.bf16 %v3597
  %v3669 = vunpack.c.l.bf16 %v3598
  %v3670 = vunpack.c.h.bf16 %v3598
  %v3671 = vunpack.c.l.bf16 %v3599
  %v3672 = vunpack.c.h.bf16 %v3599
  %v3673 = vunpack.c.l.bf16 %v3600
  %v3674 = vunpack.c.h.bf16 %v3600
  %v3675 = vunpack.c.l.bf16 %v3601
  %v3676 = vunpack.c.h.bf16 %v3601
  %v3677 = vunpack.c.l.bf16 %v3602
  %v3678 = vunpack.c.h.bf16 %v3602
  %v3679 = vunpack.c.l.bf16 %v3603
  %v3680 = vunpack.c.h.bf16 %v3603
  %v3681 = vunpack.c.l.bf16 %v3604
  %v3682 = vunpack.c.h.bf16 %v3604
  %v3683 = vunpack.c.l.bf16 %v3605
  %v3684 = vunpack.c.h.bf16 %v3605
  %v3685 = vunpack.c.l.bf16 %v3606
  %v3686 = vunpack.c.h.bf16 %v3606
  %v3687 = vunpack.c.l.bf16 %v3607
  %v3688 = vunpack.c.h.bf16 %v3607
  %v3689 = vunpack.c.l.bf16 %v3608
  %v3690 = vunpack.c.h.bf16 %v3608
  %v3691 = vunpack.c.l.bf16 %v3609
  %v3692 = vunpack.c.h.bf16 %v3609
  %v3693 = vunpack.c.l.bf16 %v3610
  %v3694 = vunpack.c.h.bf16 %v3610
  %v3695 = vunpack.c.l.bf16 %v3611
  %v3696 = vunpack.c.h.bf16 %v3611
  %v3697 = vunpack.c.l.bf16 %v3612
  %v3698 = vunpack.c.h.bf16 %v3612
  %v3699 = vunpack.c.l.bf16 %v3613
  %v3700 = vunpack.c.h.bf16 %v3613
  %v3701 = vunpack.c.l.bf16 %v3614
  %v3702 = vunpack.c.h.bf16 %v3614
  %v3703 = vunpack.c.l.bf16 %v3615
  %v3704 = vunpack.c.h.bf16 %v3615
  %v3705 = vunpack.c.l.bf16 %v3616
  %v3706 = vunpack.c.h.bf16 %v3616
  %v3707 = vunpack.c.l.bf16 %v3617
  %v3708 = vunpack.c.h.bf16 %v3617
  %v3709 = vunpack.c.l.bf16 %v3618
  %v3710 = vunpack.c.h.bf16 %v3618
  %v3711 = vunpack.c.l.bf16 %v3619
  %v3712 = vunpack.c.h.bf16 %v3619
  %v3713 = vunpack.c.l.bf16 %v3620
  %v3714 = vunpack.c.h.bf16 %v3620
  %v3715 = vunpack.c.l.bf16 %v3621
  %v3716 = vunpack.c.h.bf16 %v3621
  %v3717 = vunpack.c.l.bf16 %v3622
  %v3718 = vunpack.c.h.bf16 %v3622
  %v3719 = vunpack.c.l.bf16 %v3623
  %v3720 = vunpack.c.h.bf16 %v3623
  %v3721 = vunpack.c.l.bf16 %v3624
  %v3722 = vunpack.c.h.bf16 %v3624
  %v3723 = vunpack.c.l.bf16 %v3625
  %v3724 = vunpack.c.h.bf16 %v3625
  %v3725 = vunpack.c.l.bf16 %v3626
  %v3726 = vunpack.c.h.bf16 %v3626
  %v3727 = vunpack.c.l.bf16 %v3627
  %v3728 = vunpack.c.h.bf16 %v3627
  %v3729 = vunpack.c.l.bf16 %v3628
  %v3730 = vunpack.c.h.bf16 %v3628
  %v3731 = vunpack.c.l.bf16 %v3629
  %v3732 = vunpack.c.h.bf16 %v3629
  %v3733 = vunpack.c.l.bf16 %v3630
  %v3734 = vunpack.c.h.bf16 %v3630
  %v3735 = vunpack.c.l.bf16 %v3631
  %v3736 = vunpack.c.h.bf16 %v3631
  %v3737 = vunpack.c.l.bf16 %v3632
  %v3738 = vunpack.c.h.bf16 %v3632
  %v3739 = vunpack.c.l.bf16 %v3633
  %v3740 = vunpack.c.h.bf16 %v3633
  %v3741 = vunpack.c.l.bf16 %v3634
  %v3742 = vunpack.c.h.bf16 %v3634
  %v3743 = vunpack.c.l.bf16 %v3635
  %v3744 = vunpack.c.h.bf16 %v3635
  %v3745 = vunpack.c.l.bf16 %v3636
  %v3746 = vunpack.c.h.bf16 %v3636
  %v3747 = vunpack.c.l.bf16 %v3637
  %v3748 = vunpack.c.h.bf16 %v3637
  %v3749 = vunpack.c.l.bf16 %v3638
  %v3750 = vsub.f32 %v3639, 1.0
  %v3751 = vsub.f32 %v3640, 1.0
  %v3752 = vsub.f32 %v3641, 1.0
  %v3753 = vsub.f32 %v3642, 1.0
  %v3754 = vsub.f32 %v3643, 1.0
  %v3755 = vsub.f32 %v3644, 1.0
  %v3756 = vsub.f32 %v3645, 1.0
  %v3757 = vsub.f32 %v3646, 1.0
  %v3758 = vsub.f32 %v3647, 1.0
  %v3759 = vsub.f32 %v3648, 1.0
  %v3760 = vsub.f32 %v3649, 1.0
  %v3761 = vsub.f32 %v3650, 1.0
  %v3762 = vsub.f32 %v3651, 1.0
  %v3763 = vsub.f32 %v3652, 1.0
  %v3764 = vsub.f32 %v3653, 1.0
  %v3765 = vsub.f32 %v3654, 1.0
  %v3766 = vsub.f32 %v3655, 1.0
  %v3767 = vsub.f32 %v3656, 1.0
  %v3768 = vsub.f32 %v3657, 1.0
  %v3769 = vsub.f32 %v3658, 1.0
  %v3770 = vsub.f32 %v3659, 1.0
  %v3771 = vsub.f32 %v3660, 1.0
  %v3772 = vsub.f32 %v3661, 1.0
  %v3773 = vsub.f32 %v3662, 1.0
  %v3774 = vsub.f32 %v3663, 1.0
  %v3775 = vsub.f32 %v3664, 1.0
  %v3776 = vsub.f32 %v3665, 1.0
  %v3777 = vsub.f32 %v3666, 1.0
  %v3778 = vsub.f32 %v3667, 1.0
  %v3779 = vsub.f32 %v3668, 1.0
  %v3780 = vsub.f32 %v3669, 1.0
  %v3781 = vsub.f32 %v3670, 1.0
  %v3782 = vsub.f32 %v3671, 1.0
  %v3783 = vsub.f32 %v3672, 1.0
  %v3784 = vsub.f32 %v3673, 1.0
  %v3785 = vsub.f32 %v3674, 1.0
  %v3786 = vsub.f32 %v3675, 1.0
  %v3787 = vsub.f32 %v3676, 1.0
  %v3788 = vsub.f32 %v3677, 1.0
  %v3789 = vsub.f32 %v3678, 1.0
  %v3790 = vsub.f32 %v3679, 1.0
  %v3791 = vsub.f32 %v3680, 1.0
  %v3792 = vsub.f32 %v3681, 1.0
  %v3793 = vsub.f32 %v3682, 1.0
  %v3794 = vsub.f32 %v3683, 1.0
  %v3795 = vsub.f32 %v3684, 1.0
  %v3796 = vsub.f32 %v3685, 1.0
  %v3797 = vsub.f32 %v3686, 1.0
  %v3798 = vsub.f32 %v3687, 1.0
  %v3799 = vsub.f32 %v3688, 1.0
  %v3800 = vsub.f32 %v3689, 1.0
  %v3801 = vsub.f32 %v3690, 1.0
  %v3802 = vsub.f32 %v3691, 1.0
  %v3803 = vsub.f32 %v3692, 1.0
  %v3804 = vsub.f32 %v3693, 1.0
  %v3805 = vsub.f32 %v3694, 1.0
  %v3806 = vsub.f32 %v3695, 1.0
  %v3807 = vsub.f32 %v3696, 1.0
  %v3808 = vsub.f32 %v3697, 1.0
  %v3809 = vsub.f32 %v3698, 1.0
  %v3810 = vsub.f32 %v3699, 1.0
  %v3811 = vsub.f32 %v3700, 1.0
  %v3812 = vsub.f32 %v3701, 1.0
  %v3813 = vsub.f32 %v3702, 1.0
  %v3814 = vsub.f32 %v3703, 1.0
  %v3815 = vsub.f32 %v3704, 1.0
  %v3816 = vsub.f32 %v3705, 1.0
  %v3817 = vsub.f32 %v3706, 1.0
  %v3818 = vsub.f32 %v3707, 1.0
  %v3819 = vsub.f32 %v3708, 1.0
  %v3820 = vsub.f32 %v3709, 1.0
  %v3821 = vsub.f32 %v3710, 1.0
  %v3822 = vsub.f32 %v3711, 1.0
  %v3823 = vsub.f32 %v3712, 1.0
  %v3824 = vsub.f32 %v3713, 1.0
  %v3825 = vsub.f32 %v3714, 1.0
  %v3826 = vsub.f32 %v3715, 1.0
  %v3827 = vsub.f32 %v3716, 1.0
  %v3828 = vsub.f32 %v3717, 1.0
  %v3829 = vsub.f32 %v3718, 1.0
  %v3830 = vsub.f32 %v3719, 1.0
  %v3831 = vsub.f32 %v3720, 1.0
  %v3832 = vsub.f32 %v3721, 1.0
  %v3833 = vsub.f32 %v3722, 1.0
  %v3834 = vsub.f32 %v3723, 1.0
  %v3835 = vsub.f32 %v3724, 1.0
  %v3836 = vsub.f32 %v3725, 1.0
  %v3837 = vsub.f32 %v3726, 1.0
  %v3838 = vsub.f32 %v3727, 1.0
  %v3839 = vsub.f32 %v3728, 1.0
  %v3840 = vsub.f32 %v3729, 1.0
  %v3841 = vsub.f32 %v3730, 1.0
  %v3842 = vsub.f32 %v3731, 1.0
  %v3843 = vsub.f32 %v3732, 1.0
  %v3844 = vsub.f32 %v3733, 1.0
  %v3845 = vsub.f32 %v3734, 1.0
  %v3846 = vsub.f32 %v3735, 1.0
  %v3847 = vsub.f32 %v3736, 1.0
  %v3848 = vsub.f32 %v3737, 1.0
  %v3849 = vsub.f32 %v3738, 1.0
  %v3850 = vsub.f32 %v3739, 1.0
  %v3851 = vsub.f32 %v3740, 1.0
  %v3852 = vsub.f32 %v3741, 1.0
  %v3853 = vsub.f32 %v3742, 1.0
  %v3854 = vsub.f32 %v3743, 1.0
  %v3855 = vsub.f32 %v3744, 1.0
  %v3856 = vsub.f32 %v3745, 1.0
  %v3857 = vsub.f32 %v3746, 1.0
  %v3858 = vsub.f32 %v3747, 1.0
  %v3859 = vsub.f32 %v3748, 1.0
  %v3860 = vsub.f32 %v3749, 1.0
  %v3861 = vpack.c.bf16 %v3751, %v3750
  %v3862 = vpack.c.bf16 %v3753, %v3752
  %v3863 = vpack.c.bf16 %v3755, %v3754
  %v3864 = vpack.c.bf16 %v3757, %v3756
  %v3865 = vpack.c.bf16 %v3759, %v3758
  %v3866 = vpack.c.bf16 %v3761, %v3760
  %v3867 = vpack.c.bf16 %v3763, %v3762
  %v3868 = vpack.c.bf16 %v3765, %v3764
  %v3869 = vpack.c.bf16 %v3767, %v3766
  %v3870 = vpack.c.bf16 %v3769, %v3768
  %v3871 = vpack.c.bf16 %v3771, %v3770
  %v3872 = vpack.c.bf16 %v3773, %v3772
  %v3873 = vpack.c.bf16 %v3775, %v3774
  %v3874 = vpack.c.bf16 %v3777, %v3776
  %v3875 = vpack.c.bf16 %v3779, %v3778
  %v3876 = vpack.c.bf16 %v3781, %v3780
  %v3877 = vpack.c.bf16 %v3783, %v3782
  %v3878 = vpack.c.bf16 %v3785, %v3784
  %v3879 = vpack.c.bf16 %v3787, %v3786
  %v3880 = vpack.c.bf16 %v3789, %v3788
  %v3881 = vpack.c.bf16 %v3791, %v3790
  %v3882 = vpack.c.bf16 %v3793, %v3792
  %v3883 = vpack.c.bf16 %v3795, %v3794
  %v3884 = vpack.c.bf16 %v3797, %v3796
  %v3885 = vpack.c.bf16 %v3799, %v3798
  %v3886 = vpack.c.bf16 %v3801, %v3800
  %v3887 = vpack.c.bf16 %v3803, %v3802
  %v3888 = vpack.c.bf16 %v3805, %v3804
  %v3889 = vpack.c.bf16 %v3807, %v3806
  %v3890 = vpack.c.bf16 %v3809, %v3808
  %v3891 = vpack.c.bf16 %v3811, %v3810
  %v3892 = vpack.c.bf16 %v3813, %v3812
  %v3893 = vpack.c.bf16 %v3815, %v3814
  %v3894 = vpack.c.bf16 %v3817, %v3816
  %v3895 = vpack.c.bf16 %v3819, %v3818
  %v3896 = vpack.c.bf16 %v3821, %v3820
  %v3897 = vpack.c.bf16 %v3823, %v3822
  %v3898 = vpack.c.bf16 %v3825, %v3824
  %v3899 = vpack.c.bf16 %v3827, %v3826
  %v3900 = vpack.c.bf16 %v3829, %v3828
  %v3901 = vpack.c.bf16 %v3831, %v3830
  %v3902 = vpack.c.bf16 %v3833, %v3832
  %v3903 = vpack.c.bf16 %v3835, %v3834
  %v3904 = vpack.c.bf16 %v3837, %v3836
  %v3905 = vpack.c.bf16 %v3839, %v3838
  %v3906 = vpack.c.bf16 %v3841, %v3840
  %v3907 = vpack.c.bf16 %v3843, %v3842
  %v3908 = vpack.c.bf16 %v3845, %v3844
  %v3909 = vpack.c.bf16 %v3847, %v3846
  %v3910 = vpack.c.bf16 %v3849, %v3848
  %v3911 = vpack.c.bf16 %v3851, %v3850
  %v3912 = vpack.c.bf16 %v3853, %v3852
  %v3913 = vpack.c.bf16 %v3855, %v3854
  %v3914 = vpack.c.bf16 %v3857, %v3856
  %v3915 = vpack.c.bf16 %v3859, %v3858
  %v3916 = vpack.c.bf16 %v3860, %v3860
  %vm3917 = vmpackc.low %vm2973, %vm2972
  %vm3918 = vmpackc.low %vm2975, %vm2974
  %vm3919 = vmpackc.low %vm2977, %vm2976
  %vm3920 = vmpackc.low %vm2979, %vm2978
  %vm3921 = vmpackc.low %vm2981, %vm2980
  %vm3922 = vmpackc.low %vm2983, %vm2982
  %vm3923 = vmpackc.low %vm2985, %vm2984
  %vm3924 = vmpackc.low %vm2987, %vm2986
  %vm3925 = vmpackc.low %vm2989, %vm2988
  %vm3926 = vmpackc.low %vm2991, %vm2990
  %vm3927 = vmpackc.low %vm2993, %vm2992
  %vm3928 = vmpackc.low %vm2995, %vm2994
  %vm3929 = vmpackc.low %vm2997, %vm2996
  %vm3930 = vmpackc.low %vm2999, %vm2998
  %vm3931 = vmpackc.low %vm3001, %vm3000
  %vm3932 = vmpackc.low %vm3003, %vm3002
  %vm3933 = vmpackc.low %vm3005, %vm3004
  %vm3934 = vmpackc.low %vm3007, %vm3006
  %vm3935 = vmpackc.low %vm3009, %vm3008
  %vm3936 = vmpackc.low %vm3011, %vm3010
  %vm3937 = vmpackc.low %vm3013, %vm3012
  %vm3938 = vmpackc.low %vm3015, %vm3014
  %vm3939 = vmpackc.low %vm3017, %vm3016
  %vm3940 = vmpackc.low %vm3019, %vm3018
  %vm3941 = vmpackc.low %vm3021, %vm3020
  %vm3942 = vmpackc.low %vm3023, %vm3022
  %vm3943 = vmpackc.low %vm3025, %vm3024
  %vm3944 = vmpackc.low %vm3027, %vm3026
  %vm3945 = vmpackc.low %vm3029, %vm3028
  %vm3946 = vmpackc.low %vm3031, %vm3030
  %vm3947 = vmpackc.low %vm3033, %vm3032
  %vm3948 = vmpackc.low %vm3035, %vm3034
  %vm3949 = vmpackc.low %vm3037, %vm3036
  %vm3950 = vmpackc.low %vm3039, %vm3038
  %vm3951 = vmpackc.low %vm3041, %vm3040
  %vm3952 = vmpackc.low %vm3043, %vm3042
  %vm3953 = vmpackc.low %vm3045, %vm3044
  %vm3954 = vmpackc.low %vm3047, %vm3046
  %vm3955 = vmpackc.low %vm3049, %vm3048
  %vm3956 = vmpackc.low %vm3051, %vm3050
  %vm3957 = vmpackc.low %vm3053, %vm3052
  %vm3958 = vmpackc.low %vm3055, %vm3054
  %vm3959 = vmpackc.low %vm3057, %vm3056
  %vm3960 = vmpackc.low %vm3059, %vm3058
  %vm3961 = vmpackc.low %vm3061, %vm3060
  %vm3962 = vmpackc.low %vm3063, %vm3062
  %vm3963 = vmpackc.low %vm3065, %vm3064
  %vm3964 = vmpackc.low %vm3067, %vm3066
  %vm3965 = vmpackc.low %vm3069, %vm3068
  %vm3966 = vmpackc.low %vm3071, %vm3070
  %vm3967 = vmpackc.low %vm3073, %vm3072
  %vm3968 = vmpackc.low %vm3075, %vm3074
  %vm3969 = vmpackc.low %vm3077, %vm3076
  %vm3970 = vmpackc.low %vm3079, %vm3078
  %vm3971 = vmpackc.low %vm3081, %vm3080
  %vm3972 = vmpackc.low %vm3082, %vm3082
  %v3973 = vsel %vm3917, %v2805, %v3861
  %v3974 = vsel %vm3918, %v2806, %v3862
  %v3975 = vsel %vm3919, %v2807, %v3863
  %v3976 = vsel %vm3920, %v2808, %v3864
  %v3977 = vsel %vm3921, %v2809, %v3865
  %v3978 = vsel %vm3922, %v2810, %v3866
  %v3979 = vsel %vm3923, %v2811, %v3867
  %v3980 = vsel %vm3924, %v2812, %v3868
  %v3981 = vsel %vm3925, %v2813, %v3869
  %v3982 = vsel %vm3926, %v2814, %v3870
  %v3983 = vsel %vm3927, %v2815, %v3871
  %v3984 = vsel %vm3928, %v2816, %v3872
  %v3985 = vsel %vm3929, %v2817, %v3873
  %v3986 = vsel %vm3930, %v2818, %v3874
  %v3987 = vsel %vm3931, %v2819, %v3875
  %v3988 = vsel %vm3932, %v2820, %v3876
  %v3989 = vsel %vm3933, %v2821, %v3877
  %v3990 = vsel %vm3934, %v2822, %v3878
  %v3991 = vsel %vm3935, %v2823, %v3879
  %v3992 = vsel %vm3936, %v2824, %v3880
  %v3993 = vsel %vm3937, %v2825, %v3881
  %v3994 = vsel %vm3938, %v2826, %v3882
  %v3995 = vsel %vm3939, %v2827, %v3883
  %v3996 = vsel %vm3940, %v2828, %v3884
  %v3997 = vsel %vm3941, %v2829, %v3885
  %v3998 = vsel %vm3942, %v2830, %v3886
  %v3999 = vsel %vm3943, %v2831, %v3887
  %v4000 = vsel %vm3944, %v2832, %v3888
  %v4001 = vsel %vm3945, %v2833, %v3889
  %v4002 = vsel %vm3946, %v2834, %v3890
  %v4003 = vsel %vm3947, %v2835, %v3891
  %v4004 = vsel %vm3948, %v2836, %v3892
  %v4005 = vsel %vm3949, %v2837, %v3893
  %v4006 = vsel %vm3950, %v2838, %v3894
  %v4007 = vsel %vm3951, %v2839, %v3895
  %v4008 = vsel %vm3952, %v2840, %v3896
  %v4009 = vsel %vm3953, %v2841, %v3897
  %v4010 = vsel %vm3954, %v2842, %v3898
  %v4011 = vsel %vm3955, %v2843, %v3899
  %v4012 = vsel %vm3956, %v2844, %v3900
  %v4013 = vsel %vm3957, %v2845, %v3901
  %v4014 = vsel %vm3958, %v2846, %v3902
  %v4015 = vsel %vm3959, %v2847, %v3903
  %v4016 = vsel %vm3960, %v2848, %v3904
  %v4017 = vsel %vm3961, %v2849, %v3905
  %v4018 = vsel %vm3962, %v2850, %v3906
  %v4019 = vsel %vm3963, %v2851, %v3907
  %v4020 = vsel %vm3964, %v2852, %v3908
  %v4021 = vsel %vm3965, %v2853, %v3909
  %v4022 = vsel %vm3966, %v2854, %v3910
  %v4023 = vsel %vm3967, %v2855, %v3911
  %v4024 = vsel %vm3968, %v2856, %v3912
  %v4025 = vsel %vm3969, %v2857, %v3913
  %v4026 = vsel %vm3970, %v2858, %v3914
  %v4027 = vsel %vm3971, %v2859, %v3915
  %v4028 = vsel %vm3972, %v2860, %v3916
  %4029 = vst [vmem:[%s3] sm:$0x77] %v3973
  %4030 = vst [vmem:[%s3 + $0x8] sm:$0x77] %v3974
  %4031 = vst [vmem:[%s3 + $0x10] sm:$0x77] %v3975
  %4032 = vst [vmem:[%s3 + $0x18] sm:$0x77] %v3976
  %4033 = vst [vmem:[%s3 + $0x20] sm:$0x77] %v3977
  %4034 = vst [vmem:[%s3 + $0x28] sm:$0x77] %v3978
  %4035 = vst [vmem:[%s3 + $0x30] sm:$0x77] %v3979
  %4036 = vst [vmem:[%s3 + $0x38] sm:$0x77] %v3980
  %4037 = vst [vmem:[%s3 + $0x40] sm:$0x77] %v3981
  %4038 = vst [vmem:[%s3 + $0x48] sm:$0x77] %v3982
  %4039 = vst [vmem:[%s3 + $0x50] sm:$0x77] %v3983
  %4040 = vst [vmem:[%s3 + $0x58] sm:$0x77] %v3984
  %4041 = vst [vmem:[%s3 + $0x60] sm:$0x77] %v3985
  %4042 = vst [vmem:[%s3 + $0x68] sm:$0x77] %v3986
  %4043 = vst [vmem:[%s3 + $0x70] sm:$0x77] %v3987
  %4044 = vst [vmem:[%s3 + $0x78] sm:$0x77] %v3988
  %4045 = vst [vmem:[%s3 + $0x80] sm:$0x77] %v3989
  %4046 = vst [vmem:[%s3 + $0x88] sm:$0x77] %v3990
  %4047 = vst [vmem:[%s3 + $0x90] sm:$0x77] %v3991
  %4048 = vst [vmem:[%s3 + $0x98] sm:$0x77] %v3992
  %4049 = vst [vmem:[%s3 + $0xa0] sm:$0x77] %v3993
  %4050 = vst [vmem:[%s3 + $0xa8] sm:$0x77] %v3994
  %4051 = vst [vmem:[%s3 + $0xb0] sm:$0x77] %v3995
  %4052 = vst [vmem:[%s3 + $0xb8] sm:$0x77] %v3996
  %4053 = vst [vmem:[%s3 + $0xc0] sm:$0x77] %v3997
  %4054 = vst [vmem:[%s3 + $0xc8] sm:$0x77] %v3998
  %4055 = vst [vmem:[%s3 + $0xd0] sm:$0x77] %v3999
  %4056 = vst [vmem:[%s3 + $0xd8] sm:$0x77] %v4000
  %4057 = vst [vmem:[%s3 + $0xe0] sm:$0x77] %v4001
  %4058 = vst [vmem:[%s3 + $0xe8] sm:$0x77] %v4002
  %4059 = vst [vmem:[%s3 + $0xf0] sm:$0x77] %v4003
  %4060 = vst [vmem:[%s3 + $0xf8] sm:$0x77] %v4004
  %4061 = vst [vmem:[%s3 + $0x100] sm:$0x77] %v4005
  %4062 = vst [vmem:[%s3 + $0x108] sm:$0x77] %v4006
  %4063 = vst [vmem:[%s3 + $0x110] sm:$0x77] %v4007
  %4064 = vst [vmem:[%s3 + $0x118] sm:$0x77] %v4008
  %4065 = vst [vmem:[%s3 + $0x120] sm:$0x77] %v4009
  %4066 = vst [vmem:[%s3 + $0x128] sm:$0x77] %v4010
  %4067 = vst [vmem:[%s3 + $0x130] sm:$0x77] %v4011
  %4068 = vst [vmem:[%s3 + $0x138] sm:$0x77] %v4012
  %4069 = vst [vmem:[%s3 + $0x140] sm:$0x77] %v4013
  %4070 = vst [vmem:[%s3 + $0x148] sm:$0x77] %v4014
  %4071 = vst [vmem:[%s3 + $0x150] sm:$0x77] %v4015
  %4072 = vst [vmem:[%s3 + $0x158] sm:$0x77] %v4016
  %4073 = vst [vmem:[%s3 + $0x160] sm:$0x77] %v4017
  %4074 = vst [vmem:[%s3 + $0x168] sm:$0x77] %v4018
  %4075 = vst [vmem:[%s3 + $0x170] sm:$0x77] %v4019
  %4076 = vst [vmem:[%s3 + $0x178] sm:$0x77] %v4020
  %4077 = vst [vmem:[%s3 + $0x180] sm:$0x77] %v4021
  %4078 = vst [vmem:[%s3 + $0x188] sm:$0x77] %v4022
  %4079 = vst [vmem:[%s3 + $0x190] sm:$0x77] %v4023
  %4080 = vst [vmem:[%s3 + $0x198] sm:$0x77] %v4024
  %4081 = vst [vmem:[%s3 + $0x1a0] sm:$0x77] %v4025
  %4082 = vst [vmem:[%s3 + $0x1a8] sm:$0x77] %v4026
  %4083 = vst [vmem:[%s3 + $0x1b0] sm:$0x77] %v4027
  %vm4084 = vcmask 894976
  %4085 = vst.msk [vmem:[%s3 + $0x1b8] sm:$0x7] %vm4084, %v4028
  // Predicated region
  $region14: #{ft_loss_forward.5} parent=0 // pred_check
    _
  $region15: #{ft_loss_forward.5} parent=0 // pred_check_branch
    %4087 = sbr.rel (0) target = $region17
  $region16: #{ft_loss_forward.5} parent=0 // pred_region
    _
  $region17: #{ft_loss_forward.5} parent=0 // pred_fallthru
    _
  // Predicated region
  $region18: #{ft_loss_forward.5} parent=0 // pred_check
    _
  $region19: #{ft_loss_forward.5} parent=0 // pred_check_branch
    %4089 = sbr.rel (0) target = $region21
  $region20: #{ft_loss_forward.5} parent=0 // pred_region
    _
  $region21: #{ft_loss_forward.5} parent=0 // pred_fallthru
    _

// kernel: ft_loss_forward.6
$region0: #{ft_loss_forward.6}
  #allocation0 [shape = 'u32[]', space=smem, size = 0x4, offset = 0x4, fixed_abs, tag = 'smem constant byte address 0x4 - core index']
  #allocation1 [shape = 'u32[72,128]{1,0:T(1,128)}', space=vmem, size = 0x9000, scoped, tag = 'internal scratch']
  %s0 = inlined_call_operand.vmem [shape: bf16[16,54], index: 0, kind: input, shape index: {}]
  %s1 = inlined_call_operand.vmem [shape: f32[16,1], index: 1, kind: input, shape index: {}]
  %s2 = inlined_call_operand.vmem [shape: bf16[54,3640], index: 2, kind: input, shape index: {}]
  %s3 = inlined_call_operand.vmem [shape: bf16[8,3640], index: 3, kind: output, shape index: {0}]
  %s4 = inlined_call_operand.vmem [shape: bf16[8,3640], index: 4, kind: output, shape index: {1}]
  %5 = xla_tuple %s3, %s4
  %s6 = sld [smem:[#allocation0]]
  $region30: #{ft_loss_forward.6} parent=0
    _
  %s8 = ssub.s32 1, %s6
  %s9 = scalar_select 0, %s8, %s6
  // Predicated region
  $region2: #{ft_loss_forward.6} parent=0 // pred_check
    _
  $region3: #{ft_loss_forward.6} parent=0 // pred_check_branch
    %11 = sbr.rel (0) target = $region5
  $region4: #{ft_loss_forward.6} parent=0 // pred_region
    _
  $region5: #{ft_loss_forward.6} parent=0 // pred_fallthru
    _
  // Predicated region
  $region6: #{ft_loss_forward.6} parent=0 // pred_check
    _
  $region7: #{ft_loss_forward.6} parent=0 // pred_check_branch
    %13 = sbr.rel (0) target = $region9
  $region8: #{ft_loss_forward.6} parent=0 // pred_region
    _
  $region9: #{ft_loss_forward.6} parent=0 // pred_fallthru
    _
  // Predicated region
  $region10: #{ft_loss_forward.6} parent=0 // pred_check
    _
  $region11: #{ft_loss_forward.6} parent=0 // pred_check_branch
    %15 = sbr.rel (0) target = $region13
  $region12: #{ft_loss_forward.6} parent=0 // pred_region
    _
  $region13: #{ft_loss_forward.6} parent=0 // pred_fallthru
    _
  %v17 = vld [vmem:[%s0] sm:$0xf]
  %v18 = vld [vmem:[%s0 + $0x4] sm:$0xf]
  %v19 = vld [vmem:[%s2] sm:$0xff]
  %v20 = vld [vmem:[%s2 + $0x8] sm:$0xff]
  %v21 = vld [vmem:[%s2 + $0x10] sm:$0xff]
  %v22 = vld [vmem:[%s2 + $0x18] sm:$0xff]
  %v23 = vld [vmem:[%s2 + $0x20] sm:$0xff]
  %v24 = vld [vmem:[%s2 + $0x28] sm:$0xff]
  %v25 = vld [vmem:[%s2 + $0x30] sm:$0xff]
  %v26 = vld [vmem:[%s2 + $0x38] sm:$0xff]
  %v27 = vld [vmem:[%s2 + $0x40] sm:$0xff]
  %v28 = vld [vmem:[%s2 + $0x48] sm:$0xff]
  %v29 = vld [vmem:[%s2 + $0x50] sm:$0xff]
  %v30 = vld [vmem:[%s2 + $0x58] sm:$0xff]
  %v31 = vld [vmem:[%s2 + $0x60] sm:$0xff]
  %v32 = vld [vmem:[%s2 + $0x68] sm:$0xff]
  %v33 = vld [vmem:[%s2 + $0x70] sm:$0xf]
  %v34 = vld [vmem:[%s2 + $0x74] sm:$0xff]
  %v35 = vld [vmem:[%s2 + $0x7c] sm:$0xff]
  %v36 = vld [vmem:[%s2 + $0x84] sm:$0xff]
  %v37 = vld [vmem:[%s2 + $0x8c] sm:$0xff]
  %v38 = vld [vmem:[%s2 + $0x94] sm:$0xff]
  %v39 = vld [vmem:[%s2 + $0x9c] sm:$0xff]
  %v40 = vld [vmem:[%s2 + $0xa4] sm:$0xff]
  %v41 = vld [vmem:[%s2 + $0xac] sm:$0xff]
  %v42 = vld [vmem:[%s2 + $0xb4] sm:$0xff]
  %v43 = vld [vmem:[%s2 + $0xbc] sm:$0xff]
  %v44 = vld [vmem:[%s2 + $0xc4] sm:$0xff]
  %v45 = vld [vmem:[%s2 + $0xcc] sm:$0xff]
  %v46 = vld [vmem:[%s2 + $0xd4] sm:$0xff]
  %v47 = vld [vmem:[%s2 + $0xdc] sm:$0xff]
  %v48 = vld [vmem:[%s2 + $0xe4] sm:$0xf]
  %v49 = vld [vmem:[%s2 + $0xe8] sm:$0xff]
  %v50 = vld [vmem:[%s2 + $0xf0] sm:$0xff]
  %v51 = vld [vmem:[%s2 + $0xf8] sm:$0xff]
  %v52 = vld [vmem:[%s2 + $0x100] sm:$0xff]
  %v53 = vld [vmem:[%s2 + $0x108] sm:$0xff]
  %v54 = vld [vmem:[%s2 + $0x110] sm:$0xff]
  %v55 = vld [vmem:[%s2 + $0x118] sm:$0xff]
  %v56 = vld [vmem:[%s2 + $0x120] sm:$0xff]
  %v57 = vld [vmem:[%s2 + $0x128] sm:$0xff]
  %v58 = vld [vmem:[%s2 + $0x130] sm:$0xff]
  %v59 = vld [vmem:[%s2 + $0x138] sm:$0xff]
  %v60 = vld [vmem:[%s2 + $0x140] sm:$0xff]
  %v61 = vld [vmem:[%s2 + $0x148] sm:$0xff]
  %v62 = vld [vmem:[%s2 + $0x150] sm:$0xff]
  %v63 = vld [vmem:[%s2 + $0x158] sm:$0xf]
  %v64 = vld [vmem:[%s2 + $0x15c] sm:$0xff]
  %v65 = vld [vmem:[%s2 + $0x164] sm:$0xff]
  %v66 = vld [vmem:[%s2 + $0x16c] sm:$0xff]
  %v67 = vld [vmem:[%s2 + $0x174] sm:$0xff]
  %v68 = vld [vmem:[%s2 + $0x17c] sm:$0xff]
  %v69 = vld [vmem:[%s2 + $0x184] sm:$0xff]
  %v70 = vld [vmem:[%s2 + $0x18c] sm:$0xff]
  %v71 = vld [vmem:[%s2 + $0x194] sm:$0xff]
  %v72 = vld [vmem:[%s2 + $0x19c] sm:$0xff]
  %v73 = vld [vmem:[%s2 + $0x1a4] sm:$0xff]
  %v74 = vld [vmem:[%s2 + $0x1ac] sm:$0xff]
  %v75 = vld [vmem:[%s2 + $0x1b4] sm:$0xff]
  %v76 = vld [vmem:[%s2 + $0x1bc] sm:$0xff]
  %v77 = vld [vmem:[%s2 + $0x1c4] sm:$0xff]
  %v78 = vld [vmem:[%s2 + $0x1cc] sm:$0xf]
  %v79 = vld [vmem:[%s2 + $0x1d0] sm:$0xff]
  %v80 = vld [vmem:[%s2 + $0x1d8] sm:$0xff]
  %v81 = vld [vmem:[%s2 + $0x1e0] sm:$0xff]
  %v82 = vld [vmem:[%s2 + $0x1e8] sm:$0xff]
  %v83 = vld [vmem:[%s2 + $0x1f0] sm:$0xff]
  %v84 = vld [vmem:[%s2 + $0x1f8] sm:$0xff]
  %v85 = vld [vmem:[%s2 + $0x200] sm:$0xff]
  %v86 = vld [vmem:[%s2 + $0x208] sm:$0xff]
  %v87 = vld [vmem:[%s2 + $0x210] sm:$0xff]
  %v88 = vld [vmem:[%s2 + $0x218] sm:$0xff]
  %v89 = vld [vmem:[%s2 + $0x220] sm:$0xff]
  %v90 = vld [vmem:[%s2 + $0x228] sm:$0xff]
  %v91 = vld [vmem:[%s2 + $0x230] sm:$0xff]
  %v92 = vld [vmem:[%s2 + $0x238] sm:$0xff]
  %v93 = vld [vmem:[%s2 + $0x240] sm:$0xf]
  %v94 = vld [vmem:[%s2 + $0x244] sm:$0xff]
  %v95 = vld [vmem:[%s2 + $0x24c] sm:$0xff]
  %v96 = vld [vmem:[%s2 + $0x254] sm:$0xff]
  %v97 = vld [vmem:[%s2 + $0x25c] sm:$0xff]
  %v98 = vld [vmem:[%s2 + $0x264] sm:$0xff]
  %v99 = vld [vmem:[%s2 + $0x26c] sm:$0xff]
  %v100 = vld [vmem:[%s2 + $0x274] sm:$0xff]
  %v101 = vld [vmem:[%s2 + $0x27c] sm:$0xff]
  %v102 = vld [vmem:[%s2 + $0x284] sm:$0xff]
  %v103 = vld [vmem:[%s2 + $0x28c] sm:$0xff]
  %v104 = vld [vmem:[%s2 + $0x294] sm:$0xff]
  %v105 = vld [vmem:[%s2 + $0x29c] sm:$0xff]
  %v106 = vld [vmem:[%s2 + $0x2a4] sm:$0xff]
  %v107 = vld [vmem:[%s2 + $0x2ac] sm:$0xff]
  %v108 = vld [vmem:[%s2 + $0x2b4] sm:$0xf]
  %v109 = vld [vmem:[%s2 + $0x2b8] sm:$0x77]
  %v110 = vld [vmem:[%s2 + $0x2c0] sm:$0x77]
  %v111 = vld [vmem:[%s2 + $0x2c8] sm:$0x77]
  %v112 = vld [vmem:[%s2 + $0x2d0] sm:$0x77]
  %v113 = vld [vmem:[%s2 + $0x2d8] sm:$0x77]
  %v114 = vld [vmem:[%s2 + $0x2e0] sm:$0x77]
  %v115 = vld [vmem:[%s2 + $0x2e8] sm:$0x77]
  %v116 = vld [vmem:[%s2 + $0x2f0] sm:$0x77]
  %v117 = vld [vmem:[%s2 + $0x2f8] sm:$0x77]
  %v118 = vld [vmem:[%s2 + $0x300] sm:$0x77]
  %v119 = vld [vmem:[%s2 + $0x308] sm:$0x77]
  %v120 = vld [vmem:[%s2 + $0x310] sm:$0x77]
  %v121 = vld [vmem:[%s2 + $0x318] sm:$0x77]
  %v122 = vld [vmem:[%s2 + $0x320] sm:$0x77]
  %v123 = vld [vmem:[%s2 + $0x328] sm:$0x7]
  %v124 = vld [vmem:[%s1] sm:$0xff]
  %v125 = vld [vmem:[%s1 + $0x8] sm:$0xff]
  %127 = vset.pattern.permute.xlu0 0
  %128 = vperm.xlu0 %127, %v124
  %v129 = vpop.permute.xlu0 %128
  %132 = vset.pattern.permute.xlu0 0
  %133 = vperm.xlu0 %132, %v125
  %v134 = vpop.permute.xlu0 %133
  %v138 = vunpack.c.l.b16 %v17
  %v139 = vunpack.c.l.b16 %v18
  %v140 = vpack.c.b16 %v139, %v138
  %v246 = vunpack.c.l.b16 %v19
  %v247 = vunpack.c.h.b16 %v19
  %v248 = vunpack.c.l.b16 %v20
  %v249 = vunpack.c.h.b16 %v20
  %v250 = vunpack.c.l.b16 %v21
  %v251 = vunpack.c.h.b16 %v21
  %v252 = vunpack.c.l.b16 %v22
  %v253 = vunpack.c.h.b16 %v22
  %v254 = vunpack.c.l.b16 %v23
  %v255 = vunpack.c.h.b16 %v23
  %v256 = vunpack.c.l.b16 %v24
  %v257 = vunpack.c.h.b16 %v24
  %v258 = vunpack.c.l.b16 %v25
  %v259 = vunpack.c.h.b16 %v25
  %v260 = vunpack.c.l.b16 %v26
  %v261 = vunpack.c.h.b16 %v26
  %v262 = vunpack.c.l.b16 %v27
  %v263 = vunpack.c.h.b16 %v27
  %v264 = vunpack.c.l.b16 %v28
  %v265 = vunpack.c.h.b16 %v28
  %v266 = vunpack.c.l.b16 %v29
  %v267 = vunpack.c.h.b16 %v29
  %v268 = vunpack.c.l.b16 %v30
  %v269 = vunpack.c.h.b16 %v30
  %v270 = vunpack.c.l.b16 %v31
  %v271 = vunpack.c.h.b16 %v31
  %v272 = vunpack.c.l.b16 %v32
  %v273 = vunpack.c.h.b16 %v32
  %v274 = vunpack.c.l.b16 %v33
  %v275 = vunpack.c.l.b16 %v34
  %v276 = vunpack.c.h.b16 %v34
  %v277 = vunpack.c.l.b16 %v35
  %v278 = vunpack.c.h.b16 %v35
  %v279 = vunpack.c.l.b16 %v36
  %v280 = vunpack.c.h.b16 %v36
  %v281 = vunpack.c.l.b16 %v37
  %v282 = vunpack.c.h.b16 %v37
  %v283 = vunpack.c.l.b16 %v38
  %v284 = vunpack.c.h.b16 %v38
  %v285 = vunpack.c.l.b16 %v39
  %v286 = vunpack.c.h.b16 %v39
  %v287 = vunpack.c.l.b16 %v40
  %v288 = vunpack.c.h.b16 %v40
  %v289 = vunpack.c.l.b16 %v41
  %v290 = vunpack.c.h.b16 %v41
  %v291 = vunpack.c.l.b16 %v42
  %v292 = vunpack.c.h.b16 %v42
  %v293 = vunpack.c.l.b16 %v43
  %v294 = vunpack.c.h.b16 %v43
  %v295 = vunpack.c.l.b16 %v44
  %v296 = vunpack.c.h.b16 %v44
  %v297 = vunpack.c.l.b16 %v45
  %v298 = vunpack.c.h.b16 %v45
  %v299 = vunpack.c.l.b16 %v46
  %v300 = vunpack.c.h.b16 %v46
  %v301 = vunpack.c.l.b16 %v47
  %v302 = vunpack.c.h.b16 %v47
  %v303 = vunpack.c.l.b16 %v48
  %v304 = vunpack.c.l.b16 %v49
  %v305 = vunpack.c.h.b16 %v49
  %v306 = vunpack.c.l.b16 %v50
  %v307 = vunpack.c.h.b16 %v50
  %v308 = vunpack.c.l.b16 %v51
  %v309 = vunpack.c.h.b16 %v51
  %v310 = vunpack.c.l.b16 %v52
  %v311 = vunpack.c.h.b16 %v52
  %v312 = vunpack.c.l.b16 %v53
  %v313 = vunpack.c.h.b16 %v53
  %v314 = vunpack.c.l.b16 %v54
  %v315 = vunpack.c.h.b16 %v54
  %v316 = vunpack.c.l.b16 %v55
  %v317 = vunpack.c.h.b16 %v55
  %v318 = vunpack.c.l.b16 %v56
  %v319 = vunpack.c.h.b16 %v56
  %v320 = vunpack.c.l.b16 %v57
  %v321 = vunpack.c.h.b16 %v57
  %v322 = vunpack.c.l.b16 %v58
  %v323 = vunpack.c.h.b16 %v58
  %v324 = vunpack.c.l.b16 %v59
  %v325 = vunpack.c.h.b16 %v59
  %v326 = vunpack.c.l.b16 %v60
  %v327 = vunpack.c.h.b16 %v60
  %v328 = vunpack.c.l.b16 %v61
  %v329 = vunpack.c.h.b16 %v61
  %v330 = vunpack.c.l.b16 %v62
  %v331 = vunpack.c.h.b16 %v62
  %v332 = vunpack.c.l.b16 %v63
  %v333 = vunpack.c.l.b16 %v64
  %v334 = vunpack.c.h.b16 %v64
  %v335 = vunpack.c.l.b16 %v65
  %v336 = vunpack.c.h.b16 %v65
  %v337 = vunpack.c.l.b16 %v66
  %v338 = vunpack.c.h.b16 %v66
  %v339 = vunpack.c.l.b16 %v67
  %v340 = vunpack.c.h.b16 %v67
  %v341 = vunpack.c.l.b16 %v68
  %v342 = vunpack.c.h.b16 %v68
  %v343 = vunpack.c.l.b16 %v69
  %v344 = vunpack.c.h.b16 %v69
  %v345 = vunpack.c.l.b16 %v70
  %v346 = vunpack.c.h.b16 %v70
  %v347 = vunpack.c.l.b16 %v71
  %v348 = vunpack.c.h.b16 %v71
  %v349 = vunpack.c.l.b16 %v72
  %v350 = vunpack.c.h.b16 %v72
  %v351 = vunpack.c.l.b16 %v73
  %v352 = vunpack.c.h.b16 %v73
  %v353 = vunpack.c.l.b16 %v74
  %v354 = vunpack.c.h.b16 %v74
  %v355 = vunpack.c.l.b16 %v75
  %v356 = vunpack.c.h.b16 %v75
  %v357 = vunpack.c.l.b16 %v76
  %v358 = vunpack.c.h.b16 %v76
  %v359 = vunpack.c.l.b16 %v77
  %v360 = vunpack.c.h.b16 %v77
  %v361 = vunpack.c.l.b16 %v78
  %v362 = vunpack.c.l.b16 %v79
  %v363 = vunpack.c.h.b16 %v79
  %v364 = vunpack.c.l.b16 %v80
  %v365 = vunpack.c.h.b16 %v80
  %v366 = vunpack.c.l.b16 %v81
  %v367 = vunpack.c.h.b16 %v81
  %v368 = vunpack.c.l.b16 %v82
  %v369 = vunpack.c.h.b16 %v82
  %v370 = vunpack.c.l.b16 %v83
  %v371 = vunpack.c.h.b16 %v83
  %v372 = vunpack.c.l.b16 %v84
  %v373 = vunpack.c.h.b16 %v84
  %v374 = vunpack.c.l.b16 %v85
  %v375 = vunpack.c.h.b16 %v85
  %v376 = vunpack.c.l.b16 %v86
  %v377 = vunpack.c.h.b16 %v86
  %v378 = vunpack.c.l.b16 %v87
  %v379 = vunpack.c.h.b16 %v87
  %v380 = vunpack.c.l.b16 %v88
  %v381 = vunpack.c.h.b16 %v88
  %v382 = vunpack.c.l.b16 %v89
  %v383 = vunpack.c.h.b16 %v89
  %v384 = vunpack.c.l.b16 %v90
  %v385 = vunpack.c.h.b16 %v90
  %v386 = vunpack.c.l.b16 %v91
  %v387 = vunpack.c.h.b16 %v91
  %v388 = vunpack.c.l.b16 %v92
  %v389 = vunpack.c.h.b16 %v92
  %v390 = vunpack.c.l.b16 %v93
  %v391 = vunpack.c.l.b16 %v94
  %v392 = vunpack.c.h.b16 %v94
  %v393 = vunpack.c.l.b16 %v95
  %v394 = vunpack.c.h.b16 %v95
  %v395 = vunpack.c.l.b16 %v96
  %v396 = vunpack.c.h.b16 %v96
  %v397 = vunpack.c.l.b16 %v97
  %v398 = vunpack.c.h.b16 %v97
  %v399 = vunpack.c.l.b16 %v98
  %v400 = vunpack.c.h.b16 %v98
  %v401 = vunpack.c.l.b16 %v99
  %v402 = vunpack.c.h.b16 %v99
  %v403 = vunpack.c.l.b16 %v100
  %v404 = vunpack.c.h.b16 %v100
  %v405 = vunpack.c.l.b16 %v101
  %v406 = vunpack.c.h.b16 %v101
  %v407 = vunpack.c.l.b16 %v102
  %v408 = vunpack.c.h.b16 %v102
  %v409 = vunpack.c.l.b16 %v103
  %v410 = vunpack.c.h.b16 %v103
  %v411 = vunpack.c.l.b16 %v104
  %v412 = vunpack.c.h.b16 %v104
  %v413 = vunpack.c.l.b16 %v105
  %v414 = vunpack.c.h.b16 %v105
  %v415 = vunpack.c.l.b16 %v106
  %v416 = vunpack.c.h.b16 %v106
  %v417 = vunpack.c.l.b16 %v107
  %v418 = vunpack.c.h.b16 %v107
  %v419 = vunpack.c.l.b16 %v108
  %v420 = vunpack.c.l.b16 %v109
  %v421 = vunpack.c.h.b16 %v109
  %v422 = vunpack.c.l.b16 %v110
  %v423 = vunpack.c.h.b16 %v110
  %v424 = vunpack.c.l.b16 %v111
  %v425 = vunpack.c.h.b16 %v111
  %v426 = vunpack.c.l.b16 %v112
  %v427 = vunpack.c.h.b16 %v112
  %v428 = vunpack.c.l.b16 %v113
  %v429 = vunpack.c.h.b16 %v113
  %v430 = vunpack.c.l.b16 %v114
  %v431 = vunpack.c.h.b16 %v114
  %v432 = vunpack.c.l.b16 %v115
  %v433 = vunpack.c.h.b16 %v115
  %v434 = vunpack.c.l.b16 %v116
  %v435 = vunpack.c.h.b16 %v116
  %v436 = vunpack.c.l.b16 %v117
  %v437 = vunpack.c.h.b16 %v117
  %v438 = vunpack.c.l.b16 %v118
  %v439 = vunpack.c.h.b16 %v118
  %v440 = vunpack.c.l.b16 %v119
  %v441 = vunpack.c.h.b16 %v119
  %v442 = vunpack.c.l.b16 %v120
  %v443 = vunpack.c.h.b16 %v120
  %v444 = vunpack.c.l.b16 %v121
  %v445 = vunpack.c.h.b16 %v121
  %v446 = vunpack.c.l.b16 %v122
  %v447 = vunpack.c.h.b16 %v122
  %v448 = vunpack.c.l.b16 %v123
  %v449 = vpack.c.b16 %v275, %v246
  %v450 = vpack.c.b16 %v276, %v247
  %v451 = vpack.c.b16 %v277, %v248
  %v452 = vpack.c.b16 %v278, %v249
  %v453 = vpack.c.b16 %v279, %v250
  %v454 = vpack.c.b16 %v280, %v251
  %v455 = vpack.c.b16 %v281, %v252
  %v456 = vpack.c.b16 %v282, %v253
  %v457 = vpack.c.b16 %v283, %v254
  %v458 = vpack.c.b16 %v284, %v255
  %v459 = vpack.c.b16 %v285, %v256
  %v460 = vpack.c.b16 %v286, %v257
  %v461 = vpack.c.b16 %v287, %v258
  %v462 = vpack.c.b16 %v288, %v259
  %v463 = vpack.c.b16 %v289, %v260
  %v464 = vpack.c.b16 %v290, %v261
  %v465 = vpack.c.b16 %v291, %v262
  %v466 = vpack.c.b16 %v292, %v263
  %v467 = vpack.c.b16 %v293, %v264
  %v468 = vpack.c.b16 %v294, %v265
  %v469 = vpack.c.b16 %v295, %v266
  %v470 = vpack.c.b16 %v296, %v267
  %v471 = vpack.c.b16 %v297, %v268
  %v472 = vpack.c.b16 %v298, %v269
  %v473 = vpack.c.b16 %v299, %v270
  %v474 = vpack.c.b16 %v300, %v271
  %v475 = vpack.c.b16 %v301, %v272
  %v476 = vpack.c.b16 %v302, %v273
  %v477 = vpack.c.b16 %v303, %v274
  %v478 = vpack.c.b16 %v333, %v304
  %v479 = vpack.c.b16 %v334, %v305
  %v480 = vpack.c.b16 %v335, %v306
  %v481 = vpack.c.b16 %v336, %v307
  %v482 = vpack.c.b16 %v337, %v308
  %v483 = vpack.c.b16 %v338, %v309
  %v484 = vpack.c.b16 %v339, %v310
  %v485 = vpack.c.b16 %v340, %v311
  %v486 = vpack.c.b16 %v341, %v312
  %v487 = vpack.c.b16 %v342, %v313
  %v488 = vpack.c.b16 %v343, %v314
  %v489 = vpack.c.b16 %v344, %v315
  %v490 = vpack.c.b16 %v345, %v316
  %v491 = vpack.c.b16 %v346, %v317
  %v492 = vpack.c.b16 %v347, %v318
  %v493 = vpack.c.b16 %v348, %v319
  %v494 = vpack.c.b16 %v349, %v320
  %v495 = vpack.c.b16 %v350, %v321
  %v496 = vpack.c.b16 %v351, %v322
  %v497 = vpack.c.b16 %v352, %v323
  %v498 = vpack.c.b16 %v353, %v324
  %v499 = vpack.c.b16 %v354, %v325
  %v500 = vpack.c.b16 %v355, %v326
  %v501 = vpack.c.b16 %v356, %v327
  %v502 = vpack.c.b16 %v357, %v328
  %v503 = vpack.c.b16 %v358, %v329
  %v504 = vpack.c.b16 %v359, %v330
  %v505 = vpack.c.b16 %v360, %v331
  %v506 = vpack.c.b16 %v361, %v332
  %v507 = vpack.c.b16 %v391, %v362
  %v508 = vpack.c.b16 %v392, %v363
  %v509 = vpack.c.b16 %v393, %v364
  %v510 = vpack.c.b16 %v394, %v365
  %v511 = vpack.c.b16 %v395, %v366
  %v512 = vpack.c.b16 %v396, %v367
  %v513 = vpack.c.b16 %v397, %v368
  %v514 = vpack.c.b16 %v398, %v369
  %v515 = vpack.c.b16 %v399, %v370
  %v516 = vpack.c.b16 %v400, %v371
  %v517 = vpack.c.b16 %v401, %v372
  %v518 = vpack.c.b16 %v402, %v373
  %v519 = vpack.c.b16 %v403, %v374
  %v520 = vpack.c.b16 %v404, %v375
  %v521 = vpack.c.b16 %v405, %v376
  %v522 = vpack.c.b16 %v406, %v377
  %v523 = vpack.c.b16 %v407, %v378
  %v524 = vpack.c.b16 %v408, %v379
  %v525 = vpack.c.b16 %v409, %v380
  %v526 = vpack.c.b16 %v410, %v381
  %v527 = vpack.c.b16 %v411, %v382
  %v528 = vpack.c.b16 %v412, %v383
  %v529 = vpack.c.b16 %v413, %v384
  %v530 = vpack.c.b16 %v414, %v385
  %v531 = vpack.c.b16 %v415, %v386
  %v532 = vpack.c.b16 %v416, %v387
  %v533 = vpack.c.b16 %v417, %v388
  %v534 = vpack.c.b16 %v418, %v389
  %v535 = vpack.c.b16 %v419, %v390
  %v536 = vpack.c.b16 %v420, %v420
  %v537 = vpack.c.b16 %v421, %v421
  %v538 = vpack.c.b16 %v422, %v422
  %v539 = vpack.c.b16 %v423, %v423
  %v540 = vpack.c.b16 %v424, %v424
  %v541 = vpack.c.b16 %v425, %v425
  %v542 = vpack.c.b16 %v426, %v426
  %v543 = vpack.c.b16 %v427, %v427
  %v544 = vpack.c.b16 %v428, %v428
  %v545 = vpack.c.b16 %v429, %v429
  %v546 = vpack.c.b16 %v430, %v430
  %v547 = vpack.c.b16 %v431, %v431
  %v548 = vpack.c.b16 %v432, %v432
  %v549 = vpack.c.b16 %v433, %v433
  %v550 = vpack.c.b16 %v434, %v434
  %v551 = vpack.c.b16 %v435, %v435
  %v552 = vpack.c.b16 %v436, %v436
  %v553 = vpack.c.b16 %v437, %v437
  %v554 = vpack.c.b16 %v438, %v438
  %v555 = vpack.c.b16 %v439, %v439
  %v556 = vpack.c.b16 %v440, %v440
  %v557 = vpack.c.b16 %v441, %v441
  %v558 = vpack.c.b16 %v442, %v442
  %v559 = vpack.c.b16 %v443, %v443
  %v560 = vpack.c.b16 %v444, %v444
  %v561 = vpack.c.b16 %v445, %v445
  %v562 = vpack.c.b16 %v446, %v446
  %v563 = vpack.c.b16 %v447, %v447
  %v564 = vpack.c.b16 %v448, %v448
  %vm652 = vcmask 441344
  %v654 = vsel %vm652, %v140, 0
  %vm656 = vcmask 1042432
  %v658 = vsel %vm656, %v536, 0
  %v661 = vsel %vm656, %v537, 0
  %v664 = vsel %vm656, %v538, 0
  %v667 = vsel %vm656, %v539, 0
  %v670 = vsel %vm656, %v540, 0
  %v673 = vsel %vm656, %v541, 0
  %v676 = vsel %vm656, %v542, 0
  %v679 = vsel %vm656, %v543, 0
  %v682 = vsel %vm656, %v544, 0
  %v685 = vsel %vm656, %v545, 0
  %v688 = vsel %vm656, %v546, 0
  %v691 = vsel %vm656, %v547, 0
  %v694 = vsel %vm656, %v548, 0
  %v697 = vsel %vm656, %v549, 0
  %v700 = vsel %vm656, %v550, 0
  %v703 = vsel %vm656, %v551, 0
  %v706 = vsel %vm656, %v552, 0
  %v709 = vsel %vm656, %v553, 0
  %v712 = vsel %vm656, %v554, 0
  %v715 = vsel %vm656, %v555, 0
  %v718 = vsel %vm656, %v556, 0
  %v721 = vsel %vm656, %v557, 0
  %v724 = vsel %vm656, %v558, 0
  %v727 = vsel %vm656, %v559, 0
  %v730 = vsel %vm656, %v560, 0
  %v733 = vsel %vm656, %v561, 0
  %v736 = vsel %vm656, %v562, 0
  %v739 = vsel %vm656, %v563, 0
  %v742 = vsel %vm656, %v564, 0
  %744 = vmatpush.bf16.msra.mxu0 0
  %745 = vmatpush.bf16.msra.mxu0 0
  %746 = vmatpush.bf16.msra.mxu0 0
  %747 = vmatpush.bf16.msra.mxu0 0
  %748 = vmatpush.bf16.msra.mxu0 %v658
  %749 = vmatpush.bf16.msra.mxu0 %v507
  %750 = vmatpush.bf16.msra.mxu0 %v478
  %751 = vmatpush.bf16.msra.mxu0 %v449
  %752 = vmatmul.bf16.gmra.mxu0 %v654
  %v753 = vpop.f32.mrf.mxu0
  %v754 = vadd.f32 %v129, %v753
  %v755 = vpop.f32.mrf.mxu0
  %v756 = vadd.f32 %v134, %v755
  %757 = vdwg.mxu0
  %758 = vmatpush.bf16.msra.mxu0 0
  %759 = vmatpush.bf16.msra.mxu0 0
  %760 = vmatpush.bf16.msra.mxu0 0
  %761 = vmatpush.bf16.msra.mxu0 0
  %762 = vmatpush.bf16.msra.mxu0 %v661
  %763 = vmatpush.bf16.msra.mxu0 %v508
  %764 = vmatpush.bf16.msra.mxu0 %v479
  %765 = vmatpush.bf16.msra.mxu0 %v450
  %766 = vmatmul.bf16.gmra.mxu0 %v654
  %v767 = vpop.f32.mrf.mxu0
  %v768 = vadd.f32 %v129, %v767
  %v769 = vpop.f32.mrf.mxu0
  %v770 = vadd.f32 %v134, %v769
  %771 = vdwg.mxu0
  %772 = vmatpush.bf16.msra.mxu0 0
  %773 = vmatpush.bf16.msra.mxu0 0
  %774 = vmatpush.bf16.msra.mxu0 0
  %775 = vmatpush.bf16.msra.mxu0 0
  %776 = vmatpush.bf16.msra.mxu0 %v664
  %777 = vmatpush.bf16.msra.mxu0 %v509
  %778 = vmatpush.bf16.msra.mxu0 %v480
  %779 = vmatpush.bf16.msra.mxu0 %v451
  %780 = vmatmul.bf16.gmra.mxu0 %v654
  %v781 = vpop.f32.mrf.mxu0
  %v782 = vadd.f32 %v129, %v781
  %v783 = vpop.f32.mrf.mxu0
  %v784 = vadd.f32 %v134, %v783
  %785 = vdwg.mxu0
  %786 = vmatpush.bf16.msra.mxu0 0
  %787 = vmatpush.bf16.msra.mxu0 0
  %788 = vmatpush.bf16.msra.mxu0 0
  %789 = vmatpush.bf16.msra.mxu0 0
  %790 = vmatpush.bf16.msra.mxu0 %v667
  %791 = vmatpush.bf16.msra.mxu0 %v510
  %792 = vmatpush.bf16.msra.mxu0 %v481
  %793 = vmatpush.bf16.msra.mxu0 %v452
  %794 = vmatmul.bf16.gmra.mxu0 %v654
  %v795 = vpop.f32.mrf.mxu0
  %v796 = vadd.f32 %v129, %v795
  %v797 = vpop.f32.mrf.mxu0
  %v798 = vadd.f32 %v134, %v797
  %799 = vdwg.mxu0
  %800 = vmatpush.bf16.msra.mxu0 0
  %801 = vmatpush.bf16.msra.mxu0 0
  %802 = vmatpush.bf16.msra.mxu0 0
  %803 = vmatpush.bf16.msra.mxu0 0
  %804 = vmatpush.bf16.msra.mxu0 %v670
  %805 = vmatpush.bf16.msra.mxu0 %v511
  %806 = vmatpush.bf16.msra.mxu0 %v482
  %807 = vmatpush.bf16.msra.mxu0 %v453
  %808 = vmatmul.bf16.gmra.mxu0 %v654
  %v809 = vpop.f32.mrf.mxu0
  %v810 = vadd.f32 %v129, %v809
  %v811 = vpop.f32.mrf.mxu0
  %v812 = vadd.f32 %v134, %v811
  %813 = vdwg.mxu0
  %814 = vmatpush.bf16.msra.mxu0 0
  %815 = vmatpush.bf16.msra.mxu0 0
  %816 = vmatpush.bf16.msra.mxu0 0
  %817 = vmatpush.bf16.msra.mxu0 0
  %818 = vmatpush.bf16.msra.mxu0 %v673
  %819 = vmatpush.bf16.msra.mxu0 %v512
  %820 = vmatpush.bf16.msra.mxu0 %v483
  %821 = vmatpush.bf16.msra.mxu0 %v454
  %822 = vmatmul.bf16.gmra.mxu0 %v654
  %v823 = vpop.f32.mrf.mxu0
  %v824 = vadd.f32 %v129, %v823
  %v825 = vpop.f32.mrf.mxu0
  %v826 = vadd.f32 %v134, %v825
  %827 = vdwg.mxu0
  %828 = vmatpush.bf16.msra.mxu0 0
  %829 = vmatpush.bf16.msra.mxu0 0
  %830 = vmatpush.bf16.msra.mxu0 0
  %831 = vmatpush.bf16.msra.mxu0 0
  %832 = vmatpush.bf16.msra.mxu0 %v676
  %833 = vmatpush.bf16.msra.mxu0 %v513
  %834 = vmatpush.bf16.msra.mxu0 %v484
  %835 = vmatpush.bf16.msra.mxu0 %v455
  %836 = vmatmul.bf16.gmra.mxu0 %v654
  %v837 = vpop.f32.mrf.mxu0
  %v838 = vadd.f32 %v129, %v837
  %v839 = vpop.f32.mrf.mxu0
  %v840 = vadd.f32 %v134, %v839
  %841 = vdwg.mxu0
  %842 = vmatpush.bf16.msra.mxu0 0
  %843 = vmatpush.bf16.msra.mxu0 0
  %844 = vmatpush.bf16.msra.mxu0 0
  %845 = vmatpush.bf16.msra.mxu0 0
  %846 = vmatpush.bf16.msra.mxu0 %v679
  %847 = vmatpush.bf16.msra.mxu0 %v514
  %848 = vmatpush.bf16.msra.mxu0 %v485
  %849 = vmatpush.bf16.msra.mxu0 %v456
  %850 = vmatmul.bf16.gmra.mxu0 %v654
  %v851 = vpop.f32.mrf.mxu0
  %v852 = vadd.f32 %v129, %v851
  %v853 = vpop.f32.mrf.mxu0
  %v854 = vadd.f32 %v134, %v853
  %855 = vdwg.mxu0
  %856 = vmatpush.bf16.msra.mxu0 0
  %857 = vmatpush.bf16.msra.mxu0 0
  %858 = vmatpush.bf16.msra.mxu0 0
  %859 = vmatpush.bf16.msra.mxu0 0
  %860 = vmatpush.bf16.msra.mxu0 %v682
  %861 = vmatpush.bf16.msra.mxu0 %v515
  %862 = vmatpush.bf16.msra.mxu0 %v486
  %863 = vmatpush.bf16.msra.mxu0 %v457
  %864 = vmatmul.bf16.gmra.mxu0 %v654
  %v865 = vpop.f32.mrf.mxu0
  %v866 = vadd.f32 %v129, %v865
  %v867 = vpop.f32.mrf.mxu0
  %v868 = vadd.f32 %v134, %v867
  %869 = vdwg.mxu0
  %870 = vmatpush.bf16.msra.mxu0 0
  %871 = vmatpush.bf16.msra.mxu0 0
  %872 = vmatpush.bf16.msra.mxu0 0
  %873 = vmatpush.bf16.msra.mxu0 0
  %874 = vmatpush.bf16.msra.mxu0 %v685
  %875 = vmatpush.bf16.msra.mxu0 %v516
  %876 = vmatpush.bf16.msra.mxu0 %v487
  %877 = vmatpush.bf16.msra.mxu0 %v458
  %878 = vmatmul.bf16.gmra.mxu0 %v654
  %v879 = vpop.f32.mrf.mxu0
  %v880 = vadd.f32 %v129, %v879
  %v881 = vpop.f32.mrf.mxu0
  %v882 = vadd.f32 %v134, %v881
  %883 = vdwg.mxu0
  %884 = vmatpush.bf16.msra.mxu0 0
  %885 = vmatpush.bf16.msra.mxu0 0
  %886 = vmatpush.bf16.msra.mxu0 0
  %887 = vmatpush.bf16.msra.mxu0 0
  %888 = vmatpush.bf16.msra.mxu0 %v688
  %889 = vmatpush.bf16.msra.mxu0 %v517
  %890 = vmatpush.bf16.msra.mxu0 %v488
  %891 = vmatpush.bf16.msra.mxu0 %v459
  %892 = vmatmul.bf16.gmra.mxu0 %v654
  %v893 = vpop.f32.mrf.mxu0
  %v894 = vadd.f32 %v129, %v893
  %v895 = vpop.f32.mrf.mxu0
  %v896 = vadd.f32 %v134, %v895
  %897 = vdwg.mxu0
  %898 = vmatpush.bf16.msra.mxu0 0
  %899 = vmatpush.bf16.msra.mxu0 0
  %900 = vmatpush.bf16.msra.mxu0 0
  %901 = vmatpush.bf16.msra.mxu0 0
  %902 = vmatpush.bf16.msra.mxu0 %v691
  %903 = vmatpush.bf16.msra.mxu0 %v518
  %904 = vmatpush.bf16.msra.mxu0 %v489
  %905 = vmatpush.bf16.msra.mxu0 %v460
  %906 = vmatmul.bf16.gmra.mxu0 %v654
  %v907 = vpop.f32.mrf.mxu0
  %v908 = vadd.f32 %v129, %v907
  %v909 = vpop.f32.mrf.mxu0
  %v910 = vadd.f32 %v134, %v909
  %911 = vdwg.mxu0
  %912 = vmatpush.bf16.msra.mxu0 0
  %913 = vmatpush.bf16.msra.mxu0 0
  %914 = vmatpush.bf16.msra.mxu0 0
  %915 = vmatpush.bf16.msra.mxu0 0
  %916 = vmatpush.bf16.msra.mxu0 %v694
  %917 = vmatpush.bf16.msra.mxu0 %v519
  %918 = vmatpush.bf16.msra.mxu0 %v490
  %919 = vmatpush.bf16.msra.mxu0 %v461
  %920 = vmatmul.bf16.gmra.mxu0 %v654
  %v921 = vpop.f32.mrf.mxu0
  %v922 = vadd.f32 %v129, %v921
  %v923 = vpop.f32.mrf.mxu0
  %v924 = vadd.f32 %v134, %v923
  %925 = vdwg.mxu0
  %926 = vmatpush.bf16.msra.mxu0 0
  %927 = vmatpush.bf16.msra.mxu0 0
  %928 = vmatpush.bf16.msra.mxu0 0
  %929 = vmatpush.bf16.msra.mxu0 0
  %930 = vmatpush.bf16.msra.mxu0 %v697
  %931 = vmatpush.bf16.msra.mxu0 %v520
  %932 = vmatpush.bf16.msra.mxu0 %v491
  %933 = vmatpush.bf16.msra.mxu0 %v462
  %934 = vmatmul.bf16.gmra.mxu0 %v654
  %v935 = vpop.f32.mrf.mxu0
  %v936 = vadd.f32 %v129, %v935
  %v937 = vpop.f32.mrf.mxu0
  %v938 = vadd.f32 %v134, %v937
  %939 = vdwg.mxu0
  %940 = vmatpush.bf16.msra.mxu0 0
  %941 = vmatpush.bf16.msra.mxu0 0
  %942 = vmatpush.bf16.msra.mxu0 0
  %943 = vmatpush.bf16.msra.mxu0 0
  %944 = vmatpush.bf16.msra.mxu0 %v700
  %945 = vmatpush.bf16.msra.mxu0 %v521
  %946 = vmatpush.bf16.msra.mxu0 %v492
  %947 = vmatpush.bf16.msra.mxu0 %v463
  %948 = vmatmul.bf16.gmra.mxu0 %v654
  %v949 = vpop.f32.mrf.mxu0
  %v950 = vadd.f32 %v129, %v949
  %v951 = vpop.f32.mrf.mxu0
  %v952 = vadd.f32 %v134, %v951
  %953 = vdwg.mxu0
  %954 = vmatpush.bf16.msra.mxu0 0
  %955 = vmatpush.bf16.msra.mxu0 0
  %956 = vmatpush.bf16.msra.mxu0 0
  %957 = vmatpush.bf16.msra.mxu0 0
  %958 = vmatpush.bf16.msra.mxu0 %v703
  %959 = vmatpush.bf16.msra.mxu0 %v522
  %960 = vmatpush.bf16.msra.mxu0 %v493
  %961 = vmatpush.bf16.msra.mxu0 %v464
  %962 = vmatmul.bf16.gmra.mxu0 %v654
  %v963 = vpop.f32.mrf.mxu0
  %v964 = vadd.f32 %v129, %v963
  %v965 = vpop.f32.mrf.mxu0
  %v966 = vadd.f32 %v134, %v965
  %967 = vdwg.mxu0
  %968 = vmatpush.bf16.msra.mxu0 0
  %969 = vmatpush.bf16.msra.mxu0 0
  %970 = vmatpush.bf16.msra.mxu0 0
  %971 = vmatpush.bf16.msra.mxu0 0
  %972 = vmatpush.bf16.msra.mxu0 %v706
  %973 = vmatpush.bf16.msra.mxu0 %v523
  %974 = vmatpush.bf16.msra.mxu0 %v494
  %975 = vmatpush.bf16.msra.mxu0 %v465
  %976 = vmatmul.bf16.gmra.mxu0 %v654
  %v977 = vpop.f32.mrf.mxu0
  %v978 = vadd.f32 %v129, %v977
  %v979 = vpop.f32.mrf.mxu0
  %v980 = vadd.f32 %v134, %v979
  %981 = vdwg.mxu0
  %982 = vmatpush.bf16.msra.mxu0 0
  %983 = vmatpush.bf16.msra.mxu0 0
  %984 = vmatpush.bf16.msra.mxu0 0
  %985 = vmatpush.bf16.msra.mxu0 0
  %986 = vmatpush.bf16.msra.mxu0 %v709
  %987 = vmatpush.bf16.msra.mxu0 %v524
  %988 = vmatpush.bf16.msra.mxu0 %v495
  %989 = vmatpush.bf16.msra.mxu0 %v466
  %990 = vmatmul.bf16.gmra.mxu0 %v654
  %v991 = vpop.f32.mrf.mxu0
  %v992 = vadd.f32 %v129, %v991
  %v993 = vpop.f32.mrf.mxu0
  %v994 = vadd.f32 %v134, %v993
  %995 = vdwg.mxu0
  %996 = vmatpush.bf16.msra.mxu0 0
  %997 = vmatpush.bf16.msra.mxu0 0
  %998 = vmatpush.bf16.msra.mxu0 0
  %999 = vmatpush.bf16.msra.mxu0 0
  %1000 = vmatpush.bf16.msra.mxu0 %v712
  %1001 = vmatpush.bf16.msra.mxu0 %v525
  %1002 = vmatpush.bf16.msra.mxu0 %v496
  %1003 = vmatpush.bf16.msra.mxu0 %v467
  %1004 = vmatmul.bf16.gmra.mxu0 %v654
  %v1005 = vpop.f32.mrf.mxu0
  %v1006 = vadd.f32 %v129, %v1005
  %v1007 = vpop.f32.mrf.mxu0
  %v1008 = vadd.f32 %v134, %v1007
  %1009 = vdwg.mxu0
  %1010 = vmatpush.bf16.msra.mxu0 0
  %1011 = vmatpush.bf16.msra.mxu0 0
  %1012 = vmatpush.bf16.msra.mxu0 0
  %1013 = vmatpush.bf16.msra.mxu0 0
  %1014 = vmatpush.bf16.msra.mxu0 %v715
  %1015 = vmatpush.bf16.msra.mxu0 %v526
  %1016 = vmatpush.bf16.msra.mxu0 %v497
  %1017 = vmatpush.bf16.msra.mxu0 %v468
  %1018 = vmatmul.bf16.gmra.mxu0 %v654
  %v1019 = vpop.f32.mrf.mxu0
  %v1020 = vadd.f32 %v129, %v1019
  %v1021 = vpop.f32.mrf.mxu0
  %v1022 = vadd.f32 %v134, %v1021
  %1023 = vdwg.mxu0
  %1024 = vmatpush.bf16.msra.mxu0 0
  %1025 = vmatpush.bf16.msra.mxu0 0
  %1026 = vmatpush.bf16.msra.mxu0 0
  %1027 = vmatpush.bf16.msra.mxu0 0
  %1028 = vmatpush.bf16.msra.mxu0 %v718
  %1029 = vmatpush.bf16.msra.mxu0 %v527
  %1030 = vmatpush.bf16.msra.mxu0 %v498
  %1031 = vmatpush.bf16.msra.mxu0 %v469
  %1032 = vmatmul.bf16.gmra.mxu0 %v654
  %v1033 = vpop.f32.mrf.mxu0
  %v1034 = vadd.f32 %v129, %v1033
  %v1035 = vpop.f32.mrf.mxu0
  %v1036 = vadd.f32 %v134, %v1035
  %1037 = vdwg.mxu0
  %1038 = vmatpush.bf16.msra.mxu0 0
  %1039 = vmatpush.bf16.msra.mxu0 0
  %1040 = vmatpush.bf16.msra.mxu0 0
  %1041 = vmatpush.bf16.msra.mxu0 0
  %1042 = vmatpush.bf16.msra.mxu0 %v721
  %1043 = vmatpush.bf16.msra.mxu0 %v528
  %1044 = vmatpush.bf16.msra.mxu0 %v499
  %1045 = vmatpush.bf16.msra.mxu0 %v470
  %1046 = vmatmul.bf16.gmra.mxu0 %v654
  %v1047 = vpop.f32.mrf.mxu0
  %v1048 = vadd.f32 %v129, %v1047
  %v1049 = vpop.f32.mrf.mxu0
  %v1050 = vadd.f32 %v134, %v1049
  %1051 = vdwg.mxu0
  %1052 = vmatpush.bf16.msra.mxu0 0
  %1053 = vmatpush.bf16.msra.mxu0 0
  %1054 = vmatpush.bf16.msra.mxu0 0
  %1055 = vmatpush.bf16.msra.mxu0 0
  %1056 = vmatpush.bf16.msra.mxu0 %v724
  %1057 = vmatpush.bf16.msra.mxu0 %v529
  %1058 = vmatpush.bf16.msra.mxu0 %v500
  %1059 = vmatpush.bf16.msra.mxu0 %v471
  %1060 = vmatmul.bf16.gmra.mxu0 %v654
  %v1061 = vpop.f32.mrf.mxu0
  %v1062 = vadd.f32 %v129, %v1061
  %v1063 = vpop.f32.mrf.mxu0
  %v1064 = vadd.f32 %v134, %v1063
  %1065 = vdwg.mxu0
  %1066 = vmatpush.bf16.msra.mxu0 0
  %1067 = vmatpush.bf16.msra.mxu0 0
  %1068 = vmatpush.bf16.msra.mxu0 0
  %1069 = vmatpush.bf16.msra.mxu0 0
  %1070 = vmatpush.bf16.msra.mxu0 %v727
  %1071 = vmatpush.bf16.msra.mxu0 %v530
  %1072 = vmatpush.bf16.msra.mxu0 %v501
  %1073 = vmatpush.bf16.msra.mxu0 %v472
  %1074 = vmatmul.bf16.gmra.mxu0 %v654
  %v1075 = vpop.f32.mrf.mxu0
  %v1076 = vadd.f32 %v129, %v1075
  %v1077 = vpop.f32.mrf.mxu0
  %v1078 = vadd.f32 %v134, %v1077
  %1079 = vdwg.mxu0
  %1080 = vmatpush.bf16.msra.mxu0 0
  %1081 = vmatpush.bf16.msra.mxu0 0
  %1082 = vmatpush.bf16.msra.mxu0 0
  %1083 = vmatpush.bf16.msra.mxu0 0
  %1084 = vmatpush.bf16.msra.mxu0 %v730
  %1085 = vmatpush.bf16.msra.mxu0 %v531
  %1086 = vmatpush.bf16.msra.mxu0 %v502
  %1087 = vmatpush.bf16.msra.mxu0 %v473
  %1088 = vmatmul.bf16.gmra.mxu0 %v654
  %v1089 = vpop.f32.mrf.mxu0
  %v1090 = vadd.f32 %v129, %v1089
  %v1091 = vpop.f32.mrf.mxu0
  %v1092 = vadd.f32 %v134, %v1091
  %1093 = vdwg.mxu0
  %1094 = vmatpush.bf16.msra.mxu0 0
  %1095 = vmatpush.bf16.msra.mxu0 0
  %1096 = vmatpush.bf16.msra.mxu0 0
  %1097 = vmatpush.bf16.msra.mxu0 0
  %1098 = vmatpush.bf16.msra.mxu0 %v733
  %1099 = vmatpush.bf16.msra.mxu0 %v532
  %1100 = vmatpush.bf16.msra.mxu0 %v503
  %1101 = vmatpush.bf16.msra.mxu0 %v474
  %1102 = vmatmul.bf16.gmra.mxu0 %v654
  %v1103 = vpop.f32.mrf.mxu0
  %v1104 = vadd.f32 %v129, %v1103
  %v1105 = vpop.f32.mrf.mxu0
  %v1106 = vadd.f32 %v134, %v1105
  %1107 = vdwg.mxu0
  %1108 = vmatpush.bf16.msra.mxu0 0
  %1109 = vmatpush.bf16.msra.mxu0 0
  %1110 = vmatpush.bf16.msra.mxu0 0
  %1111 = vmatpush.bf16.msra.mxu0 0
  %1112 = vmatpush.bf16.msra.mxu0 %v736
  %1113 = vmatpush.bf16.msra.mxu0 %v533
  %1114 = vmatpush.bf16.msra.mxu0 %v504
  %1115 = vmatpush.bf16.msra.mxu0 %v475
  %1116 = vmatmul.bf16.gmra.mxu0 %v654
  %v1117 = vpop.f32.mrf.mxu0
  %v1118 = vadd.f32 %v129, %v1117
  %v1119 = vpop.f32.mrf.mxu0
  %v1120 = vadd.f32 %v134, %v1119
  %1121 = vdwg.mxu0
  %1122 = vmatpush.bf16.msra.mxu0 0
  %1123 = vmatpush.bf16.msra.mxu0 0
  %1124 = vmatpush.bf16.msra.mxu0 0
  %1125 = vmatpush.bf16.msra.mxu0 0
  %1126 = vmatpush.bf16.msra.mxu0 %v739
  %1127 = vmatpush.bf16.msra.mxu0 %v534
  %1128 = vmatpush.bf16.msra.mxu0 %v505
  %1129 = vmatpush.bf16.msra.mxu0 %v476
  %1130 = vmatmul.bf16.gmra.mxu0 %v654
  %v1131 = vpop.f32.mrf.mxu0
  %v1132 = vadd.f32 %v129, %v1131
  %v1133 = vpop.f32.mrf.mxu0
  %v1134 = vadd.f32 %v134, %v1133
  %1135 = vdwg.mxu0
  %1136 = vmatpush.bf16.msra.mxu0 0
  %1137 = vmatpush.bf16.msra.mxu0 0
  %1138 = vmatpush.bf16.msra.mxu0 0
  %1139 = vmatpush.bf16.msra.mxu0 0
  %1140 = vmatpush.bf16.msra.mxu0 %v742
  %1141 = vmatpush.bf16.msra.mxu0 %v535
  %1142 = vmatpush.bf16.msra.mxu0 %v506
  %1143 = vmatpush.bf16.msra.mxu0 %v477
  %1144 = vmatmul.bf16.gmra.mxu0 %v654
  %v1145 = vpop.f32.mrf.mxu0
  %v1146 = vadd.f32 %v129, %v1145
  %v1147 = vpop.f32.mrf.mxu0
  %v1148 = vadd.f32 %v134, %v1147
  %1149 = vdwg.mxu0
  %v1150 = vpack.c.bf16 %v768, %v754
  %v1151 = vpack.c.bf16 %v796, %v782
  %v1152 = vpack.c.bf16 %v824, %v810
  %v1153 = vpack.c.bf16 %v852, %v838
  %v1154 = vpack.c.bf16 %v880, %v866
  %v1155 = vpack.c.bf16 %v908, %v894
  %v1156 = vpack.c.bf16 %v936, %v922
  %v1157 = vpack.c.bf16 %v964, %v950
  %v1158 = vpack.c.bf16 %v992, %v978
  %v1159 = vpack.c.bf16 %v1020, %v1006
  %v1160 = vpack.c.bf16 %v1048, %v1034
  %v1161 = vpack.c.bf16 %v1076, %v1062
  %v1162 = vpack.c.bf16 %v1104, %v1090
  %v1163 = vpack.c.bf16 %v1132, %v1118
  %v1164 = vpack.c.bf16 %v1146, %v1146
  %v1165 = vunpack.c.l.bf16 %v1150
  %v1166 = vunpack.c.h.bf16 %v1150
  %v1167 = vunpack.c.l.bf16 %v1151
  %v1168 = vunpack.c.h.bf16 %v1151
  %v1169 = vunpack.c.l.bf16 %v1152
  %v1170 = vunpack.c.h.bf16 %v1152
  %v1171 = vunpack.c.l.bf16 %v1153
  %v1172 = vunpack.c.h.bf16 %v1153
  %v1173 = vunpack.c.l.bf16 %v1154
  %v1174 = vunpack.c.h.bf16 %v1154
  %v1175 = vunpack.c.l.bf16 %v1155
  %v1176 = vunpack.c.h.bf16 %v1155
  %v1177 = vunpack.c.l.bf16 %v1156
  %v1178 = vunpack.c.h.bf16 %v1156
  %v1179 = vunpack.c.l.bf16 %v1157
  %v1180 = vunpack.c.h.bf16 %v1157
  %v1181 = vunpack.c.l.bf16 %v1158
  %v1182 = vunpack.c.h.bf16 %v1158
  %v1183 = vunpack.c.l.bf16 %v1159
  %v1184 = vunpack.c.h.bf16 %v1159
  %v1185 = vunpack.c.l.bf16 %v1160
  %v1186 = vunpack.c.h.bf16 %v1160
  %v1187 = vunpack.c.l.bf16 %v1161
  %v1188 = vunpack.c.h.bf16 %v1161
  %v1189 = vunpack.c.l.bf16 %v1162
  %v1190 = vunpack.c.h.bf16 %v1162
  %v1191 = vunpack.c.l.bf16 %v1163
  %v1192 = vunpack.c.h.bf16 %v1163
  %v1193 = vunpack.c.l.bf16 %v1164
  %vm1194 = vcmp.gt.f32.partialorder %v1165, 0.0
  %vm1195 = vcmp.gt.f32.partialorder %v1166, 0.0
  %vm1196 = vcmp.gt.f32.partialorder %v1167, 0.0
  %vm1197 = vcmp.gt.f32.partialorder %v1168, 0.0
  %vm1198 = vcmp.gt.f32.partialorder %v1169, 0.0
  %vm1199 = vcmp.gt.f32.partialorder %v1170, 0.0
  %vm1200 = vcmp.gt.f32.partialorder %v1171, 0.0
  %vm1201 = vcmp.gt.f32.partialorder %v1172, 0.0
  %vm1202 = vcmp.gt.f32.partialorder %v1173, 0.0
  %vm1203 = vcmp.gt.f32.partialorder %v1174, 0.0
  %vm1204 = vcmp.gt.f32.partialorder %v1175, 0.0
  %vm1205 = vcmp.gt.f32.partialorder %v1176, 0.0
  %vm1206 = vcmp.gt.f32.partialorder %v1177, 0.0
  %vm1207 = vcmp.gt.f32.partialorder %v1178, 0.0
  %vm1208 = vcmp.gt.f32.partialorder %v1179, 0.0
  %vm1209 = vcmp.gt.f32.partialorder %v1180, 0.0
  %vm1210 = vcmp.gt.f32.partialorder %v1181, 0.0
  %vm1211 = vcmp.gt.f32.partialorder %v1182, 0.0
  %vm1212 = vcmp.gt.f32.partialorder %v1183, 0.0
  %vm1213 = vcmp.gt.f32.partialorder %v1184, 0.0
  %vm1214 = vcmp.gt.f32.partialorder %v1185, 0.0
  %vm1215 = vcmp.gt.f32.partialorder %v1186, 0.0
  %vm1216 = vcmp.gt.f32.partialorder %v1187, 0.0
  %vm1217 = vcmp.gt.f32.partialorder %v1188, 0.0
  %vm1218 = vcmp.gt.f32.partialorder %v1189, 0.0
  %vm1219 = vcmp.gt.f32.partialorder %v1190, 0.0
  %vm1220 = vcmp.gt.f32.partialorder %v1191, 0.0
  %vm1221 = vcmp.gt.f32.partialorder %v1192, 0.0
  %vm1222 = vcmp.gt.f32.partialorder %v1193, 0.0
  %v1223 = vmin.f32 %v1165, 0.0
  %v1224 = vmin.f32 %v1166, 0.0
  %v1225 = vmin.f32 %v1167, 0.0
  %v1226 = vmin.f32 %v1168, 0.0
  %v1227 = vmin.f32 %v1169, 0.0
  %v1228 = vmin.f32 %v1170, 0.0
  %v1229 = vmin.f32 %v1171, 0.0
  %v1230 = vmin.f32 %v1172, 0.0
  %v1231 = vmin.f32 %v1173, 0.0
  %v1232 = vmin.f32 %v1174, 0.0
  %v1233 = vmin.f32 %v1175, 0.0
  %v1234 = vmin.f32 %v1176, 0.0
  %v1235 = vmin.f32 %v1177, 0.0
  %v1236 = vmin.f32 %v1178, 0.0
  %v1237 = vmin.f32 %v1179, 0.0
  %v1238 = vmin.f32 %v1180, 0.0
  %v1239 = vmin.f32 %v1181, 0.0
  %v1240 = vmin.f32 %v1182, 0.0
  %v1241 = vmin.f32 %v1183, 0.0
  %v1242 = vmin.f32 %v1184, 0.0
  %v1243 = vmin.f32 %v1185, 0.0
  %v1244 = vmin.f32 %v1186, 0.0
  %v1245 = vmin.f32 %v1187, 0.0
  %v1246 = vmin.f32 %v1188, 0.0
  %v1247 = vmin.f32 %v1189, 0.0
  %v1248 = vmin.f32 %v1190, 0.0
  %v1249 = vmin.f32 %v1191, 0.0
  %v1250 = vmin.f32 %v1192, 0.0
  %v1251 = vmin.f32 %v1193, 0.0
  %v1252 = vpack.c.bf16 %v1224, %v1223
  %v1253 = vpack.c.bf16 %v1226, %v1225
  %v1254 = vpack.c.bf16 %v1228, %v1227
  %v1255 = vpack.c.bf16 %v1230, %v1229
  %v1256 = vpack.c.bf16 %v1232, %v1231
  %v1257 = vpack.c.bf16 %v1234, %v1233
  %v1258 = vpack.c.bf16 %v1236, %v1235
  %v1259 = vpack.c.bf16 %v1238, %v1237
  %v1260 = vpack.c.bf16 %v1240, %v1239
  %v1261 = vpack.c.bf16 %v1242, %v1241
  %v1262 = vpack.c.bf16 %v1244, %v1243
  %v1263 = vpack.c.bf16 %v1246, %v1245
  %v1264 = vpack.c.bf16 %v1248, %v1247
  %v1265 = vpack.c.bf16 %v1250, %v1249
  %v1266 = vpack.c.bf16 %v1251, %v1251
  %v1267 = vunpack.c.l.bf16 %v1252
  %v1268 = vunpack.c.h.bf16 %v1252
  %v1269 = vunpack.c.l.bf16 %v1253
  %v1270 = vunpack.c.h.bf16 %v1253
  %v1271 = vunpack.c.l.bf16 %v1254
  %v1272 = vunpack.c.h.bf16 %v1254
  %v1273 = vunpack.c.l.bf16 %v1255
  %v1274 = vunpack.c.h.bf16 %v1255
  %v1275 = vunpack.c.l.bf16 %v1256
  %v1276 = vunpack.c.h.bf16 %v1256
  %v1277 = vunpack.c.l.bf16 %v1257
  %v1278 = vunpack.c.h.bf16 %v1257
  %v1279 = vunpack.c.l.bf16 %v1258
  %v1280 = vunpack.c.h.bf16 %v1258
  %v1281 = vunpack.c.l.bf16 %v1259
  %v1282 = vunpack.c.h.bf16 %v1259
  %v1283 = vunpack.c.l.bf16 %v1260
  %v1284 = vunpack.c.h.bf16 %v1260
  %v1285 = vunpack.c.l.bf16 %v1261
  %v1286 = vunpack.c.h.bf16 %v1261
  %v1287 = vunpack.c.l.bf16 %v1262
  %v1288 = vunpack.c.h.bf16 %v1262
  %v1289 = vunpack.c.l.bf16 %v1263
  %v1290 = vunpack.c.h.bf16 %v1263
  %v1291 = vunpack.c.l.bf16 %v1264
  %v1292 = vunpack.c.h.bf16 %v1264
  %v1293 = vunpack.c.l.bf16 %v1265
  %v1294 = vunpack.c.h.bf16 %v1265
  %v1295 = vunpack.c.l.bf16 %v1266
  %v1296 = vmul.f32 %v1267, 1.442695
  %v1297 = vpow.pop %v1296
  %v1298 = vmul.f32 %v1268, 1.442695
  %v1299 = vpow.pop %v1298
  %v1300 = vmul.f32 %v1269, 1.442695
  %v1301 = vpow.pop %v1300
  %v1302 = vmul.f32 %v1270, 1.442695
  %v1303 = vpow.pop %v1302
  %v1304 = vmul.f32 %v1271, 1.442695
  %v1305 = vpow.pop %v1304
  %v1306 = vmul.f32 %v1272, 1.442695
  %v1307 = vpow.pop %v1306
  %v1308 = vmul.f32 %v1273, 1.442695
  %v1309 = vpow.pop %v1308
  %v1310 = vmul.f32 %v1274, 1.442695
  %v1311 = vpow.pop %v1310
  %v1312 = vmul.f32 %v1275, 1.442695
  %v1313 = vpow.pop %v1312
  %v1314 = vmul.f32 %v1276, 1.442695
  %v1315 = vpow.pop %v1314
  %v1316 = vmul.f32 %v1277, 1.442695
  %v1317 = vpow.pop %v1316
  %v1318 = vmul.f32 %v1278, 1.442695
  %v1319 = vpow.pop %v1318
  %v1320 = vmul.f32 %v1279, 1.442695
  %v1321 = vpow.pop %v1320
  %v1322 = vmul.f32 %v1280, 1.442695
  %v1323 = vpow.pop %v1322
  %v1324 = vmul.f32 %v1281, 1.442695
  %v1325 = vpow.pop %v1324
  %v1326 = vmul.f32 %v1282, 1.442695
  %v1327 = vpow.pop %v1326
  %v1328 = vmul.f32 %v1283, 1.442695
  %v1329 = vpow.pop %v1328
  %v1330 = vmul.f32 %v1284, 1.442695
  %v1331 = vpow.pop %v1330
  %v1332 = vmul.f32 %v1285, 1.442695
  %v1333 = vpow.pop %v1332
  %v1334 = vmul.f32 %v1286, 1.442695
  %v1335 = vpow.pop %v1334
  %v1336 = vmul.f32 %v1287, 1.442695
  %v1337 = vpow.pop %v1336
  %v1338 = vmul.f32 %v1288, 1.442695
  %v1339 = vpow.pop %v1338
  %v1340 = vmul.f32 %v1289, 1.442695
  %v1341 = vpow.pop %v1340
  %v1342 = vmul.f32 %v1290, 1.442695
  %v1343 = vpow.pop %v1342
  %v1344 = vmul.f32 %v1291, 1.442695
  %v1345 = vpow.pop %v1344
  %v1346 = vmul.f32 %v1292, 1.442695
  %v1347 = vpow.pop %v1346
  %v1348 = vmul.f32 %v1293, 1.442695
  %v1349 = vpow.pop %v1348
  %v1350 = vmul.f32 %v1294, 1.442695
  %v1351 = vpow.pop %v1350
  %v1352 = vmul.f32 %v1295, 1.442695
  %v1353 = vpow.pop %v1352
  %v1354 = vpack.c.bf16 %v1299, %v1297
  %v1355 = vpack.c.bf16 %v1303, %v1301
  %v1356 = vpack.c.bf16 %v1307, %v1305
  %v1357 = vpack.c.bf16 %v1311, %v1309
  %v1358 = vpack.c.bf16 %v1315, %v1313
  %v1359 = vpack.c.bf16 %v1319, %v1317
  %v1360 = vpack.c.bf16 %v1323, %v1321
  %v1361 = vpack.c.bf16 %v1327, %v1325
  %v1362 = vpack.c.bf16 %v1331, %v1329
  %v1363 = vpack.c.bf16 %v1335, %v1333
  %v1364 = vpack.c.bf16 %v1339, %v1337
  %v1365 = vpack.c.bf16 %v1343, %v1341
  %v1366 = vpack.c.bf16 %v1347, %v1345
  %v1367 = vpack.c.bf16 %v1351, %v1349
  %v1368 = vpack.c.bf16 %v1353, %v1353
  %v1369 = vunpack.c.l.bf16 %v1354
  %v1370 = vunpack.c.h.bf16 %v1354
  %v1371 = vunpack.c.l.bf16 %v1355
  %v1372 = vunpack.c.h.bf16 %v1355
  %v1373 = vunpack.c.l.bf16 %v1356
  %v1374 = vunpack.c.h.bf16 %v1356
  %v1375 = vunpack.c.l.bf16 %v1357
  %v1376 = vunpack.c.h.bf16 %v1357
  %v1377 = vunpack.c.l.bf16 %v1358
  %v1378 = vunpack.c.h.bf16 %v1358
  %v1379 = vunpack.c.l.bf16 %v1359
  %v1380 = vunpack.c.h.bf16 %v1359
  %v1381 = vunpack.c.l.bf16 %v1360
  %v1382 = vunpack.c.h.bf16 %v1360
  %v1383 = vunpack.c.l.bf16 %v1361
  %v1384 = vunpack.c.h.bf16 %v1361
  %v1385 = vunpack.c.l.bf16 %v1362
  %v1386 = vunpack.c.h.bf16 %v1362
  %v1387 = vunpack.c.l.bf16 %v1363
  %v1388 = vunpack.c.h.bf16 %v1363
  %v1389 = vunpack.c.l.bf16 %v1364
  %v1390 = vunpack.c.h.bf16 %v1364
  %v1391 = vunpack.c.l.bf16 %v1365
  %v1392 = vunpack.c.h.bf16 %v1365
  %v1393 = vunpack.c.l.bf16 %v1366
  %v1394 = vunpack.c.h.bf16 %v1366
  %v1395 = vunpack.c.l.bf16 %v1367
  %v1396 = vunpack.c.h.bf16 %v1367
  %v1397 = vunpack.c.l.bf16 %v1368
  %v1398 = vsub.f32 %v1369, 1.0
  %v1399 = vsub.f32 %v1370, 1.0
  %v1400 = vsub.f32 %v1371, 1.0
  %v1401 = vsub.f32 %v1372, 1.0
  %v1402 = vsub.f32 %v1373, 1.0
  %v1403 = vsub.f32 %v1374, 1.0
  %v1404 = vsub.f32 %v1375, 1.0
  %v1405 = vsub.f32 %v1376, 1.0
  %v1406 = vsub.f32 %v1377, 1.0
  %v1407 = vsub.f32 %v1378, 1.0
  %v1408 = vsub.f32 %v1379, 1.0
  %v1409 = vsub.f32 %v1380, 1.0
  %v1410 = vsub.f32 %v1381, 1.0
  %v1411 = vsub.f32 %v1382, 1.0
  %v1412 = vsub.f32 %v1383, 1.0
  %v1413 = vsub.f32 %v1384, 1.0
  %v1414 = vsub.f32 %v1385, 1.0
  %v1415 = vsub.f32 %v1386, 1.0
  %v1416 = vsub.f32 %v1387, 1.0
  %v1417 = vsub.f32 %v1388, 1.0
  %v1418 = vsub.f32 %v1389, 1.0
  %v1419 = vsub.f32 %v1390, 1.0
  %v1420 = vsub.f32 %v1391, 1.0
  %v1421 = vsub.f32 %v1392, 1.0
  %v1422 = vsub.f32 %v1393, 1.0
  %v1423 = vsub.f32 %v1394, 1.0
  %v1424 = vsub.f32 %v1395, 1.0
  %v1425 = vsub.f32 %v1396, 1.0
  %v1426 = vsub.f32 %v1397, 1.0
  %v1427 = vpack.c.bf16 %v1399, %v1398
  %v1428 = vpack.c.bf16 %v1401, %v1400
  %v1429 = vpack.c.bf16 %v1403, %v1402
  %v1430 = vpack.c.bf16 %v1405, %v1404
  %v1431 = vpack.c.bf16 %v1407, %v1406
  %v1432 = vpack.c.bf16 %v1409, %v1408
  %v1433 = vpack.c.bf16 %v1411, %v1410
  %v1434 = vpack.c.bf16 %v1413, %v1412
  %v1435 = vpack.c.bf16 %v1415, %v1414
  %v1436 = vpack.c.bf16 %v1417, %v1416
  %v1437 = vpack.c.bf16 %v1419, %v1418
  %v1438 = vpack.c.bf16 %v1421, %v1420
  %v1439 = vpack.c.bf16 %v1423, %v1422
  %v1440 = vpack.c.bf16 %v1425, %v1424
  %v1441 = vpack.c.bf16 %v1426, %v1426
  %vm1442 = vmpackc.low %vm1195, %vm1194
  %vm1443 = vmpackc.low %vm1197, %vm1196
  %vm1444 = vmpackc.low %vm1199, %vm1198
  %vm1445 = vmpackc.low %vm1201, %vm1200
  %vm1446 = vmpackc.low %vm1203, %vm1202
  %vm1447 = vmpackc.low %vm1205, %vm1204
  %vm1448 = vmpackc.low %vm1207, %vm1206
  %vm1449 = vmpackc.low %vm1209, %vm1208
  %vm1450 = vmpackc.low %vm1211, %vm1210
  %vm1451 = vmpackc.low %vm1213, %vm1212
  %vm1452 = vmpackc.low %vm1215, %vm1214
  %vm1453 = vmpackc.low %vm1217, %vm1216
  %vm1454 = vmpackc.low %vm1219, %vm1218
  %vm1455 = vmpackc.low %vm1221, %vm1220
  %vm1456 = vmpackc.low %vm1222, %vm1222
  %v1457 = vsel %vm1442, %v1150, %v1427
  %v1458 = vsel %vm1443, %v1151, %v1428
  %v1459 = vsel %vm1444, %v1152, %v1429
  %v1460 = vsel %vm1445, %v1153, %v1430
  %v1461 = vsel %vm1446, %v1154, %v1431
  %v1462 = vsel %vm1447, %v1155, %v1432
  %v1463 = vsel %vm1448, %v1156, %v1433
  %v1464 = vsel %vm1449, %v1157, %v1434
  %v1465 = vsel %vm1450, %v1158, %v1435
  %v1466 = vsel %vm1451, %v1159, %v1436
  %v1467 = vsel %vm1452, %v1160, %v1437
  %v1468 = vsel %vm1453, %v1161, %v1438
  %v1469 = vsel %vm1454, %v1162, %v1439
  %v1470 = vsel %vm1455, %v1163, %v1440
  %v1471 = vsel %vm1456, %v1164, %v1441
  %1472 = vst [vmem:[%s3] sm:$0xff] %v1457
  %1473 = vst [vmem:[%s3 + $0x8] sm:$0xff] %v1458
  %1474 = vst [vmem:[%s3 + $0x10] sm:$0xff] %v1459
  %1475 = vst [vmem:[%s3 + $0x18] sm:$0xff] %v1460
  %1476 = vst [vmem:[%s3 + $0x20] sm:$0xff] %v1461
  %1477 = vst [vmem:[%s3 + $0x28] sm:$0xff] %v1462
  %1478 = vst [vmem:[%s3 + $0x30] sm:$0xff] %v1463
  %1479 = vst [vmem:[%s3 + $0x38] sm:$0xff] %v1464
  %1480 = vst [vmem:[%s3 + $0x40] sm:$0xff] %v1465
  %1481 = vst [vmem:[%s3 + $0x48] sm:$0xff] %v1466
  %1482 = vst [vmem:[%s3 + $0x50] sm:$0xff] %v1467
  %1483 = vst [vmem:[%s3 + $0x58] sm:$0xff] %v1468
  %1484 = vst [vmem:[%s3 + $0x60] sm:$0xff] %v1469
  %1485 = vst [vmem:[%s3 + $0x68] sm:$0xff] %v1470
  %vm1486 = vcmask 453632
  %1487 = vst.msk [vmem:[%s3 + $0x70] sm:$0xf] %vm1486, %v1471
  %v1488 = vpack.c.bf16 %v770, %v756
  %v1489 = vpack.c.bf16 %v798, %v784
  %v1490 = vpack.c.bf16 %v826, %v812
  %v1491 = vpack.c.bf16 %v854, %v840
  %v1492 = vpack.c.bf16 %v882, %v868
  %v1493 = vpack.c.bf16 %v910, %v896
  %v1494 = vpack.c.bf16 %v938, %v924
  %v1495 = vpack.c.bf16 %v966, %v952
  %v1496 = vpack.c.bf16 %v994, %v980
  %v1497 = vpack.c.bf16 %v1022, %v1008
  %v1498 = vpack.c.bf16 %v1050, %v1036
  %v1499 = vpack.c.bf16 %v1078, %v1064
  %v1500 = vpack.c.bf16 %v1106, %v1092
  %v1501 = vpack.c.bf16 %v1134, %v1120
  %v1502 = vpack.c.bf16 %v1148, %v1148
  %1503 = vst [vmem:[%s4] sm:$0xff] %v1488
  %1504 = vst [vmem:[%s4 + $0x8] sm:$0xff] %v1489
  %1505 = vst [vmem:[%s4 + $0x10] sm:$0xff] %v1490
  %1506 = vst [vmem:[%s4 + $0x18] sm:$0xff] %v1491
  %1507 = vst [vmem:[%s4 + $0x20] sm:$0xff] %v1492
  %1508 = vst [vmem:[%s4 + $0x28] sm:$0xff] %v1493
  %1509 = vst [vmem:[%s4 + $0x30] sm:$0xff] %v1494
  %1510 = vst [vmem:[%s4 + $0x38] sm:$0xff] %v1495
  %1511 = vst [vmem:[%s4 + $0x40] sm:$0xff] %v1496
  %1512 = vst [vmem:[%s4 + $0x48] sm:$0xff] %v1497
  %1513 = vst [vmem:[%s4 + $0x50] sm:$0xff] %v1498
  %1514 = vst [vmem:[%s4 + $0x58] sm:$0xff] %v1499
  %1515 = vst [vmem:[%s4 + $0x60] sm:$0xff] %v1500
  %1516 = vst [vmem:[%s4 + $0x68] sm:$0xff] %v1501
  %1517 = vst.msk [vmem:[%s4 + $0x70] sm:$0xf] %vm1486, %v1502
  // Predicated region
  $region14: #{ft_loss_forward.6} parent=0 // pred_check
    _
  $region15: #{ft_loss_forward.6} parent=0 // pred_check_branch
    %1519 = sbr.rel (0) target = $region17
  $region16: #{ft_loss_forward.6} parent=0 // pred_region
    _
  $region17: #{ft_loss_forward.6} parent=0 // pred_fallthru
    _
  // Predicated region
  $region18: #{ft_loss_forward.6} parent=0 // pred_check
    _
  $region19: #{ft_loss_forward.6} parent=0 // pred_check_branch
    %1521 = sbr.rel (0) target = $region21
  $region20: #{ft_loss_forward.6} parent=0 // pred_region
    _
  $region21: #{ft_loss_forward.6} parent=0 // pred_fallthru
    _
  // Predicated region
  $region22: #{ft_loss_forward.6} parent=0 // pred_check
    _
  $region23: #{ft_loss_forward.6} parent=0 // pred_check_branch
    %1523 = sbr.rel (0) target = $region25
  $region24: #{ft_loss_forward.6} parent=0 // pred_region
    _
  $region25: #{ft_loss_forward.6} parent=0 // pred_fallthru
    _
  // Predicated region
  $region26: #{ft_loss_forward.6} parent=0 // pred_check
    _
  $region27: #{ft_loss_forward.6} parent=0 // pred_check_branch
    %1525 = sbr.rel (0) target = $region29
  $region28: #{ft_loss_forward.6} parent=0 // pred_region
    _
  $region29: #{ft_loss_forward.6} parent=0 // pred_fallthru
    _

// kernel: ft_loss_forward.7
$region0: #{ft_loss_forward.7}
  #allocation0 [shape = 'u32[]', space=smem, size = 0x4, offset = 0x4, fixed_abs, tag = 'smem constant byte address 0x4 - core index']
  #allocation1 [shape = 'u32[72,128]{1,0:T(1,128)}', space=vmem, size = 0x9000, scoped, tag = 'internal scratch']
  %s0 = inlined_call_operand.vmem [shape: bf16[8,72], index: 0, kind: input, shape index: {}]
  %s1 = inlined_call_operand.vmem [shape: f32[8,1], index: 1, kind: input, shape index: {}]
  %s2 = inlined_call_operand.vmem [shape: bf16[72,3640], index: 2, kind: input, shape index: {}]
  %s3 = inlined_call_operand.vmem [shape: bf16[8,3640], index: 3, kind: input, shape index: {}]
  %s4 = inlined_call_operand.vmem [shape: bf16[8,3640], index: 4, kind: output, shape index: {}]
  %s5 = sld [smem:[#allocation0]]
  $region26: #{ft_loss_forward.7} parent=0
    _
  %s7 = ssub.s32 1, %s5
  %s8 = scalar_select 0, %s7, %s5
  // Predicated region
  $region2: #{ft_loss_forward.7} parent=0 // pred_check
    _
  $region3: #{ft_loss_forward.7} parent=0 // pred_check_branch
    %10 = sbr.rel (0) target = $region5
  $region4: #{ft_loss_forward.7} parent=0 // pred_region
    _
  $region5: #{ft_loss_forward.7} parent=0 // pred_fallthru
    _
  // Predicated region
  $region6: #{ft_loss_forward.7} parent=0 // pred_check
    _
  $region7: #{ft_loss_forward.7} parent=0 // pred_check_branch
    %12 = sbr.rel (0) target = $region9
  $region8: #{ft_loss_forward.7} parent=0 // pred_region
    _
  $region9: #{ft_loss_forward.7} parent=0 // pred_fallthru
    _
  // Predicated region
  $region10: #{ft_loss_forward.7} parent=0 // pred_check
    _
  $region11: #{ft_loss_forward.7} parent=0 // pred_check_branch
    %14 = sbr.rel (0) target = $region13
  $region12: #{ft_loss_forward.7} parent=0 // pred_region
    _
  $region13: #{ft_loss_forward.7} parent=0 // pred_fallthru
    _
  // Predicated region
  $region14: #{ft_loss_forward.7} parent=0 // pred_check
    _
  $region15: #{ft_loss_forward.7} parent=0 // pred_check_branch
    %16 = sbr.rel (0) target = $region17
  $region16: #{ft_loss_forward.7} parent=0 // pred_region
    _
  $region17: #{ft_loss_forward.7} parent=0 // pred_fallthru
    _
  %v18 = vld [vmem:[%s0] sm:$0xf]
  %v19 = vld [vmem:[%s2] sm:$0xff]
  %v20 = vld [vmem:[%s2 + $0x8] sm:$0xff]
  %v21 = vld [vmem:[%s2 + $0x10] sm:$0xff]
  %v22 = vld [vmem:[%s2 + $0x18] sm:$0xff]
  %v23 = vld [vmem:[%s2 + $0x20] sm:$0xff]
  %v24 = vld [vmem:[%s2 + $0x28] sm:$0xff]
  %v25 = vld [vmem:[%s2 + $0x30] sm:$0xff]
  %v26 = vld [vmem:[%s2 + $0x38] sm:$0xff]
  %v27 = vld [vmem:[%s2 + $0x40] sm:$0xff]
  %v28 = vld [vmem:[%s2 + $0x48] sm:$0xff]
  %v29 = vld [vmem:[%s2 + $0x50] sm:$0xff]
  %v30 = vld [vmem:[%s2 + $0x58] sm:$0xff]
  %v31 = vld [vmem:[%s2 + $0x60] sm:$0xff]
  %v32 = vld [vmem:[%s2 + $0x68] sm:$0xff]
  %v33 = vld [vmem:[%s2 + $0x70] sm:$0xf]
  %v34 = vld [vmem:[%s2 + $0x74] sm:$0xff]
  %v35 = vld [vmem:[%s2 + $0x7c] sm:$0xff]
  %v36 = vld [vmem:[%s2 + $0x84] sm:$0xff]
  %v37 = vld [vmem:[%s2 + $0x8c] sm:$0xff]
  %v38 = vld [vmem:[%s2 + $0x94] sm:$0xff]
  %v39 = vld [vmem:[%s2 + $0x9c] sm:$0xff]
  %v40 = vld [vmem:[%s2 + $0xa4] sm:$0xff]
  %v41 = vld [vmem:[%s2 + $0xac] sm:$0xff]
  %v42 = vld [vmem:[%s2 + $0xb4] sm:$0xff]
  %v43 = vld [vmem:[%s2 + $0xbc] sm:$0xff]
  %v44 = vld [vmem:[%s2 + $0xc4] sm:$0xff]
  %v45 = vld [vmem:[%s2 + $0xcc] sm:$0xff]
  %v46 = vld [vmem:[%s2 + $0xd4] sm:$0xff]
  %v47 = vld [vmem:[%s2 + $0xdc] sm:$0xff]
  %v48 = vld [vmem:[%s2 + $0xe4] sm:$0xf]
  %v49 = vld [vmem:[%s2 + $0xe8] sm:$0xff]
  %v50 = vld [vmem:[%s2 + $0xf0] sm:$0xff]
  %v51 = vld [vmem:[%s2 + $0xf8] sm:$0xff]
  %v52 = vld [vmem:[%s2 + $0x100] sm:$0xff]
  %v53 = vld [vmem:[%s2 + $0x108] sm:$0xff]
  %v54 = vld [vmem:[%s2 + $0x110] sm:$0xff]
  %v55 = vld [vmem:[%s2 + $0x118] sm:$0xff]
  %v56 = vld [vmem:[%s2 + $0x120] sm:$0xff]
  %v57 = vld [vmem:[%s2 + $0x128] sm:$0xff]
  %v58 = vld [vmem:[%s2 + $0x130] sm:$0xff]
  %v59 = vld [vmem:[%s2 + $0x138] sm:$0xff]
  %v60 = vld [vmem:[%s2 + $0x140] sm:$0xff]
  %v61 = vld [vmem:[%s2 + $0x148] sm:$0xff]
  %v62 = vld [vmem:[%s2 + $0x150] sm:$0xff]
  %v63 = vld [vmem:[%s2 + $0x158] sm:$0xf]
  %v64 = vld [vmem:[%s2 + $0x15c] sm:$0xff]
  %v65 = vld [vmem:[%s2 + $0x164] sm:$0xff]
  %v66 = vld [vmem:[%s2 + $0x16c] sm:$0xff]
  %v67 = vld [vmem:[%s2 + $0x174] sm:$0xff]
  %v68 = vld [vmem:[%s2 + $0x17c] sm:$0xff]
  %v69 = vld [vmem:[%s2 + $0x184] sm:$0xff]
  %v70 = vld [vmem:[%s2 + $0x18c] sm:$0xff]
  %v71 = vld [vmem:[%s2 + $0x194] sm:$0xff]
  %v72 = vld [vmem:[%s2 + $0x19c] sm:$0xff]
  %v73 = vld [vmem:[%s2 + $0x1a4] sm:$0xff]
  %v74 = vld [vmem:[%s2 + $0x1ac] sm:$0xff]
  %v75 = vld [vmem:[%s2 + $0x1b4] sm:$0xff]
  %v76 = vld [vmem:[%s2 + $0x1bc] sm:$0xff]
  %v77 = vld [vmem:[%s2 + $0x1c4] sm:$0xff]
  %v78 = vld [vmem:[%s2 + $0x1cc] sm:$0xf]
  %v79 = vld [vmem:[%s2 + $0x1d0] sm:$0xff]
  %v80 = vld [vmem:[%s2 + $0x1d8] sm:$0xff]
  %v81 = vld [vmem:[%s2 + $0x1e0] sm:$0xff]
  %v82 = vld [vmem:[%s2 + $0x1e8] sm:$0xff]
  %v83 = vld [vmem:[%s2 + $0x1f0] sm:$0xff]
  %v84 = vld [vmem:[%s2 + $0x1f8] sm:$0xff]
  %v85 = vld [vmem:[%s2 + $0x200] sm:$0xff]
  %v86 = vld [vmem:[%s2 + $0x208] sm:$0xff]
  %v87 = vld [vmem:[%s2 + $0x210] sm:$0xff]
  %v88 = vld [vmem:[%s2 + $0x218] sm:$0xff]
  %v89 = vld [vmem:[%s2 + $0x220] sm:$0xff]
  %v90 = vld [vmem:[%s2 + $0x228] sm:$0xff]
  %v91 = vld [vmem:[%s2 + $0x230] sm:$0xff]
  %v92 = vld [vmem:[%s2 + $0x238] sm:$0xff]
  %v93 = vld [vmem:[%s2 + $0x240] sm:$0xf]
  %v94 = vld [vmem:[%s2 + $0x244] sm:$0xff]
  %v95 = vld [vmem:[%s2 + $0x24c] sm:$0xff]
  %v96 = vld [vmem:[%s2 + $0x254] sm:$0xff]
  %v97 = vld [vmem:[%s2 + $0x25c] sm:$0xff]
  %v98 = vld [vmem:[%s2 + $0x264] sm:$0xff]
  %v99 = vld [vmem:[%s2 + $0x26c] sm:$0xff]
  %v100 = vld [vmem:[%s2 + $0x274] sm:$0xff]
  %v101 = vld [vmem:[%s2 + $0x27c] sm:$0xff]
  %v102 = vld [vmem:[%s2 + $0x284] sm:$0xff]
  %v103 = vld [vmem:[%s2 + $0x28c] sm:$0xff]
  %v104 = vld [vmem:[%s2 + $0x294] sm:$0xff]
  %v105 = vld [vmem:[%s2 + $0x29c] sm:$0xff]
  %v106 = vld [vmem:[%s2 + $0x2a4] sm:$0xff]
  %v107 = vld [vmem:[%s2 + $0x2ac] sm:$0xff]
  %v108 = vld [vmem:[%s2 + $0x2b4] sm:$0xf]
  %v109 = vld [vmem:[%s2 + $0x2b8] sm:$0xff]
  %v110 = vld [vmem:[%s2 + $0x2c0] sm:$0xff]
  %v111 = vld [vmem:[%s2 + $0x2c8] sm:$0xff]
  %v112 = vld [vmem:[%s2 + $0x2d0] sm:$0xff]
  %v113 = vld [vmem:[%s2 + $0x2d8] sm:$0xff]
  %v114 = vld [vmem:[%s2 + $0x2e0] sm:$0xff]
  %v115 = vld [vmem:[%s2 + $0x2e8] sm:$0xff]
  %v116 = vld [vmem:[%s2 + $0x2f0] sm:$0xff]
  %v117 = vld [vmem:[%s2 + $0x2f8] sm:$0xff]
  %v118 = vld [vmem:[%s2 + $0x300] sm:$0xff]
  %v119 = vld [vmem:[%s2 + $0x308] sm:$0xff]
  %v120 = vld [vmem:[%s2 + $0x310] sm:$0xff]
  %v121 = vld [vmem:[%s2 + $0x318] sm:$0xff]
  %v122 = vld [vmem:[%s2 + $0x320] sm:$0xff]
  %v123 = vld [vmem:[%s2 + $0x328] sm:$0xf]
  %v124 = vld [vmem:[%s2 + $0x32c] sm:$0xff]
  %v125 = vld [vmem:[%s2 + $0x334] sm:$0xff]
  %v126 = vld [vmem:[%s2 + $0x33c] sm:$0xff]
  %v127 = vld [vmem:[%s2 + $0x344] sm:$0xff]
  %v128 = vld [vmem:[%s2 + $0x34c] sm:$0xff]
  %v129 = vld [vmem:[%s2 + $0x354] sm:$0xff]
  %v130 = vld [vmem:[%s2 + $0x35c] sm:$0xff]
  %v131 = vld [vmem:[%s2 + $0x364] sm:$0xff]
  %v132 = vld [vmem:[%s2 + $0x36c] sm:$0xff]
  %v133 = vld [vmem:[%s2 + $0x374] sm:$0xff]
  %v134 = vld [vmem:[%s2 + $0x37c] sm:$0xff]
  %v135 = vld [vmem:[%s2 + $0x384] sm:$0xff]
  %v136 = vld [vmem:[%s2 + $0x38c] sm:$0xff]
  %v137 = vld [vmem:[%s2 + $0x394] sm:$0xff]
  %v138 = vld [vmem:[%s2 + $0x39c] sm:$0xf]
  %v139 = vld [vmem:[%s2 + $0x3a0] sm:$0xff]
  %v140 = vld [vmem:[%s2 + $0x3a8] sm:$0xff]
  %v141 = vld [vmem:[%s2 + $0x3b0] sm:$0xff]
  %v142 = vld [vmem:[%s2 + $0x3b8] sm:$0xff]
  %v143 = vld [vmem:[%s2 + $0x3c0] sm:$0xff]
  %v144 = vld [vmem:[%s2 + $0x3c8] sm:$0xff]
  %v145 = vld [vmem:[%s2 + $0x3d0] sm:$0xff]
  %v146 = vld [vmem:[%s2 + $0x3d8] sm:$0xff]
  %v147 = vld [vmem:[%s2 + $0x3e0] sm:$0xff]
  %v148 = vld [vmem:[%s2 + $0x3e8] sm:$0xff]
  %v149 = vld [vmem:[%s2 + $0x3f0] sm:$0xff]
  %v150 = vld [vmem:[%s2 + $0x3f8] sm:$0xff]
  %v151 = vld [vmem:[%s2 + $0x400] sm:$0xff]
  %v152 = vld [vmem:[%s2 + $0x408] sm:$0xff]
  %v153 = vld [vmem:[%s2 + $0x410] sm:$0xf]
  %v154 = vld [vmem:[%s1] sm:$0xff]
  %156 = vset.pattern.permute.xlu0 0
  %157 = vperm.xlu0 %156, %v154
  %v158 = vpop.permute.xlu0 %157
  %v295 = vunpack.c.l.b16 %v19
  %v296 = vunpack.c.h.b16 %v19
  %v297 = vunpack.c.l.b16 %v20
  %v298 = vunpack.c.h.b16 %v20
  %v299 = vunpack.c.l.b16 %v21
  %v300 = vunpack.c.h.b16 %v21
  %v301 = vunpack.c.l.b16 %v22
  %v302 = vunpack.c.h.b16 %v22
  %v303 = vunpack.c.l.b16 %v23
  %v304 = vunpack.c.h.b16 %v23
  %v305 = vunpack.c.l.b16 %v24
  %v306 = vunpack.c.h.b16 %v24
  %v307 = vunpack.c.l.b16 %v25
  %v308 = vunpack.c.h.b16 %v25
  %v309 = vunpack.c.l.b16 %v26
  %v310 = vunpack.c.h.b16 %v26
  %v311 = vunpack.c.l.b16 %v27
  %v312 = vunpack.c.h.b16 %v27
  %v313 = vunpack.c.l.b16 %v28
  %v314 = vunpack.c.h.b16 %v28
  %v315 = vunpack.c.l.b16 %v29
  %v316 = vunpack.c.h.b16 %v29
  %v317 = vunpack.c.l.b16 %v30
  %v318 = vunpack.c.h.b16 %v30
  %v319 = vunpack.c.l.b16 %v31
  %v320 = vunpack.c.h.b16 %v31
  %v321 = vunpack.c.l.b16 %v32
  %v322 = vunpack.c.h.b16 %v32
  %v323 = vunpack.c.l.b16 %v33
  %v324 = vunpack.c.l.b16 %v34
  %v325 = vunpack.c.h.b16 %v34
  %v326 = vunpack.c.l.b16 %v35
  %v327 = vunpack.c.h.b16 %v35
  %v328 = vunpack.c.l.b16 %v36
  %v329 = vunpack.c.h.b16 %v36
  %v330 = vunpack.c.l.b16 %v37
  %v331 = vunpack.c.h.b16 %v37
  %v332 = vunpack.c.l.b16 %v38
  %v333 = vunpack.c.h.b16 %v38
  %v334 = vunpack.c.l.b16 %v39
  %v335 = vunpack.c.h.b16 %v39
  %v336 = vunpack.c.l.b16 %v40
  %v337 = vunpack.c.h.b16 %v40
  %v338 = vunpack.c.l.b16 %v41
  %v339 = vunpack.c.h.b16 %v41
  %v340 = vunpack.c.l.b16 %v42
  %v341 = vunpack.c.h.b16 %v42
  %v342 = vunpack.c.l.b16 %v43
  %v343 = vunpack.c.h.b16 %v43
  %v344 = vunpack.c.l.b16 %v44
  %v345 = vunpack.c.h.b16 %v44
  %v346 = vunpack.c.l.b16 %v45
  %v347 = vunpack.c.h.b16 %v45
  %v348 = vunpack.c.l.b16 %v46
  %v349 = vunpack.c.h.b16 %v46
  %v350 = vunpack.c.l.b16 %v47
  %v351 = vunpack.c.h.b16 %v47
  %v352 = vunpack.c.l.b16 %v48
  %v353 = vunpack.c.l.b16 %v49
  %v354 = vunpack.c.h.b16 %v49
  %v355 = vunpack.c.l.b16 %v50
  %v356 = vunpack.c.h.b16 %v50
  %v357 = vunpack.c.l.b16 %v51
  %v358 = vunpack.c.h.b16 %v51
  %v359 = vunpack.c.l.b16 %v52
  %v360 = vunpack.c.h.b16 %v52
  %v361 = vunpack.c.l.b16 %v53
  %v362 = vunpack.c.h.b16 %v53
  %v363 = vunpack.c.l.b16 %v54
  %v364 = vunpack.c.h.b16 %v54
  %v365 = vunpack.c.l.b16 %v55
  %v366 = vunpack.c.h.b16 %v55
  %v367 = vunpack.c.l.b16 %v56
  %v368 = vunpack.c.h.b16 %v56
  %v369 = vunpack.c.l.b16 %v57
  %v370 = vunpack.c.h.b16 %v57
  %v371 = vunpack.c.l.b16 %v58
  %v372 = vunpack.c.h.b16 %v58
  %v373 = vunpack.c.l.b16 %v59
  %v374 = vunpack.c.h.b16 %v59
  %v375 = vunpack.c.l.b16 %v60
  %v376 = vunpack.c.h.b16 %v60
  %v377 = vunpack.c.l.b16 %v61
  %v378 = vunpack.c.h.b16 %v61
  %v379 = vunpack.c.l.b16 %v62
  %v380 = vunpack.c.h.b16 %v62
  %v381 = vunpack.c.l.b16 %v63
  %v382 = vunpack.c.l.b16 %v64
  %v383 = vunpack.c.h.b16 %v64
  %v384 = vunpack.c.l.b16 %v65
  %v385 = vunpack.c.h.b16 %v65
  %v386 = vunpack.c.l.b16 %v66
  %v387 = vunpack.c.h.b16 %v66
  %v388 = vunpack.c.l.b16 %v67
  %v389 = vunpack.c.h.b16 %v67
  %v390 = vunpack.c.l.b16 %v68
  %v391 = vunpack.c.h.b16 %v68
  %v392 = vunpack.c.l.b16 %v69
  %v393 = vunpack.c.h.b16 %v69
  %v394 = vunpack.c.l.b16 %v70
  %v395 = vunpack.c.h.b16 %v70
  %v396 = vunpack.c.l.b16 %v71
  %v397 = vunpack.c.h.b16 %v71
  %v398 = vunpack.c.l.b16 %v72
  %v399 = vunpack.c.h.b16 %v72
  %v400 = vunpack.c.l.b16 %v73
  %v401 = vunpack.c.h.b16 %v73
  %v402 = vunpack.c.l.b16 %v74
  %v403 = vunpack.c.h.b16 %v74
  %v404 = vunpack.c.l.b16 %v75
  %v405 = vunpack.c.h.b16 %v75
  %v406 = vunpack.c.l.b16 %v76
  %v407 = vunpack.c.h.b16 %v76
  %v408 = vunpack.c.l.b16 %v77
  %v409 = vunpack.c.h.b16 %v77
  %v410 = vunpack.c.l.b16 %v78
  %v411 = vunpack.c.l.b16 %v79
  %v412 = vunpack.c.h.b16 %v79
  %v413 = vunpack.c.l.b16 %v80
  %v414 = vunpack.c.h.b16 %v80
  %v415 = vunpack.c.l.b16 %v81
  %v416 = vunpack.c.h.b16 %v81
  %v417 = vunpack.c.l.b16 %v82
  %v418 = vunpack.c.h.b16 %v82
  %v419 = vunpack.c.l.b16 %v83
  %v420 = vunpack.c.h.b16 %v83
  %v421 = vunpack.c.l.b16 %v84
  %v422 = vunpack.c.h.b16 %v84
  %v423 = vunpack.c.l.b16 %v85
  %v424 = vunpack.c.h.b16 %v85
  %v425 = vunpack.c.l.b16 %v86
  %v426 = vunpack.c.h.b16 %v86
  %v427 = vunpack.c.l.b16 %v87
  %v428 = vunpack.c.h.b16 %v87
  %v429 = vunpack.c.l.b16 %v88
  %v430 = vunpack.c.h.b16 %v88
  %v431 = vunpack.c.l.b16 %v89
  %v432 = vunpack.c.h.b16 %v89
  %v433 = vunpack.c.l.b16 %v90
  %v434 = vunpack.c.h.b16 %v90
  %v435 = vunpack.c.l.b16 %v91
  %v436 = vunpack.c.h.b16 %v91
  %v437 = vunpack.c.l.b16 %v92
  %v438 = vunpack.c.h.b16 %v92
  %v439 = vunpack.c.l.b16 %v93
  %v440 = vunpack.c.l.b16 %v94
  %v441 = vunpack.c.h.b16 %v94
  %v442 = vunpack.c.l.b16 %v95
  %v443 = vunpack.c.h.b16 %v95
  %v444 = vunpack.c.l.b16 %v96
  %v445 = vunpack.c.h.b16 %v96
  %v446 = vunpack.c.l.b16 %v97
  %v447 = vunpack.c.h.b16 %v97
  %v448 = vunpack.c.l.b16 %v98
  %v449 = vunpack.c.h.b16 %v98
  %v450 = vunpack.c.l.b16 %v99
  %v451 = vunpack.c.h.b16 %v99
  %v452 = vunpack.c.l.b16 %v100
  %v453 = vunpack.c.h.b16 %v100
  %v454 = vunpack.c.l.b16 %v101
  %v455 = vunpack.c.h.b16 %v101
  %v456 = vunpack.c.l.b16 %v102
  %v457 = vunpack.c.h.b16 %v102
  %v458 = vunpack.c.l.b16 %v103
  %v459 = vunpack.c.h.b16 %v103
  %v460 = vunpack.c.l.b16 %v104
  %v461 = vunpack.c.h.b16 %v104
  %v462 = vunpack.c.l.b16 %v105
  %v463 = vunpack.c.h.b16 %v105
  %v464 = vunpack.c.l.b16 %v106
  %v465 = vunpack.c.h.b16 %v106
  %v466 = vunpack.c.l.b16 %v107
  %v467 = vunpack.c.h.b16 %v107
  %v468 = vunpack.c.l.b16 %v108
  %v469 = vunpack.c.l.b16 %v109
  %v470 = vunpack.c.h.b16 %v109
  %v471 = vunpack.c.l.b16 %v110
  %v472 = vunpack.c.h.b16 %v110
  %v473 = vunpack.c.l.b16 %v111
  %v474 = vunpack.c.h.b16 %v111
  %v475 = vunpack.c.l.b16 %v112
  %v476 = vunpack.c.h.b16 %v112
  %v477 = vunpack.c.l.b16 %v113
  %v478 = vunpack.c.h.b16 %v113
  %v479 = vunpack.c.l.b16 %v114
  %v480 = vunpack.c.h.b16 %v114
  %v481 = vunpack.c.l.b16 %v115
  %v482 = vunpack.c.h.b16 %v115
  %v483 = vunpack.c.l.b16 %v116
  %v484 = vunpack.c.h.b16 %v116
  %v485 = vunpack.c.l.b16 %v117
  %v486 = vunpack.c.h.b16 %v117
  %v487 = vunpack.c.l.b16 %v118
  %v488 = vunpack.c.h.b16 %v118
  %v489 = vunpack.c.l.b16 %v119
  %v490 = vunpack.c.h.b16 %v119
  %v491 = vunpack.c.l.b16 %v120
  %v492 = vunpack.c.h.b16 %v120
  %v493 = vunpack.c.l.b16 %v121
  %v494 = vunpack.c.h.b16 %v121
  %v495 = vunpack.c.l.b16 %v122
  %v496 = vunpack.c.h.b16 %v122
  %v497 = vunpack.c.l.b16 %v123
  %v498 = vunpack.c.l.b16 %v124
  %v499 = vunpack.c.h.b16 %v124
  %v500 = vunpack.c.l.b16 %v125
  %v501 = vunpack.c.h.b16 %v125
  %v502 = vunpack.c.l.b16 %v126
  %v503 = vunpack.c.h.b16 %v126
  %v504 = vunpack.c.l.b16 %v127
  %v505 = vunpack.c.h.b16 %v127
  %v506 = vunpack.c.l.b16 %v128
  %v507 = vunpack.c.h.b16 %v128
  %v508 = vunpack.c.l.b16 %v129
  %v509 = vunpack.c.h.b16 %v129
  %v510 = vunpack.c.l.b16 %v130
  %v511 = vunpack.c.h.b16 %v130
  %v512 = vunpack.c.l.b16 %v131
  %v513 = vunpack.c.h.b16 %v131
  %v514 = vunpack.c.l.b16 %v132
  %v515 = vunpack.c.h.b16 %v132
  %v516 = vunpack.c.l.b16 %v133
  %v517 = vunpack.c.h.b16 %v133
  %v518 = vunpack.c.l.b16 %v134
  %v519 = vunpack.c.h.b16 %v134
  %v520 = vunpack.c.l.b16 %v135
  %v521 = vunpack.c.h.b16 %v135
  %v522 = vunpack.c.l.b16 %v136
  %v523 = vunpack.c.h.b16 %v136
  %v524 = vunpack.c.l.b16 %v137
  %v525 = vunpack.c.h.b16 %v137
  %v526 = vunpack.c.l.b16 %v138
  %v527 = vunpack.c.l.b16 %v139
  %v528 = vunpack.c.h.b16 %v139
  %v529 = vunpack.c.l.b16 %v140
  %v530 = vunpack.c.h.b16 %v140
  %v531 = vunpack.c.l.b16 %v141
  %v532 = vunpack.c.h.b16 %v141
  %v533 = vunpack.c.l.b16 %v142
  %v534 = vunpack.c.h.b16 %v142
  %v535 = vunpack.c.l.b16 %v143
  %v536 = vunpack.c.h.b16 %v143
  %v537 = vunpack.c.l.b16 %v144
  %v538 = vunpack.c.h.b16 %v144
  %v539 = vunpack.c.l.b16 %v145
  %v540 = vunpack.c.h.b16 %v145
  %v541 = vunpack.c.l.b16 %v146
  %v542 = vunpack.c.h.b16 %v146
  %v543 = vunpack.c.l.b16 %v147
  %v544 = vunpack.c.h.b16 %v147
  %v545 = vunpack.c.l.b16 %v148
  %v546 = vunpack.c.h.b16 %v148
  %v547 = vunpack.c.l.b16 %v149
  %v548 = vunpack.c.h.b16 %v149
  %v549 = vunpack.c.l.b16 %v150
  %v550 = vunpack.c.h.b16 %v150
  %v551 = vunpack.c.l.b16 %v151
  %v552 = vunpack.c.h.b16 %v151
  %v553 = vunpack.c.l.b16 %v152
  %v554 = vunpack.c.h.b16 %v152
  %v555 = vunpack.c.l.b16 %v153
  %v556 = vpack.c.b16 %v324, %v295
  %v557 = vpack.c.b16 %v325, %v296
  %v558 = vpack.c.b16 %v326, %v297
  %v559 = vpack.c.b16 %v327, %v298
  %v560 = vpack.c.b16 %v328, %v299
  %v561 = vpack.c.b16 %v329, %v300
  %v562 = vpack.c.b16 %v330, %v301
  %v563 = vpack.c.b16 %v331, %v302
  %v564 = vpack.c.b16 %v332, %v303
  %v565 = vpack.c.b16 %v333, %v304
  %v566 = vpack.c.b16 %v334, %v305
  %v567 = vpack.c.b16 %v335, %v306
  %v568 = vpack.c.b16 %v336, %v307
  %v569 = vpack.c.b16 %v337, %v308
  %v570 = vpack.c.b16 %v338, %v309
  %v571 = vpack.c.b16 %v339, %v310
  %v572 = vpack.c.b16 %v340, %v311
  %v573 = vpack.c.b16 %v341, %v312
  %v574 = vpack.c.b16 %v342, %v313
  %v575 = vpack.c.b16 %v343, %v314
  %v576 = vpack.c.b16 %v344, %v315
  %v577 = vpack.c.b16 %v345, %v316
  %v578 = vpack.c.b16 %v346, %v317
  %v579 = vpack.c.b16 %v347, %v318
  %v580 = vpack.c.b16 %v348, %v319
  %v581 = vpack.c.b16 %v349, %v320
  %v582 = vpack.c.b16 %v350, %v321
  %v583 = vpack.c.b16 %v351, %v322
  %v584 = vpack.c.b16 %v352, %v323
  %v585 = vpack.c.b16 %v382, %v353
  %v586 = vpack.c.b16 %v383, %v354
  %v587 = vpack.c.b16 %v384, %v355
  %v588 = vpack.c.b16 %v385, %v356
  %v589 = vpack.c.b16 %v386, %v357
  %v590 = vpack.c.b16 %v387, %v358
  %v591 = vpack.c.b16 %v388, %v359
  %v592 = vpack.c.b16 %v389, %v360
  %v593 = vpack.c.b16 %v390, %v361
  %v594 = vpack.c.b16 %v391, %v362
  %v595 = vpack.c.b16 %v392, %v363
  %v596 = vpack.c.b16 %v393, %v364
  %v597 = vpack.c.b16 %v394, %v365
  %v598 = vpack.c.b16 %v395, %v366
  %v599 = vpack.c.b16 %v396, %v367
  %v600 = vpack.c.b16 %v397, %v368
  %v601 = vpack.c.b16 %v398, %v369
  %v602 = vpack.c.b16 %v399, %v370
  %v603 = vpack.c.b16 %v400, %v371
  %v604 = vpack.c.b16 %v401, %v372
  %v605 = vpack.c.b16 %v402, %v373
  %v606 = vpack.c.b16 %v403, %v374
  %v607 = vpack.c.b16 %v404, %v375
  %v608 = vpack.c.b16 %v405, %v376
  %v609 = vpack.c.b16 %v406, %v377
  %v610 = vpack.c.b16 %v407, %v378
  %v611 = vpack.c.b16 %v408, %v379
  %v612 = vpack.c.b16 %v409, %v380
  %v613 = vpack.c.b16 %v410, %v381
  %v614 = vpack.c.b16 %v440, %v411
  %v615 = vpack.c.b16 %v441, %v412
  %v616 = vpack.c.b16 %v442, %v413
  %v617 = vpack.c.b16 %v443, %v414
  %v618 = vpack.c.b16 %v444, %v415
  %v619 = vpack.c.b16 %v445, %v416
  %v620 = vpack.c.b16 %v446, %v417
  %v621 = vpack.c.b16 %v447, %v418
  %v622 = vpack.c.b16 %v448, %v419
  %v623 = vpack.c.b16 %v449, %v420
  %v624 = vpack.c.b16 %v450, %v421
  %v625 = vpack.c.b16 %v451, %v422
  %v626 = vpack.c.b16 %v452, %v423
  %v627 = vpack.c.b16 %v453, %v424
  %v628 = vpack.c.b16 %v454, %v425
  %v629 = vpack.c.b16 %v455, %v426
  %v630 = vpack.c.b16 %v456, %v427
  %v631 = vpack.c.b16 %v457, %v428
  %v632 = vpack.c.b16 %v458, %v429
  %v633 = vpack.c.b16 %v459, %v430
  %v634 = vpack.c.b16 %v460, %v431
  %v635 = vpack.c.b16 %v461, %v432
  %v636 = vpack.c.b16 %v462, %v433
  %v637 = vpack.c.b16 %v463, %v434
  %v638 = vpack.c.b16 %v464, %v435
  %v639 = vpack.c.b16 %v465, %v436
  %v640 = vpack.c.b16 %v466, %v437
  %v641 = vpack.c.b16 %v467, %v438
  %v642 = vpack.c.b16 %v468, %v439
  %v643 = vpack.c.b16 %v498, %v469
  %v644 = vpack.c.b16 %v499, %v470
  %v645 = vpack.c.b16 %v500, %v471
  %v646 = vpack.c.b16 %v501, %v472
  %v647 = vpack.c.b16 %v502, %v473
  %v648 = vpack.c.b16 %v503, %v474
  %v649 = vpack.c.b16 %v504, %v475
  %v650 = vpack.c.b16 %v505, %v476
  %v651 = vpack.c.b16 %v506, %v477
  %v652 = vpack.c.b16 %v507, %v478
  %v653 = vpack.c.b16 %v508, %v479
  %v654 = vpack.c.b16 %v509, %v480
  %v655 = vpack.c.b16 %v510, %v481
  %v656 = vpack.c.b16 %v511, %v482
  %v657 = vpack.c.b16 %v512, %v483
  %v658 = vpack.c.b16 %v513, %v484
  %v659 = vpack.c.b16 %v514, %v485
  %v660 = vpack.c.b16 %v515, %v486
  %v661 = vpack.c.b16 %v516, %v487
  %v662 = vpack.c.b16 %v517, %v488
  %v663 = vpack.c.b16 %v518, %v489
  %v664 = vpack.c.b16 %v519, %v490
  %v665 = vpack.c.b16 %v520, %v491
  %v666 = vpack.c.b16 %v521, %v492
  %v667 = vpack.c.b16 %v522, %v493
  %v668 = vpack.c.b16 %v523, %v494
  %v669 = vpack.c.b16 %v524, %v495
  %v670 = vpack.c.b16 %v525, %v496
  %v671 = vpack.c.b16 %v526, %v497
  %v672 = vpack.c.b16 %v527, %v527
  %v673 = vpack.c.b16 %v528, %v528
  %v674 = vpack.c.b16 %v529, %v529
  %v675 = vpack.c.b16 %v530, %v530
  %v676 = vpack.c.b16 %v531, %v531
  %v677 = vpack.c.b16 %v532, %v532
  %v678 = vpack.c.b16 %v533, %v533
  %v679 = vpack.c.b16 %v534, %v534
  %v680 = vpack.c.b16 %v535, %v535
  %v681 = vpack.c.b16 %v536, %v536
  %v682 = vpack.c.b16 %v537, %v537
  %v683 = vpack.c.b16 %v538, %v538
  %v684 = vpack.c.b16 %v539, %v539
  %v685 = vpack.c.b16 %v540, %v540
  %v686 = vpack.c.b16 %v541, %v541
  %v687 = vpack.c.b16 %v542, %v542
  %v688 = vpack.c.b16 %v543, %v543
  %v689 = vpack.c.b16 %v544, %v544
  %v690 = vpack.c.b16 %v545, %v545
  %v691 = vpack.c.b16 %v546, %v546
  %v692 = vpack.c.b16 %v547, %v547
  %v693 = vpack.c.b16 %v548, %v548
  %v694 = vpack.c.b16 %v549, %v549
  %v695 = vpack.c.b16 %v550, %v550
  %v696 = vpack.c.b16 %v551, %v551
  %v697 = vpack.c.b16 %v552, %v552
  %v698 = vpack.c.b16 %v553, %v553
  %v699 = vpack.c.b16 %v554, %v554
  %v700 = vpack.c.b16 %v555, %v555
  %vm817 = vcmask 588800
  %v819 = vsel %vm817, %v18, 0
  %vm821 = vcmask 1043456
  %v823 = vsel %vm821, %v672, 0
  %v826 = vsel %vm821, %v673, 0
  %v829 = vsel %vm821, %v674, 0
  %v832 = vsel %vm821, %v675, 0
  %v835 = vsel %vm821, %v676, 0
  %v838 = vsel %vm821, %v677, 0
  %v841 = vsel %vm821, %v678, 0
  %v844 = vsel %vm821, %v679, 0
  %v847 = vsel %vm821, %v680, 0
  %v850 = vsel %vm821, %v681, 0
  %v853 = vsel %vm821, %v682, 0
  %v856 = vsel %vm821, %v683, 0
  %v859 = vsel %vm821, %v684, 0
  %v862 = vsel %vm821, %v685, 0
  %v865 = vsel %vm821, %v686, 0
  %v868 = vsel %vm821, %v687, 0
  %v871 = vsel %vm821, %v688, 0
  %v874 = vsel %vm821, %v689, 0
  %v877 = vsel %vm821, %v690, 0
  %v880 = vsel %vm821, %v691, 0
  %v883 = vsel %vm821, %v692, 0
  %v886 = vsel %vm821, %v693, 0
  %v889 = vsel %vm821, %v694, 0
  %v892 = vsel %vm821, %v695, 0
  %v895 = vsel %vm821, %v696, 0
  %v898 = vsel %vm821, %v697, 0
  %v901 = vsel %vm821, %v698, 0
  %v904 = vsel %vm821, %v699, 0
  %v907 = vsel %vm821, %v700, 0
  %909 = vmatpush.bf16.msra.mxu0 0
  %910 = vmatpush.bf16.msra.mxu0 0
  %911 = vmatpush.bf16.msra.mxu0 0
  %912 = vmatpush.bf16.msra.mxu0 %v823
  %913 = vmatpush.bf16.msra.mxu0 %v643
  %914 = vmatpush.bf16.msra.mxu0 %v614
  %915 = vmatpush.bf16.msra.mxu0 %v585
  %916 = vmatpush.bf16.msra.mxu0 %v556
  %917 = vmatmul.bf16.gmra.mxu0 %v819
  %v918 = vpop.f32.mrf.mxu0
  %v919 = vadd.f32 %v158, %v918
  %v920 = vpop.f32.mrf.mxu0
  %921 = vdwg.mxu0
  %922 = vmatpush.bf16.msra.mxu0 0
  %923 = vmatpush.bf16.msra.mxu0 0
  %924 = vmatpush.bf16.msra.mxu0 0
  %925 = vmatpush.bf16.msra.mxu0 %v826
  %926 = vmatpush.bf16.msra.mxu0 %v644
  %927 = vmatpush.bf16.msra.mxu0 %v615
  %928 = vmatpush.bf16.msra.mxu0 %v586
  %929 = vmatpush.bf16.msra.mxu0 %v557
  %930 = vmatmul.bf16.gmra.mxu0 %v819
  %v931 = vpop.f32.mrf.mxu0
  %v932 = vadd.f32 %v158, %v931
  %v933 = vpop.f32.mrf.mxu0
  %934 = vdwg.mxu0
  %935 = vmatpush.bf16.msra.mxu0 0
  %936 = vmatpush.bf16.msra.mxu0 0
  %937 = vmatpush.bf16.msra.mxu0 0
  %938 = vmatpush.bf16.msra.mxu0 %v829
  %939 = vmatpush.bf16.msra.mxu0 %v645
  %940 = vmatpush.bf16.msra.mxu0 %v616
  %941 = vmatpush.bf16.msra.mxu0 %v587
  %942 = vmatpush.bf16.msra.mxu0 %v558
  %943 = vmatmul.bf16.gmra.mxu0 %v819
  %v944 = vpop.f32.mrf.mxu0
  %v945 = vadd.f32 %v158, %v944
  %v946 = vpop.f32.mrf.mxu0
  %947 = vdwg.mxu0
  %948 = vmatpush.bf16.msra.mxu0 0
  %949 = vmatpush.bf16.msra.mxu0 0
  %950 = vmatpush.bf16.msra.mxu0 0
  %951 = vmatpush.bf16.msra.mxu0 %v832
  %952 = vmatpush.bf16.msra.mxu0 %v646
  %953 = vmatpush.bf16.msra.mxu0 %v617
  %954 = vmatpush.bf16.msra.mxu0 %v588
  %955 = vmatpush.bf16.msra.mxu0 %v559
  %956 = vmatmul.bf16.gmra.mxu0 %v819
  %v957 = vpop.f32.mrf.mxu0
  %v958 = vadd.f32 %v158, %v957
  %v959 = vpop.f32.mrf.mxu0
  %960 = vdwg.mxu0
  %961 = vmatpush.bf16.msra.mxu0 0
  %962 = vmatpush.bf16.msra.mxu0 0
  %963 = vmatpush.bf16.msra.mxu0 0
  %964 = vmatpush.bf16.msra.mxu0 %v835
  %965 = vmatpush.bf16.msra.mxu0 %v647
  %966 = vmatpush.bf16.msra.mxu0 %v618
  %967 = vmatpush.bf16.msra.mxu0 %v589
  %968 = vmatpush.bf16.msra.mxu0 %v560
  %969 = vmatmul.bf16.gmra.mxu0 %v819
  %v970 = vpop.f32.mrf.mxu0
  %v971 = vadd.f32 %v158, %v970
  %v972 = vpop.f32.mrf.mxu0
  %973 = vdwg.mxu0
  %974 = vmatpush.bf16.msra.mxu0 0
  %975 = vmatpush.bf16.msra.mxu0 0
  %976 = vmatpush.bf16.msra.mxu0 0
  %977 = vmatpush.bf16.msra.mxu0 %v838
  %978 = vmatpush.bf16.msra.mxu0 %v648
  %979 = vmatpush.bf16.msra.mxu0 %v619
  %980 = vmatpush.bf16.msra.mxu0 %v590
  %981 = vmatpush.bf16.msra.mxu0 %v561
  %982 = vmatmul.bf16.gmra.mxu0 %v819
  %v983 = vpop.f32.mrf.mxu0
  %v984 = vadd.f32 %v158, %v983
  %v985 = vpop.f32.mrf.mxu0
  %986 = vdwg.mxu0
  %987 = vmatpush.bf16.msra.mxu0 0
  %988 = vmatpush.bf16.msra.mxu0 0
  %989 = vmatpush.bf16.msra.mxu0 0
  %990 = vmatpush.bf16.msra.mxu0 %v841
  %991 = vmatpush.bf16.msra.mxu0 %v649
  %992 = vmatpush.bf16.msra.mxu0 %v620
  %993 = vmatpush.bf16.msra.mxu0 %v591
  %994 = vmatpush.bf16.msra.mxu0 %v562
  %995 = vmatmul.bf16.gmra.mxu0 %v819
  %v996 = vpop.f32.mrf.mxu0
  %v997 = vadd.f32 %v158, %v996
  %v998 = vpop.f32.mrf.mxu0
  %999 = vdwg.mxu0
  %1000 = vmatpush.bf16.msra.mxu0 0
  %1001 = vmatpush.bf16.msra.mxu0 0
  %1002 = vmatpush.bf16.msra.mxu0 0
  %1003 = vmatpush.bf16.msra.mxu0 %v844
  %1004 = vmatpush.bf16.msra.mxu0 %v650
  %1005 = vmatpush.bf16.msra.mxu0 %v621
  %1006 = vmatpush.bf16.msra.mxu0 %v592
  %1007 = vmatpush.bf16.msra.mxu0 %v563
  %1008 = vmatmul.bf16.gmra.mxu0 %v819
  %v1009 = vpop.f32.mrf.mxu0
  %v1010 = vadd.f32 %v158, %v1009
  %v1011 = vpop.f32.mrf.mxu0
  %1012 = vdwg.mxu0
  %1013 = vmatpush.bf16.msra.mxu0 0
  %1014 = vmatpush.bf16.msra.mxu0 0
  %1015 = vmatpush.bf16.msra.mxu0 0
  %1016 = vmatpush.bf16.msra.mxu0 %v847
  %1017 = vmatpush.bf16.msra.mxu0 %v651
  %1018 = vmatpush.bf16.msra.mxu0 %v622
  %1019 = vmatpush.bf16.msra.mxu0 %v593
  %1020 = vmatpush.bf16.msra.mxu0 %v564
  %1021 = vmatmul.bf16.gmra.mxu0 %v819
  %v1022 = vpop.f32.mrf.mxu0
  %v1023 = vadd.f32 %v158, %v1022
  %v1024 = vpop.f32.mrf.mxu0
  %1025 = vdwg.mxu0
  %1026 = vmatpush.bf16.msra.mxu0 0
  %1027 = vmatpush.bf16.msra.mxu0 0
  %1028 = vmatpush.bf16.msra.mxu0 0
  %1029 = vmatpush.bf16.msra.mxu0 %v850
  %1030 = vmatpush.bf16.msra.mxu0 %v652
  %1031 = vmatpush.bf16.msra.mxu0 %v623
  %1032 = vmatpush.bf16.msra.mxu0 %v594
  %1033 = vmatpush.bf16.msra.mxu0 %v565
  %1034 = vmatmul.bf16.gmra.mxu0 %v819
  %v1035 = vpop.f32.mrf.mxu0
  %v1036 = vadd.f32 %v158, %v1035
  %v1037 = vpop.f32.mrf.mxu0
  %1038 = vdwg.mxu0
  %1039 = vmatpush.bf16.msra.mxu0 0
  %1040 = vmatpush.bf16.msra.mxu0 0
  %1041 = vmatpush.bf16.msra.mxu0 0
  %1042 = vmatpush.bf16.msra.mxu0 %v853
  %1043 = vmatpush.bf16.msra.mxu0 %v653
  %1044 = vmatpush.bf16.msra.mxu0 %v624
  %1045 = vmatpush.bf16.msra.mxu0 %v595
  %1046 = vmatpush.bf16.msra.mxu0 %v566
  %1047 = vmatmul.bf16.gmra.mxu0 %v819
  %v1048 = vpop.f32.mrf.mxu0
  %v1049 = vadd.f32 %v158, %v1048
  %v1050 = vpop.f32.mrf.mxu0
  %1051 = vdwg.mxu0
  %1052 = vmatpush.bf16.msra.mxu0 0
  %1053 = vmatpush.bf16.msra.mxu0 0
  %1054 = vmatpush.bf16.msra.mxu0 0
  %1055 = vmatpush.bf16.msra.mxu0 %v856
  %1056 = vmatpush.bf16.msra.mxu0 %v654
  %1057 = vmatpush.bf16.msra.mxu0 %v625
  %1058 = vmatpush.bf16.msra.mxu0 %v596
  %1059 = vmatpush.bf16.msra.mxu0 %v567
  %1060 = vmatmul.bf16.gmra.mxu0 %v819
  %v1061 = vpop.f32.mrf.mxu0
  %v1062 = vadd.f32 %v158, %v1061
  %v1063 = vpop.f32.mrf.mxu0
  %1064 = vdwg.mxu0
  %1065 = vmatpush.bf16.msra.mxu0 0
  %1066 = vmatpush.bf16.msra.mxu0 0
  %1067 = vmatpush.bf16.msra.mxu0 0
  %1068 = vmatpush.bf16.msra.mxu0 %v859
  %1069 = vmatpush.bf16.msra.mxu0 %v655
  %1070 = vmatpush.bf16.msra.mxu0 %v626
  %1071 = vmatpush.bf16.msra.mxu0 %v597
  %1072 = vmatpush.bf16.msra.mxu0 %v568
  %1073 = vmatmul.bf16.gmra.mxu0 %v819
  %v1074 = vpop.f32.mrf.mxu0
  %v1075 = vadd.f32 %v158, %v1074
  %v1076 = vpop.f32.mrf.mxu0
  %1077 = vdwg.mxu0
  %1078 = vmatpush.bf16.msra.mxu0 0
  %1079 = vmatpush.bf16.msra.mxu0 0
  %1080 = vmatpush.bf16.msra.mxu0 0
  %1081 = vmatpush.bf16.msra.mxu0 %v862
  %1082 = vmatpush.bf16.msra.mxu0 %v656
  %1083 = vmatpush.bf16.msra.mxu0 %v627
  %1084 = vmatpush.bf16.msra.mxu0 %v598
  %1085 = vmatpush.bf16.msra.mxu0 %v569
  %1086 = vmatmul.bf16.gmra.mxu0 %v819
  %v1087 = vpop.f32.mrf.mxu0
  %v1088 = vadd.f32 %v158, %v1087
  %v1089 = vpop.f32.mrf.mxu0
  %1090 = vdwg.mxu0
  %1091 = vmatpush.bf16.msra.mxu0 0
  %1092 = vmatpush.bf16.msra.mxu0 0
  %1093 = vmatpush.bf16.msra.mxu0 0
  %1094 = vmatpush.bf16.msra.mxu0 %v865
  %1095 = vmatpush.bf16.msra.mxu0 %v657
  %1096 = vmatpush.bf16.msra.mxu0 %v628
  %1097 = vmatpush.bf16.msra.mxu0 %v599
  %1098 = vmatpush.bf16.msra.mxu0 %v570
  %1099 = vmatmul.bf16.gmra.mxu0 %v819
  %v1100 = vpop.f32.mrf.mxu0
  %v1101 = vadd.f32 %v158, %v1100
  %v1102 = vpop.f32.mrf.mxu0
  %1103 = vdwg.mxu0
  %1104 = vmatpush.bf16.msra.mxu0 0
  %1105 = vmatpush.bf16.msra.mxu0 0
  %1106 = vmatpush.bf16.msra.mxu0 0
  %1107 = vmatpush.bf16.msra.mxu0 %v868
  %1108 = vmatpush.bf16.msra.mxu0 %v658
  %1109 = vmatpush.bf16.msra.mxu0 %v629
  %1110 = vmatpush.bf16.msra.mxu0 %v600
  %1111 = vmatpush.bf16.msra.mxu0 %v571
  %1112 = vmatmul.bf16.gmra.mxu0 %v819
  %v1113 = vpop.f32.mrf.mxu0
  %v1114 = vadd.f32 %v158, %v1113
  %v1115 = vpop.f32.mrf.mxu0
  %1116 = vdwg.mxu0
  %1117 = vmatpush.bf16.msra.mxu0 0
  %1118 = vmatpush.bf16.msra.mxu0 0
  %1119 = vmatpush.bf16.msra.mxu0 0
  %1120 = vmatpush.bf16.msra.mxu0 %v871
  %1121 = vmatpush.bf16.msra.mxu0 %v659
  %1122 = vmatpush.bf16.msra.mxu0 %v630
  %1123 = vmatpush.bf16.msra.mxu0 %v601
  %1124 = vmatpush.bf16.msra.mxu0 %v572
  %1125 = vmatmul.bf16.gmra.mxu0 %v819
  %v1126 = vpop.f32.mrf.mxu0
  %v1127 = vadd.f32 %v158, %v1126
  %v1128 = vpop.f32.mrf.mxu0
  %1129 = vdwg.mxu0
  %1130 = vmatpush.bf16.msra.mxu0 0
  %1131 = vmatpush.bf16.msra.mxu0 0
  %1132 = vmatpush.bf16.msra.mxu0 0
  %1133 = vmatpush.bf16.msra.mxu0 %v874
  %1134 = vmatpush.bf16.msra.mxu0 %v660
  %1135 = vmatpush.bf16.msra.mxu0 %v631
  %1136 = vmatpush.bf16.msra.mxu0 %v602
  %1137 = vmatpush.bf16.msra.mxu0 %v573
  %1138 = vmatmul.bf16.gmra.mxu0 %v819
  %v1139 = vpop.f32.mrf.mxu0
  %v1140 = vadd.f32 %v158, %v1139
  %v1141 = vpop.f32.mrf.mxu0
  %1142 = vdwg.mxu0
  %1143 = vmatpush.bf16.msra.mxu0 0
  %1144 = vmatpush.bf16.msra.mxu0 0
  %1145 = vmatpush.bf16.msra.mxu0 0
  %1146 = vmatpush.bf16.msra.mxu0 %v877
  %1147 = vmatpush.bf16.msra.mxu0 %v661
  %1148 = vmatpush.bf16.msra.mxu0 %v632
  %1149 = vmatpush.bf16.msra.mxu0 %v603
  %1150 = vmatpush.bf16.msra.mxu0 %v574
  %1151 = vmatmul.bf16.gmra.mxu0 %v819
  %v1152 = vpop.f32.mrf.mxu0
  %v1153 = vadd.f32 %v158, %v1152
  %v1154 = vpop.f32.mrf.mxu0
  %1155 = vdwg.mxu0
  %1156 = vmatpush.bf16.msra.mxu0 0
  %1157 = vmatpush.bf16.msra.mxu0 0
  %1158 = vmatpush.bf16.msra.mxu0 0
  %1159 = vmatpush.bf16.msra.mxu0 %v880
  %1160 = vmatpush.bf16.msra.mxu0 %v662
  %1161 = vmatpush.bf16.msra.mxu0 %v633
  %1162 = vmatpush.bf16.msra.mxu0 %v604
  %1163 = vmatpush.bf16.msra.mxu0 %v575
  %1164 = vmatmul.bf16.gmra.mxu0 %v819
  %v1165 = vpop.f32.mrf.mxu0
  %v1166 = vadd.f32 %v158, %v1165
  %v1167 = vpop.f32.mrf.mxu0
  %1168 = vdwg.mxu0
  %1169 = vmatpush.bf16.msra.mxu0 0
  %1170 = vmatpush.bf16.msra.mxu0 0
  %1171 = vmatpush.bf16.msra.mxu0 0
  %1172 = vmatpush.bf16.msra.mxu0 %v883
  %1173 = vmatpush.bf16.msra.mxu0 %v663
  %1174 = vmatpush.bf16.msra.mxu0 %v634
  %1175 = vmatpush.bf16.msra.mxu0 %v605
  %1176 = vmatpush.bf16.msra.mxu0 %v576
  %1177 = vmatmul.bf16.gmra.mxu0 %v819
  %v1178 = vpop.f32.mrf.mxu0
  %v1179 = vadd.f32 %v158, %v1178
  %v1180 = vpop.f32.mrf.mxu0
  %1181 = vdwg.mxu0
  %1182 = vmatpush.bf16.msra.mxu0 0
  %1183 = vmatpush.bf16.msra.mxu0 0
  %1184 = vmatpush.bf16.msra.mxu0 0
  %1185 = vmatpush.bf16.msra.mxu0 %v886
  %1186 = vmatpush.bf16.msra.mxu0 %v664
  %1187 = vmatpush.bf16.msra.mxu0 %v635
  %1188 = vmatpush.bf16.msra.mxu0 %v606
  %1189 = vmatpush.bf16.msra.mxu0 %v577
  %1190 = vmatmul.bf16.gmra.mxu0 %v819
  %v1191 = vpop.f32.mrf.mxu0
  %v1192 = vadd.f32 %v158, %v1191
  %v1193 = vpop.f32.mrf.mxu0
  %1194 = vdwg.mxu0
  %1195 = vmatpush.bf16.msra.mxu0 0
  %1196 = vmatpush.bf16.msra.mxu0 0
  %1197 = vmatpush.bf16.msra.mxu0 0
  %1198 = vmatpush.bf16.msra.mxu0 %v889
  %1199 = vmatpush.bf16.msra.mxu0 %v665
  %1200 = vmatpush.bf16.msra.mxu0 %v636
  %1201 = vmatpush.bf16.msra.mxu0 %v607
  %1202 = vmatpush.bf16.msra.mxu0 %v578
  %1203 = vmatmul.bf16.gmra.mxu0 %v819
  %v1204 = vpop.f32.mrf.mxu0
  %v1205 = vadd.f32 %v158, %v1204
  %v1206 = vpop.f32.mrf.mxu0
  %1207 = vdwg.mxu0
  %1208 = vmatpush.bf16.msra.mxu0 0
  %1209 = vmatpush.bf16.msra.mxu0 0
  %1210 = vmatpush.bf16.msra.mxu0 0
  %1211 = vmatpush.bf16.msra.mxu0 %v892
  %1212 = vmatpush.bf16.msra.mxu0 %v666
  %1213 = vmatpush.bf16.msra.mxu0 %v637
  %1214 = vmatpush.bf16.msra.mxu0 %v608
  %1215 = vmatpush.bf16.msra.mxu0 %v579
  %1216 = vmatmul.bf16.gmra.mxu0 %v819
  %v1217 = vpop.f32.mrf.mxu0
  %v1218 = vadd.f32 %v158, %v1217
  %v1219 = vpop.f32.mrf.mxu0
  %1220 = vdwg.mxu0
  %1221 = vmatpush.bf16.msra.mxu0 0
  %1222 = vmatpush.bf16.msra.mxu0 0
  %1223 = vmatpush.bf16.msra.mxu0 0
  %1224 = vmatpush.bf16.msra.mxu0 %v895
  %1225 = vmatpush.bf16.msra.mxu0 %v667
  %1226 = vmatpush.bf16.msra.mxu0 %v638
  %1227 = vmatpush.bf16.msra.mxu0 %v609
  %1228 = vmatpush.bf16.msra.mxu0 %v580
  %1229 = vmatmul.bf16.gmra.mxu0 %v819
  %v1230 = vpop.f32.mrf.mxu0
  %v1231 = vadd.f32 %v158, %v1230
  %v1232 = vpop.f32.mrf.mxu0
  %1233 = vdwg.mxu0
  %1234 = vmatpush.bf16.msra.mxu0 0
  %1235 = vmatpush.bf16.msra.mxu0 0
  %1236 = vmatpush.bf16.msra.mxu0 0
  %1237 = vmatpush.bf16.msra.mxu0 %v898
  %1238 = vmatpush.bf16.msra.mxu0 %v668
  %1239 = vmatpush.bf16.msra.mxu0 %v639
  %1240 = vmatpush.bf16.msra.mxu0 %v610
  %1241 = vmatpush.bf16.msra.mxu0 %v581
  %1242 = vmatmul.bf16.gmra.mxu0 %v819
  %v1243 = vpop.f32.mrf.mxu0
  %v1244 = vadd.f32 %v158, %v1243
  %v1245 = vpop.f32.mrf.mxu0
  %1246 = vdwg.mxu0
  %1247 = vmatpush.bf16.msra.mxu0 0
  %1248 = vmatpush.bf16.msra.mxu0 0
  %1249 = vmatpush.bf16.msra.mxu0 0
  %1250 = vmatpush.bf16.msra.mxu0 %v901
  %1251 = vmatpush.bf16.msra.mxu0 %v669
  %1252 = vmatpush.bf16.msra.mxu0 %v640
  %1253 = vmatpush.bf16.msra.mxu0 %v611
  %1254 = vmatpush.bf16.msra.mxu0 %v582
  %1255 = vmatmul.bf16.gmra.mxu0 %v819
  %v1256 = vpop.f32.mrf.mxu0
  %v1257 = vadd.f32 %v158, %v1256
  %v1258 = vpop.f32.mrf.mxu0
  %1259 = vdwg.mxu0
  %1260 = vmatpush.bf16.msra.mxu0 0
  %1261 = vmatpush.bf16.msra.mxu0 0
  %1262 = vmatpush.bf16.msra.mxu0 0
  %1263 = vmatpush.bf16.msra.mxu0 %v904
  %1264 = vmatpush.bf16.msra.mxu0 %v670
  %1265 = vmatpush.bf16.msra.mxu0 %v641
  %1266 = vmatpush.bf16.msra.mxu0 %v612
  %1267 = vmatpush.bf16.msra.mxu0 %v583
  %1268 = vmatmul.bf16.gmra.mxu0 %v819
  %v1269 = vpop.f32.mrf.mxu0
  %v1270 = vadd.f32 %v158, %v1269
  %v1271 = vpop.f32.mrf.mxu0
  %1272 = vdwg.mxu0
  %1273 = vmatpush.bf16.msra.mxu0 0
  %1274 = vmatpush.bf16.msra.mxu0 0
  %1275 = vmatpush.bf16.msra.mxu0 0
  %1276 = vmatpush.bf16.msra.mxu0 %v907
  %1277 = vmatpush.bf16.msra.mxu0 %v671
  %1278 = vmatpush.bf16.msra.mxu0 %v642
  %1279 = vmatpush.bf16.msra.mxu0 %v613
  %1280 = vmatpush.bf16.msra.mxu0 %v584
  %1281 = vmatmul.bf16.gmra.mxu0 %v819
  %v1282 = vpop.f32.mrf.mxu0
  %v1283 = vadd.f32 %v158, %v1282
  %v1284 = vpop.f32.mrf.mxu0
  %1285 = vdwg.mxu0
  %v1286 = vld [vmem:[%s3] sm:$0xff]
  %v1287 = vld [vmem:[%s3 + $0x8] sm:$0xff]
  %v1288 = vld [vmem:[%s3 + $0x10] sm:$0xff]
  %v1289 = vld [vmem:[%s3 + $0x18] sm:$0xff]
  %v1290 = vld [vmem:[%s3 + $0x20] sm:$0xff]
  %v1291 = vld [vmem:[%s3 + $0x28] sm:$0xff]
  %v1292 = vld [vmem:[%s3 + $0x30] sm:$0xff]
  %v1293 = vld [vmem:[%s3 + $0x38] sm:$0xff]
  %v1294 = vld [vmem:[%s3 + $0x40] sm:$0xff]
  %v1295 = vld [vmem:[%s3 + $0x48] sm:$0xff]
  %v1296 = vld [vmem:[%s3 + $0x50] sm:$0xff]
  %v1297 = vld [vmem:[%s3 + $0x58] sm:$0xff]
  %v1298 = vld [vmem:[%s3 + $0x60] sm:$0xff]
  %v1299 = vld [vmem:[%s3 + $0x68] sm:$0xff]
  %v1300 = vld [vmem:[%s3 + $0x70] sm:$0xf]
  %v1301 = vunpack.c.l.bf16 %v1286
  %v1302 = vunpack.c.h.bf16 %v1286
  %v1303 = vunpack.c.l.bf16 %v1287
  %v1304 = vunpack.c.h.bf16 %v1287
  %v1305 = vunpack.c.l.bf16 %v1288
  %v1306 = vunpack.c.h.bf16 %v1288
  %v1307 = vunpack.c.l.bf16 %v1289
  %v1308 = vunpack.c.h.bf16 %v1289
  %v1309 = vunpack.c.l.bf16 %v1290
  %v1310 = vunpack.c.h.bf16 %v1290
  %v1311 = vunpack.c.l.bf16 %v1291
  %v1312 = vunpack.c.h.bf16 %v1291
  %v1313 = vunpack.c.l.bf16 %v1292
  %v1314 = vunpack.c.h.bf16 %v1292
  %v1315 = vunpack.c.l.bf16 %v1293
  %v1316 = vunpack.c.h.bf16 %v1293
  %v1317 = vunpack.c.l.bf16 %v1294
  %v1318 = vunpack.c.h.bf16 %v1294
  %v1319 = vunpack.c.l.bf16 %v1295
  %v1320 = vunpack.c.h.bf16 %v1295
  %v1321 = vunpack.c.l.bf16 %v1296
  %v1322 = vunpack.c.h.bf16 %v1296
  %v1323 = vunpack.c.l.bf16 %v1297
  %v1324 = vunpack.c.h.bf16 %v1297
  %v1325 = vunpack.c.l.bf16 %v1298
  %v1326 = vunpack.c.h.bf16 %v1298
  %v1327 = vunpack.c.l.bf16 %v1299
  %v1328 = vunpack.c.h.bf16 %v1299
  %v1329 = vunpack.c.l.bf16 %v1300
  %v1330 = vadd.f32 %v919, %v1301
  %v1331 = vadd.f32 %v932, %v1302
  %v1332 = vadd.f32 %v945, %v1303
  %v1333 = vadd.f32 %v958, %v1304
  %v1334 = vadd.f32 %v971, %v1305
  %v1335 = vadd.f32 %v984, %v1306
  %v1336 = vadd.f32 %v997, %v1307
  %v1337 = vadd.f32 %v1010, %v1308
  %v1338 = vadd.f32 %v1023, %v1309
  %v1339 = vadd.f32 %v1036, %v1310
  %v1340 = vadd.f32 %v1049, %v1311
  %v1341 = vadd.f32 %v1062, %v1312
  %v1342 = vadd.f32 %v1075, %v1313
  %v1343 = vadd.f32 %v1088, %v1314
  %v1344 = vadd.f32 %v1101, %v1315
  %v1345 = vadd.f32 %v1114, %v1316
  %v1346 = vadd.f32 %v1127, %v1317
  %v1347 = vadd.f32 %v1140, %v1318
  %v1348 = vadd.f32 %v1153, %v1319
  %v1349 = vadd.f32 %v1166, %v1320
  %v1350 = vadd.f32 %v1179, %v1321
  %v1351 = vadd.f32 %v1192, %v1322
  %v1352 = vadd.f32 %v1205, %v1323
  %v1353 = vadd.f32 %v1218, %v1324
  %v1354 = vadd.f32 %v1231, %v1325
  %v1355 = vadd.f32 %v1244, %v1326
  %v1356 = vadd.f32 %v1257, %v1327
  %v1357 = vadd.f32 %v1270, %v1328
  %v1358 = vadd.f32 %v1283, %v1329
  %v1359 = vpack.c.bf16 %v1331, %v1330
  %v1360 = vpack.c.bf16 %v1333, %v1332
  %v1361 = vpack.c.bf16 %v1335, %v1334
  %v1362 = vpack.c.bf16 %v1337, %v1336
  %v1363 = vpack.c.bf16 %v1339, %v1338
  %v1364 = vpack.c.bf16 %v1341, %v1340
  %v1365 = vpack.c.bf16 %v1343, %v1342
  %v1366 = vpack.c.bf16 %v1345, %v1344
  %v1367 = vpack.c.bf16 %v1347, %v1346
  %v1368 = vpack.c.bf16 %v1349, %v1348
  %v1369 = vpack.c.bf16 %v1351, %v1350
  %v1370 = vpack.c.bf16 %v1353, %v1352
  %v1371 = vpack.c.bf16 %v1355, %v1354
  %v1372 = vpack.c.bf16 %v1357, %v1356
  %v1373 = vpack.c.bf16 %v1358, %v1358
  %1374 = vst [vmem:[%s4] sm:$0xff] %v1359
  %1375 = vst [vmem:[%s4 + $0x8] sm:$0xff] %v1360
  %1376 = vst [vmem:[%s4 + $0x10] sm:$0xff] %v1361
  %1377 = vst [vmem:[%s4 + $0x18] sm:$0xff] %v1362
  %1378 = vst [vmem:[%s4 + $0x20] sm:$0xff] %v1363
  %1379 = vst [vmem:[%s4 + $0x28] sm:$0xff] %v1364
  %1380 = vst [vmem:[%s4 + $0x30] sm:$0xff] %v1365
  %1381 = vst [vmem:[%s4 + $0x38] sm:$0xff] %v1366
  %1382 = vst [vmem:[%s4 + $0x40] sm:$0xff] %v1367
  %1383 = vst [vmem:[%s4 + $0x48] sm:$0xff] %v1368
  %1384 = vst [vmem:[%s4 + $0x50] sm:$0xff] %v1369
  %1385 = vst [vmem:[%s4 + $0x58] sm:$0xff] %v1370
  %1386 = vst [vmem:[%s4 + $0x60] sm:$0xff] %v1371
  %1387 = vst [vmem:[%s4 + $0x68] sm:$0xff] %v1372
  %vm1388 = vcmask 453632
  %1389 = vst.msk [vmem:[%s4 + $0x70] sm:$0xf] %vm1388, %v1373
  // Predicated region
  $region18: #{ft_loss_forward.7} parent=0 // pred_check
    _
  $region19: #{ft_loss_forward.7} parent=0 // pred_check_branch
    %1391 = sbr.rel (0) target = $region21
  $region20: #{ft_loss_forward.7} parent=0 // pred_region
    _
  $region21: #{ft_loss_forward.7} parent=0 // pred_fallthru
    _
  // Predicated region
  $region22: #{ft_loss_forward.7} parent=0 // pred_check
    _
  $region23: #{ft_loss_forward.7} parent=0 // pred_check_branch
    %1393 = sbr.rel (0) target = $region25
  $region24: #{ft_loss_forward.7} parent=0 // pred_region
    _
  $region25: #{ft_loss_forward.7} parent=0 // pred_fallthru
    _

// kernel: ft_loss_forward.8
$region0: #{ft_loss_forward.8}
  #allocation0 [shape = 'u32[]', space=smem, size = 0x4, offset = 0x4, fixed_abs, tag = 'smem constant byte address 0x4 - core index']
  #allocation1 [shape = 'u32[72,128]{1,0:T(1,128)}', space=vmem, size = 0x9000, scoped, tag = 'internal scratch']
  %s0 = inlined_call_operand.vmem [shape: bf16[32,72], index: 0, kind: input, shape index: {}]
  %s1 = inlined_call_operand.vmem [shape: f32[32,1], index: 1, kind: input, shape index: {}]
  %s2 = inlined_call_operand.vmem [shape: bf16[72,924], index: 2, kind: input, shape index: {}]
  %s3 = inlined_call_operand.vmem [shape: bf16[16,924], index: 3, kind: output, shape index: {0}]
  %s4 = inlined_call_operand.vmem [shape: bf16[16,924], index: 4, kind: output, shape index: {1}]
  %5 = xla_tuple %s3, %s4
  %s6 = sld [smem:[#allocation0]]
  $region30: #{ft_loss_forward.8} parent=0
    _
  %s8 = ssub.s32 1, %s6
  %s9 = scalar_select 0, %s8, %s6
  // Predicated region
  $region2: #{ft_loss_forward.8} parent=0 // pred_check
    _
  $region3: #{ft_loss_forward.8} parent=0 // pred_check_branch
    %11 = sbr.rel (0) target = $region5
  $region4: #{ft_loss_forward.8} parent=0 // pred_region
    _
  $region5: #{ft_loss_forward.8} parent=0 // pred_fallthru
    _
  // Predicated region
  $region6: #{ft_loss_forward.8} parent=0 // pred_check
    _
  $region7: #{ft_loss_forward.8} parent=0 // pred_check_branch
    %13 = sbr.rel (0) target = $region9
  $region8: #{ft_loss_forward.8} parent=0 // pred_region
    _
  $region9: #{ft_loss_forward.8} parent=0 // pred_fallthru
    _
  // Predicated region
  $region10: #{ft_loss_forward.8} parent=0 // pred_check
    _
  $region11: #{ft_loss_forward.8} parent=0 // pred_check_branch
    %15 = sbr.rel (0) target = $region13
  $region12: #{ft_loss_forward.8} parent=0 // pred_region
    _
  $region13: #{ft_loss_forward.8} parent=0 // pred_fallthru
    _
  %v17 = vld [vmem:[%s0] sm:$0xf]
  %v18 = vld [vmem:[%s0 + $0x4] sm:$0xf]
  %v19 = vld [vmem:[%s0 + $0x8] sm:$0xf]
  %v20 = vld [vmem:[%s0 + $0xc] sm:$0xf]
  %v21 = vld [vmem:[%s2] sm:$0xff]
  %v22 = vld [vmem:[%s2 + $0x8] sm:$0xff]
  %v23 = vld [vmem:[%s2 + $0x10] sm:$0xff]
  %v24 = vld [vmem:[%s2 + $0x18] sm:$0xff]
  %v25 = vld [vmem:[%s2 + $0x20] sm:$0xff]
  %v26 = vld [vmem:[%s2 + $0x28] sm:$0xff]
  %v27 = vld [vmem:[%s2 + $0x30] sm:$0xff]
  %v28 = vld [vmem:[%s2 + $0x38] sm:$0xff]
  %v29 = vld [vmem:[%s2 + $0x40] sm:$0xff]
  %v30 = vld [vmem:[%s2 + $0x48] sm:$0xff]
  %v31 = vld [vmem:[%s2 + $0x50] sm:$0xff]
  %v32 = vld [vmem:[%s2 + $0x58] sm:$0xff]
  %v33 = vld [vmem:[%s2 + $0x60] sm:$0xff]
  %v34 = vld [vmem:[%s2 + $0x68] sm:$0xff]
  %v35 = vld [vmem:[%s2 + $0x70] sm:$0xff]
  %v36 = vld [vmem:[%s2 + $0x78] sm:$0xff]
  %v37 = vld [vmem:[%s2 + $0x80] sm:$0xff]
  %v38 = vld [vmem:[%s2 + $0x88] sm:$0xff]
  %v39 = vld [vmem:[%s2 + $0x90] sm:$0xff]
  %v40 = vld [vmem:[%s2 + $0x98] sm:$0xff]
  %v41 = vld [vmem:[%s2 + $0xa0] sm:$0xff]
  %v42 = vld [vmem:[%s2 + $0xa8] sm:$0xff]
  %v43 = vld [vmem:[%s2 + $0xb0] sm:$0xff]
  %v44 = vld [vmem:[%s2 + $0xb8] sm:$0xff]
  %v45 = vld [vmem:[%s2 + $0xc0] sm:$0xff]
  %v46 = vld [vmem:[%s2 + $0xc8] sm:$0xff]
  %v47 = vld [vmem:[%s2 + $0xd0] sm:$0xff]
  %v48 = vld [vmem:[%s2 + $0xd8] sm:$0xff]
  %v49 = vld [vmem:[%s2 + $0xe0] sm:$0xff]
  %v50 = vld [vmem:[%s2 + $0xe8] sm:$0xff]
  %v51 = vld [vmem:[%s2 + $0xf0] sm:$0xff]
  %v52 = vld [vmem:[%s2 + $0xf8] sm:$0xff]
  %v53 = vld [vmem:[%s2 + $0x100] sm:$0xff]
  %v54 = vld [vmem:[%s2 + $0x108] sm:$0xff]
  %v55 = vld [vmem:[%s2 + $0x110] sm:$0xff]
  %v56 = vld [vmem:[%s2 + $0x118] sm:$0xff]
  %v57 = vld [vmem:[%s1] sm:$0xff]
  %v58 = vld [vmem:[%s1 + $0x8] sm:$0xff]
  %v59 = vld [vmem:[%s1 + $0x10] sm:$0xff]
  %v60 = vld [vmem:[%s1 + $0x18] sm:$0xff]
  %62 = vset.pattern.permute.xlu0 0
  %63 = vperm.xlu0 %62, %v57
  %v64 = vpop.permute.xlu0 %63
  %67 = vset.pattern.permute.xlu0 0
  %68 = vperm.xlu0 %67, %v58
  %v69 = vpop.permute.xlu0 %68
  %72 = vset.pattern.permute.xlu0 0
  %73 = vperm.xlu0 %72, %v59
  %v74 = vpop.permute.xlu0 %73
  %77 = vset.pattern.permute.xlu0 0
  %78 = vperm.xlu0 %77, %v60
  %v79 = vpop.permute.xlu0 %78
  %v85 = vunpack.c.l.b16 %v17
  %v86 = vunpack.c.l.b16 %v18
  %v87 = vunpack.c.l.b16 %v19
  %v88 = vunpack.c.l.b16 %v20
  %v89 = vpack.c.b16 %v86, %v85
  %v90 = vpack.c.b16 %v88, %v87
  %v127 = vunpack.c.l.b16 %v21
  %v128 = vunpack.c.h.b16 %v21
  %v129 = vunpack.c.l.b16 %v22
  %v130 = vunpack.c.h.b16 %v22
  %v131 = vunpack.c.l.b16 %v23
  %v132 = vunpack.c.h.b16 %v23
  %v133 = vunpack.c.l.b16 %v24
  %v134 = vunpack.c.h.b16 %v24
  %v135 = vunpack.c.l.b16 %v25
  %v136 = vunpack.c.h.b16 %v25
  %v137 = vunpack.c.l.b16 %v26
  %v138 = vunpack.c.h.b16 %v26
  %v139 = vunpack.c.l.b16 %v27
  %v140 = vunpack.c.h.b16 %v27
  %v141 = vunpack.c.l.b16 %v28
  %v142 = vunpack.c.h.b16 %v28
  %v143 = vunpack.c.l.b16 %v29
  %v144 = vunpack.c.h.b16 %v29
  %v145 = vunpack.c.l.b16 %v30
  %v146 = vunpack.c.h.b16 %v30
  %v147 = vunpack.c.l.b16 %v31
  %v148 = vunpack.c.h.b16 %v31
  %v149 = vunpack.c.l.b16 %v32
  %v150 = vunpack.c.h.b16 %v32
  %v151 = vunpack.c.l.b16 %v33
  %v152 = vunpack.c.h.b16 %v33
  %v153 = vunpack.c.l.b16 %v34
  %v154 = vunpack.c.h.b16 %v34
  %v155 = vunpack.c.l.b16 %v35
  %v156 = vunpack.c.h.b16 %v35
  %v157 = vunpack.c.l.b16 %v36
  %v158 = vunpack.c.h.b16 %v36
  %v159 = vunpack.c.l.b16 %v37
  %v160 = vunpack.c.h.b16 %v37
  %v161 = vunpack.c.l.b16 %v38
  %v162 = vunpack.c.h.b16 %v38
  %v163 = vunpack.c.l.b16 %v39
  %v164 = vunpack.c.h.b16 %v39
  %v165 = vunpack.c.l.b16 %v40
  %v166 = vunpack.c.h.b16 %v40
  %v167 = vunpack.c.l.b16 %v41
  %v168 = vunpack.c.h.b16 %v41
  %v169 = vunpack.c.l.b16 %v42
  %v170 = vunpack.c.h.b16 %v42
  %v171 = vunpack.c.l.b16 %v43
  %v172 = vunpack.c.h.b16 %v43
  %v173 = vunpack.c.l.b16 %v44
  %v174 = vunpack.c.h.b16 %v44
  %v175 = vunpack.c.l.b16 %v45
  %v176 = vunpack.c.h.b16 %v45
  %v177 = vunpack.c.l.b16 %v46
  %v178 = vunpack.c.h.b16 %v46
  %v179 = vunpack.c.l.b16 %v47
  %v180 = vunpack.c.h.b16 %v47
  %v181 = vunpack.c.l.b16 %v48
  %v182 = vunpack.c.h.b16 %v48
  %v183 = vunpack.c.l.b16 %v49
  %v184 = vunpack.c.h.b16 %v49
  %v185 = vunpack.c.l.b16 %v50
  %v186 = vunpack.c.h.b16 %v50
  %v187 = vunpack.c.l.b16 %v51
  %v188 = vunpack.c.h.b16 %v51
  %v189 = vunpack.c.l.b16 %v52
  %v190 = vunpack.c.h.b16 %v52
  %v191 = vunpack.c.l.b16 %v53
  %v192 = vunpack.c.h.b16 %v53
  %v193 = vunpack.c.l.b16 %v54
  %v194 = vunpack.c.h.b16 %v54
  %v195 = vunpack.c.l.b16 %v55
  %v196 = vunpack.c.h.b16 %v55
  %v197 = vunpack.c.l.b16 %v56
  %v198 = vunpack.c.h.b16 %v56
  %v199 = vpack.c.b16 %v135, %v127
  %v200 = vpack.c.b16 %v136, %v128
  %v201 = vpack.c.b16 %v137, %v129
  %v202 = vpack.c.b16 %v138, %v130
  %v203 = vpack.c.b16 %v139, %v131
  %v204 = vpack.c.b16 %v140, %v132
  %v205 = vpack.c.b16 %v141, %v133
  %v206 = vpack.c.b16 %v142, %v134
  %v207 = vpack.c.b16 %v151, %v143
  %v208 = vpack.c.b16 %v152, %v144
  %v209 = vpack.c.b16 %v153, %v145
  %v210 = vpack.c.b16 %v154, %v146
  %v211 = vpack.c.b16 %v155, %v147
  %v212 = vpack.c.b16 %v156, %v148
  %v213 = vpack.c.b16 %v157, %v149
  %v214 = vpack.c.b16 %v158, %v150
  %v215 = vpack.c.b16 %v167, %v159
  %v216 = vpack.c.b16 %v168, %v160
  %v217 = vpack.c.b16 %v169, %v161
  %v218 = vpack.c.b16 %v170, %v162
  %v219 = vpack.c.b16 %v171, %v163
  %v220 = vpack.c.b16 %v172, %v164
  %v221 = vpack.c.b16 %v173, %v165
  %v222 = vpack.c.b16 %v174, %v166
  %v223 = vpack.c.b16 %v183, %v175
  %v224 = vpack.c.b16 %v184, %v176
  %v225 = vpack.c.b16 %v185, %v177
  %v226 = vpack.c.b16 %v186, %v178
  %v227 = vpack.c.b16 %v187, %v179
  %v228 = vpack.c.b16 %v188, %v180
  %v229 = vpack.c.b16 %v189, %v181
  %v230 = vpack.c.b16 %v190, %v182
  %v231 = vpack.c.b16 %v191, %v191
  %v232 = vpack.c.b16 %v192, %v192
  %v233 = vpack.c.b16 %v193, %v193
  %v234 = vpack.c.b16 %v194, %v194
  %v235 = vpack.c.b16 %v195, %v195
  %v236 = vpack.c.b16 %v196, %v196
  %v237 = vpack.c.b16 %v197, %v197
  %v238 = vpack.c.b16 %v198, %v198
  %vm271 = vcmask 588800
  %v273 = vsel %vm271, %v89, 0
  %v276 = vsel %vm271, %v90, 0
  %vm278 = vcmask 1043456
  %v280 = vsel %vm278, %v231, 0
  %v283 = vsel %vm278, %v232, 0
  %v286 = vsel %vm278, %v233, 0
  %v289 = vsel %vm278, %v234, 0
  %v292 = vsel %vm278, %v235, 0
  %v295 = vsel %vm278, %v236, 0
  %v298 = vsel %vm278, %v237, 0
  %v301 = vsel %vm278, %v238, 0
  %303 = vmatpush.bf16.msra.mxu0 0
  %304 = vmatpush.bf16.msra.mxu0 0
  %305 = vmatpush.bf16.msra.mxu0 0
  %306 = vmatpush.bf16.msra.mxu0 %v280
  %307 = vmatpush.bf16.msra.mxu0 %v223
  %308 = vmatpush.bf16.msra.mxu0 %v215
  %309 = vmatpush.bf16.msra.mxu0 %v207
  %310 = vmatpush.bf16.msra.mxu0 %v199
  %311 = vmatmul.bf16.gmra.mxu0 %v273
  %v312 = vpop.f32.mrf.mxu0
  %v313 = vadd.f32 %v64, %v312
  %v314 = vpop.f32.mrf.mxu0
  %v315 = vadd.f32 %v69, %v314
  %316 = vmatmul.bf16.gmra.mxu0 %v276
  %v317 = vpop.f32.mrf.mxu0
  %v318 = vadd.f32 %v74, %v317
  %v319 = vpop.f32.mrf.mxu0
  %v320 = vadd.f32 %v79, %v319
  %321 = vdwg.mxu0
  %322 = vmatpush.bf16.msra.mxu0 0
  %323 = vmatpush.bf16.msra.mxu0 0
  %324 = vmatpush.bf16.msra.mxu0 0
  %325 = vmatpush.bf16.msra.mxu0 %v283
  %326 = vmatpush.bf16.msra.mxu0 %v224
  %327 = vmatpush.bf16.msra.mxu0 %v216
  %328 = vmatpush.bf16.msra.mxu0 %v208
  %329 = vmatpush.bf16.msra.mxu0 %v200
  %330 = vmatmul.bf16.gmra.mxu0 %v273
  %v331 = vpop.f32.mrf.mxu0
  %v332 = vadd.f32 %v64, %v331
  %v333 = vpop.f32.mrf.mxu0
  %v334 = vadd.f32 %v69, %v333
  %335 = vmatmul.bf16.gmra.mxu0 %v276
  %v336 = vpop.f32.mrf.mxu0
  %v337 = vadd.f32 %v74, %v336
  %v338 = vpop.f32.mrf.mxu0
  %v339 = vadd.f32 %v79, %v338
  %340 = vdwg.mxu0
  %341 = vmatpush.bf16.msra.mxu0 0
  %342 = vmatpush.bf16.msra.mxu0 0
  %343 = vmatpush.bf16.msra.mxu0 0
  %344 = vmatpush.bf16.msra.mxu0 %v286
  %345 = vmatpush.bf16.msra.mxu0 %v225
  %346 = vmatpush.bf16.msra.mxu0 %v217
  %347 = vmatpush.bf16.msra.mxu0 %v209
  %348 = vmatpush.bf16.msra.mxu0 %v201
  %349 = vmatmul.bf16.gmra.mxu0 %v273
  %v350 = vpop.f32.mrf.mxu0
  %v351 = vadd.f32 %v64, %v350
  %v352 = vpop.f32.mrf.mxu0
  %v353 = vadd.f32 %v69, %v352
  %354 = vmatmul.bf16.gmra.mxu0 %v276
  %v355 = vpop.f32.mrf.mxu0
  %v356 = vadd.f32 %v74, %v355
  %v357 = vpop.f32.mrf.mxu0
  %v358 = vadd.f32 %v79, %v357
  %359 = vdwg.mxu0
  %360 = vmatpush.bf16.msra.mxu0 0
  %361 = vmatpush.bf16.msra.mxu0 0
  %362 = vmatpush.bf16.msra.mxu0 0
  %363 = vmatpush.bf16.msra.mxu0 %v289
  %364 = vmatpush.bf16.msra.mxu0 %v226
  %365 = vmatpush.bf16.msra.mxu0 %v218
  %366 = vmatpush.bf16.msra.mxu0 %v210
  %367 = vmatpush.bf16.msra.mxu0 %v202
  %368 = vmatmul.bf16.gmra.mxu0 %v273
  %v369 = vpop.f32.mrf.mxu0
  %v370 = vadd.f32 %v64, %v369
  %v371 = vpop.f32.mrf.mxu0
  %v372 = vadd.f32 %v69, %v371
  %373 = vmatmul.bf16.gmra.mxu0 %v276
  %v374 = vpop.f32.mrf.mxu0
  %v375 = vadd.f32 %v74, %v374
  %v376 = vpop.f32.mrf.mxu0
  %v377 = vadd.f32 %v79, %v376
  %378 = vdwg.mxu0
  %379 = vmatpush.bf16.msra.mxu0 0
  %380 = vmatpush.bf16.msra.mxu0 0
  %381 = vmatpush.bf16.msra.mxu0 0
  %382 = vmatpush.bf16.msra.mxu0 %v292
  %383 = vmatpush.bf16.msra.mxu0 %v227
  %384 = vmatpush.bf16.msra.mxu0 %v219
  %385 = vmatpush.bf16.msra.mxu0 %v211
  %386 = vmatpush.bf16.msra.mxu0 %v203
  %387 = vmatmul.bf16.gmra.mxu0 %v273
  %v388 = vpop.f32.mrf.mxu0
  %v389 = vadd.f32 %v64, %v388
  %v390 = vpop.f32.mrf.mxu0
  %v391 = vadd.f32 %v69, %v390
  %392 = vmatmul.bf16.gmra.mxu0 %v276
  %v393 = vpop.f32.mrf.mxu0
  %v394 = vadd.f32 %v74, %v393
  %v395 = vpop.f32.mrf.mxu0
  %v396 = vadd.f32 %v79, %v395
  %397 = vdwg.mxu0
  %398 = vmatpush.bf16.msra.mxu0 0
  %399 = vmatpush.bf16.msra.mxu0 0
  %400 = vmatpush.bf16.msra.mxu0 0
  %401 = vmatpush.bf16.msra.mxu0 %v295
  %402 = vmatpush.bf16.msra.mxu0 %v228
  %403 = vmatpush.bf16.msra.mxu0 %v220
  %404 = vmatpush.bf16.msra.mxu0 %v212
  %405 = vmatpush.bf16.msra.mxu0 %v204
  %406 = vmatmul.bf16.gmra.mxu0 %v273
  %v407 = vpop.f32.mrf.mxu0
  %v408 = vadd.f32 %v64, %v407
  %v409 = vpop.f32.mrf.mxu0
  %v410 = vadd.f32 %v69, %v409
  %411 = vmatmul.bf16.gmra.mxu0 %v276
  %v412 = vpop.f32.mrf.mxu0
  %v413 = vadd.f32 %v74, %v412
  %v414 = vpop.f32.mrf.mxu0
  %v415 = vadd.f32 %v79, %v414
  %416 = vdwg.mxu0
  %417 = vmatpush.bf16.msra.mxu0 0
  %418 = vmatpush.bf16.msra.mxu0 0
  %419 = vmatpush.bf16.msra.mxu0 0
  %420 = vmatpush.bf16.msra.mxu0 %v298
  %421 = vmatpush.bf16.msra.mxu0 %v229
  %422 = vmatpush.bf16.msra.mxu0 %v221
  %423 = vmatpush.bf16.msra.mxu0 %v213
  %424 = vmatpush.bf16.msra.mxu0 %v205
  %425 = vmatmul.bf16.gmra.mxu0 %v273
  %v426 = vpop.f32.mrf.mxu0
  %v427 = vadd.f32 %v64, %v426
  %v428 = vpop.f32.mrf.mxu0
  %v429 = vadd.f32 %v69, %v428
  %430 = vmatmul.bf16.gmra.mxu0 %v276
  %v431 = vpop.f32.mrf.mxu0
  %v432 = vadd.f32 %v74, %v431
  %v433 = vpop.f32.mrf.mxu0
  %v434 = vadd.f32 %v79, %v433
  %435 = vdwg.mxu0
  %436 = vmatpush.bf16.msra.mxu0 0
  %437 = vmatpush.bf16.msra.mxu0 0
  %438 = vmatpush.bf16.msra.mxu0 0
  %439 = vmatpush.bf16.msra.mxu0 %v301
  %440 = vmatpush.bf16.msra.mxu0 %v230
  %441 = vmatpush.bf16.msra.mxu0 %v222
  %442 = vmatpush.bf16.msra.mxu0 %v214
  %443 = vmatpush.bf16.msra.mxu0 %v206
  %444 = vmatmul.bf16.gmra.mxu0 %v273
  %v445 = vpop.f32.mrf.mxu0
  %v446 = vadd.f32 %v64, %v445
  %v447 = vpop.f32.mrf.mxu0
  %v448 = vadd.f32 %v69, %v447
  %449 = vmatmul.bf16.gmra.mxu0 %v276
  %v450 = vpop.f32.mrf.mxu0
  %v451 = vadd.f32 %v74, %v450
  %v452 = vpop.f32.mrf.mxu0
  %v453 = vadd.f32 %v79, %v452
  %454 = vdwg.mxu0
  %v455 = vpack.c.bf16 %v332, %v313
  %v456 = vpack.c.bf16 %v370, %v351
  %v457 = vpack.c.bf16 %v408, %v389
  %v458 = vpack.c.bf16 %v446, %v427
  %v459 = vpack.c.bf16 %v334, %v315
  %v460 = vpack.c.bf16 %v372, %v353
  %v461 = vpack.c.bf16 %v410, %v391
  %v462 = vpack.c.bf16 %v448, %v429
  %v463 = vunpack.c.l.bf16 %v455
  %v464 = vunpack.c.h.bf16 %v455
  %v465 = vunpack.c.l.bf16 %v456
  %v466 = vunpack.c.h.bf16 %v456
  %v467 = vunpack.c.l.bf16 %v457
  %v468 = vunpack.c.h.bf16 %v457
  %v469 = vunpack.c.l.bf16 %v458
  %v470 = vunpack.c.h.bf16 %v458
  %v471 = vunpack.c.l.bf16 %v459
  %v472 = vunpack.c.h.bf16 %v459
  %v473 = vunpack.c.l.bf16 %v460
  %v474 = vunpack.c.h.bf16 %v460
  %v475 = vunpack.c.l.bf16 %v461
  %v476 = vunpack.c.h.bf16 %v461
  %v477 = vunpack.c.l.bf16 %v462
  %v478 = vunpack.c.h.bf16 %v462
  %vm479 = vcmp.gt.f32.partialorder %v463, 0.0
  %vm480 = vcmp.gt.f32.partialorder %v464, 0.0
  %vm481 = vcmp.gt.f32.partialorder %v465, 0.0
  %vm482 = vcmp.gt.f32.partialorder %v466, 0.0
  %vm483 = vcmp.gt.f32.partialorder %v467, 0.0
  %vm484 = vcmp.gt.f32.partialorder %v468, 0.0
  %vm485 = vcmp.gt.f32.partialorder %v469, 0.0
  %vm486 = vcmp.gt.f32.partialorder %v470, 0.0
  %vm487 = vcmp.gt.f32.partialorder %v471, 0.0
  %vm488 = vcmp.gt.f32.partialorder %v472, 0.0
  %vm489 = vcmp.gt.f32.partialorder %v473, 0.0
  %vm490 = vcmp.gt.f32.partialorder %v474, 0.0
  %vm491 = vcmp.gt.f32.partialorder %v475, 0.0
  %vm492 = vcmp.gt.f32.partialorder %v476, 0.0
  %vm493 = vcmp.gt.f32.partialorder %v477, 0.0
  %vm494 = vcmp.gt.f32.partialorder %v478, 0.0
  %v495 = vmin.f32 %v463, 0.0
  %v496 = vmin.f32 %v464, 0.0
  %v497 = vmin.f32 %v465, 0.0
  %v498 = vmin.f32 %v466, 0.0
  %v499 = vmin.f32 %v467, 0.0
  %v500 = vmin.f32 %v468, 0.0
  %v501 = vmin.f32 %v469, 0.0
  %v502 = vmin.f32 %v470, 0.0
  %v503 = vmin.f32 %v471, 0.0
  %v504 = vmin.f32 %v472, 0.0
  %v505 = vmin.f32 %v473, 0.0
  %v506 = vmin.f32 %v474, 0.0
  %v507 = vmin.f32 %v475, 0.0
  %v508 = vmin.f32 %v476, 0.0
  %v509 = vmin.f32 %v477, 0.0
  %v510 = vmin.f32 %v478, 0.0
  %v511 = vpack.c.bf16 %v496, %v495
  %v512 = vpack.c.bf16 %v498, %v497
  %v513 = vpack.c.bf16 %v500, %v499
  %v514 = vpack.c.bf16 %v502, %v501
  %v515 = vpack.c.bf16 %v504, %v503
  %v516 = vpack.c.bf16 %v506, %v505
  %v517 = vpack.c.bf16 %v508, %v507
  %v518 = vpack.c.bf16 %v510, %v509
  %v519 = vunpack.c.l.bf16 %v511
  %v520 = vunpack.c.h.bf16 %v511
  %v521 = vunpack.c.l.bf16 %v512
  %v522 = vunpack.c.h.bf16 %v512
  %v523 = vunpack.c.l.bf16 %v513
  %v524 = vunpack.c.h.bf16 %v513
  %v525 = vunpack.c.l.bf16 %v514
  %v526 = vunpack.c.h.bf16 %v514
  %v527 = vunpack.c.l.bf16 %v515
  %v528 = vunpack.c.h.bf16 %v515
  %v529 = vunpack.c.l.bf16 %v516
  %v530 = vunpack.c.h.bf16 %v516
  %v531 = vunpack.c.l.bf16 %v517
  %v532 = vunpack.c.h.bf16 %v517
  %v533 = vunpack.c.l.bf16 %v518
  %v534 = vunpack.c.h.bf16 %v518
  %v535 = vmul.f32 %v519, 1.442695
  %v536 = vpow.pop %v535
  %v537 = vmul.f32 %v520, 1.442695
  %v538 = vpow.pop %v537
  %v539 = vmul.f32 %v521, 1.442695
  %v540 = vpow.pop %v539
  %v541 = vmul.f32 %v522, 1.442695
  %v542 = vpow.pop %v541
  %v543 = vmul.f32 %v523, 1.442695
  %v544 = vpow.pop %v543
  %v545 = vmul.f32 %v524, 1.442695
  %v546 = vpow.pop %v545
  %v547 = vmul.f32 %v525, 1.442695
  %v548 = vpow.pop %v547
  %v549 = vmul.f32 %v526, 1.442695
  %v550 = vpow.pop %v549
  %v551 = vmul.f32 %v527, 1.442695
  %v552 = vpow.pop %v551
  %v553 = vmul.f32 %v528, 1.442695
  %v554 = vpow.pop %v553
  %v555 = vmul.f32 %v529, 1.442695
  %v556 = vpow.pop %v555
  %v557 = vmul.f32 %v530, 1.442695
  %v558 = vpow.pop %v557
  %v559 = vmul.f32 %v531, 1.442695
  %v560 = vpow.pop %v559
  %v561 = vmul.f32 %v532, 1.442695
  %v562 = vpow.pop %v561
  %v563 = vmul.f32 %v533, 1.442695
  %v564 = vpow.pop %v563
  %v565 = vmul.f32 %v534, 1.442695
  %v566 = vpow.pop %v565
  %v567 = vpack.c.bf16 %v538, %v536
  %v568 = vpack.c.bf16 %v542, %v540
  %v569 = vpack.c.bf16 %v546, %v544
  %v570 = vpack.c.bf16 %v550, %v548
  %v571 = vpack.c.bf16 %v554, %v552
  %v572 = vpack.c.bf16 %v558, %v556
  %v573 = vpack.c.bf16 %v562, %v560
  %v574 = vpack.c.bf16 %v566, %v564
  %v575 = vunpack.c.l.bf16 %v567
  %v576 = vunpack.c.h.bf16 %v567
  %v577 = vunpack.c.l.bf16 %v568
  %v578 = vunpack.c.h.bf16 %v568
  %v579 = vunpack.c.l.bf16 %v569
  %v580 = vunpack.c.h.bf16 %v569
  %v581 = vunpack.c.l.bf16 %v570
  %v582 = vunpack.c.h.bf16 %v570
  %v583 = vunpack.c.l.bf16 %v571
  %v584 = vunpack.c.h.bf16 %v571
  %v585 = vunpack.c.l.bf16 %v572
  %v586 = vunpack.c.h.bf16 %v572
  %v587 = vunpack.c.l.bf16 %v573
  %v588 = vunpack.c.h.bf16 %v573
  %v589 = vunpack.c.l.bf16 %v574
  %v590 = vunpack.c.h.bf16 %v574
  %v591 = vsub.f32 %v575, 1.0
  %v592 = vsub.f32 %v576, 1.0
  %v593 = vsub.f32 %v577, 1.0
  %v594 = vsub.f32 %v578, 1.0
  %v595 = vsub.f32 %v579, 1.0
  %v596 = vsub.f32 %v580, 1.0
  %v597 = vsub.f32 %v581, 1.0
  %v598 = vsub.f32 %v582, 1.0
  %v599 = vsub.f32 %v583, 1.0
  %v600 = vsub.f32 %v584, 1.0
  %v601 = vsub.f32 %v585, 1.0
  %v602 = vsub.f32 %v586, 1.0
  %v603 = vsub.f32 %v587, 1.0
  %v604 = vsub.f32 %v588, 1.0
  %v605 = vsub.f32 %v589, 1.0
  %v606 = vsub.f32 %v590, 1.0
  %v607 = vpack.c.bf16 %v592, %v591
  %v608 = vpack.c.bf16 %v594, %v593
  %v609 = vpack.c.bf16 %v596, %v595
  %v610 = vpack.c.bf16 %v598, %v597
  %v611 = vpack.c.bf16 %v600, %v599
  %v612 = vpack.c.bf16 %v602, %v601
  %v613 = vpack.c.bf16 %v604, %v603
  %v614 = vpack.c.bf16 %v606, %v605
  %vm615 = vmpackc.low %vm480, %vm479
  %vm616 = vmpackc.low %vm482, %vm481
  %vm617 = vmpackc.low %vm484, %vm483
  %vm618 = vmpackc.low %vm486, %vm485
  %vm619 = vmpackc.low %vm488, %vm487
  %vm620 = vmpackc.low %vm490, %vm489
  %vm621 = vmpackc.low %vm492, %vm491
  %vm622 = vmpackc.low %vm494, %vm493
  %v623 = vsel %vm615, %v455, %v607
  %v624 = vsel %vm616, %v456, %v608
  %v625 = vsel %vm617, %v457, %v609
  %v626 = vsel %vm618, %v458, %v610
  %v627 = vsel %vm619, %v459, %v611
  %v628 = vsel %vm620, %v460, %v612
  %v629 = vsel %vm621, %v461, %v613
  %v630 = vsel %vm622, %v462, %v614
  %631 = vst [vmem:[%s3] sm:$0xff] %v623
  %632 = vst [vmem:[%s3 + $0x8] sm:$0xff] %v624
  %633 = vst [vmem:[%s3 + $0x10] sm:$0xff] %v625
  %vm634 = vcmask 228356
  %vm635 = vmor %vm634, %vm278
  %636 = vst.msk [vmem:[%s3 + $0x18] sm:$0xff] %vm635, %v626
  %637 = vst [vmem:[%s3 + $0x20] sm:$0xff] %v627
  %638 = vst [vmem:[%s3 + $0x28] sm:$0xff] %v628
  %639 = vst [vmem:[%s3 + $0x30] sm:$0xff] %v629
  %640 = vst.msk [vmem:[%s3 + $0x38] sm:$0xff] %vm635, %v630
  %v641 = vpack.c.bf16 %v337, %v318
  %v642 = vpack.c.bf16 %v375, %v356
  %v643 = vpack.c.bf16 %v413, %v394
  %v644 = vpack.c.bf16 %v451, %v432
  %v645 = vpack.c.bf16 %v339, %v320
  %v646 = vpack.c.bf16 %v377, %v358
  %v647 = vpack.c.bf16 %v415, %v396
  %v648 = vpack.c.bf16 %v453, %v434
  %649 = vst [vmem:[%s4] sm:$0xff] %v641
  %650 = vst [vmem:[%s4 + $0x8] sm:$0xff] %v642
  %651 = vst [vmem:[%s4 + $0x10] sm:$0xff] %v643
  %652 = vst.msk [vmem:[%s4 + $0x18] sm:$0xff] %vm635, %v644
  %653 = vst [vmem:[%s4 + $0x20] sm:$0xff] %v645
  %654 = vst [vmem:[%s4 + $0x28] sm:$0xff] %v646
  %655 = vst [vmem:[%s4 + $0x30] sm:$0xff] %v647
  %656 = vst.msk [vmem:[%s4 + $0x38] sm:$0xff] %vm635, %v648
  // Predicated region
  $region14: #{ft_loss_forward.8} parent=0 // pred_check
    _
  $region15: #{ft_loss_forward.8} parent=0 // pred_check_branch
    %658 = sbr.rel (0) target = $region17
  $region16: #{ft_loss_forward.8} parent=0 // pred_region
    _
  $region17: #{ft_loss_forward.8} parent=0 // pred_fallthru
    _
  // Predicated region
  $region18: #{ft_loss_forward.8} parent=0 // pred_check
    _
  $region19: #{ft_loss_forward.8} parent=0 // pred_check_branch
    %660 = sbr.rel (0) target = $region21
  $region20: #{ft_loss_forward.8} parent=0 // pred_region
    _
  $region21: #{ft_loss_forward.8} parent=0 // pred_fallthru
    _
  // Predicated region
  $region22: #{ft_loss_forward.8} parent=0 // pred_check
    _
  $region23: #{ft_loss_forward.8} parent=0 // pred_check_branch
    %662 = sbr.rel (0) target = $region25
  $region24: #{ft_loss_forward.8} parent=0 // pred_region
    _
  $region25: #{ft_loss_forward.8} parent=0 // pred_fallthru
    _
  // Predicated region
  $region26: #{ft_loss_forward.8} parent=0 // pred_check
    _
  $region27: #{ft_loss_forward.8} parent=0 // pred_check_branch
    %664 = sbr.rel (0) target = $region29
  $region28: #{ft_loss_forward.8} parent=0 // pred_region
    _
  $region29: #{ft_loss_forward.8} parent=0 // pred_fallthru
    _

// kernel: ft_loss_forward.9
$region0: #{ft_loss_forward.9}
  #allocation0 [shape = 'u32[]', space=smem, size = 0x4, offset = 0x4, fixed_abs, tag = 'smem constant byte address 0x4 - core index']
  #allocation1 [shape = 'u32[72,128]{1,0:T(1,128)}', space=vmem, size = 0x9000, scoped, tag = 'internal scratch']
  %s0 = inlined_call_operand.vmem [shape: bf16[16,144], index: 0, kind: input, shape index: {}]
  %s1 = inlined_call_operand.vmem [shape: f32[16,1], index: 1, kind: input, shape index: {}]
  %s2 = inlined_call_operand.vmem [shape: bf16[144,924], index: 2, kind: input, shape index: {}]
  %s3 = inlined_call_operand.vmem [shape: bf16[16,924], index: 3, kind: input, shape index: {}]
  %s4 = inlined_call_operand.vmem [shape: bf16[16,924], index: 4, kind: output, shape index: {}]
  %s5 = sld [smem:[#allocation0]]
  $region26: #{ft_loss_forward.9} parent=0
    _
  %s7 = ssub.s32 1, %s5
  %s8 = scalar_select 0, %s7, %s5
  // Predicated region
  $region2: #{ft_loss_forward.9} parent=0 // pred_check
    _
  $region3: #{ft_loss_forward.9} parent=0 // pred_check_branch
    %10 = sbr.rel (0) target = $region5
  $region4: #{ft_loss_forward.9} parent=0 // pred_region
    _
  $region5: #{ft_loss_forward.9} parent=0 // pred_fallthru
    _
  // Predicated region
  $region6: #{ft_loss_forward.9} parent=0 // pred_check
    _
  $region7: #{ft_loss_forward.9} parent=0 // pred_check_branch
    %12 = sbr.rel (0) target = $region9
  $region8: #{ft_loss_forward.9} parent=0 // pred_region
    _
  $region9: #{ft_loss_forward.9} parent=0 // pred_fallthru
    _
  // Predicated region
  $region10: #{ft_loss_forward.9} parent=0 // pred_check
    _
  $region11: #{ft_loss_forward.9} parent=0 // pred_check_branch
    %14 = sbr.rel (0) target = $region13
  $region12: #{ft_loss_forward.9} parent=0 // pred_region
    _
  $region13: #{ft_loss_forward.9} parent=0 // pred_fallthru
    _
  // Predicated region
  $region14: #{ft_loss_forward.9} parent=0 // pred_check
    _
  $region15: #{ft_loss_forward.9} parent=0 // pred_check_branch
    %16 = sbr.rel (0) target = $region17
  $region16: #{ft_loss_forward.9} parent=0 // pred_region
    _
  $region17: #{ft_loss_forward.9} parent=0 // pred_fallthru
    _
  %v18 = vld [vmem:[%s0] sm:$0xff]
  %v19 = vld [vmem:[%s0 + $0x8] sm:$0xff]
  %v20 = vld [vmem:[%s2] sm:$0xff]
  %v21 = vld [vmem:[%s2 + $0x8] sm:$0xff]
  %v22 = vld [vmem:[%s2 + $0x10] sm:$0xff]
  %v23 = vld [vmem:[%s2 + $0x18] sm:$0xff]
  %v24 = vld [vmem:[%s2 + $0x20] sm:$0xff]
  %v25 = vld [vmem:[%s2 + $0x28] sm:$0xff]
  %v26 = vld [vmem:[%s2 + $0x30] sm:$0xff]
  %v27 = vld [vmem:[%s2 + $0x38] sm:$0xff]
  %v28 = vld [vmem:[%s2 + $0x40] sm:$0xff]
  %v29 = vld [vmem:[%s2 + $0x48] sm:$0xff]
  %v30 = vld [vmem:[%s2 + $0x50] sm:$0xff]
  %v31 = vld [vmem:[%s2 + $0x58] sm:$0xff]
  %v32 = vld [vmem:[%s2 + $0x60] sm:$0xff]
  %v33 = vld [vmem:[%s2 + $0x68] sm:$0xff]
  %v34 = vld [vmem:[%s2 + $0x70] sm:$0xff]
  %v35 = vld [vmem:[%s2 + $0x78] sm:$0xff]
  %v36 = vld [vmem:[%s2 + $0x80] sm:$0xff]
  %v37 = vld [vmem:[%s2 + $0x88] sm:$0xff]
  %v38 = vld [vmem:[%s2 + $0x90] sm:$0xff]
  %v39 = vld [vmem:[%s2 + $0x98] sm:$0xff]
  %v40 = vld [vmem:[%s2 + $0xa0] sm:$0xff]
  %v41 = vld [vmem:[%s2 + $0xa8] sm:$0xff]
  %v42 = vld [vmem:[%s2 + $0xb0] sm:$0xff]
  %v43 = vld [vmem:[%s2 + $0xb8] sm:$0xff]
  %v44 = vld [vmem:[%s2 + $0xc0] sm:$0xff]
  %v45 = vld [vmem:[%s2 + $0xc8] sm:$0xff]
  %v46 = vld [vmem:[%s2 + $0xd0] sm:$0xff]
  %v47 = vld [vmem:[%s2 + $0xd8] sm:$0xff]
  %v48 = vld [vmem:[%s2 + $0xe0] sm:$0xff]
  %v49 = vld [vmem:[%s2 + $0xe8] sm:$0xff]
  %v50 = vld [vmem:[%s2 + $0xf0] sm:$0xff]
  %v51 = vld [vmem:[%s2 + $0xf8] sm:$0xff]
  %v52 = vld [vmem:[%s2 + $0x100] sm:$0xff]
  %v53 = vld [vmem:[%s2 + $0x108] sm:$0xff]
  %v54 = vld [vmem:[%s2 + $0x110] sm:$0xff]
  %v55 = vld [vmem:[%s2 + $0x118] sm:$0xff]
  %v56 = vld [vmem:[%s2 + $0x120] sm:$0xff]
  %v57 = vld [vmem:[%s2 + $0x128] sm:$0xff]
  %v58 = vld [vmem:[%s2 + $0x130] sm:$0xff]
  %v59 = vld [vmem:[%s2 + $0x138] sm:$0xff]
  %v60 = vld [vmem:[%s2 + $0x140] sm:$0xff]
  %v61 = vld [vmem:[%s2 + $0x148] sm:$0xff]
  %v62 = vld [vmem:[%s2 + $0x150] sm:$0xff]
  %v63 = vld [vmem:[%s2 + $0x158] sm:$0xff]
  %v64 = vld [vmem:[%s2 + $0x160] sm:$0xff]
  %v65 = vld [vmem:[%s2 + $0x168] sm:$0xff]
  %v66 = vld [vmem:[%s2 + $0x170] sm:$0xff]
  %v67 = vld [vmem:[%s2 + $0x178] sm:$0xff]
  %v68 = vld [vmem:[%s2 + $0x180] sm:$0xff]
  %v69 = vld [vmem:[%s2 + $0x188] sm:$0xff]
  %v70 = vld [vmem:[%s2 + $0x190] sm:$0xff]
  %v71 = vld [vmem:[%s2 + $0x198] sm:$0xff]
  %v72 = vld [vmem:[%s2 + $0x1a0] sm:$0xff]
  %v73 = vld [vmem:[%s2 + $0x1a8] sm:$0xff]
  %v74 = vld [vmem:[%s2 + $0x1b0] sm:$0xff]
  %v75 = vld [vmem:[%s2 + $0x1b8] sm:$0xff]
  %v76 = vld [vmem:[%s2 + $0x1c0] sm:$0xff]
  %v77 = vld [vmem:[%s2 + $0x1c8] sm:$0xff]
  %v78 = vld [vmem:[%s2 + $0x1d0] sm:$0xff]
  %v79 = vld [vmem:[%s2 + $0x1d8] sm:$0xff]
  %v80 = vld [vmem:[%s2 + $0x1e0] sm:$0xff]
  %v81 = vld [vmem:[%s2 + $0x1e8] sm:$0xff]
  %v82 = vld [vmem:[%s2 + $0x1f0] sm:$0xff]
  %v83 = vld [vmem:[%s2 + $0x1f8] sm:$0xff]
  %v84 = vld [vmem:[%s2 + $0x200] sm:$0xff]
  %v85 = vld [vmem:[%s2 + $0x208] sm:$0xff]
  %v86 = vld [vmem:[%s2 + $0x210] sm:$0xff]
  %v87 = vld [vmem:[%s2 + $0x218] sm:$0xff]
  %v88 = vld [vmem:[%s2 + $0x220] sm:$0xff]
  %v89 = vld [vmem:[%s2 + $0x228] sm:$0xff]
  %v90 = vld [vmem:[%s2 + $0x230] sm:$0xff]
  %v91 = vld [vmem:[%s2 + $0x238] sm:$0xff]
  %v92 = vld [vmem:[%s1] sm:$0xff]
  %v93 = vld [vmem:[%s1 + $0x8] sm:$0xff]
  %95 = vset.pattern.permute.xlu0 0
  %96 = vperm.xlu0 %95, %v92
  %v97 = vpop.permute.xlu0 %96
  %100 = vset.pattern.permute.xlu0 0
  %101 = vperm.xlu0 %100, %v93
  %v102 = vpop.permute.xlu0 %101
  %v106 = vunpack.c.l.b16 %v18
  %v107 = vunpack.c.h.b16 %v18
  %v108 = vunpack.c.l.b16 %v19
  %v109 = vunpack.c.h.b16 %v19
  %v110 = vpack.c.b16 %v108, %v106
  %v111 = vpack.c.b16 %v109, %v107
  %v185 = vunpack.c.l.b16 %v20
  %v186 = vunpack.c.h.b16 %v20
  %v187 = vunpack.c.l.b16 %v21
  %v188 = vunpack.c.h.b16 %v21
  %v189 = vunpack.c.l.b16 %v22
  %v190 = vunpack.c.h.b16 %v22
  %v191 = vunpack.c.l.b16 %v23
  %v192 = vunpack.c.h.b16 %v23
  %v193 = vunpack.c.l.b16 %v24
  %v194 = vunpack.c.h.b16 %v24
  %v195 = vunpack.c.l.b16 %v25
  %v196 = vunpack.c.h.b16 %v25
  %v197 = vunpack.c.l.b16 %v26
  %v198 = vunpack.c.h.b16 %v26
  %v199 = vunpack.c.l.b16 %v27
  %v200 = vunpack.c.h.b16 %v27
  %v201 = vunpack.c.l.b16 %v28
  %v202 = vunpack.c.h.b16 %v28
  %v203 = vunpack.c.l.b16 %v29
  %v204 = vunpack.c.h.b16 %v29
  %v205 = vunpack.c.l.b16 %v30
  %v206 = vunpack.c.h.b16 %v30
  %v207 = vunpack.c.l.b16 %v31
  %v208 = vunpack.c.h.b16 %v31
  %v209 = vunpack.c.l.b16 %v32
  %v210 = vunpack.c.h.b16 %v32
  %v211 = vunpack.c.l.b16 %v33
  %v212 = vunpack.c.h.b16 %v33
  %v213 = vunpack.c.l.b16 %v34
  %v214 = vunpack.c.h.b16 %v34
  %v215 = vunpack.c.l.b16 %v35
  %v216 = vunpack.c.h.b16 %v35
  %v217 = vunpack.c.l.b16 %v36
  %v218 = vunpack.c.h.b16 %v36
  %v219 = vunpack.c.l.b16 %v37
  %v220 = vunpack.c.h.b16 %v37
  %v221 = vunpack.c.l.b16 %v38
  %v222 = vunpack.c.h.b16 %v38
  %v223 = vunpack.c.l.b16 %v39
  %v224 = vunpack.c.h.b16 %v39
  %v225 = vunpack.c.l.b16 %v40
  %v226 = vunpack.c.h.b16 %v40
  %v227 = vunpack.c.l.b16 %v41
  %v228 = vunpack.c.h.b16 %v41
  %v229 = vunpack.c.l.b16 %v42
  %v230 = vunpack.c.h.b16 %v42
  %v231 = vunpack.c.l.b16 %v43
  %v232 = vunpack.c.h.b16 %v43
  %v233 = vunpack.c.l.b16 %v44
  %v234 = vunpack.c.h.b16 %v44
  %v235 = vunpack.c.l.b16 %v45
  %v236 = vunpack.c.h.b16 %v45
  %v237 = vunpack.c.l.b16 %v46
  %v238 = vunpack.c.h.b16 %v46
  %v239 = vunpack.c.l.b16 %v47
  %v240 = vunpack.c.h.b16 %v47
  %v241 = vunpack.c.l.b16 %v48
  %v242 = vunpack.c.h.b16 %v48
  %v243 = vunpack.c.l.b16 %v49
  %v244 = vunpack.c.h.b16 %v49
  %v245 = vunpack.c.l.b16 %v50
  %v246 = vunpack.c.h.b16 %v50
  %v247 = vunpack.c.l.b16 %v51
  %v248 = vunpack.c.h.b16 %v51
  %v249 = vunpack.c.l.b16 %v52
  %v250 = vunpack.c.h.b16 %v52
  %v251 = vunpack.c.l.b16 %v53
  %v252 = vunpack.c.h.b16 %v53
  %v253 = vunpack.c.l.b16 %v54
  %v254 = vunpack.c.h.b16 %v54
  %v255 = vunpack.c.l.b16 %v55
  %v256 = vunpack.c.h.b16 %v55
  %v257 = vunpack.c.l.b16 %v56
  %v258 = vunpack.c.h.b16 %v56
  %v259 = vunpack.c.l.b16 %v57
  %v260 = vunpack.c.h.b16 %v57
  %v261 = vunpack.c.l.b16 %v58
  %v262 = vunpack.c.h.b16 %v58
  %v263 = vunpack.c.l.b16 %v59
  %v264 = vunpack.c.h.b16 %v59
  %v265 = vunpack.c.l.b16 %v60
  %v266 = vunpack.c.h.b16 %v60
  %v267 = vunpack.c.l.b16 %v61
  %v268 = vunpack.c.h.b16 %v61
  %v269 = vunpack.c.l.b16 %v62
  %v270 = vunpack.c.h.b16 %v62
  %v271 = vunpack.c.l.b16 %v63
  %v272 = vunpack.c.h.b16 %v63
  %v273 = vunpack.c.l.b16 %v64
  %v274 = vunpack.c.h.b16 %v64
  %v275 = vunpack.c.l.b16 %v65
  %v276 = vunpack.c.h.b16 %v65
  %v277 = vunpack.c.l.b16 %v66
  %v278 = vunpack.c.h.b16 %v66
  %v279 = vunpack.c.l.b16 %v67
  %v280 = vunpack.c.h.b16 %v67
  %v281 = vunpack.c.l.b16 %v68
  %v282 = vunpack.c.h.b16 %v68
  %v283 = vunpack.c.l.b16 %v69
  %v284 = vunpack.c.h.b16 %v69
  %v285 = vunpack.c.l.b16 %v70
  %v286 = vunpack.c.h.b16 %v70
  %v287 = vunpack.c.l.b16 %v71
  %v288 = vunpack.c.h.b16 %v71
  %v289 = vunpack.c.l.b16 %v72
  %v290 = vunpack.c.h.b16 %v72
  %v291 = vunpack.c.l.b16 %v73
  %v292 = vunpack.c.h.b16 %v73
  %v293 = vunpack.c.l.b16 %v74
  %v294 = vunpack.c.h.b16 %v74
  %v295 = vunpack.c.l.b16 %v75
  %v296 = vunpack.c.h.b16 %v75
  %v297 = vunpack.c.l.b16 %v76
  %v298 = vunpack.c.h.b16 %v76
  %v299 = vunpack.c.l.b16 %v77
  %v300 = vunpack.c.h.b16 %v77
  %v301 = vunpack.c.l.b16 %v78
  %v302 = vunpack.c.h.b16 %v78
  %v303 = vunpack.c.l.b16 %v79
  %v304 = vunpack.c.h.b16 %v79
  %v305 = vunpack.c.l.b16 %v80
  %v306 = vunpack.c.h.b16 %v80
  %v307 = vunpack.c.l.b16 %v81
  %v308 = vunpack.c.h.b16 %v81
  %v309 = vunpack.c.l.b16 %v82
  %v310 = vunpack.c.h.b16 %v82
  %v311 = vunpack.c.l.b16 %v83
  %v312 = vunpack.c.h.b16 %v83
  %v313 = vunpack.c.l.b16 %v84
  %v314 = vunpack.c.h.b16 %v84
  %v315 = vunpack.c.l.b16 %v85
  %v316 = vunpack.c.h.b16 %v85
  %v317 = vunpack.c.l.b16 %v86
  %v318 = vunpack.c.h.b16 %v86
  %v319 = vunpack.c.l.b16 %v87
  %v320 = vunpack.c.h.b16 %v87
  %v321 = vunpack.c.l.b16 %v88
  %v322 = vunpack.c.h.b16 %v88
  %v323 = vunpack.c.l.b16 %v89
  %v324 = vunpack.c.h.b16 %v89
  %v325 = vunpack.c.l.b16 %v90
  %v326 = vunpack.c.h.b16 %v90
  %v327 = vunpack.c.l.b16 %v91
  %v328 = vunpack.c.h.b16 %v91
  %v329 = vpack.c.b16 %v193, %v185
  %v330 = vpack.c.b16 %v194, %v186
  %v331 = vpack.c.b16 %v195, %v187
  %v332 = vpack.c.b16 %v196, %v188
  %v333 = vpack.c.b16 %v197, %v189
  %v334 = vpack.c.b16 %v198, %v190
  %v335 = vpack.c.b16 %v199, %v191
  %v336 = vpack.c.b16 %v200, %v192
  %v337 = vpack.c.b16 %v209, %v201
  %v338 = vpack.c.b16 %v210, %v202
  %v339 = vpack.c.b16 %v211, %v203
  %v340 = vpack.c.b16 %v212, %v204
  %v341 = vpack.c.b16 %v213, %v205
  %v342 = vpack.c.b16 %v214, %v206
  %v343 = vpack.c.b16 %v215, %v207
  %v344 = vpack.c.b16 %v216, %v208
  %v345 = vpack.c.b16 %v225, %v217
  %v346 = vpack.c.b16 %v226, %v218
  %v347 = vpack.c.b16 %v227, %v219
  %v348 = vpack.c.b16 %v228, %v220
  %v349 = vpack.c.b16 %v229, %v221
  %v350 = vpack.c.b16 %v230, %v222
  %v351 = vpack.c.b16 %v231, %v223
  %v352 = vpack.c.b16 %v232, %v224
  %v353 = vpack.c.b16 %v241, %v233
  %v354 = vpack.c.b16 %v242, %v234
  %v355 = vpack.c.b16 %v243, %v235
  %v356 = vpack.c.b16 %v244, %v236
  %v357 = vpack.c.b16 %v245, %v237
  %v358 = vpack.c.b16 %v246, %v238
  %v359 = vpack.c.b16 %v247, %v239
  %v360 = vpack.c.b16 %v248, %v240
  %v361 = vpack.c.b16 %v257, %v249
  %v362 = vpack.c.b16 %v258, %v250
  %v363 = vpack.c.b16 %v259, %v251
  %v364 = vpack.c.b16 %v260, %v252
  %v365 = vpack.c.b16 %v261, %v253
  %v366 = vpack.c.b16 %v262, %v254
  %v367 = vpack.c.b16 %v263, %v255
  %v368 = vpack.c.b16 %v264, %v256
  %v369 = vpack.c.b16 %v273, %v265
  %v370 = vpack.c.b16 %v274, %v266
  %v371 = vpack.c.b16 %v275, %v267
  %v372 = vpack.c.b16 %v276, %v268
  %v373 = vpack.c.b16 %v277, %v269
  %v374 = vpack.c.b16 %v278, %v270
  %v375 = vpack.c.b16 %v279, %v271
  %v376 = vpack.c.b16 %v280, %v272
  %v377 = vpack.c.b16 %v289, %v281
  %v378 = vpack.c.b16 %v290, %v282
  %v379 = vpack.c.b16 %v291, %v283
  %v380 = vpack.c.b16 %v292, %v284
  %v381 = vpack.c.b16 %v293, %v285
  %v382 = vpack.c.b16 %v294, %v286
  %v383 = vpack.c.b16 %v295, %v287
  %v384 = vpack.c.b16 %v296, %v288
  %v385 = vpack.c.b16 %v305, %v297
  %v386 = vpack.c.b16 %v306, %v298
  %v387 = vpack.c.b16 %v307, %v299
  %v388 = vpack.c.b16 %v308, %v300
  %v389 = vpack.c.b16 %v309, %v301
  %v390 = vpack.c.b16 %v310, %v302
  %v391 = vpack.c.b16 %v311, %v303
  %v392 = vpack.c.b16 %v312, %v304
  %v393 = vpack.c.b16 %v321, %v313
  %v394 = vpack.c.b16 %v322, %v314
  %v395 = vpack.c.b16 %v323, %v315
  %v396 = vpack.c.b16 %v324, %v316
  %v397 = vpack.c.b16 %v325, %v317
  %v398 = vpack.c.b16 %v326, %v318
  %v399 = vpack.c.b16 %v327, %v319
  %v400 = vpack.c.b16 %v328, %v320
  %vm473 = vcmask 130048
  %v475 = vsel %vm473, %v111, 0
  %477 = vmatpush.bf16.msra.mxu0 %v385
  %478 = vmatpush.bf16.msra.mxu0 %v377
  %479 = vmatpush.bf16.msra.mxu0 %v369
  %480 = vmatpush.bf16.msra.mxu0 %v361
  %481 = vmatpush.bf16.msra.mxu0 %v353
  %482 = vmatpush.bf16.msra.mxu0 %v345
  %483 = vmatpush.bf16.msra.mxu0 %v337
  %484 = vmatpush.bf16.msra.mxu0 %v329
  %485 = vmatmul.bf16.gmra.mxu0 %v110
  %v486 = vpop.f32.mrf.mxu0
  %v487 = vadd.f32 %v97, %v486
  %v488 = vpop.f32.mrf.mxu0
  %v489 = vadd.f32 %v102, %v488
  %490 = vdwg.mxu0
  %491 = vmatpush.bf16.msra.mxu0 0
  %492 = vmatpush.bf16.msra.mxu0 0
  %493 = vmatpush.bf16.msra.mxu0 0
  %494 = vmatpush.bf16.msra.mxu0 0
  %495 = vmatpush.bf16.msra.mxu0 0
  %496 = vmatpush.bf16.msra.mxu0 0
  %497 = vmatpush.bf16.msra.mxu0 0
  %498 = vmatpush.bf16.msra.mxu0 %v393
  %499 = vmatmul.bf16.gmra.mxu0 %v475
  %v500 = vpop.f32.mrf.mxu0
  %v501 = vadd.f32 %v487, %v500
  %v502 = vpop.f32.mrf.mxu0
  %v503 = vadd.f32 %v489, %v502
  %504 = vdwg.mxu0
  %505 = vmatpush.bf16.msra.mxu0 %v386
  %506 = vmatpush.bf16.msra.mxu0 %v378
  %507 = vmatpush.bf16.msra.mxu0 %v370
  %508 = vmatpush.bf16.msra.mxu0 %v362
  %509 = vmatpush.bf16.msra.mxu0 %v354
  %510 = vmatpush.bf16.msra.mxu0 %v346
  %511 = vmatpush.bf16.msra.mxu0 %v338
  %512 = vmatpush.bf16.msra.mxu0 %v330
  %513 = vmatmul.bf16.gmra.mxu0 %v110
  %v514 = vpop.f32.mrf.mxu0
  %v515 = vadd.f32 %v97, %v514
  %v516 = vpop.f32.mrf.mxu0
  %v517 = vadd.f32 %v102, %v516
  %518 = vdwg.mxu0
  %519 = vmatpush.bf16.msra.mxu0 0
  %520 = vmatpush.bf16.msra.mxu0 0
  %521 = vmatpush.bf16.msra.mxu0 0
  %522 = vmatpush.bf16.msra.mxu0 0
  %523 = vmatpush.bf16.msra.mxu0 0
  %524 = vmatpush.bf16.msra.mxu0 0
  %525 = vmatpush.bf16.msra.mxu0 0
  %526 = vmatpush.bf16.msra.mxu0 %v394
  %527 = vmatmul.bf16.gmra.mxu0 %v475
  %v528 = vpop.f32.mrf.mxu0
  %v529 = vadd.f32 %v515, %v528
  %v530 = vpop.f32.mrf.mxu0
  %v531 = vadd.f32 %v517, %v530
  %532 = vdwg.mxu0
  %533 = vmatpush.bf16.msra.mxu0 %v387
  %534 = vmatpush.bf16.msra.mxu0 %v379
  %535 = vmatpush.bf16.msra.mxu0 %v371
  %536 = vmatpush.bf16.msra.mxu0 %v363
  %537 = vmatpush.bf16.msra.mxu0 %v355
  %538 = vmatpush.bf16.msra.mxu0 %v347
  %539 = vmatpush.bf16.msra.mxu0 %v339
  %540 = vmatpush.bf16.msra.mxu0 %v331
  %541 = vmatmul.bf16.gmra.mxu0 %v110
  %v542 = vpop.f32.mrf.mxu0
  %v543 = vadd.f32 %v97, %v542
  %v544 = vpop.f32.mrf.mxu0
  %v545 = vadd.f32 %v102, %v544
  %546 = vdwg.mxu0
  %547 = vmatpush.bf16.msra.mxu0 0
  %548 = vmatpush.bf16.msra.mxu0 0
  %549 = vmatpush.bf16.msra.mxu0 0
  %550 = vmatpush.bf16.msra.mxu0 0
  %551 = vmatpush.bf16.msra.mxu0 0
  %552 = vmatpush.bf16.msra.mxu0 0
  %553 = vmatpush.bf16.msra.mxu0 0
  %554 = vmatpush.bf16.msra.mxu0 %v395
  %555 = vmatmul.bf16.gmra.mxu0 %v475
  %v556 = vpop.f32.mrf.mxu0
  %v557 = vadd.f32 %v543, %v556
  %v558 = vpop.f32.mrf.mxu0
  %v559 = vadd.f32 %v545, %v558
  %560 = vdwg.mxu0
  %561 = vmatpush.bf16.msra.mxu0 %v388
  %562 = vmatpush.bf16.msra.mxu0 %v380
  %563 = vmatpush.bf16.msra.mxu0 %v372
  %564 = vmatpush.bf16.msra.mxu0 %v364
  %565 = vmatpush.bf16.msra.mxu0 %v356
  %566 = vmatpush.bf16.msra.mxu0 %v348
  %567 = vmatpush.bf16.msra.mxu0 %v340
  %568 = vmatpush.bf16.msra.mxu0 %v332
  %569 = vmatmul.bf16.gmra.mxu0 %v110
  %v570 = vpop.f32.mrf.mxu0
  %v571 = vadd.f32 %v97, %v570
  %v572 = vpop.f32.mrf.mxu0
  %v573 = vadd.f32 %v102, %v572
  %574 = vdwg.mxu0
  %575 = vmatpush.bf16.msra.mxu0 0
  %576 = vmatpush.bf16.msra.mxu0 0
  %577 = vmatpush.bf16.msra.mxu0 0
  %578 = vmatpush.bf16.msra.mxu0 0
  %579 = vmatpush.bf16.msra.mxu0 0
  %580 = vmatpush.bf16.msra.mxu0 0
  %581 = vmatpush.bf16.msra.mxu0 0
  %582 = vmatpush.bf16.msra.mxu0 %v396
  %583 = vmatmul.bf16.gmra.mxu0 %v475
  %v584 = vpop.f32.mrf.mxu0
  %v585 = vadd.f32 %v571, %v584
  %v586 = vpop.f32.mrf.mxu0
  %v587 = vadd.f32 %v573, %v586
  %588 = vdwg.mxu0
  %589 = vmatpush.bf16.msra.mxu0 %v389
  %590 = vmatpush.bf16.msra.mxu0 %v381
  %591 = vmatpush.bf16.msra.mxu0 %v373
  %592 = vmatpush.bf16.msra.mxu0 %v365
  %593 = vmatpush.bf16.msra.mxu0 %v357
  %594 = vmatpush.bf16.msra.mxu0 %v349
  %595 = vmatpush.bf16.msra.mxu0 %v341
  %596 = vmatpush.bf16.msra.mxu0 %v333
  %597 = vmatmul.bf16.gmra.mxu0 %v110
  %v598 = vpop.f32.mrf.mxu0
  %v599 = vadd.f32 %v97, %v598
  %v600 = vpop.f32.mrf.mxu0
  %v601 = vadd.f32 %v102, %v600
  %602 = vdwg.mxu0
  %603 = vmatpush.bf16.msra.mxu0 0
  %604 = vmatpush.bf16.msra.mxu0 0
  %605 = vmatpush.bf16.msra.mxu0 0
  %606 = vmatpush.bf16.msra.mxu0 0
  %607 = vmatpush.bf16.msra.mxu0 0
  %608 = vmatpush.bf16.msra.mxu0 0
  %609 = vmatpush.bf16.msra.mxu0 0
  %610 = vmatpush.bf16.msra.mxu0 %v397
  %611 = vmatmul.bf16.gmra.mxu0 %v475
  %v612 = vpop.f32.mrf.mxu0
  %v613 = vadd.f32 %v599, %v612
  %v614 = vpop.f32.mrf.mxu0
  %v615 = vadd.f32 %v601, %v614
  %616 = vdwg.mxu0
  %617 = vmatpush.bf16.msra.mxu0 %v390
  %618 = vmatpush.bf16.msra.mxu0 %v382
  %619 = vmatpush.bf16.msra.mxu0 %v374
  %620 = vmatpush.bf16.msra.mxu0 %v366
  %621 = vmatpush.bf16.msra.mxu0 %v358
  %622 = vmatpush.bf16.msra.mxu0 %v350
  %623 = vmatpush.bf16.msra.mxu0 %v342
  %624 = vmatpush.bf16.msra.mxu0 %v334
  %625 = vmatmul.bf16.gmra.mxu0 %v110
  %v626 = vpop.f32.mrf.mxu0
  %v627 = vadd.f32 %v97, %v626
  %v628 = vpop.f32.mrf.mxu0
  %v629 = vadd.f32 %v102, %v628
  %630 = vdwg.mxu0
  %631 = vmatpush.bf16.msra.mxu0 0
  %632 = vmatpush.bf16.msra.mxu0 0
  %633 = vmatpush.bf16.msra.mxu0 0
  %634 = vmatpush.bf16.msra.mxu0 0
  %635 = vmatpush.bf16.msra.mxu0 0
  %636 = vmatpush.bf16.msra.mxu0 0
  %637 = vmatpush.bf16.msra.mxu0 0
  %638 = vmatpush.bf16.msra.mxu0 %v398
  %639 = vmatmul.bf16.gmra.mxu0 %v475
  %v640 = vpop.f32.mrf.mxu0
  %v641 = vadd.f32 %v627, %v640
  %v642 = vpop.f32.mrf.mxu0
  %v643 = vadd.f32 %v629, %v642
  %644 = vdwg.mxu0
  %645 = vmatpush.bf16.msra.mxu0 %v391
  %646 = vmatpush.bf16.msra.mxu0 %v383
  %647 = vmatpush.bf16.msra.mxu0 %v375
  %648 = vmatpush.bf16.msra.mxu0 %v367
  %649 = vmatpush.bf16.msra.mxu0 %v359
  %650 = vmatpush.bf16.msra.mxu0 %v351
  %651 = vmatpush.bf16.msra.mxu0 %v343
  %652 = vmatpush.bf16.msra.mxu0 %v335
  %653 = vmatmul.bf16.gmra.mxu0 %v110
  %v654 = vpop.f32.mrf.mxu0
  %v655 = vadd.f32 %v97, %v654
  %v656 = vpop.f32.mrf.mxu0
  %v657 = vadd.f32 %v102, %v656
  %658 = vdwg.mxu0
  %659 = vmatpush.bf16.msra.mxu0 0
  %660 = vmatpush.bf16.msra.mxu0 0
  %661 = vmatpush.bf16.msra.mxu0 0
  %662 = vmatpush.bf16.msra.mxu0 0
  %663 = vmatpush.bf16.msra.mxu0 0
  %664 = vmatpush.bf16.msra.mxu0 0
  %665 = vmatpush.bf16.msra.mxu0 0
  %666 = vmatpush.bf16.msra.mxu0 %v399
  %667 = vmatmul.bf16.gmra.mxu0 %v475
  %v668 = vpop.f32.mrf.mxu0
  %v669 = vadd.f32 %v655, %v668
  %v670 = vpop.f32.mrf.mxu0
  %v671 = vadd.f32 %v657, %v670
  %672 = vdwg.mxu0
  %673 = vmatpush.bf16.msra.mxu0 %v392
  %674 = vmatpush.bf16.msra.mxu0 %v384
  %675 = vmatpush.bf16.msra.mxu0 %v376
  %676 = vmatpush.bf16.msra.mxu0 %v368
  %677 = vmatpush.bf16.msra.mxu0 %v360
  %678 = vmatpush.bf16.msra.mxu0 %v352
  %679 = vmatpush.bf16.msra.mxu0 %v344
  %680 = vmatpush.bf16.msra.mxu0 %v336
  %681 = vmatmul.bf16.gmra.mxu0 %v110
  %v682 = vpop.f32.mrf.mxu0
  %v683 = vadd.f32 %v97, %v682
  %v684 = vpop.f32.mrf.mxu0
  %v685 = vadd.f32 %v102, %v684
  %686 = vdwg.mxu0
  %687 = vmatpush.bf16.msra.mxu0 0
  %688 = vmatpush.bf16.msra.mxu0 0
  %689 = vmatpush.bf16.msra.mxu0 0
  %690 = vmatpush.bf16.msra.mxu0 0
  %691 = vmatpush.bf16.msra.mxu0 0
  %692 = vmatpush.bf16.msra.mxu0 0
  %693 = vmatpush.bf16.msra.mxu0 0
  %694 = vmatpush.bf16.msra.mxu0 %v400
  %695 = vmatmul.bf16.gmra.mxu0 %v475
  %v696 = vpop.f32.mrf.mxu0
  %v697 = vadd.f32 %v683, %v696
  %v698 = vpop.f32.mrf.mxu0
  %v699 = vadd.f32 %v685, %v698
  %700 = vdwg.mxu0
  %v701 = vld [vmem:[%s3] sm:$0xff]
  %v702 = vld [vmem:[%s3 + $0x8] sm:$0xff]
  %v703 = vld [vmem:[%s3 + $0x10] sm:$0xff]
  %v704 = vld [vmem:[%s3 + $0x18] sm:$0xff]
  %v705 = vld [vmem:[%s3 + $0x20] sm:$0xff]
  %v706 = vld [vmem:[%s3 + $0x28] sm:$0xff]
  %v707 = vld [vmem:[%s3 + $0x30] sm:$0xff]
  %v708 = vld [vmem:[%s3 + $0x38] sm:$0xff]
  %v709 = vunpack.c.l.bf16 %v701
  %v710 = vunpack.c.h.bf16 %v701
  %v711 = vunpack.c.l.bf16 %v702
  %v712 = vunpack.c.h.bf16 %v702
  %v713 = vunpack.c.l.bf16 %v703
  %v714 = vunpack.c.h.bf16 %v703
  %v715 = vunpack.c.l.bf16 %v704
  %v716 = vunpack.c.h.bf16 %v704
  %v717 = vunpack.c.l.bf16 %v705
  %v718 = vunpack.c.h.bf16 %v705
  %v719 = vunpack.c.l.bf16 %v706
  %v720 = vunpack.c.h.bf16 %v706
  %v721 = vunpack.c.l.bf16 %v707
  %v722 = vunpack.c.h.bf16 %v707
  %v723 = vunpack.c.l.bf16 %v708
  %v724 = vunpack.c.h.bf16 %v708
  %v725 = vadd.f32 %v501, %v709
  %v726 = vadd.f32 %v529, %v710
  %v727 = vadd.f32 %v557, %v711
  %v728 = vadd.f32 %v585, %v712
  %v729 = vadd.f32 %v613, %v713
  %v730 = vadd.f32 %v641, %v714
  %v731 = vadd.f32 %v669, %v715
  %v732 = vadd.f32 %v697, %v716
  %v733 = vadd.f32 %v503, %v717
  %v734 = vadd.f32 %v531, %v718
  %v735 = vadd.f32 %v559, %v719
  %v736 = vadd.f32 %v587, %v720
  %v737 = vadd.f32 %v615, %v721
  %v738 = vadd.f32 %v643, %v722
  %v739 = vadd.f32 %v671, %v723
  %v740 = vadd.f32 %v699, %v724
  %v741 = vpack.c.bf16 %v726, %v725
  %v742 = vpack.c.bf16 %v728, %v727
  %v743 = vpack.c.bf16 %v730, %v729
  %v744 = vpack.c.bf16 %v732, %v731
  %v745 = vpack.c.bf16 %v734, %v733
  %v746 = vpack.c.bf16 %v736, %v735
  %v747 = vpack.c.bf16 %v738, %v737
  %v748 = vpack.c.bf16 %v740, %v739
  %749 = vst [vmem:[%s4] sm:$0xff] %v741
  %750 = vst [vmem:[%s4 + $0x8] sm:$0xff] %v742
  %751 = vst [vmem:[%s4 + $0x10] sm:$0xff] %v743
  %vm752 = vcmask 1043456
  %vm753 = vcmask 228356
  %vm754 = vmor %vm753, %vm752
  %755 = vst.msk [vmem:[%s4 + $0x18] sm:$0xff] %vm754, %v744
  %756 = vst [vmem:[%s4 + $0x20] sm:$0xff] %v745
  %757 = vst [vmem:[%s4 + $0x28] sm:$0xff] %v746
  %758 = vst [vmem:[%s4 + $0x30] sm:$0xff] %v747
  %759 = vst.msk [vmem:[%s4 + $0x38] sm:$0xff] %vm754, %v748
  // Predicated region
  $region18: #{ft_loss_forward.9} parent=0 // pred_check
    _
  $region19: #{ft_loss_forward.9} parent=0 // pred_check_branch
    %761 = sbr.rel (0) target = $region21
  $region20: #{ft_loss_forward.9} parent=0 // pred_region
    _
  $region21: #{ft_loss_forward.9} parent=0 // pred_fallthru
    _
  // Predicated region
  $region22: #{ft_loss_forward.9} parent=0 // pred_check
    _
  $region23: #{ft_loss_forward.9} parent=0 // pred_check_branch
    %763 = sbr.rel (0) target = $region25
  $region24: #{ft_loss_forward.9} parent=0 // pred_region
    _
  $region25: #{ft_loss_forward.9} parent=0 // pred_fallthru
    _

</llo_original>
